<compile_context>
chip_gen: v7x
topology: tpu7x:2x2x1
jax: 0.10.0
libtpu: 0.0.40
codegen_flags: <defaults>
</compile_context>

<pallas_src>
from functools import partial

import jax
import jax.numpy as jnp
from jax.experimental import pallas as pl
from jax.experimental.pallas import tpu as pltpu


# User-facing parameter names (as produced by init_params).
PARAM_ORDER = [
    "vw1", "vb1", "vw2", "vb2", "vw3", "vb3",
    "gw1", "gb1", "gw2", "gb2", "gw3", "gb3",
    "ew1", "eb1", "ew2", "eb2", "ew3", "eb3",
    "wq", "bq", "wk", "bk", "wv", "bv", "wo", "bo",
    "sw1", "sb1", "sw2", "sb2",
    "ow", "ob",
]

# Order of the (padded / fused) parameter arrays as the kernel receives them.
KERNEL_PARAM_ORDER = [
    "vw1", "vb1", "vw2", "vb2", "vw3", "vb3",
    "gw1", "gb1", "gw2", "gb2", "gw3", "gb3",
    "ew1", "eb1", "ew2", "eb2", "ew3", "eb3",
    "wqkv", "bqkv", "wo", "bo",
    "sw1", "sb1", "sw2", "sb2",
    "ow", "ob",
    "head_mask", "head_mask_t",
]

# Params that feed the MXU as the (possibly bf16) matmul operand.
MATMUL_WEIGHTS = frozenset([
    "vw1", "vw2", "vw3", "gw1", "gw2", "gw3", "ew1", "ew2", "ew3",
    "wqkv", "wo", "sw1", "sw2", "ow",
])


def _round_up(x, m):
    return ((x + m - 1) // m) * m


def _nbytes(x):
    return int(x.size) * x.dtype.itemsize


def _mm(x, w_ref):
    """MXU matmul: x cast to the (possibly bf16) weight dtype, f32 accumulate."""
    w = w_ref[...]
    return jnp.dot(x.astype(w.dtype), w, preferred_element_type=jnp.float32)


def _linear(x, w_ref, b_ref, relu=False):
    y = _mm(x, w_ref) + b_ref[...]
    return jnp.maximum(y, 0.0) if relu else y


def crossmodal_kernel(
    # --- inputs (one batch tile each) ---
    voice_ref, gesture_ref, eye_ref,
    # voice encoder: Dv->512->256->E
    vw1, vb1, vw2, vb2, vw3, vb3,
    # gesture encoder: Dg->512->256->E
    gw1, gb1, gw2, gb2, gw3, gb3,
    # eye encoder: De->256->128->E
    ew1, eb1, ew2, eb2, ew3, eb3,
    # multihead attention: fused QKV projection + out-projection
    wqkv, bqkv, wo, bo,
    # shared layers: E->128->64 (64 lane-padded to SH_p)
    sw1, sb1, sw2, sb2,
    # output layer: 64->out_dim (lane-padded to OD_p)
    ow, ob,
    # precomputed block one-hot head masks
    hm_ref, hmt_ref,
    # --- packed lane-dense output slab [out | vf | gf | ef | shared] ---
    out_ref,
    *, head_dim,
):
    f32 = jnp.float32
    bt = voice_ref.shape[0]
    E_p = vw3.shape[1]
    OD_p = ow.shape[1]

    # ---- modality encoders (Dropout is identity at inference) ----
    vf = _linear(_linear(_linear(voice_ref[...], vw1, vb1, True), vw2, vb2, True),
                 vw3, vb3)
    gf = _linear(_linear(_linear(gesture_ref[...], gw1, gb1, True), gw2, gb2, True),
                 gw3, gb3)
    ef = _linear(_linear(_linear(eye_ref[...], ew1, eb1, True), ew2, eb2, True),
                 ew3, eb3)

    # ---- self-attention over the 3 modality tokens --------------------------
    # Single fused QKV projection over the (3*bt, E_p) token slab.
    feats = jnp.concatenate([vf, gf, ef], axis=0)             # (3bt, E_p) f32
    qkv = _mm(feats, wqkv) + bqkv[...]                        # (3bt, 3E_p) f32
    q = qkv[:, :E_p]
    k = qkv[:, E_p:2 * E_p]
    v = qkv[:, 2 * E_p:]

    hm = hm_ref[...]                                          # (E_p, Hm) f32
    hmt = hmt_ref[...]                                        # (Hm, E_p) f32
    scale = 1.0 / float(head_dim) ** 0.5

    # q token block i pairs with k/v token block (i + j) % 3 via a sublane roll
    # (XLU) — no (9*bt, E) materialised slabs.  The result is invariant to how
    # the three offsets are labelled as long as k and v use the same roll.
    def rolled(x, j):
        return x if j == 0 else pltpu.roll(x, shift=(3 - j) * bt, axis=0)

    # Per-head scores via the lane-reducing head-mask matmul; kept in f32 even
    # on the bf16 path (tiny N, and this is the precision-critical sum).
    s = [jnp.dot(q * rolled(k, j), hm, preferred_element_type=f32) * scale
         for j in range(3)]                                   # 3 x (3bt, Hm)

    # Softmax over the 3 key tokens per (row, head) — pure VPU/EUP work.
    m = jnp.maximum(jnp.maximum(s[0], s[1]), s[2])
    e0, e1, e2 = (jnp.exp(sj - m) for sj in s)
    inv = 1.0 / (e0 + e1 + e2)

    # Broadcast per-head probs back to lanes (f32 head-mask matmul), weight V.
    ctx = jnp.zeros((3 * bt, E_p), f32)
    for j, ej in enumerate((e0, e1, e2)):
        pj = jnp.dot(ej * inv, hmt, preferred_element_type=f32)   # (3bt, E_p)
        ctx = ctx + pj * rolled(v, j)

    # torch.mean over the 3 tokens commutes with the linear out-projection.
    ctx_mean = (ctx[:bt] + ctx[bt:2 * bt] + ctx[2 * bt:]) * (1.0 / 3.0)
    fused = _mm(ctx_mean, wo) + bo[...]                       # (bt, E_p)

    # ---- shared layers + output head ----
    h1 = jnp.maximum(_mm(fused, sw1) + sb1[...], 0.0)         # (bt, 128)
    h2 = jnp.maximum(_mm(h1, sw2) + sb2[...], 0.0)            # (bt, SH_p)
    out = _mm(h2, ow) + ob[...]                               # (bt, OD_p)

    # ---- ONE lane-dense packed output slab; every slice is 128-lane aligned.
    out_ref[:, :OD_p] = out
    out_ref[:, OD_p:OD_p + E_p] = vf
    out_ref[:, OD_p + E_p:OD_p + 2 * E_p] = gf
    out_ref[:, OD_p + 2 * E_p:OD_p + 3 * E_p] = ef
    out_ref[:, OD_p + 3 * E_p:] = h2


def crossmodal_forward(params, voice, gesture, eye, *, num_heads=4,
                       batch_tile=256, matmul_dtype=jnp.bfloat16,
                       vmem_limit_bytes=None):
    """Run the fused kernel with a batch-tiled grid.

    batch_tile: rows per grid step.  256 keeps the attention working set
      (~6 x (3*bt, Ep) f32 slabs) inside v7x's 64 MiB VMEM even at E=512; on
      v6e (128 MiB) batch_tile=512 amortises the ~0.35 us/step overhead better
      for large batches; on v5e keep <=128-256.  The tile is clamped so the
      "parallel" batch axis yields >=2 grid steps (v7x has 2 TensorCores).
    matmul_dtype: MXU operand dtype.  bf16 is the default on ALL generations
      (bf16-native MXU everywhere); accumulation/biases/elementwise stay f32.
    """
    B = voice.shape[0]
    E = params["vw3"].shape[1]
    OD = params["ow"].shape[1]
    SH = params["sw2"].shape[1]
    H = num_heads
    assert E % H == 0, f"shared_dim={E} must be divisible by num_heads={H}"
    hd = E // H

    E_p = _round_up(E, 128)
    OD_p = _round_up(OD, 128)
    SH_p = _round_up(SH, 128)
    Hm = _round_up(H, 8)

    # ---- lane padding (exact: zero rows/cols contribute nothing, ReLU(0)=0) --
    def pad2(x, rows=None, cols=None):
        r, c = x.shape
        rt = r if rows is None else rows
        ct = c if cols is None else cols
        if (rt, ct) == (r, c):
            return x
        return jnp.pad(x, ((0, rt - r), (0, ct - c)))

    def pad_lanes(x):
        return pad2(x, cols=_round_up(x.shape[1], 128))

    voice_p, gesture_p, eye_p = pad_lanes(voice), pad_lanes(gesture), pad_lanes(eye)
    Dv_p, Dg_p, De_p = voice_p.shape[1], gesture_p.shape[1], eye_p.shape[1]

    p = {
        "vw1": pad2(params["vw1"], rows=Dv_p), "vb1": params["vb1"],
        "vw2": params["vw2"], "vb2": params["vb2"],
        "vw3": pad2(params["vw3"], cols=E_p), "vb3": pad2(params["vb3"], cols=E_p),
        "gw1": pad2(params["gw1"], rows=Dg_p), "gb1": params["gb1"],
        "gw2": params["gw2"], "gb2": params["gb2"],
        "gw3": pad2(params["gw3"], cols=E_p), "gb3": pad2(params["gb3"], cols=E_p),
        "ew1": pad2(params["ew1"], rows=De_p), "eb1": params["eb1"],
        "ew2": params["ew2"], "eb2": params["eb2"],
        "ew3": pad2(params["ew3"], cols=E_p), "eb3": pad2(params["eb3"], cols=E_p),
        "wo": pad2(params["wo"], rows=E_p, cols=E_p),
        "bo": pad2(params["bo"], cols=E_p),
        "sw1": pad2(params["sw1"], rows=E_p), "sb1": params["sb1"],
        "sw2": pad2(params["sw2"], cols=SH_p), "sb2": pad2(params["sb2"], cols=SH_p),
        "ow": pad2(params["ow"], rows=SH_p, cols=OD_p),
        "ob": pad2(params["ob"], cols=OD_p),
    }
    # Fused QKV projection (one MXU op in the kernel instead of three).
    p["wqkv"] = jnp.concatenate(
        [pad2(params[w], rows=E_p, cols=E_p) for w in ("wq", "wk", "wv")], axis=1)
    p["bqkv"] = jnp.concatenate(
        [pad2(params[b], cols=E_p) for b in ("bq", "bk", "bv")], axis=1)

    # Block one-hot head masks over the REAL E lanes / REAL H heads only,
    # precomputed once here instead of rebuilt on every grid step.
    d = jnp.arange(E_p)[:, None]
    h = jnp.arange(Hm)[None, :]
    hm = ((d // hd) == h) & (d < E) & (h < H)
    p["head_mask"] = hm.astype(jnp.float32)                       # (E_p, Hm)
    p["head_mask_t"] = jnp.transpose(hm).astype(jnp.float32)      # (Hm, E_p)

    # ---- bf16 MXU operands (weights pre-cast once; biases + masks stay f32) --
    if matmul_dtype != jnp.float32:
        for name in MATMUL_WEIGHTS:
            p[name] = p[name].astype(matmul_dtype)
        voice_p = voice_p.astype(matmul_dtype)
        gesture_p = gesture_p.astype(matmul_dtype)
        eye_p = eye_p.astype(matmul_dtype)

    # ---- batch tiling ---------------------------------------------------------
    bt = _round_up(max(8, min(batch_tile, B)), 8)
    if B > 8 and pl.cdiv(B, bt) < 2:
        bt = _round_up(pl.cdiv(B, 2), 8)        # >=2 grid steps for v7x's 2 TCs
    Bp = _round_up(B, bt)
    if Bp != B:
        padb = lambda x: jnp.pad(x, ((0, Bp - B), (0, 0)))
        voice_p, gesture_p, eye_p = padb(voice_p), padb(gesture_p), padb(eye_p)
    grid = (Bp // bt,)

    # ---- packed lane-dense output slab: [out | vf | gf | ef | shared] --------
    W = OD_p + 3 * E_p + SH_p                   # multiple of 128 by construction
    out_shape = jax.ShapeDtypeStruct((Bp, W), jnp.float32)

    args = [voice_p, gesture_p, eye_p] + [p[name] for name in KERNEL_PARAM_ORDER]

    # ---- explicit VMEM budget (v5e's 16 MiB scoped default is too small;
    #      keep well under v7x's 64 MiB physical).
    weight_bytes = sum(_nbytes(p[name]) for name in KERNEL_PARAM_ORDER)
    io_bytes = 2 * (bt * (Dv_p + Dg_p + De_p) * voice_p.dtype.itemsize
                    + bt * W * 4)
    act_bytes = 4 * bt * (2 * 512 + 2 * 256 + 2 * 128 + 12 * 3 * E_p + W)
    est = 2 * weight_bytes + io_bytes + act_bytes   # 2x weights: double-buffer fallback
    if vmem_limit_bytes is None:
        vmem_limit_bytes = int(min(100 * 2 ** 20, max(32 * 2 ** 20, 1.4 * est)))

    # ---- advisory cost estimate ----------------------------------------------
    def mm_flops(m_, k_, n_):
        return 2 * m_ * k_ * n_
    flops = (
        mm_flops(Bp, Dv_p, 512) + mm_flops(Bp, 512, 256) + mm_flops(Bp, 256, E_p)
        + mm_flops(Bp, Dg_p, 512) + mm_flops(Bp, 512, 256) + mm_flops(Bp, 256, E_p)
        + mm_flops(Bp, De_p, 256) + mm_flops(Bp, 256, 128) + mm_flops(Bp, 128, E_p)
        + mm_flops(3 * Bp, E_p, 3 * E_p)          # fused QKV projection
        + 3 * mm_flops(3 * Bp, E_p, Hm)           # per-head scores
        + 3 * mm_flops(3 * Bp, Hm, E_p)           # probs -> lanes
        + mm_flops(Bp, E_p, E_p)                  # attention out-projection
        + mm_flops(Bp, E_p, 128) + mm_flops(Bp, 128, SH_p) + mm_flops(Bp, SH_p, OD_p)
    )
    # NOTE: weights are counted ONCE deliberately — they are DMA'd once and stay
    # VMEM-resident across grid steps (constant index_map), so counting them per
    # grid step would over-state HBM traffic.  Advisory only.
    bytes_accessed = sum(_nbytes(a) for a in args) + Bp * W * 4
    cost = pl.CostEstimate(flops=int(flops), transcendentals=int(9 * Bp * Hm),
                           bytes_accessed=int(bytes_accessed))

    def batch_spec(ncols):
        return pl.BlockSpec((bt, ncols), lambda i: (i, 0))

    def run(single_buffer_weights):
        def resident_spec(arr):
            if single_buffer_weights:
                # Constant index_map -> DMA'd once; Buffered(1) drops the useless
                # second buffer (halves the resident-weight VMEM footprint).
                return pl.BlockSpec(arr.shape, lambda i: (0, 0),
                                    pipeline_mode=pl.Buffered(1))
            return pl.BlockSpec(arr.shape, lambda i: (0, 0))

        in_specs = [batch_spec(Dv_p), batch_spec(Dg_p), batch_spec(De_p)]
        in_specs += [resident_spec(p[name]) for name in KERNEL_PARAM_ORDER]

        return pl.pallas_call(
            partial(crossmodal_kernel, head_dim=hd),
            grid=grid,
            in_specs=in_specs,
            out_specs=batch_spec(W),
            out_shape=out_shape,
            compiler_params=pltpu.CompilerParams(
                dimension_semantics=("parallel",),
                vmem_limit_bytes=vmem_limit_bytes),
            cost_estimate=cost,
        )(*args)

    try:
        slab = run(single_buffer_weights=True)
    except Exception:
        # pipeline_mode=pl.Buffered(1) not supported by this jax version;
        # fall back to default (double-buffered) resident weights.
        slab = run(single_buffer_weights=False)

    off = OD_p
    out = slab[:B, :OD]
    vf = slab[:B, off:off + E]
    gf = slab[:B, off + E_p:off + E_p + E]
    ef = slab[:B, off + 2 * E_p:off + 2 * E_p + E]
    sh = slab[:B, off + 3 * E_p:off + 3 * E_p + SH]
    return out, vf, gf, ef, sh


def reference_forward(params, voice, gesture, eye, *, num_heads=4):
    """Plain-JAX reference with the same (in_features, out_features) layout."""
    p = params

    def lin(x, w, b, relu=False):
        y = x @ w + b
        return jnp.maximum(y, 0.0) if relu else y

    vf = lin(lin(lin(voice, p["vw1"], p["vb1"], True), p["vw2"], p["vb2"], True),
             p["vw3"], p["vb3"])
    gf = lin(lin(lin(gesture, p["gw1"], p["gb1"], True), p["gw2"], p["gb2"], True),
             p["gw3"], p["gb3"])
    ef = lin(lin(lin(eye, p["ew1"], p["eb1"], True), p["ew2"], p["eb2"], True),
             p["ew3"], p["eb3"])

    feats = jnp.stack([vf, gf, ef], axis=0)                        # (3, B, E)
    B, E = vf.shape
    H = num_heads
    hd = E // H
    q = feats @ p["wq"] + p["bq"]
    k = feats @ p["wk"] + p["bk"]
    v = feats @ p["wv"] + p["bv"]

    def split(x):
        return x.reshape(3, B, H, hd).transpose(1, 2, 0, 3)        # (B, H, 3, hd)

    qh, kh, vh = split(q), split(k), split(v)
    scores = jnp.einsum("bhqd,bhkd->bhqk", qh, kh) / float(hd) ** 0.5
    probs = jax.nn.softmax(scores, axis=-1)
    ctx = jnp.einsum("bhqk,bhkd->bhqd", probs, vh)
    ctx = ctx.transpose(2, 0, 1, 3).reshape(3, B, E)
    att = ctx @ p["wo"] + p["bo"]
    fused = att.mean(axis=0)
    h1 = jnp.maximum(fused @ p["sw1"] + p["sb1"], 0.0)
    h2 = jnp.maximum(h1 @ p["sw2"] + p["sb2"], 0.0)
    out = h2 @ p["ow"] + p["ob"]
    return out, vf, gf, ef, h2


def init_params(key, voice_dim, gesture_dim, eye_dim, shared_dim, output_dim):
    """Deterministic synthetic parameters (PyTorch-default-style scaling)."""
    shapes = {
        "vw1": (voice_dim, 512), "vb1": (1, 512),
        "vw2": (512, 256),       "vb2": (1, 256),
        "vw3": (256, shared_dim), "vb3": (1, shared_dim),
        "gw1": (gesture_dim, 512), "gb1": (1, 512),
        "gw2": (512, 256),         "gb2": (1, 256),
        "gw3": (256, shared_dim),  "gb3": (1, shared_dim),
        "ew1": (eye_dim, 256), "eb1": (1, 256),
        "ew2": (256, 128),     "eb2": (1, 128),
        "ew3": (128, shared_dim), "eb3": (1, shared_dim),
        "wq": (shared_dim, shared_dim), "bq": (1, shared_dim),
        "wk": (shared_dim, shared_dim), "bk": (1, shared_dim),
        "wv": (shared_dim, shared_dim), "bv": (1, shared_dim),
        "wo": (shared_dim, shared_dim), "bo": (1, shared_dim),
        "sw1": (shared_dim, 128), "sb1": (1, 128),
        "sw2": (128, 64),         "sb2": (1, 64),
        "ow": (64, output_dim),   "ob": (1, output_dim),
    }
    params = {}
    keys = jax.random.split(key, len(PARAM_ORDER))
    for name, k in zip(PARAM_ORDER, keys):
        shape = shapes[name]
        fan_in = shape[0] if shape[0] > 1 else shape[1]
        bound = 1.0 / float(fan_in) ** 0.5
        params[name] = jax.random.uniform(
            k, shape, dtype=jnp.float32, minval=-bound, maxval=bound)
    return params


if __name__ == "__main__":
    # Small, module-consistent shapes.  B=12 + batch_tile=8 exercises the grid
    # (2 steps) and the batch-padding path; shared_dim=32 exercises the E->128
    # lane-padding path.
    B = 12
    voice_dim, gesture_dim, eye_dim = 64, 48, 16
    shared_dim, output_dim = 32, 8          # shared_dim divisible by num_heads=4
    num_heads = 4

    key = jax.random.PRNGKey(0)
    kp, kv, kg, ke = jax.random.split(key, 4)

    params = init_params(kp, voice_dim, gesture_dim, eye_dim,
                         shared_dim, output_dim)
    voice = jax.random.normal(kv, (B, voice_dim), dtype=jnp.float32)
    gesture = jax.random.normal(kg, (B, gesture_dim), dtype=jnp.float32)
    eye = jax.random.normal(ke, (B, eye_dim), dtype=jnp.float32)

    ref = jax.block_until_ready(
        reference_forward(params, voice, gesture, eye, num_heads=num_heads))

    names = ["output", "voice_features", "gesture_features",
             "eye_features", "shared_representation"]
    expected = [(B, output_dim), (B, shared_dim), (B, shared_dim),
                (B, shared_dim), (B, 64)]

    # f32 MXU-operand path (tight check).
    outs_f32 = jax.block_until_ready(
        crossmodal_forward(params, voice, gesture, eye, num_heads=num_heads,
                           batch_tile=8, matmul_dtype=jnp.float32))
    for name, shp, a, b in zip(names, expected, outs_f32, ref):
        assert a.shape == shp, f"{name}: {a.shape} != {shp}"
        err = float(jnp.max(jnp.abs(a - b)))
        # Loose-ish tolerance: XLA's default f32 matmul precision on TPU differs
        # slightly from the Pallas/MXU path; real bugs would be O(0.1+).
        assert err < 5e-2, f"{name} (f32) mismatch vs reference: max abs err {err}"

    # Default bf16 MXU-operand path (f32 accumulation) — looser tolerance.
    outs_bf16 = jax.block_until_ready(
        crossmodal_forward(params, voice, gesture, eye, num_heads=num_heads,
                           batch_tile=8))
    for name, shp, a, b in zip(names, expected, outs_bf16, ref):
        assert a.shape == shp, f"{name}: {a.shape} != {shp}"
        err = float(jnp.max(jnp.abs(a - b)))
        assert err < 2e-1, f"{name} (bf16) mismatch vs reference: max abs err {err}"

    print("KERNEL_OK")
</pallas_src>

<mosaic_0001>
module attributes {stable_mosaic.version = 11 : i64} {
  func.func @crossmodal_kernel(%arg0: i32, %arg1: memref<8x128xf32, #tpu.memory_space<vmem>>, %arg2: memref<8x128xf32, #tpu.memory_space<vmem>>, %arg3: memref<8x128xf32, #tpu.memory_space<vmem>>, %arg4: memref<128x512xf32, #tpu.memory_space<vmem>>, %arg5: memref<1x512xf32, #tpu.memory_space<vmem>>, %arg6: memref<512x256xf32, #tpu.memory_space<vmem>>, %arg7: memref<1x256xf32, #tpu.memory_space<vmem>>, %arg8: memref<256x128xf32, #tpu.memory_space<vmem>>, %arg9: memref<1x128xf32, #tpu.memory_space<vmem>>, %arg10: memref<128x512xf32, #tpu.memory_space<vmem>>, %arg11: memref<1x512xf32, #tpu.memory_space<vmem>>, %arg12: memref<512x256xf32, #tpu.memory_space<vmem>>, %arg13: memref<1x256xf32, #tpu.memory_space<vmem>>, %arg14: memref<256x128xf32, #tpu.memory_space<vmem>>, %arg15: memref<1x128xf32, #tpu.memory_space<vmem>>, %arg16: memref<128x256xf32, #tpu.memory_space<vmem>>, %arg17: memref<1x256xf32, #tpu.memory_space<vmem>>, %arg18: memref<256x128xf32, #tpu.memory_space<vmem>>, %arg19: memref<1x128xf32, #tpu.memory_space<vmem>>, %arg20: memref<128x128xf32, #tpu.memory_space<vmem>>, %arg21: memref<1x128xf32, #tpu.memory_space<vmem>>, %arg22: memref<128x384xf32, #tpu.memory_space<vmem>>, %arg23: memref<1x384xf32, #tpu.memory_space<vmem>>, %arg24: memref<128x128xf32, #tpu.memory_space<vmem>>, %arg25: memref<1x128xf32, #tpu.memory_space<vmem>>, %arg26: memref<128x128xf32, #tpu.memory_space<vmem>>, %arg27: memref<1x128xf32, #tpu.memory_space<vmem>>, %arg28: memref<128x128xf32, #tpu.memory_space<vmem>>, %arg29: memref<1x128xf32, #tpu.memory_space<vmem>>, %arg30: memref<128x128xf32, #tpu.memory_space<vmem>>, %arg31: memref<1x128xf32, #tpu.memory_space<vmem>>, %arg32: memref<128x8xf32, #tpu.memory_space<vmem>>, %arg33: memref<8x128xf32, #tpu.memory_space<vmem>>, %arg34: memref<8x640xf32, #tpu.memory_space<vmem>>) attributes {dimension_semantics = [#tpu.dimension_semantics<parallel>], iteration_bounds = array<i64: 2>, scalar_prefetch = 0 : i64, scratch_operands = 0 : i64, tpu.core_type = #tpu.core_type<tc>, window_params = [{transform_indices = @transform_0, window_bounds = array<i64: 8, 128>}, {transform_indices = @transform_1, window_bounds = array<i64: 8, 128>}, {transform_indices = @transform_2, window_bounds = array<i64: 8, 128>}, {pipeline_mode = #tpu.pipeline_mode<synchronous>, transform_indices = @transform_3, window_bounds = array<i64: 128, 512>}, {pipeline_mode = #tpu.pipeline_mode<synchronous>, transform_indices = @transform_4, window_bounds = array<i64: 1, 512>}, {pipeline_mode = #tpu.pipeline_mode<synchronous>, transform_indices = @transform_5, window_bounds = array<i64: 512, 256>}, {pipeline_mode = #tpu.pipeline_mode<synchronous>, transform_indices = @transform_6, window_bounds = array<i64: 1, 256>}, {pipeline_mode = #tpu.pipeline_mode<synchronous>, transform_indices = @transform_7, window_bounds = array<i64: 256, 128>}, {pipeline_mode = #tpu.pipeline_mode<synchronous>, transform_indices = @transform_8, window_bounds = array<i64: 1, 128>}, {pipeline_mode = #tpu.pipeline_mode<synchronous>, transform_indices = @transform_9, window_bounds = array<i64: 128, 512>}, {pipeline_mode = #tpu.pipeline_mode<synchronous>, transform_indices = @transform_10, window_bounds = array<i64: 1, 512>}, {pipeline_mode = #tpu.pipeline_mode<synchronous>, transform_indices = @transform_11, window_bounds = array<i64: 512, 256>}, {pipeline_mode = #tpu.pipeline_mode<synchronous>, transform_indices = @transform_12, window_bounds = array<i64: 1, 256>}, {pipeline_mode = #tpu.pipeline_mode<synchronous>, transform_indices = @transform_13, window_bounds = array<i64: 256, 128>}, {pipeline_mode = #tpu.pipeline_mode<synchronous>, transform_indices = @transform_14, window_bounds = array<i64: 1, 128>}, {pipeline_mode = #tpu.pipeline_mode<synchronous>, transform_indices = @transform_15, window_bounds = array<i64: 128, 256>}, {pipeline_mode = #tpu.pipeline_mode<synchronous>, transform_indices = @transform_16, window_bounds = array<i64: 1, 256>}, {pipeline_mode = #tpu.pipeline_mode<synchronous>, transform_indices = @transform_17, window_bounds = array<i64: 256, 128>}, {pipeline_mode = #tpu.pipeline_mode<synchronous>, transform_indices = @transform_18, window_bounds = array<i64: 1, 128>}, {pipeline_mode = #tpu.pipeline_mode<synchronous>, transform_indices = @transform_19, window_bounds = array<i64: 128, 128>}, {pipeline_mode = #tpu.pipeline_mode<synchronous>, transform_indices = @transform_20, window_bounds = array<i64: 1, 128>}, {pipeline_mode = #tpu.pipeline_mode<synchronous>, transform_indices = @transform_21, window_bounds = array<i64: 128, 384>}, {pipeline_mode = #tpu.pipeline_mode<synchronous>, transform_indices = @transform_22, window_bounds = array<i64: 1, 384>}, {pipeline_mode = #tpu.pipeline_mode<synchronous>, transform_indices = @transform_23, window_bounds = array<i64: 128, 128>}, {pipeline_mode = #tpu.pipeline_mode<synchronous>, transform_indices = @transform_24, window_bounds = array<i64: 1, 128>}, {pipeline_mode = #tpu.pipeline_mode<synchronous>, transform_indices = @transform_25, window_bounds = array<i64: 128, 128>}, {pipeline_mode = #tpu.pipeline_mode<synchronous>, transform_indices = @transform_26, window_bounds = array<i64: 1, 128>}, {pipeline_mode = #tpu.pipeline_mode<synchronous>, transform_indices = @transform_27, window_bounds = array<i64: 128, 128>}, {pipeline_mode = #tpu.pipeline_mode<synchronous>, transform_indices = @transform_28, window_bounds = array<i64: 1, 128>}, {pipeline_mode = #tpu.pipeline_mode<synchronous>, transform_indices = @transform_29, window_bounds = array<i64: 128, 128>}, {pipeline_mode = #tpu.pipeline_mode<synchronous>, transform_indices = @transform_30, window_bounds = array<i64: 1, 128>}, {pipeline_mode = #tpu.pipeline_mode<synchronous>, transform_indices = @transform_31, window_bounds = array<i64: 128, 8>}, {pipeline_mode = #tpu.pipeline_mode<synchronous>, transform_indices = @transform_32, window_bounds = array<i64: 8, 128>}, {transform_indices = @transform_33, window_bounds = array<i64: 8, 640>}]} {
    %c0 = arith.constant 0 : index
    %c0_0 = arith.constant 0 : index
    %0 = vector.load %arg1[%c0, %c0_0] : memref<8x128xf32, #tpu.memory_space<vmem>>, vector<8x128xf32>
    %c0_1 = arith.constant 0 : index
    %c0_2 = arith.constant 0 : index
    %1 = vector.load %arg4[%c0_1, %c0_2] : memref<128x512xf32, #tpu.memory_space<vmem>>, vector<128x512xf32>
    %cst = arith.constant dense<0.000000e+00> : vector<8x512xf32>
    %2 = tpu.matmul %0, %1, %cst {dimension_numbers = #tpu.dot_dimension_numbers<[1], [0], [0], [1], [0, 0, 1, 1], [], []>} : vector<8x128xf32>, vector<128x512xf32>, vector<8x512xf32> -> vector<8x512xf32>
    %c0_3 = arith.constant 0 : index
    %c0_4 = arith.constant 0 : index
    %3 = vector.load %arg5[%c0_3, %c0_4] : memref<1x512xf32, #tpu.memory_space<vmem>>, vector<1x512xf32>
    %4 = vector.broadcast %3 : vector<1x512xf32> to vector<8x512xf32>
    %5 = arith.addf %2, %4 : vector<8x512xf32>
    %cst_5 = arith.constant 0.000000e+00 : f32
    %6 = vector.broadcast %cst_5 : f32 to vector<8x512xf32>
    %7 = arith.maximumf %5, %6 : vector<8x512xf32>
    %c0_6 = arith.constant 0 : index
    %c0_7 = arith.constant 0 : index
    %8 = vector.load %arg6[%c0_6, %c0_7] : memref<512x256xf32, #tpu.memory_space<vmem>>, vector<512x256xf32>
    %cst_8 = arith.constant dense<0.000000e+00> : vector<8x256xf32>
    %9 = tpu.matmul %7, %8, %cst_8 {dimension_numbers = #tpu.dot_dimension_numbers<[1], [0], [0], [1], [0, 0, 1, 1], [], []>} : vector<8x512xf32>, vector<512x256xf32>, vector<8x256xf32> -> vector<8x256xf32>
    %c0_9 = arith.constant 0 : index
    %c0_10 = arith.constant 0 : index
    %10 = vector.load %arg7[%c0_9, %c0_10] : memref<1x256xf32, #tpu.memory_space<vmem>>, vector<1x256xf32>
    %11 = vector.broadcast %10 : vector<1x256xf32> to vector<8x256xf32>
    %12 = arith.addf %9, %11 : vector<8x256xf32>
    %cst_11 = arith.constant 0.000000e+00 : f32
    %13 = vector.broadcast %cst_11 : f32 to vector<8x256xf32>
    %14 = arith.maximumf %12, %13 : vector<8x256xf32>
    %c0_12 = arith.constant 0 : index
    %c0_13 = arith.constant 0 : index
    %15 = vector.load %arg8[%c0_12, %c0_13] : memref<256x128xf32, #tpu.memory_space<vmem>>, vector<256x128xf32>
    %cst_14 = arith.constant dense<0.000000e+00> : vector<8x128xf32>
    %16 = tpu.matmul %14, %15, %cst_14 {dimension_numbers = #tpu.dot_dimension_numbers<[1], [0], [0], [1], [0, 0, 1, 1], [], []>} : vector<8x256xf32>, vector<256x128xf32>, vector<8x128xf32> -> vector<8x128xf32>
    %c0_15 = arith.constant 0 : index
    %c0_16 = arith.constant 0 : index
    %17 = vector.load %arg9[%c0_15, %c0_16] : memref<1x128xf32, #tpu.memory_space<vmem>>, vector<1x128xf32>
    %18 = vector.broadcast %17 : vector<1x128xf32> to vector<8x128xf32>
    %19 = arith.addf %16, %18 : vector<8x128xf32>
    %c0_17 = arith.constant 0 : index
    %c0_18 = arith.constant 0 : index
    %20 = vector.load %arg2[%c0_17, %c0_18] : memref<8x128xf32, #tpu.memory_space<vmem>>, vector<8x128xf32>
    %c0_19 = arith.constant 0 : index
    %c0_20 = arith.constant 0 : index
    %21 = vector.load %arg10[%c0_19, %c0_20] : memref<128x512xf32, #tpu.memory_space<vmem>>, vector<128x512xf32>
    %cst_21 = arith.constant dense<0.000000e+00> : vector<8x512xf32>
    %22 = tpu.matmul %20, %21, %cst_21 {dimension_numbers = #tpu.dot_dimension_numbers<[1], [0], [0], [1], [0, 0, 1, 1], [], []>} : vector<8x128xf32>, vector<128x512xf32>, vector<8x512xf32> -> vector<8x512xf32>
    %c0_22 = arith.constant 0 : index
    %c0_23 = arith.constant 0 : index
    %23 = vector.load %arg11[%c0_22, %c0_23] : memref<1x512xf32, #tpu.memory_space<vmem>>, vector<1x512xf32>
    %24 = vector.broadcast %23 : vector<1x512xf32> to vector<8x512xf32>
    %25 = arith.addf %22, %24 : vector<8x512xf32>
    %cst_24 = arith.constant 0.000000e+00 : f32
    %26 = vector.broadcast %cst_24 : f32 to vector<8x512xf32>
    %27 = arith.maximumf %25, %26 : vector<8x512xf32>
    %c0_25 = arith.constant 0 : index
    %c0_26 = arith.constant 0 : index
    %28 = vector.load %arg12[%c0_25, %c0_26] : memref<512x256xf32, #tpu.memory_space<vmem>>, vector<512x256xf32>
    %cst_27 = arith.constant dense<0.000000e+00> : vector<8x256xf32>
    %29 = tpu.matmul %27, %28, %cst_27 {dimension_numbers = #tpu.dot_dimension_numbers<[1], [0], [0], [1], [0, 0, 1, 1], [], []>} : vector<8x512xf32>, vector<512x256xf32>, vector<8x256xf32> -> vector<8x256xf32>
    %c0_28 = arith.constant 0 : index
    %c0_29 = arith.constant 0 : index
    %30 = vector.load %arg13[%c0_28, %c0_29] : memref<1x256xf32, #tpu.memory_space<vmem>>, vector<1x256xf32>
    %31 = vector.broadcast %30 : vector<1x256xf32> to vector<8x256xf32>
    %32 = arith.addf %29, %31 : vector<8x256xf32>
    %cst_30 = arith.constant 0.000000e+00 : f32
    %33 = vector.broadcast %cst_30 : f32 to vector<8x256xf32>
    %34 = arith.maximumf %32, %33 : vector<8x256xf32>
    %c0_31 = arith.constant 0 : index
    %c0_32 = arith.constant 0 : index
    %35 = vector.load %arg14[%c0_31, %c0_32] : memref<256x128xf32, #tpu.memory_space<vmem>>, vector<256x128xf32>
    %cst_33 = arith.constant dense<0.000000e+00> : vector<8x128xf32>
    %36 = tpu.matmul %34, %35, %cst_33 {dimension_numbers = #tpu.dot_dimension_numbers<[1], [0], [0], [1], [0, 0, 1, 1], [], []>} : vector<8x256xf32>, vector<256x128xf32>, vector<8x128xf32> -> vector<8x128xf32>
    %c0_34 = arith.constant 0 : index
    %c0_35 = arith.constant 0 : index
    %37 = vector.load %arg15[%c0_34, %c0_35] : memref<1x128xf32, #tpu.memory_space<vmem>>, vector<1x128xf32>
    %38 = vector.broadcast %37 : vector<1x128xf32> to vector<8x128xf32>
    %39 = arith.addf %36, %38 : vector<8x128xf32>
    %c0_36 = arith.constant 0 : index
    %c0_37 = arith.constant 0 : index
    %40 = vector.load %arg3[%c0_36, %c0_37] : memref<8x128xf32, #tpu.memory_space<vmem>>, vector<8x128xf32>
    %c0_38 = arith.constant 0 : index
    %c0_39 = arith.constant 0 : index
    %41 = vector.load %arg16[%c0_38, %c0_39] : memref<128x256xf32, #tpu.memory_space<vmem>>, vector<128x256xf32>
    %cst_40 = arith.constant dense<0.000000e+00> : vector<8x256xf32>
    %42 = tpu.matmul %40, %41, %cst_40 {dimension_numbers = #tpu.dot_dimension_numbers<[1], [0], [0], [1], [0, 0, 1, 1], [], []>} : vector<8x128xf32>, vector<128x256xf32>, vector<8x256xf32> -> vector<8x256xf32>
    %c0_41 = arith.constant 0 : index
    %c0_42 = arith.constant 0 : index
    %43 = vector.load %arg17[%c0_41, %c0_42] : memref<1x256xf32, #tpu.memory_space<vmem>>, vector<1x256xf32>
    %44 = vector.broadcast %43 : vector<1x256xf32> to vector<8x256xf32>
    %45 = arith.addf %42, %44 : vector<8x256xf32>
    %cst_43 = arith.constant 0.000000e+00 : f32
    %46 = vector.broadcast %cst_43 : f32 to vector<8x256xf32>
    %47 = arith.maximumf %45, %46 : vector<8x256xf32>
    %c0_44 = arith.constant 0 : index
    %c0_45 = arith.constant 0 : index
    %48 = vector.load %arg18[%c0_44, %c0_45] : memref<256x128xf32, #tpu.memory_space<vmem>>, vector<256x128xf32>
    %cst_46 = arith.constant dense<0.000000e+00> : vector<8x128xf32>
    %49 = tpu.matmul %47, %48, %cst_46 {dimension_numbers = #tpu.dot_dimension_numbers<[1], [0], [0], [1], [0, 0, 1, 1], [], []>} : vector<8x256xf32>, vector<256x128xf32>, vector<8x128xf32> -> vector<8x128xf32>
    %c0_47 = arith.constant 0 : index
    %c0_48 = arith.constant 0 : index
    %50 = vector.load %arg19[%c0_47, %c0_48] : memref<1x128xf32, #tpu.memory_space<vmem>>, vector<1x128xf32>
    %51 = vector.broadcast %50 : vector<1x128xf32> to vector<8x128xf32>
    %52 = arith.addf %49, %51 : vector<8x128xf32>
    %cst_49 = arith.constant 0.000000e+00 : f32
    %53 = vector.broadcast %cst_49 : f32 to vector<8x128xf32>
    %54 = arith.maximumf %52, %53 : vector<8x128xf32>
    %c0_50 = arith.constant 0 : index
    %c0_51 = arith.constant 0 : index
    %55 = vector.load %arg20[%c0_50, %c0_51] : memref<128x128xf32, #tpu.memory_space<vmem>>, vector<128x128xf32>
    %cst_52 = arith.constant dense<0.000000e+00> : vector<8x128xf32>
    %56 = tpu.matmul %54, %55, %cst_52 {dimension_numbers = #tpu.dot_dimension_numbers<[1], [0], [0], [1], [0, 0, 1, 1], [], []>} : vector<8x128xf32>, vector<128x128xf32>, vector<8x128xf32> -> vector<8x128xf32>
    %c0_53 = arith.constant 0 : index
    %c0_54 = arith.constant 0 : index
    %57 = vector.load %arg21[%c0_53, %c0_54] : memref<1x128xf32, #tpu.memory_space<vmem>>, vector<1x128xf32>
    %58 = vector.broadcast %57 : vector<1x128xf32> to vector<8x128xf32>
    %59 = arith.addf %56, %58 : vector<8x128xf32>
    %60 = tpu.concatenate %19, %39, %59 in 0 : vector<8x128xf32>, vector<8x128xf32>, vector<8x128xf32> -> vector<24x128xf32>
    %c0_55 = arith.constant 0 : index
    %c0_56 = arith.constant 0 : index
    %61 = vector.load %arg22[%c0_55, %c0_56] : memref<128x384xf32, #tpu.memory_space<vmem>>, vector<128x384xf32>
    %cst_57 = arith.constant dense<0.000000e+00> : vector<24x384xf32>
    %62 = tpu.matmul %60, %61, %cst_57 {dimension_numbers = #tpu.dot_dimension_numbers<[1], [0], [0], [1], [0, 0, 1, 1], [], []>} : vector<24x128xf32>, vector<128x384xf32>, vector<24x384xf32> -> vector<24x384xf32>
    %c0_58 = arith.constant 0 : index
    %c0_59 = arith.constant 0 : index
    %63 = vector.load %arg23[%c0_58, %c0_59] : memref<1x384xf32, #tpu.memory_space<vmem>>, vector<1x384xf32>
    %64 = vector.broadcast %63 : vector<1x384xf32> to vector<24x384xf32>
    %65 = arith.addf %62, %64 : vector<24x384xf32>
    %66 = vector.extract_strided_slice %65 {offsets = [0, 0], sizes = [24, 128], strides = [1, 1]} : vector<24x384xf32> to vector<24x128xf32>
    %67 = vector.extract_strided_slice %65 {offsets = [0, 128], sizes = [24, 128], strides = [1, 1]} : vector<24x384xf32> to vector<24x128xf32>
    %68 = vector.extract_strided_slice %65 {offsets = [0, 256], sizes = [24, 128], strides = [1, 1]} : vector<24x384xf32> to vector<24x128xf32>
    %c0_60 = arith.constant 0 : index
    %c0_61 = arith.constant 0 : index
    %69 = vector.load %arg32[%c0_60, %c0_61] : memref<128x8xf32, #tpu.memory_space<vmem>>, vector<128x8xf32>
    %c0_62 = arith.constant 0 : index
    %c0_63 = arith.constant 0 : index
    %70 = vector.load %arg33[%c0_62, %c0_63] : memref<8x128xf32, #tpu.memory_space<vmem>>, vector<8x128xf32>
    %71 = arith.mulf %66, %67 : vector<24x128xf32>
    %cst_64 = arith.constant dense<0.000000e+00> : vector<24x8xf32>
    %72 = tpu.matmul %71, %69, %cst_64 {dimension_numbers = #tpu.dot_dimension_numbers<[1], [0], [0], [1], [0, 0, 1, 1], [], []>} : vector<24x128xf32>, vector<128x8xf32>, vector<24x8xf32> -> vector<24x8xf32>
    %cst_65 = arith.constant 0.353553385 : f32
    %73 = vector.broadcast %cst_65 : f32 to vector<24x8xf32>
    %74 = arith.mulf %72, %73 : vector<24x8xf32>
    %c16_i32 = arith.constant 16 : i32
    %75 = tpu.dynamic_rotate %67 by %c16_i32 dim 0 : vector<24x128xf32>, i32 -> vector<24x128xf32>
    %76 = arith.mulf %66, %75 : vector<24x128xf32>
    %cst_66 = arith.constant dense<0.000000e+00> : vector<24x8xf32>
    %77 = tpu.matmul %76, %69, %cst_66 {dimension_numbers = #tpu.dot_dimension_numbers<[1], [0], [0], [1], [0, 0, 1, 1], [], []>} : vector<24x128xf32>, vector<128x8xf32>, vector<24x8xf32> -> vector<24x8xf32>
    %cst_67 = arith.constant 0.353553385 : f32
    %78 = vector.broadcast %cst_67 : f32 to vector<24x8xf32>
    %79 = arith.mulf %77, %78 : vector<24x8xf32>
    %c8_i32 = arith.constant 8 : i32
    %80 = tpu.dynamic_rotate %67 by %c8_i32 dim 0 : vector<24x128xf32>, i32 -> vector<24x128xf32>
    %81 = arith.mulf %66, %80 : vector<24x128xf32>
    %cst_68 = arith.constant dense<0.000000e+00> : vector<24x8xf32>
    %82 = tpu.matmul %81, %69, %cst_68 {dimension_numbers = #tpu.dot_dimension_numbers<[1], [0], [0], [1], [0, 0, 1, 1], [], []>} : vector<24x128xf32>, vector<128x8xf32>, vector<24x8xf32> -> vector<24x8xf32>
    %cst_69 = arith.constant 0.353553385 : f32
    %83 = vector.broadcast %cst_69 : f32 to vector<24x8xf32>
    %84 = arith.mulf %82, %83 : vector<24x8xf32>
    %85 = arith.maximumf %74, %79 : vector<24x8xf32>
    %86 = arith.maximumf %85, %84 : vector<24x8xf32>
    %87 = arith.subf %74, %86 : vector<24x8xf32>
    %88 = math.exp %87 : vector<24x8xf32>
    %89 = arith.subf %79, %86 : vector<24x8xf32>
    %90 = math.exp %89 : vector<24x8xf32>
    %91 = arith.subf %84, %86 : vector<24x8xf32>
    %92 = math.exp %91 : vector<24x8xf32>
    %93 = arith.addf %88, %90 : vector<24x8xf32>
    %94 = arith.addf %93, %92 : vector<24x8xf32>
    %cst_70 = arith.constant 1.000000e+00 : f32
    %95 = vector.broadcast %cst_70 : f32 to vector<24x8xf32>
    %96 = arith.divf %95, %94 : vector<24x8xf32>
    %cst_71 = arith.constant 0.000000e+00 : f32
    %97 = vector.broadcast %cst_71 : f32 to vector<24x128xf32>
    %98 = arith.mulf %88, %96 : vector<24x8xf32>
    %cst_72 = arith.constant dense<0.000000e+00> : vector<24x128xf32>
    %99 = tpu.matmul %98, %70, %cst_72 {dimension_numbers = #tpu.dot_dimension_numbers<[1], [0], [0], [1], [0, 0, 1, 1], [], []>} : vector<24x8xf32>, vector<8x128xf32>, vector<24x128xf32> -> vector<24x128xf32>
    %100 = arith.mulf %99, %68 : vector<24x128xf32>
    %101 = arith.addf %97, %100 : vector<24x128xf32>
    %102 = arith.mulf %90, %96 : vector<24x8xf32>
    %cst_73 = arith.constant dense<0.000000e+00> : vector<24x128xf32>
    %103 = tpu.matmul %102, %70, %cst_73 {dimension_numbers = #tpu.dot_dimension_numbers<[1], [0], [0], [1], [0, 0, 1, 1], [], []>} : vector<24x8xf32>, vector<8x128xf32>, vector<24x128xf32> -> vector<24x128xf32>
    %c16_i32_74 = arith.constant 16 : i32
    %104 = tpu.dynamic_rotate %68 by %c16_i32_74 dim 0 : vector<24x128xf32>, i32 -> vector<24x128xf32>
    %105 = arith.mulf %103, %104 : vector<24x128xf32>
    %106 = arith.addf %101, %105 : vector<24x128xf32>
    %107 = arith.mulf %92, %96 : vector<24x8xf32>
    %cst_75 = arith.constant dense<0.000000e+00> : vector<24x128xf32>
    %108 = tpu.matmul %107, %70, %cst_75 {dimension_numbers = #tpu.dot_dimension_numbers<[1], [0], [0], [1], [0, 0, 1, 1], [], []>} : vector<24x8xf32>, vector<8x128xf32>, vector<24x128xf32> -> vector<24x128xf32>
    %c8_i32_76 = arith.constant 8 : i32
    %109 = tpu.dynamic_rotate %68 by %c8_i32_76 dim 0 : vector<24x128xf32>, i32 -> vector<24x128xf32>
    %110 = arith.mulf %108, %109 : vector<24x128xf32>
    %111 = arith.addf %106, %110 : vector<24x128xf32>
    %112 = vector.extract_strided_slice %111 {offsets = [0, 0], sizes = [8, 128], strides = [1, 1]} : vector<24x128xf32> to vector<8x128xf32>
    %113 = vector.extract_strided_slice %111 {offsets = [8, 0], sizes = [8, 128], strides = [1, 1]} : vector<24x128xf32> to vector<8x128xf32>
    %114 = arith.addf %112, %113 : vector<8x128xf32>
    %115 = vector.extract_strided_slice %111 {offsets = [16, 0], sizes = [8, 128], strides = [1, 1]} : vector<24x128xf32> to vector<8x128xf32>
    %116 = arith.addf %114, %115 : vector<8x128xf32>
    %cst_77 = arith.constant 0.333333343 : f32
    %117 = vector.broadcast %cst_77 : f32 to vector<8x128xf32>
    %118 = arith.mulf %116, %117 : vector<8x128xf32>
    %c0_78 = arith.constant 0 : index
    %c0_79 = arith.constant 0 : index
    %119 = vector.load %arg24[%c0_78, %c0_79] : memref<128x128xf32, #tpu.memory_space<vmem>>, vector<128x128xf32>
    %cst_80 = arith.constant dense<0.000000e+00> : vector<8x128xf32>
    %120 = tpu.matmul %118, %119, %cst_80 {dimension_numbers = #tpu.dot_dimension_numbers<[1], [0], [0], [1], [0, 0, 1, 1], [], []>} : vector<8x128xf32>, vector<128x128xf32>, vector<8x128xf32> -> vector<8x128xf32>
    %c0_81 = arith.constant 0 : index
    %c0_82 = arith.constant 0 : index
    %121 = vector.load %arg25[%c0_81, %c0_82] : memref<1x128xf32, #tpu.memory_space<vmem>>, vector<1x128xf32>
    %122 = vector.broadcast %121 : vector<1x128xf32> to vector<8x128xf32>
    %123 = arith.addf %120, %122 : vector<8x128xf32>
    %c0_83 = arith.constant 0 : index
    %c0_84 = arith.constant 0 : index
    %124 = vector.load %arg26[%c0_83, %c0_84] : memref<128x128xf32, #tpu.memory_space<vmem>>, vector<128x128xf32>
    %cst_85 = arith.constant dense<0.000000e+00> : vector<8x128xf32>
    %125 = tpu.matmul %123, %124, %cst_85 {dimension_numbers = #tpu.dot_dimension_numbers<[1], [0], [0], [1], [0, 0, 1, 1], [], []>} : vector<8x128xf32>, vector<128x128xf32>, vector<8x128xf32> -> vector<8x128xf32>
    %c0_86 = arith.constant 0 : index
    %c0_87 = arith.constant 0 : index
    %126 = vector.load %arg27[%c0_86, %c0_87] : memref<1x128xf32, #tpu.memory_space<vmem>>, vector<1x128xf32>
    %127 = vector.broadcast %126 : vector<1x128xf32> to vector<8x128xf32>
    %128 = arith.addf %125, %127 : vector<8x128xf32>
    %cst_88 = arith.constant 0.000000e+00 : f32
    %129 = vector.broadcast %cst_88 : f32 to vector<8x128xf32>
    %130 = arith.maximumf %128, %129 : vector<8x128xf32>
    %c0_89 = arith.constant 0 : index
    %c0_90 = arith.constant 0 : index
    %131 = vector.load %arg28[%c0_89, %c0_90] : memref<128x128xf32, #tpu.memory_space<vmem>>, vector<128x128xf32>
    %cst_91 = arith.constant dense<0.000000e+00> : vector<8x128xf32>
    %132 = tpu.matmul %130, %131, %cst_91 {dimension_numbers = #tpu.dot_dimension_numbers<[1], [0], [0], [1], [0, 0, 1, 1], [], []>} : vector<8x128xf32>, vector<128x128xf32>, vector<8x128xf32> -> vector<8x128xf32>
    %c0_92 = arith.constant 0 : index
    %c0_93 = arith.constant 0 : index
    %133 = vector.load %arg29[%c0_92, %c0_93] : memref<1x128xf32, #tpu.memory_space<vmem>>, vector<1x128xf32>
    %134 = vector.broadcast %133 : vector<1x128xf32> to vector<8x128xf32>
    %135 = arith.addf %132, %134 : vector<8x128xf32>
    %cst_94 = arith.constant 0.000000e+00 : f32
    %136 = vector.broadcast %cst_94 : f32 to vector<8x128xf32>
    %137 = arith.maximumf %135, %136 : vector<8x128xf32>
    %c0_95 = arith.constant 0 : index
    %c0_96 = arith.constant 0 : index
    %138 = vector.load %arg30[%c0_95, %c0_96] : memref<128x128xf32, #tpu.memory_space<vmem>>, vector<128x128xf32>
    %cst_97 = arith.constant dense<0.000000e+00> : vector<8x128xf32>
    %139 = tpu.matmul %137, %138, %cst_97 {dimension_numbers = #tpu.dot_dimension_numbers<[1], [0], [0], [1], [0, 0, 1, 1], [], []>} : vector<8x128xf32>, vector<128x128xf32>, vector<8x128xf32> -> vector<8x128xf32>
    %c0_98 = arith.constant 0 : index
    %c0_99 = arith.constant 0 : index
    %140 = vector.load %arg31[%c0_98, %c0_99] : memref<1x128xf32, #tpu.memory_space<vmem>>, vector<1x128xf32>
    %141 = vector.broadcast %140 : vector<1x128xf32> to vector<8x128xf32>
    %142 = arith.addf %139, %141 : vector<8x128xf32>
    %c0_100 = arith.constant 0 : index
    %c0_101 = arith.constant 0 : index
    %143 = vector.load %arg34[%c0_100, %c0_101] : memref<8x640xf32, #tpu.memory_space<vmem>>, vector<8x128xf32>
    tpu.vector_store %arg34[%c0_100, %c0_101], %142 {strides = array<i32>} : memref<8x640xf32, #tpu.memory_space<vmem>>, vector<8x128xf32>,
    %c0_102 = arith.constant 0 : index
    %c128 = arith.constant 128 : index
    %144 = vector.load %arg34[%c0_102, %c128] : memref<8x640xf32, #tpu.memory_space<vmem>>, vector<8x128xf32>
    tpu.vector_store %arg34[%c0_102, %c128], %19 {strides = array<i32>} : memref<8x640xf32, #tpu.memory_space<vmem>>, vector<8x128xf32>,
    %c0_103 = arith.constant 0 : index
    %c256 = arith.constant 256 : index
    %145 = vector.load %arg34[%c0_103, %c256] : memref<8x640xf32, #tpu.memory_space<vmem>>, vector<8x128xf32>
    tpu.vector_store %arg34[%c0_103, %c256], %39 {strides = array<i32>} : memref<8x640xf32, #tpu.memory_space<vmem>>, vector<8x128xf32>,
    %c0_104 = arith.constant 0 : index
    %c384 = arith.constant 384 : index
    %146 = vector.load %arg34[%c0_104, %c384] : memref<8x640xf32, #tpu.memory_space<vmem>>, vector<8x128xf32>
    tpu.vector_store %arg34[%c0_104, %c384], %59 {strides = array<i32>} : memref<8x640xf32, #tpu.memory_space<vmem>>, vector<8x128xf32>,
    %c0_105 = arith.constant 0 : index
    %c512 = arith.constant 512 : index
    %147 = vector.load %arg34[%c0_105, %c512] : memref<8x640xf32, #tpu.memory_space<vmem>>, vector<8x128xf32>
    tpu.vector_store %arg34[%c0_105, %c512], %137 {strides = array<i32>} : memref<8x640xf32, #tpu.memory_space<vmem>>, vector<8x128xf32>,
    return
  }
  func.func @transform_0(%arg0: i32) -> (i32, i32) {
    %c0_i32 = arith.constant 0 : i32
    %c0_i32_0 = arith.constant 0 : i32
    return %arg0, %c0_i32 : i32, i32
  }
  func.func @transform_1(%arg0: i32) -> (i32, i32) {
    %c0_i32 = arith.constant 0 : i32
    %c0_i32_0 = arith.constant 0 : i32
    return %arg0, %c0_i32 : i32, i32
  }
  func.func @transform_2(%arg0: i32) -> (i32, i32) {
    %c0_i32 = arith.constant 0 : i32
    %c0_i32_0 = arith.constant 0 : i32
    return %arg0, %c0_i32 : i32, i32
  }
  func.func @transform_3(%arg0: i32) -> (i32, i32) {
    %c0_i32 = arith.constant 0 : i32
    %c0_i32_0 = arith.constant 0 : i32
    %c0_i32_1 = arith.constant 0 : i32
    return %c0_i32, %c0_i32_0 : i32, i32
  }
  func.func @transform_4(%arg0: i32) -> (i32, i32) {
    %c0_i32 = arith.constant 0 : i32
    %c0_i32_0 = arith.constant 0 : i32
    %c0_i32_1 = arith.constant 0 : i32
    return %c0_i32, %c0_i32_0 : i32, i32
  }
  func.func @transform_5(%arg0: i32) -> (i32, i32) {
    %c0_i32 = arith.constant 0 : i32
    %c0_i32_0 = arith.constant 0 : i32
    %c0_i32_1 = arith.constant 0 : i32
    return %c0_i32, %c0_i32_0 : i32, i32
  }
  func.func @transform_6(%arg0: i32) -> (i32, i32) {
    %c0_i32 = arith.constant 0 : i32
    %c0_i32_0 = arith.constant 0 : i32
    %c0_i32_1 = arith.constant 0 : i32
    return %c0_i32, %c0_i32_0 : i32, i32
  }
  func.func @transform_7(%arg0: i32) -> (i32, i32) {
    %c0_i32 = arith.constant 0 : i32
    %c0_i32_0 = arith.constant 0 : i32
    %c0_i32_1 = arith.constant 0 : i32
    return %c0_i32, %c0_i32_0 : i32, i32
  }
  func.func @transform_8(%arg0: i32) -> (i32, i32) {
    %c0_i32 = arith.constant 0 : i32
    %c0_i32_0 = arith.constant 0 : i32
    %c0_i32_1 = arith.constant 0 : i32
    return %c0_i32, %c0_i32_0 : i32, i32
  }
  func.func @transform_9(%arg0: i32) -> (i32, i32) {
    %c0_i32 = arith.constant 0 : i32
    %c0_i32_0 = arith.constant 0 : i32
    %c0_i32_1 = arith.constant 0 : i32
    return %c0_i32, %c0_i32_0 : i32, i32
  }
  func.func @transform_10(%arg0: i32) -> (i32, i32) {
    %c0_i32 = arith.constant 0 : i32
    %c0_i32_0 = arith.constant 0 : i32
    %c0_i32_1 = arith.constant 0 : i32
    return %c0_i32, %c0_i32_0 : i32, i32
  }
  func.func @transform_11(%arg0: i32) -> (i32, i32) {
    %c0_i32 = arith.constant 0 : i32
    %c0_i32_0 = arith.constant 0 : i32
    %c0_i32_1 = arith.constant 0 : i32
    return %c0_i32, %c0_i32_0 : i32, i32
  }
  func.func @transform_12(%arg0: i32) -> (i32, i32) {
    %c0_i32 = arith.constant 0 : i32
    %c0_i32_0 = arith.constant 0 : i32
    %c0_i32_1 = arith.constant 0 : i32
    return %c0_i32, %c0_i32_0 : i32, i32
  }
  func.func @transform_13(%arg0: i32) -> (i32, i32) {
    %c0_i32 = arith.constant 0 : i32
    %c0_i32_0 = arith.constant 0 : i32
    %c0_i32_1 = arith.constant 0 : i32
    return %c0_i32, %c0_i32_0 : i32, i32
  }
  func.func @transform_14(%arg0: i32) -> (i32, i32) {
    %c0_i32 = arith.constant 0 : i32
    %c0_i32_0 = arith.constant 0 : i32
    %c0_i32_1 = arith.constant 0 : i32
    return %c0_i32, %c0_i32_0 : i32, i32
  }
  func.func @transform_15(%arg0: i32) -> (i32, i32) {
    %c0_i32 = arith.constant 0 : i32
    %c0_i32_0 = arith.constant 0 : i32
    %c0_i32_1 = arith.constant 0 : i32
    return %c0_i32, %c0_i32_0 : i32, i32
  }
  func.func @transform_16(%arg0: i32) -> (i32, i32) {
    %c0_i32 = arith.constant 0 : i32
    %c0_i32_0 = arith.constant 0 : i32
    %c0_i32_1 = arith.constant 0 : i32
    return %c0_i32, %c0_i32_0 : i32, i32
  }
  func.func @transform_17(%arg0: i32) -> (i32, i32) {
    %c0_i32 = arith.constant 0 : i32
    %c0_i32_0 = arith.constant 0 : i32
    %c0_i32_1 = arith.constant 0 : i32
    return %c0_i32, %c0_i32_0 : i32, i32
  }
  func.func @transform_18(%arg0: i32) -> (i32, i32) {
    %c0_i32 = arith.constant 0 : i32
    %c0_i32_0 = arith.constant 0 : i32
    %c0_i32_1 = arith.constant 0 : i32
    return %c0_i32, %c0_i32_0 : i32, i32
  }
  func.func @transform_19(%arg0: i32) -> (i32, i32) {
    %c0_i32 = arith.constant 0 : i32
    %c0_i32_0 = arith.constant 0 : i32
    %c0_i32_1 = arith.constant 0 : i32
    return %c0_i32, %c0_i32_0 : i32, i32
  }
  func.func @transform_20(%arg0: i32) -> (i32, i32) {
    %c0_i32 = arith.constant 0 : i32
    %c0_i32_0 = arith.constant 0 : i32
    %c0_i32_1 = arith.constant 0 : i32
    return %c0_i32, %c0_i32_0 : i32, i32
  }
  func.func @transform_21(%arg0: i32) -> (i32, i32) {
    %c0_i32 = arith.constant 0 : i32
    %c0_i32_0 = arith.constant 0 : i32
    %c0_i32_1 = arith.constant 0 : i32
    return %c0_i32, %c0_i32_0 : i32, i32
  }
  func.func @transform_22(%arg0: i32) -> (i32, i32) {
    %c0_i32 = arith.constant 0 : i32
    %c0_i32_0 = arith.constant 0 : i32
    %c0_i32_1 = arith.constant 0 : i32
    return %c0_i32, %c0_i32_0 : i32, i32
  }
  func.func @transform_23(%arg0: i32) -> (i32, i32) {
    %c0_i32 = arith.constant 0 : i32
    %c0_i32_0 = arith.constant 0 : i32
    %c0_i32_1 = arith.constant 0 : i32
    return %c0_i32, %c0_i32_0 : i32, i32
  }
  func.func @transform_24(%arg0: i32) -> (i32, i32) {
    %c0_i32 = arith.constant 0 : i32
    %c0_i32_0 = arith.constant 0 : i32
    %c0_i32_1 = arith.constant 0 : i32
    return %c0_i32, %c0_i32_0 : i32, i32
  }
  func.func @transform_25(%arg0: i32) -> (i32, i32) {
    %c0_i32 = arith.constant 0 : i32
    %c0_i32_0 = arith.constant 0 : i32
    %c0_i32_1 = arith.constant 0 : i32
    return %c0_i32, %c0_i32_0 : i32, i32
  }
  func.func @transform_26(%arg0: i32) -> (i32, i32) {
    %c0_i32 = arith.constant 0 : i32
    %c0_i32_0 = arith.constant 0 : i32
    %c0_i32_1 = arith.constant 0 : i32
    return %c0_i32, %c0_i32_0 : i32, i32
  }
  func.func @transform_27(%arg0: i32) -> (i32, i32) {
    %c0_i32 = arith.constant 0 : i32
    %c0_i32_0 = arith.constant 0 : i32
    %c0_i32_1 = arith.constant 0 : i32
    return %c0_i32, %c0_i32_0 : i32, i32
  }
  func.func @transform_28(%arg0: i32) -> (i32, i32) {
    %c0_i32 = arith.constant 0 : i32
    %c0_i32_0 = arith.constant 0 : i32
    %c0_i32_1 = arith.constant 0 : i32
    return %c0_i32, %c0_i32_0 : i32, i32
  }
  func.func @transform_29(%arg0: i32) -> (i32, i32) {
    %c0_i32 = arith.constant 0 : i32
    %c0_i32_0 = arith.constant 0 : i32
    %c0_i32_1 = arith.constant 0 : i32
    return %c0_i32, %c0_i32_0 : i32, i32
  }
  func.func @transform_30(%arg0: i32) -> (i32, i32) {
    %c0_i32 = arith.constant 0 : i32
    %c0_i32_0 = arith.constant 0 : i32
    %c0_i32_1 = arith.constant 0 : i32
    return %c0_i32, %c0_i32_0 : i32, i32
  }
  func.func @transform_31(%arg0: i32) -> (i32, i32) {
    %c0_i32 = arith.constant 0 : i32
    %c0_i32_0 = arith.constant 0 : i32
    %c0_i32_1 = arith.constant 0 : i32
    return %c0_i32, %c0_i32_0 : i32, i32
  }
  func.func @transform_32(%arg0: i32) -> (i32, i32) {
    %c0_i32 = arith.constant 0 : i32
    %c0_i32_0 = arith.constant 0 : i32
    %c0_i32_1 = arith.constant 0 : i32
    return %c0_i32, %c0_i32_0 : i32, i32
  }
  func.func @transform_33(%arg0: i32) -> (i32, i32) {
    %c0_i32 = arith.constant 0 : i32
    %c0_i32_0 = arith.constant 0 : i32
    return %arg0, %c0_i32 : i32, i32
  }
}

module attributes {stable_mosaic.version = 11 : i64} {
  func.func @crossmodal_kernel(%arg0: i32, %arg1: memref<8x128xf32, #tpu.memory_space<vmem>>, %arg2: memref<8x128xf32, #tpu.memory_space<vmem>>, %arg3: memref<8x128xf32, #tpu.memory_space<vmem>>, %arg4: memref<128x512xf32, #tpu.memory_space<vmem>>, %arg5: memref<1x512xf32, #tpu.memory_space<vmem>>, %arg6: memref<512x256xf32, #tpu.memory_space<vmem>>, %arg7: memref<1x256xf32, #tpu.memory_space<vmem>>, %arg8: memref<256x128xf32, #tpu.memory_space<vmem>>, %arg9: memref<1x128xf32, #tpu.memory_space<vmem>>, %arg10: memref<128x512xf32, #tpu.memory_space<vmem>>, %arg11: memref<1x512xf32, #tpu.memory_space<vmem>>, %arg12: memref<512x256xf32, #tpu.memory_space<vmem>>, %arg13: memref<1x256xf32, #tpu.memory_space<vmem>>, %arg14: memref<256x128xf32, #tpu.memory_space<vmem>>, %arg15: memref<1x128xf32, #tpu.memory_space<vmem>>, %arg16: memref<128x256xf32, #tpu.memory_space<vmem>>, %arg17: memref<1x256xf32, #tpu.memory_space<vmem>>, %arg18: memref<256x128xf32, #tpu.memory_space<vmem>>, %arg19: memref<1x128xf32, #tpu.memory_space<vmem>>, %arg20: memref<128x128xf32, #tpu.memory_space<vmem>>, %arg21: memref<1x128xf32, #tpu.memory_space<vmem>>, %arg22: memref<128x384xf32, #tpu.memory_space<vmem>>, %arg23: memref<1x384xf32, #tpu.memory_space<vmem>>, %arg24: memref<128x128xf32, #tpu.memory_space<vmem>>, %arg25: memref<1x128xf32, #tpu.memory_space<vmem>>, %arg26: memref<128x128xf32, #tpu.memory_space<vmem>>, %arg27: memref<1x128xf32, #tpu.memory_space<vmem>>, %arg28: memref<128x128xf32, #tpu.memory_space<vmem>>, %arg29: memref<1x128xf32, #tpu.memory_space<vmem>>, %arg30: memref<128x128xf32, #tpu.memory_space<vmem>>, %arg31: memref<1x128xf32, #tpu.memory_space<vmem>>, %arg32: memref<128x8xf32, #tpu.memory_space<vmem>>, %arg33: memref<8x128xf32, #tpu.memory_space<vmem>>, %arg34: memref<8x640xf32, #tpu.memory_space<vmem>>) attributes {dimension_semantics = [#tpu.dimension_semantics<parallel>], iteration_bounds = array<i64: 2>, scalar_prefetch = 0 : i64, scratch_operands = 0 : i64, tpu.core_type = #tpu.core_type<tc>, window_params = [{transform_indices = @transform_0, window_bounds = array<i64: 8, 128>}, {transform_indices = @transform_1, window_bounds = array<i64: 8, 128>}, {transform_indices = @transform_2, window_bounds = array<i64: 8, 128>}, {pipeline_mode = #tpu.pipeline_mode<synchronous>, transform_indices = @transform_3, window_bounds = array<i64: 128, 512>}, {pipeline_mode = #tpu.pipeline_mode<synchronous>, transform_indices = @transform_4, window_bounds = array<i64: 1, 512>}, {pipeline_mode = #tpu.pipeline_mode<synchronous>, transform_indices = @transform_5, window_bounds = array<i64: 512, 256>}, {pipeline_mode = #tpu.pipeline_mode<synchronous>, transform_indices = @transform_6, window_bounds = array<i64: 1, 256>}, {pipeline_mode = #tpu.pipeline_mode<synchronous>, transform_indices = @transform_7, window_bounds = array<i64: 256, 128>}, {pipeline_mode = #tpu.pipeline_mode<synchronous>, transform_indices = @transform_8, window_bounds = array<i64: 1, 128>}, {pipeline_mode = #tpu.pipeline_mode<synchronous>, transform_indices = @transform_9, window_bounds = array<i64: 128, 512>}, {pipeline_mode = #tpu.pipeline_mode<synchronous>, transform_indices = @transform_10, window_bounds = array<i64: 1, 512>}, {pipeline_mode = #tpu.pipeline_mode<synchronous>, transform_indices = @transform_11, window_bounds = array<i64: 512, 256>}, {pipeline_mode = #tpu.pipeline_mode<synchronous>, transform_indices = @transform_12, window_bounds = array<i64: 1, 256>}, {pipeline_mode = #tpu.pipeline_mode<synchronous>, transform_indices = @transform_13, window_bounds = array<i64: 256, 128>}, {pipeline_mode = #tpu.pipeline_mode<synchronous>, transform_indices = @transform_14, window_bounds = array<i64: 1, 128>}, {pipeline_mode = #tpu.pipeline_mode<synchronous>, transform_indices = @transform_15, window_bounds = array<i64: 128, 256>}, {pipeline_mode = #tpu.pipeline_mode<synchronous>, transform_indices = @transform_16, window_bounds = array<i64: 1, 256>}, {pipeline_mode = #tpu.pipeline_mode<synchronous>, transform_indices = @transform_17, window_bounds = array<i64: 256, 128>}, {pipeline_mode = #tpu.pipeline_mode<synchronous>, transform_indices = @transform_18, window_bounds = array<i64: 1, 128>}, {pipeline_mode = #tpu.pipeline_mode<synchronous>, transform_indices = @transform_19, window_bounds = array<i64: 128, 128>}, {pipeline_mode = #tpu.pipeline_mode<synchronous>, transform_indices = @transform_20, window_bounds = array<i64: 1, 128>}, {pipeline_mode = #tpu.pipeline_mode<synchronous>, transform_indices = @transform_21, window_bounds = array<i64: 128, 384>}, {pipeline_mode = #tpu.pipeline_mode<synchronous>, transform_indices = @transform_22, window_bounds = array<i64: 1, 384>}, {pipeline_mode = #tpu.pipeline_mode<synchronous>, transform_indices = @transform_23, window_bounds = array<i64: 128, 128>}, {pipeline_mode = #tpu.pipeline_mode<synchronous>, transform_indices = @transform_24, window_bounds = array<i64: 1, 128>}, {pipeline_mode = #tpu.pipeline_mode<synchronous>, transform_indices = @transform_25, window_bounds = array<i64: 128, 128>}, {pipeline_mode = #tpu.pipeline_mode<synchronous>, transform_indices = @transform_26, window_bounds = array<i64: 1, 128>}, {pipeline_mode = #tpu.pipeline_mode<synchronous>, transform_indices = @transform_27, window_bounds = array<i64: 128, 128>}, {pipeline_mode = #tpu.pipeline_mode<synchronous>, transform_indices = @transform_28, window_bounds = array<i64: 1, 128>}, {pipeline_mode = #tpu.pipeline_mode<synchronous>, transform_indices = @transform_29, window_bounds = array<i64: 128, 128>}, {pipeline_mode = #tpu.pipeline_mode<synchronous>, transform_indices = @transform_30, window_bounds = array<i64: 1, 128>}, {pipeline_mode = #tpu.pipeline_mode<synchronous>, transform_indices = @transform_31, window_bounds = array<i64: 128, 8>}, {pipeline_mode = #tpu.pipeline_mode<synchronous>, transform_indices = @transform_32, window_bounds = array<i64: 8, 128>}, {transform_indices = @transform_33, window_bounds = array<i64: 8, 640>}]} {
    %c0 = arith.constant 0 : index
    %c0_0 = arith.constant 0 : index
    %0 = vector.load %arg1[%c0, %c0_0] : memref<8x128xf32, #tpu.memory_space<vmem>>, vector<8x128xf32>
    %c0_1 = arith.constant 0 : index
    %c0_2 = arith.constant 0 : index
    %1 = vector.load %arg4[%c0_1, %c0_2] : memref<128x512xf32, #tpu.memory_space<vmem>>, vector<128x512xf32>
    %cst = arith.constant dense<0.000000e+00> : vector<8x512xf32>
    %2 = tpu.matmul %0, %1, %cst {dimension_numbers = #tpu.dot_dimension_numbers<[1], [0], [0], [1], [0, 0, 1, 1], [], []>} : vector<8x128xf32>, vector<128x512xf32>, vector<8x512xf32> -> vector<8x512xf32>
    %c0_3 = arith.constant 0 : index
    %c0_4 = arith.constant 0 : index
    %3 = vector.load %arg5[%c0_3, %c0_4] : memref<1x512xf32, #tpu.memory_space<vmem>>, vector<1x512xf32>
    %4 = vector.broadcast %3 : vector<1x512xf32> to vector<8x512xf32>
    %5 = arith.addf %2, %4 : vector<8x512xf32>
    %cst_5 = arith.constant 0.000000e+00 : f32
    %6 = vector.broadcast %cst_5 : f32 to vector<8x512xf32>
    %7 = arith.maximumf %5, %6 : vector<8x512xf32>
    %c0_6 = arith.constant 0 : index
    %c0_7 = arith.constant 0 : index
    %8 = vector.load %arg6[%c0_6, %c0_7] : memref<512x256xf32, #tpu.memory_space<vmem>>, vector<512x256xf32>
    %cst_8 = arith.constant dense<0.000000e+00> : vector<8x256xf32>
    %9 = tpu.matmul %7, %8, %cst_8 {dimension_numbers = #tpu.dot_dimension_numbers<[1], [0], [0], [1], [0, 0, 1, 1], [], []>} : vector<8x512xf32>, vector<512x256xf32>, vector<8x256xf32> -> vector<8x256xf32>
    %c0_9 = arith.constant 0 : index
    %c0_10 = arith.constant 0 : index
    %10 = vector.load %arg7[%c0_9, %c0_10] : memref<1x256xf32, #tpu.memory_space<vmem>>, vector<1x256xf32>
    %11 = vector.broadcast %10 : vector<1x256xf32> to vector<8x256xf32>
    %12 = arith.addf %9, %11 : vector<8x256xf32>
    %cst_11 = arith.constant 0.000000e+00 : f32
    %13 = vector.broadcast %cst_11 : f32 to vector<8x256xf32>
    %14 = arith.maximumf %12, %13 : vector<8x256xf32>
    %c0_12 = arith.constant 0 : index
    %c0_13 = arith.constant 0 : index
    %15 = vector.load %arg8[%c0_12, %c0_13] : memref<256x128xf32, #tpu.memory_space<vmem>>, vector<256x128xf32>
    %cst_14 = arith.constant dense<0.000000e+00> : vector<8x128xf32>
    %16 = tpu.matmul %14, %15, %cst_14 {dimension_numbers = #tpu.dot_dimension_numbers<[1], [0], [0], [1], [0, 0, 1, 1], [], []>} : vector<8x256xf32>, vector<256x128xf32>, vector<8x128xf32> -> vector<8x128xf32>
    %c0_15 = arith.constant 0 : index
    %c0_16 = arith.constant 0 : index
    %17 = vector.load %arg9[%c0_15, %c0_16] : memref<1x128xf32, #tpu.memory_space<vmem>>, vector<1x128xf32>
    %18 = vector.broadcast %17 : vector<1x128xf32> to vector<8x128xf32>
    %19 = arith.addf %16, %18 : vector<8x128xf32>
    %c0_17 = arith.constant 0 : index
    %c0_18 = arith.constant 0 : index
    %20 = vector.load %arg2[%c0_17, %c0_18] : memref<8x128xf32, #tpu.memory_space<vmem>>, vector<8x128xf32>
    %c0_19 = arith.constant 0 : index
    %c0_20 = arith.constant 0 : index
    %21 = vector.load %arg10[%c0_19, %c0_20] : memref<128x512xf32, #tpu.memory_space<vmem>>, vector<128x512xf32>
    %cst_21 = arith.constant dense<0.000000e+00> : vector<8x512xf32>
    %22 = tpu.matmul %20, %21, %cst_21 {dimension_numbers = #tpu.dot_dimension_numbers<[1], [0], [0], [1], [0, 0, 1, 1], [], []>} : vector<8x128xf32>, vector<128x512xf32>, vector<8x512xf32> -> vector<8x512xf32>
    %c0_22 = arith.constant 0 : index
    %c0_23 = arith.constant 0 : index
    %23 = vector.load %arg11[%c0_22, %c0_23] : memref<1x512xf32, #tpu.memory_space<vmem>>, vector<1x512xf32>
    %24 = vector.broadcast %23 : vector<1x512xf32> to vector<8x512xf32>
    %25 = arith.addf %22, %24 : vector<8x512xf32>
    %cst_24 = arith.constant 0.000000e+00 : f32
    %26 = vector.broadcast %cst_24 : f32 to vector<8x512xf32>
    %27 = arith.maximumf %25, %26 : vector<8x512xf32>
    %c0_25 = arith.constant 0 : index
    %c0_26 = arith.constant 0 : index
    %28 = vector.load %arg12[%c0_25, %c0_26] : memref<512x256xf32, #tpu.memory_space<vmem>>, vector<512x256xf32>
    %cst_27 = arith.constant dense<0.000000e+00> : vector<8x256xf32>
    %29 = tpu.matmul %27, %28, %cst_27 {dimension_numbers = #tpu.dot_dimension_numbers<[1], [0], [0], [1], [0, 0, 1, 1], [], []>} : vector<8x512xf32>, vector<512x256xf32>, vector<8x256xf32> -> vector<8x256xf32>
    %c0_28 = arith.constant 0 : index
    %c0_29 = arith.constant 0 : index
    %30 = vector.load %arg13[%c0_28, %c0_29] : memref<1x256xf32, #tpu.memory_space<vmem>>, vector<1x256xf32>
    %31 = vector.broadcast %30 : vector<1x256xf32> to vector<8x256xf32>
    %32 = arith.addf %29, %31 : vector<8x256xf32>
    %cst_30 = arith.constant 0.000000e+00 : f32
    %33 = vector.broadcast %cst_30 : f32 to vector<8x256xf32>
    %34 = arith.maximumf %32, %33 : vector<8x256xf32>
    %c0_31 = arith.constant 0 : index
    %c0_32 = arith.constant 0 : index
    %35 = vector.load %arg14[%c0_31, %c0_32] : memref<256x128xf32, #tpu.memory_space<vmem>>, vector<256x128xf32>
    %cst_33 = arith.constant dense<0.000000e+00> : vector<8x128xf32>
    %36 = tpu.matmul %34, %35, %cst_33 {dimension_numbers = #tpu.dot_dimension_numbers<[1], [0], [0], [1], [0, 0, 1, 1], [], []>} : vector<8x256xf32>, vector<256x128xf32>, vector<8x128xf32> -> vector<8x128xf32>
    %c0_34 = arith.constant 0 : index
    %c0_35 = arith.constant 0 : index
    %37 = vector.load %arg15[%c0_34, %c0_35] : memref<1x128xf32, #tpu.memory_space<vmem>>, vector<1x128xf32>
    %38 = vector.broadcast %37 : vector<1x128xf32> to vector<8x128xf32>
    %39 = arith.addf %36, %38 : vector<8x128xf32>
    %c0_36 = arith.constant 0 : index
    %c0_37 = arith.constant 0 : index
    %40 = vector.load %arg3[%c0_36, %c0_37] : memref<8x128xf32, #tpu.memory_space<vmem>>, vector<8x128xf32>
    %c0_38 = arith.constant 0 : index
    %c0_39 = arith.constant 0 : index
    %41 = vector.load %arg16[%c0_38, %c0_39] : memref<128x256xf32, #tpu.memory_space<vmem>>, vector<128x256xf32>
    %cst_40 = arith.constant dense<0.000000e+00> : vector<8x256xf32>
    %42 = tpu.matmul %40, %41, %cst_40 {dimension_numbers = #tpu.dot_dimension_numbers<[1], [0], [0], [1], [0, 0, 1, 1], [], []>} : vector<8x128xf32>, vector<128x256xf32>, vector<8x256xf32> -> vector<8x256xf32>
    %c0_41 = arith.constant 0 : index
    %c0_42 = arith.constant 0 : index
    %43 = vector.load %arg17[%c0_41, %c0_42] : memref<1x256xf32, #tpu.memory_space<vmem>>, vector<1x256xf32>
    %44 = vector.broadcast %43 : vector<1x256xf32> to vector<8x256xf32>
    %45 = arith.addf %42, %44 : vector<8x256xf32>
    %cst_43 = arith.constant 0.000000e+00 : f32
    %46 = vector.broadcast %cst_43 : f32 to vector<8x256xf32>
    %47 = arith.maximumf %45, %46 : vector<8x256xf32>
    %c0_44 = arith.constant 0 : index
    %c0_45 = arith.constant 0 : index
    %48 = vector.load %arg18[%c0_44, %c0_45] : memref<256x128xf32, #tpu.memory_space<vmem>>, vector<256x128xf32>
    %cst_46 = arith.constant dense<0.000000e+00> : vector<8x128xf32>
    %49 = tpu.matmul %47, %48, %cst_46 {dimension_numbers = #tpu.dot_dimension_numbers<[1], [0], [0], [1], [0, 0, 1, 1], [], []>} : vector<8x256xf32>, vector<256x128xf32>, vector<8x128xf32> -> vector<8x128xf32>
    %c0_47 = arith.constant 0 : index
    %c0_48 = arith.constant 0 : index
    %50 = vector.load %arg19[%c0_47, %c0_48] : memref<1x128xf32, #tpu.memory_space<vmem>>, vector<1x128xf32>
    %51 = vector.broadcast %50 : vector<1x128xf32> to vector<8x128xf32>
    %52 = arith.addf %49, %51 : vector<8x128xf32>
    %cst_49 = arith.constant 0.000000e+00 : f32
    %53 = vector.broadcast %cst_49 : f32 to vector<8x128xf32>
    %54 = arith.maximumf %52, %53 : vector<8x128xf32>
    %c0_50 = arith.constant 0 : index
    %c0_51 = arith.constant 0 : index
    %55 = vector.load %arg20[%c0_50, %c0_51] : memref<128x128xf32, #tpu.memory_space<vmem>>, vector<128x128xf32>
    %cst_52 = arith.constant dense<0.000000e+00> : vector<8x128xf32>
    %56 = tpu.matmul %54, %55, %cst_52 {dimension_numbers = #tpu.dot_dimension_numbers<[1], [0], [0], [1], [0, 0, 1, 1], [], []>} : vector<8x128xf32>, vector<128x128xf32>, vector<8x128xf32> -> vector<8x128xf32>
    %c0_53 = arith.constant 0 : index
    %c0_54 = arith.constant 0 : index
    %57 = vector.load %arg21[%c0_53, %c0_54] : memref<1x128xf32, #tpu.memory_space<vmem>>, vector<1x128xf32>
    %58 = vector.broadcast %57 : vector<1x128xf32> to vector<8x128xf32>
    %59 = arith.addf %56, %58 : vector<8x128xf32>
    %60 = tpu.concatenate %19, %39, %59 in 0 : vector<8x128xf32>, vector<8x128xf32>, vector<8x128xf32> -> vector<24x128xf32>
    %c0_55 = arith.constant 0 : index
    %c0_56 = arith.constant 0 : index
    %61 = vector.load %arg22[%c0_55, %c0_56] : memref<128x384xf32, #tpu.memory_space<vmem>>, vector<128x384xf32>
    %cst_57 = arith.constant dense<0.000000e+00> : vector<24x384xf32>
    %62 = tpu.matmul %60, %61, %cst_57 {dimension_numbers = #tpu.dot_dimension_numbers<[1], [0], [0], [1], [0, 0, 1, 1], [], []>} : vector<24x128xf32>, vector<128x384xf32>, vector<24x384xf32> -> vector<24x384xf32>
    %c0_58 = arith.constant 0 : index
    %c0_59 = arith.constant 0 : index
    %63 = vector.load %arg23[%c0_58, %c0_59] : memref<1x384xf32, #tpu.memory_space<vmem>>, vector<1x384xf32>
    %64 = vector.broadcast %63 : vector<1x384xf32> to vector<24x384xf32>
    %65 = arith.addf %62, %64 : vector<24x384xf32>
    %66 = vector.extract_strided_slice %65 {offsets = [0, 0], sizes = [24, 128], strides = [1, 1]} : vector<24x384xf32> to vector<24x128xf32>
    %67 = vector.extract_strided_slice %65 {offsets = [0, 128], sizes = [24, 128], strides = [1, 1]} : vector<24x384xf32> to vector<24x128xf32>
    %68 = vector.extract_strided_slice %65 {offsets = [0, 256], sizes = [24, 128], strides = [1, 1]} : vector<24x384xf32> to vector<24x128xf32>
    %c0_60 = arith.constant 0 : index
    %c0_61 = arith.constant 0 : index
    %69 = vector.load %arg32[%c0_60, %c0_61] : memref<128x8xf32, #tpu.memory_space<vmem>>, vector<128x8xf32>
    %c0_62 = arith.constant 0 : index
    %c0_63 = arith.constant 0 : index
    %70 = vector.load %arg33[%c0_62, %c0_63] : memref<8x128xf32, #tpu.memory_space<vmem>>, vector<8x128xf32>
    %71 = arith.mulf %66, %67 : vector<24x128xf32>
    %cst_64 = arith.constant dense<0.000000e+00> : vector<24x8xf32>
    %72 = tpu.matmul %71, %69, %cst_64 {dimension_numbers = #tpu.dot_dimension_numbers<[1], [0], [0], [1], [0, 0, 1, 1], [], []>} : vector<24x128xf32>, vector<128x8xf32>, vector<24x8xf32> -> vector<24x8xf32>
    %cst_65 = arith.constant 0.353553385 : f32
    %73 = vector.broadcast %cst_65 : f32 to vector<24x8xf32>
    %74 = arith.mulf %72, %73 : vector<24x8xf32>
    %c16_i32 = arith.constant 16 : i32
    %75 = tpu.dynamic_rotate %67 by %c16_i32 dim 0 : vector<24x128xf32>, i32 -> vector<24x128xf32>
    %76 = arith.mulf %66, %75 : vector<24x128xf32>
    %cst_66 = arith.constant dense<0.000000e+00> : vector<24x8xf32>
    %77 = tpu.matmul %76, %69, %cst_66 {dimension_numbers = #tpu.dot_dimension_numbers<[1], [0], [0], [1], [0, 0, 1, 1], [], []>} : vector<24x128xf32>, vector<128x8xf32>, vector<24x8xf32> -> vector<24x8xf32>
    %cst_67 = arith.constant 0.353553385 : f32
    %78 = vector.broadcast %cst_67 : f32 to vector<24x8xf32>
    %79 = arith.mulf %77, %78 : vector<24x8xf32>
    %c8_i32 = arith.constant 8 : i32
    %80 = tpu.dynamic_rotate %67 by %c8_i32 dim 0 : vector<24x128xf32>, i32 -> vector<24x128xf32>
    %81 = arith.mulf %66, %80 : vector<24x128xf32>
    %cst_68 = arith.constant dense<0.000000e+00> : vector<24x8xf32>
    %82 = tpu.matmul %81, %69, %cst_68 {dimension_numbers = #tpu.dot_dimension_numbers<[1], [0], [0], [1], [0, 0, 1, 1], [], []>} : vector<24x128xf32>, vector<128x8xf32>, vector<24x8xf32> -> vector<24x8xf32>
    %cst_69 = arith.constant 0.353553385 : f32
    %83 = vector.broadcast %cst_69 : f32 to vector<24x8xf32>
    %84 = arith.mulf %82, %83 : vector<24x8xf32>
    %85 = arith.maximumf %74, %79 : vector<24x8xf32>
    %86 = arith.maximumf %85, %84 : vector<24x8xf32>
    %87 = arith.subf %74, %86 : vector<24x8xf32>
    %88 = math.exp %87 : vector<24x8xf32>
    %89 = arith.subf %79, %86 : vector<24x8xf32>
    %90 = math.exp %89 : vector<24x8xf32>
    %91 = arith.subf %84, %86 : vector<24x8xf32>
    %92 = math.exp %91 : vector<24x8xf32>
    %93 = arith.addf %88, %90 : vector<24x8xf32>
    %94 = arith.addf %93, %92 : vector<24x8xf32>
    %cst_70 = arith.constant 1.000000e+00 : f32
    %95 = vector.broadcast %cst_70 : f32 to vector<24x8xf32>
    %96 = arith.divf %95, %94 : vector<24x8xf32>
    %cst_71 = arith.constant 0.000000e+00 : f32
    %97 = vector.broadcast %cst_71 : f32 to vector<24x128xf32>
    %98 = arith.mulf %88, %96 : vector<24x8xf32>
    %cst_72 = arith.constant dense<0.000000e+00> : vector<24x128xf32>
    %99 = tpu.matmul %98, %70, %cst_72 {dimension_numbers = #tpu.dot_dimension_numbers<[1], [0], [0], [1], [0, 0, 1, 1], [], []>} : vector<24x8xf32>, vector<8x128xf32>, vector<24x128xf32> -> vector<24x128xf32>
    %100 = arith.mulf %99, %68 : vector<24x128xf32>
    %101 = arith.addf %97, %100 : vector<24x128xf32>
    %102 = arith.mulf %90, %96 : vector<24x8xf32>
    %cst_73 = arith.constant dense<0.000000e+00> : vector<24x128xf32>
    %103 = tpu.matmul %102, %70, %cst_73 {dimension_numbers = #tpu.dot_dimension_numbers<[1], [0], [0], [1], [0, 0, 1, 1], [], []>} : vector<24x8xf32>, vector<8x128xf32>, vector<24x128xf32> -> vector<24x128xf32>
    %c16_i32_74 = arith.constant 16 : i32
    %104 = tpu.dynamic_rotate %68 by %c16_i32_74 dim 0 : vector<24x128xf32>, i32 -> vector<24x128xf32>
    %105 = arith.mulf %103, %104 : vector<24x128xf32>
    %106 = arith.addf %101, %105 : vector<24x128xf32>
    %107 = arith.mulf %92, %96 : vector<24x8xf32>
    %cst_75 = arith.constant dense<0.000000e+00> : vector<24x128xf32>
    %108 = tpu.matmul %107, %70, %cst_75 {dimension_numbers = #tpu.dot_dimension_numbers<[1], [0], [0], [1], [0, 0, 1, 1], [], []>} : vector<24x8xf32>, vector<8x128xf32>, vector<24x128xf32> -> vector<24x128xf32>
    %c8_i32_76 = arith.constant 8 : i32
    %109 = tpu.dynamic_rotate %68 by %c8_i32_76 dim 0 : vector<24x128xf32>, i32 -> vector<24x128xf32>
    %110 = arith.mulf %108, %109 : vector<24x128xf32>
    %111 = arith.addf %106, %110 : vector<24x128xf32>
    %112 = vector.extract_strided_slice %111 {offsets = [0, 0], sizes = [8, 128], strides = [1, 1]} : vector<24x128xf32> to vector<8x128xf32>
    %113 = vector.extract_strided_slice %111 {offsets = [8, 0], sizes = [8, 128], strides = [1, 1]} : vector<24x128xf32> to vector<8x128xf32>
    %114 = arith.addf %112, %113 : vector<8x128xf32>
    %115 = vector.extract_strided_slice %111 {offsets = [16, 0], sizes = [8, 128], strides = [1, 1]} : vector<24x128xf32> to vector<8x128xf32>
    %116 = arith.addf %114, %115 : vector<8x128xf32>
    %cst_77 = arith.constant 0.333333343 : f32
    %117 = vector.broadcast %cst_77 : f32 to vector<8x128xf32>
    %118 = arith.mulf %116, %117 : vector<8x128xf32>
    %c0_78 = arith.constant 0 : index
    %c0_79 = arith.constant 0 : index
    %119 = vector.load %arg24[%c0_78, %c0_79] : memref<128x128xf32, #tpu.memory_space<vmem>>, vector<128x128xf32>
    %cst_80 = arith.constant dense<0.000000e+00> : vector<8x128xf32>
    %120 = tpu.matmul %118, %119, %cst_80 {dimension_numbers = #tpu.dot_dimension_numbers<[1], [0], [0], [1], [0, 0, 1, 1], [], []>} : vector<8x128xf32>, vector<128x128xf32>, vector<8x128xf32> -> vector<8x128xf32>
    %c0_81 = arith.constant 0 : index
    %c0_82 = arith.constant 0 : index
    %121 = vector.load %arg25[%c0_81, %c0_82] : memref<1x128xf32, #tpu.memory_space<vmem>>, vector<1x128xf32>
    %122 = vector.broadcast %121 : vector<1x128xf32> to vector<8x128xf32>
    %123 = arith.addf %120, %122 : vector<8x128xf32>
    %c0_83 = arith.constant 0 : index
    %c0_84 = arith.constant 0 : index
    %124 = vector.load %arg26[%c0_83, %c0_84] : memref<128x128xf32, #tpu.memory_space<vmem>>, vector<128x128xf32>
    %cst_85 = arith.constant dense<0.000000e+00> : vector<8x128xf32>
    %125 = tpu.matmul %123, %124, %cst_85 {dimension_numbers = #tpu.dot_dimension_numbers<[1], [0], [0], [1], [0, 0, 1, 1], [], []>} : vector<8x128xf32>, vector<128x128xf32>, vector<8x128xf32> -> vector<8x128xf32>
    %c0_86 = arith.constant 0 : index
    %c0_87 = arith.constant 0 : index
    %126 = vector.load %arg27[%c0_86, %c0_87] : memref<1x128xf32, #tpu.memory_space<vmem>>, vector<1x128xf32>
    %127 = vector.broadcast %126 : vector<1x128xf32> to vector<8x128xf32>
    %128 = arith.addf %125, %127 : vector<8x128xf32>
    %cst_88 = arith.constant 0.000000e+00 : f32
    %129 = vector.broadcast %cst_88 : f32 to vector<8x128xf32>
    %130 = arith.maximumf %128, %129 : vector<8x128xf32>
    %c0_89 = arith.constant 0 : index
    %c0_90 = arith.constant 0 : index
    %131 = vector.load %arg28[%c0_89, %c0_90] : memref<128x128xf32, #tpu.memory_space<vmem>>, vector<128x128xf32>
    %cst_91 = arith.constant dense<0.000000e+00> : vector<8x128xf32>
    %132 = tpu.matmul %130, %131, %cst_91 {dimension_numbers = #tpu.dot_dimension_numbers<[1], [0], [0], [1], [0, 0, 1, 1], [], []>} : vector<8x128xf32>, vector<128x128xf32>, vector<8x128xf32> -> vector<8x128xf32>
    %c0_92 = arith.constant 0 : index
    %c0_93 = arith.constant 0 : index
    %133 = vector.load %arg29[%c0_92, %c0_93] : memref<1x128xf32, #tpu.memory_space<vmem>>, vector<1x128xf32>
    %134 = vector.broadcast %133 : vector<1x128xf32> to vector<8x128xf32>
    %135 = arith.addf %132, %134 : vector<8x128xf32>
    %cst_94 = arith.constant 0.000000e+00 : f32
    %136 = vector.broadcast %cst_94 : f32 to vector<8x128xf32>
    %137 = arith.maximumf %135, %136 : vector<8x128xf32>
    %c0_95 = arith.constant 0 : index
    %c0_96 = arith.constant 0 : index
    %138 = vector.load %arg30[%c0_95, %c0_96] : memref<128x128xf32, #tpu.memory_space<vmem>>, vector<128x128xf32>
    %cst_97 = arith.constant dense<0.000000e+00> : vector<8x128xf32>
    %139 = tpu.matmul %137, %138, %cst_97 {dimension_numbers = #tpu.dot_dimension_numbers<[1], [0], [0], [1], [0, 0, 1, 1], [], []>} : vector<8x128xf32>, vector<128x128xf32>, vector<8x128xf32> -> vector<8x128xf32>
    %c0_98 = arith.constant 0 : index
    %c0_99 = arith.constant 0 : index
    %140 = vector.load %arg31[%c0_98, %c0_99] : memref<1x128xf32, #tpu.memory_space<vmem>>, vector<1x128xf32>
    %141 = vector.broadcast %140 : vector<1x128xf32> to vector<8x128xf32>
    %142 = arith.addf %139, %141 : vector<8x128xf32>
    %c0_100 = arith.constant 0 : index
    %c0_101 = arith.constant 0 : index
    %143 = vector.load %arg34[%c0_100, %c0_101] : memref<8x640xf32, #tpu.memory_space<vmem>>, vector<8x128xf32>
    tpu.vector_store %arg34[%c0_100, %c0_101], %142 {strides = array<i32>} : memref<8x640xf32, #tpu.memory_space<vmem>>, vector<8x128xf32>,
    %c0_102 = arith.constant 0 : index
    %c128 = arith.constant 128 : index
    %144 = vector.load %arg34[%c0_102, %c128] : memref<8x640xf32, #tpu.memory_space<vmem>>, vector<8x128xf32>
    tpu.vector_store %arg34[%c0_102, %c128], %19 {strides = array<i32>} : memref<8x640xf32, #tpu.memory_space<vmem>>, vector<8x128xf32>,
    %c0_103 = arith.constant 0 : index
    %c256 = arith.constant 256 : index
    %145 = vector.load %arg34[%c0_103, %c256] : memref<8x640xf32, #tpu.memory_space<vmem>>, vector<8x128xf32>
    tpu.vector_store %arg34[%c0_103, %c256], %39 {strides = array<i32>} : memref<8x640xf32, #tpu.memory_space<vmem>>, vector<8x128xf32>,
    %c0_104 = arith.constant 0 : index
    %c384 = arith.constant 384 : index
    %146 = vector.load %arg34[%c0_104, %c384] : memref<8x640xf32, #tpu.memory_space<vmem>>, vector<8x128xf32>
    tpu.vector_store %arg34[%c0_104, %c384], %59 {strides = array<i32>} : memref<8x640xf32, #tpu.memory_space<vmem>>, vector<8x128xf32>,
    %c0_105 = arith.constant 0 : index
    %c512 = arith.constant 512 : index
    %147 = vector.load %arg34[%c0_105, %c512] : memref<8x640xf32, #tpu.memory_space<vmem>>, vector<8x128xf32>
    tpu.vector_store %arg34[%c0_105, %c512], %137 {strides = array<i32>} : memref<8x640xf32, #tpu.memory_space<vmem>>, vector<8x128xf32>,
    return
  }
  func.func @transform_0(%arg0: i32) -> (i32, i32) {
    %c0_i32 = arith.constant 0 : i32
    %c0_i32_0 = arith.constant 0 : i32
    return %arg0, %c0_i32 : i32, i32
  }
  func.func @transform_1(%arg0: i32) -> (i32, i32) {
    %c0_i32 = arith.constant 0 : i32
    %c0_i32_0 = arith.constant 0 : i32
    return %arg0, %c0_i32 : i32, i32
  }
  func.func @transform_2(%arg0: i32) -> (i32, i32) {
    %c0_i32 = arith.constant 0 : i32
    %c0_i32_0 = arith.constant 0 : i32
    return %arg0, %c0_i32 : i32, i32
  }
  func.func @transform_3(%arg0: i32) -> (i32, i32) {
    %c0_i32 = arith.constant 0 : i32
    %c0_i32_0 = arith.constant 0 : i32
    %c0_i32_1 = arith.constant 0 : i32
    return %c0_i32, %c0_i32_0 : i32, i32
  }
  func.func @transform_4(%arg0: i32) -> (i32, i32) {
    %c0_i32 = arith.constant 0 : i32
    %c0_i32_0 = arith.constant 0 : i32
    %c0_i32_1 = arith.constant 0 : i32
    return %c0_i32, %c0_i32_0 : i32, i32
  }
  func.func @transform_5(%arg0: i32) -> (i32, i32) {
    %c0_i32 = arith.constant 0 : i32
    %c0_i32_0 = arith.constant 0 : i32
    %c0_i32_1 = arith.constant 0 : i32
    return %c0_i32, %c0_i32_0 : i32, i32
  }
  func.func @transform_6(%arg0: i32) -> (i32, i32) {
    %c0_i32 = arith.constant 0 : i32
    %c0_i32_0 = arith.constant 0 : i32
    %c0_i32_1 = arith.constant 0 : i32
    return %c0_i32, %c0_i32_0 : i32, i32
  }
  func.func @transform_7(%arg0: i32) -> (i32, i32) {
    %c0_i32 = arith.constant 0 : i32
    %c0_i32_0 = arith.constant 0 : i32
    %c0_i32_1 = arith.constant 0 : i32
    return %c0_i32, %c0_i32_0 : i32, i32
  }
  func.func @transform_8(%arg0: i32) -> (i32, i32) {
    %c0_i32 = arith.constant 0 : i32
    %c0_i32_0 = arith.constant 0 : i32
    %c0_i32_1 = arith.constant 0 : i32
    return %c0_i32, %c0_i32_0 : i32, i32
  }
  func.func @transform_9(%arg0: i32) -> (i32, i32) {
    %c0_i32 = arith.constant 0 : i32
    %c0_i32_0 = arith.constant 0 : i32
    %c0_i32_1 = arith.constant 0 : i32
    return %c0_i32, %c0_i32_0 : i32, i32
  }
  func.func @transform_10(%arg0: i32) -> (i32, i32) {
    %c0_i32 = arith.constant 0 : i32
    %c0_i32_0 = arith.constant 0 : i32
    %c0_i32_1 = arith.constant 0 : i32
    return %c0_i32, %c0_i32_0 : i32, i32
  }
  func.func @transform_11(%arg0: i32) -> (i32, i32) {
    %c0_i32 = arith.constant 0 : i32
    %c0_i32_0 = arith.constant 0 : i32
    %c0_i32_1 = arith.constant 0 : i32
    return %c0_i32, %c0_i32_0 : i32, i32
  }
  func.func @transform_12(%arg0: i32) -> (i32, i32) {
    %c0_i32 = arith.constant 0 : i32
    %c0_i32_0 = arith.constant 0 : i32
    %c0_i32_1 = arith.constant 0 : i32
    return %c0_i32, %c0_i32_0 : i32, i32
  }
  func.func @transform_13(%arg0: i32) -> (i32, i32) {
    %c0_i32 = arith.constant 0 : i32
    %c0_i32_0 = arith.constant 0 : i32
    %c0_i32_1 = arith.constant 0 : i32
    return %c0_i32, %c0_i32_0 : i32, i32
  }
  func.func @transform_14(%arg0: i32) -> (i32, i32) {
    %c0_i32 = arith.constant 0 : i32
    %c0_i32_0 = arith.constant 0 : i32
    %c0_i32_1 = arith.constant 0 : i32
    return %c0_i32, %c0_i32_0 : i32, i32
  }
  func.func @transform_15(%arg0: i32) -> (i32, i32) {
    %c0_i32 = arith.constant 0 : i32
    %c0_i32_0 = arith.constant 0 : i32
    %c0_i32_1 = arith.constant 0 : i32
    return %c0_i32, %c0_i32_0 : i32, i32
  }
  func.func @transform_16(%arg0: i32) -> (i32, i32) {
    %c0_i32 = arith.constant 0 : i32
    %c0_i32_0 = arith.constant 0 : i32
    %c0_i32_1 = arith.constant 0 : i32
    return %c0_i32, %c0_i32_0 : i32, i32
  }
  func.func @transform_17(%arg0: i32) -> (i32, i32) {
    %c0_i32 = arith.constant 0 : i32
    %c0_i32_0 = arith.constant 0 : i32
    %c0_i32_1 = arith.constant 0 : i32
    return %c0_i32, %c0_i32_0 : i32, i32
  }
  func.func @transform_18(%arg0: i32) -> (i32, i32) {
    %c0_i32 = arith.constant 0 : i32
    %c0_i32_0 = arith.constant 0 : i32
    %c0_i32_1 = arith.constant 0 : i32
    return %c0_i32, %c0_i32_0 : i32, i32
  }
  func.func @transform_19(%arg0: i32) -> (i32, i32) {
    %c0_i32 = arith.constant 0 : i32
    %c0_i32_0 = arith.constant 0 : i32
    %c0_i32_1 = arith.constant 0 : i32
    return %c0_i32, %c0_i32_0 : i32, i32
  }
  func.func @transform_20(%arg0: i32) -> (i32, i32) {
    %c0_i32 = arith.constant 0 : i32
    %c0_i32_0 = arith.constant 0 : i32
    %c0_i32_1 = arith.constant 0 : i32
    return %c0_i32, %c0_i32_0 : i32, i32
  }
  func.func @transform_21(%arg0: i32) -> (i32, i32) {
    %c0_i32 = arith.constant 0 : i32
    %c0_i32_0 = arith.constant 0 : i32
    %c0_i32_1 = arith.constant 0 : i32
    return %c0_i32, %c0_i32_0 : i32, i32
  }
  func.func @transform_22(%arg0: i32) -> (i32, i32) {
    %c0_i32 = arith.constant 0 : i32
    %c0_i32_0 = arith.constant 0 : i32
    %c0_i32_1 = arith.constant 0 : i32
    return %c0_i32, %c0_i32_0 : i32, i32
  }
  func.func @transform_23(%arg0: i32) -> (i32, i32) {
    %c0_i32 = arith.constant 0 : i32
    %c0_i32_0 = arith.constant 0 : i32
    %c0_i32_1 = arith.constant 0 : i32
    return %c0_i32, %c0_i32_0 : i32, i32
  }
  func.func @transform_24(%arg0: i32) -> (i32, i32) {
    %c0_i32 = arith.constant 0 : i32
    %c0_i32_0 = arith.constant 0 : i32
    %c0_i32_1 = arith.constant 0 : i32
    return %c0_i32, %c0_i32_0 : i32, i32
  }
  func.func @transform_25(%arg0: i32) -> (i32, i32) {
    %c0_i32 = arith.constant 0 : i32
    %c0_i32_0 = arith.constant 0 : i32
    %c0_i32_1 = arith.constant 0 : i32
    return %c0_i32, %c0_i32_0 : i32, i32
  }
  func.func @transform_26(%arg0: i32) -> (i32, i32) {
    %c0_i32 = arith.constant 0 : i32
    %c0_i32_0 = arith.constant 0 : i32
    %c0_i32_1 = arith.constant 0 : i32
    return %c0_i32, %c0_i32_0 : i32, i32
  }
  func.func @transform_27(%arg0: i32) -> (i32, i32) {
    %c0_i32 = arith.constant 0 : i32
    %c0_i32_0 = arith.constant 0 : i32
    %c0_i32_1 = arith.constant 0 : i32
    return %c0_i32, %c0_i32_0 : i32, i32
  }
  func.func @transform_28(%arg0: i32) -> (i32, i32) {
    %c0_i32 = arith.constant 0 : i32
    %c0_i32_0 = arith.constant 0 : i32
    %c0_i32_1 = arith.constant 0 : i32
    return %c0_i32, %c0_i32_0 : i32, i32
  }
  func.func @transform_29(%arg0: i32) -> (i32, i32) {
    %c0_i32 = arith.constant 0 : i32
    %c0_i32_0 = arith.constant 0 : i32
    %c0_i32_1 = arith.constant 0 : i32
    return %c0_i32, %c0_i32_0 : i32, i32
  }
  func.func @transform_30(%arg0: i32) -> (i32, i32) {
    %c0_i32 = arith.constant 0 : i32
    %c0_i32_0 = arith.constant 0 : i32
    %c0_i32_1 = arith.constant 0 : i32
    return %c0_i32, %c0_i32_0 : i32, i32
  }
  func.func @transform_31(%arg0: i32) -> (i32, i32) {
    %c0_i32 = arith.constant 0 : i32
    %c0_i32_0 = arith.constant 0 : i32
    %c0_i32_1 = arith.constant 0 : i32
    return %c0_i32, %c0_i32_0 : i32, i32
  }
  func.func @transform_32(%arg0: i32) -> (i32, i32) {
    %c0_i32 = arith.constant 0 : i32
    %c0_i32_0 = arith.constant 0 : i32
    %c0_i32_1 = arith.constant 0 : i32
    return %c0_i32, %c0_i32_0 : i32, i32
  }
  func.func @transform_33(%arg0: i32) -> (i32, i32) {
    %c0_i32 = arith.constant 0 : i32
    %c0_i32_0 = arith.constant 0 : i32
    return %arg0, %c0_i32 : i32, i32
  }
}

</mosaic_0001>

<llo_original>
// kernel: tpu_custom_call.1
$region0: #{tpu_custom_call.1}
  #allocation0 [shape = 'u32[]', space=smem, size = 0x4, offset = 0x4, fixed_abs, tag = 'smem constant byte address 0x4 - core index']
  #allocation1 [shape = 'u32[144,128]{1,0:T(1,128)}', space=vmem, size = 0x12000, scoped, tag = 'internal scratch']
  %s0 = inlined_call_operand.smem [shape: u32[34], index: -1, kind: input, shape index: {}]
  %s1 = sld [smem:[%s0]]
  %s2 = scalar_lea.smem %s0, 1
  %s3 = sld [smem:[%s2]]
  %s4 = scalar_lea.smem %s0, 2
  %s5 = sld [smem:[%s4]]
  %s6 = scalar_lea.smem %s0, 3
  %s7 = sld [smem:[%s6]]
  %s8 = scalar_lea.smem %s0, 4
  %s9 = sld [smem:[%s8]]
  %s10 = scalar_lea.smem %s0, 5
  %s11 = sld [smem:[%s10]]
  %s12 = scalar_lea.smem %s0, 6
  %s13 = sld [smem:[%s12]]
  %s14 = scalar_lea.smem %s0, 7
  %s15 = sld [smem:[%s14]]
  %s16 = scalar_lea.smem %s0, 8
  %s17 = sld [smem:[%s16]]
  %s18 = scalar_lea.smem %s0, 9
  %s19 = sld [smem:[%s18]]
  %s20 = scalar_lea.smem %s0, 10
  %s21 = sld [smem:[%s20]]
  %s22 = scalar_lea.smem %s0, 11
  %s23 = sld [smem:[%s22]]
  %s24 = scalar_lea.smem %s0, 12
  %s25 = sld [smem:[%s24]]
  %s26 = scalar_lea.smem %s0, 13
  %s27 = sld [smem:[%s26]]
  %s28 = scalar_lea.smem %s0, 14
  %s29 = sld [smem:[%s28]]
  %s30 = scalar_lea.smem %s0, 15
  %s31 = sld [smem:[%s30]]
  %s32 = scalar_lea.smem %s0, 16
  %s33 = sld [smem:[%s32]]
  %s34 = scalar_lea.smem %s0, 17
  %s35 = sld [smem:[%s34]]
  %s36 = scalar_lea.smem %s0, 18
  %s37 = sld [smem:[%s36]]
  %s38 = scalar_lea.smem %s0, 19
  %s39 = sld [smem:[%s38]]
  %s40 = scalar_lea.smem %s0, 20
  %s41 = sld [smem:[%s40]]
  %s42 = scalar_lea.smem %s0, 21
  %s43 = sld [smem:[%s42]]
  %s44 = scalar_lea.smem %s0, 22
  %s45 = sld [smem:[%s44]]
  %s46 = scalar_lea.smem %s0, 23
  %s47 = sld [smem:[%s46]]
  %s48 = scalar_lea.smem %s0, 24
  %s49 = sld [smem:[%s48]]
  %s50 = scalar_lea.smem %s0, 25
  %s51 = sld [smem:[%s50]]
  %s52 = scalar_lea.smem %s0, 26
  %s53 = sld [smem:[%s52]]
  %s54 = scalar_lea.smem %s0, 27
  %s55 = sld [smem:[%s54]]
  %s56 = scalar_lea.smem %s0, 28
  %s57 = sld [smem:[%s56]]
  %s58 = scalar_lea.smem %s0, 29
  %s59 = sld [smem:[%s58]]
  %s60 = scalar_lea.smem %s0, 30
  %s61 = sld [smem:[%s60]]
  %s62 = scalar_lea.smem %s0, 31
  %s63 = sld [smem:[%s62]]
  %s64 = scalar_lea.smem %s0, 32
  %s65 = sld [smem:[%s64]]
  %s66 = scalar_lea.smem %s0, 33
  %s67 = sld [smem:[%s66]]
  %s68 = sld [smem:[#allocation0]]
  $region225: #{tpu_custom_call.1} parent=0
    _
  %s70 = ssub.s32 1, %s68
  %s71 = scalar_select 0, %s70, %s68
  $region1: #{tpu_custom_call.1} parent=0
    #allocation2 [shape = 'u8[262144]{0}', space=vmem, size = 0x40000, scoped, tag = 'input window, operand 3, single buffered']
    #allocation3 [shape = 's32[2]{0}', space=sflag, size = 0x8, scoped, tag = 'scoped memory for tpu_custom_call.1']
    #allocation4 [shape = 's32[2]{0}', space=sflag, size = 0x8, scoped, tag = 'scoped memory for tpu_custom_call.1']
    #allocation5 [shape = 'u8[524288]{0}', space=vmem, size = 0x80000, scoped, tag = 'input window, operand 5, single buffered']
    #allocation6 [shape = 's32[1]{0}', space=sflag, size = 0x4, scoped, tag = 'scoped memory for tpu_custom_call.1']
    #allocation7 [shape = 'u8[131072]{0}', space=vmem, size = 0x20000, scoped, tag = 'input window, operand 7, single buffered']
    #allocation8 [shape = 'u8[262144]{0}', space=vmem, size = 0x40000, scoped, tag = 'input window, operand 9, single buffered']
    #allocation9 [shape = 's32[1]{0}', space=sflag, size = 0x4, scoped, tag = 'scoped memory for tpu_custom_call.1']
    #allocation10 [shape = 'u8[524288]{0}', space=vmem, size = 0x80000, scoped, tag = 'input window, operand 11, single buffered']
    #allocation11 [shape = 'u8[131072]{0}', space=vmem, size = 0x20000, scoped, tag = 'input window, operand 13, single buffered']
    #allocation12 [shape = 's32[1]{0}', space=sflag, size = 0x4, scoped, tag = 'scoped memory for tpu_custom_call.1']
    #allocation13 [shape = 'u8[131072]{0}', space=vmem, size = 0x20000, scoped, tag = 'input window, operand 15, single buffered']
    #allocation14 [shape = 'u8[131072]{0}', space=vmem, size = 0x20000, scoped, tag = 'input window, operand 17, single buffered']
    #allocation15 [shape = 's32[1]{0}', space=sflag, size = 0x4, scoped, tag = 'scoped memory for tpu_custom_call.1']
    #allocation16 [shape = 'u8[512]{0}', space=vmem, size = 0x400, scoped, tag = 'input window, operand 18, single buffered']
    #allocation17 [shape = 'u8[512]{0}', space=vmem, size = 0x400, scoped, tag = 'input window, operand 20, single buffered']
    #allocation18 [shape = 's32[1]{0}', space=sflag, size = 0x4, scoped, tag = 'scoped memory for tpu_custom_call.1']
    #allocation19 [shape = 'u8[196608]{0}', space=vmem, size = 0x30000, scoped, tag = 'input window, operand 21, single buffered']
    #allocation20 [shape = 'u8[65536]{0}', space=vmem, size = 0x10000, scoped, tag = 'input window, operand 23, single buffered']
    #allocation21 [shape = 's32[1]{0}', space=sflag, size = 0x4, scoped, tag = 'scoped memory for tpu_custom_call.1']
    #allocation22 [shape = 'u8[65536]{0}', space=vmem, size = 0x10000, scoped, tag = 'input window, operand 25, single buffered']
    #allocation23 [shape = 'u8[65536]{0}', space=vmem, size = 0x10000, scoped, tag = 'input window, operand 27, single buffered']
    #allocation24 [shape = 's32[1]{0}', space=sflag, size = 0x4, scoped, tag = 'scoped memory for tpu_custom_call.1']
    #allocation25 [shape = 'u8[65536]{0}', space=vmem, size = 0x10000, scoped, tag = 'input window, operand 29, single buffered']
    #allocation26 [shape = 'u8[40960]{0}', space=vmem, size = 0xa000, scoped, tag = 'output window, operand 0']
    %72 = vsyncpa [#allocation3], 0
    %73 = vsyncpa [#allocation6], 0
    %74 = vsyncpa [#allocation9], 0
    %75 = vsyncpa [#allocation12], 0
    %76 = vsyncpa [#allocation15], 0
    %77 = vsyncpa [#allocation18], 0
    %78 = vsyncpa [#allocation21], 0
    %79 = vsyncpa [#allocation24], 0
    %80 = vsyncpa [#allocation4], 0
    %s81 = scalar_lea.sflag [#allocation4], 1
    %82 = vsyncpa %s81, 0
    loop: start=0, step=1, limit=4
    $region2: #{tpu_custom_call.1} parent=1 // loop_pre_header
      _
    $region3: #{tpu_custom_call.1} parent=1 // loop_header
      %s84 = sphi 0, %s88
      %p85 = scmp.ge.s32.totalorder %s84, 4
      %s94 = sphi 0, %s96
      %s97 = sphi 0, %s94
      %s98 = sphi 0, %s97
      %s114 = sphi 0, %s98
      %s120 = sphi 0, %s122
      %s123 = sphi 0, %s120
      %s124 = sphi 0, %s123
      %s140 = sphi 0, %s124
      %s146 = sphi 0, %s148
      %s149 = sphi 0, %s146
      %s150 = sphi 0, %s149
      %s166 = sphi 0, %s150
      %s170 = sphi 0, %s170
      %s172 = sphi 0, %s170
      %s173 = sphi 0, %s172
      %s187 = sphi 0, %s173
      %s191 = sphi 0, %s191
      %s193 = sphi 0, %s191
      %s194 = sphi 0, %s193
      %s208 = sphi 0, %s194
      %s212 = sphi 0, %s212
      %s214 = sphi 0, %s212
      %s215 = sphi 0, %s214
      %s229 = sphi 0, %s215
      %s233 = sphi 0, %s233
      %s235 = sphi 0, %s233
      %s236 = sphi 0, %s235
      %s250 = sphi 0, %s236
      %s254 = sphi 0, %s254
      %s256 = sphi 0, %s254
      %s257 = sphi 0, %s256
      %s271 = sphi 0, %s257
      %s275 = sphi 0, %s275
      %s277 = sphi 0, %s275
      %s278 = sphi 0, %s277
      %s292 = sphi 0, %s278
      %s296 = sphi 0, %s296
      %s298 = sphi 0, %s296
      %s299 = sphi 0, %s298
      %s313 = sphi 0, %s299
      %s317 = sphi 0, %s317
      %s319 = sphi 0, %s317
      %s320 = sphi 0, %s319
      %s334 = sphi 0, %s320
      %s338 = sphi 0, %s338
      %s340 = sphi 0, %s338
      %s341 = sphi 0, %s340
      %s355 = sphi 0, %s341
      %s359 = sphi 0, %s359
      %s361 = sphi 0, %s359
      %s362 = sphi 0, %s361
      %s376 = sphi 0, %s362
      %s380 = sphi 0, %s380
      %s382 = sphi 0, %s380
      %s383 = sphi 0, %s382
      %s397 = sphi 0, %s383
      %s401 = sphi 0, %s401
      %s403 = sphi 0, %s401
      %s404 = sphi 0, %s403
      %s418 = sphi 0, %s404
      %s422 = sphi 0, %s422
      %s424 = sphi 0, %s422
      %s425 = sphi 0, %s424
      %s439 = sphi 0, %s425
      %s443 = sphi 0, %s443
      %s445 = sphi 0, %s443
      %s446 = sphi 0, %s445
      %s460 = sphi 0, %s446
      %s464 = sphi 0, %s464
      %s466 = sphi 0, %s464
      %s467 = sphi 0, %s466
      %s481 = sphi 0, %s467
      %s485 = sphi 0, %s485
      %s487 = sphi 0, %s485
      %s488 = sphi 0, %s487
      %s502 = sphi 0, %s488
      %s506 = sphi 0, %s506
      %s508 = sphi 0, %s506
      %s509 = sphi 0, %s508
      %s523 = sphi 0, %s509
      %s527 = sphi 0, %s527
      %s529 = sphi 0, %s527
      %s530 = sphi 0, %s529
      %s544 = sphi 0, %s530
      %s548 = sphi 0, %s548
      %s550 = sphi 0, %s548
      %s551 = sphi 0, %s550
      %s565 = sphi 0, %s551
      %s569 = sphi 0, %s569
      %s571 = sphi 0, %s569
      %s572 = sphi 0, %s571
      %s586 = sphi 0, %s572
      %s590 = sphi 0, %s590
      %s592 = sphi 0, %s590
      %s593 = sphi 0, %s592
      %s607 = sphi 0, %s593
      %s611 = sphi 0, %s611
      %s613 = sphi 0, %s611
      %s614 = sphi 0, %s613
      %s628 = sphi 0, %s614
      %s632 = sphi 0, %s632
      %s634 = sphi 0, %s632
      %s635 = sphi 0, %s634
      %s649 = sphi 0, %s635
      %s653 = sphi 0, %s653
      %s655 = sphi 0, %s653
      %s656 = sphi 0, %s655
      %s670 = sphi 0, %s656
      %s674 = sphi 0, %s674
      %s676 = sphi 0, %s674
      %s677 = sphi 0, %s676
      %s691 = sphi 0, %s677
      %s695 = sphi 0, %s695
      %s697 = sphi 0, %s695
      %s698 = sphi 0, %s697
      %s712 = sphi 0, %s698
      %s716 = sphi 0, %s716
      %s718 = sphi 0, %s716
      %s719 = sphi 0, %s718
      %s733 = sphi 0, %s719
      %s737 = sphi 0, %s737
      %s739 = sphi 0, %s737
      %s740 = sphi 0, %s739
      %s754 = sphi 0, %s740
      %s758 = sphi 0, %s758
      %s760 = sphi 0, %s758
      %s761 = sphi 0, %s760
      %s775 = sphi 0, %s761
      %s779 = sphi 0, %s779
      %s781 = sphi 0, %s779
      %s782 = sphi 0, %s781
      %s796 = sphi 0, %s782
      %s802 = sphi 0, %s804
      %s805 = sphi 0, %s802
      %s806 = sphi 0, %s805
      %s822 = sphi 0, %s806
    $region4: #{tpu_custom_call.1} parent=1 // loop_header_branch
      %87 = sbr.rel (%p85) target = $region8
    $region5: #{tpu_custom_call.1} parent=1 // loop_body
      %s89 = ssub.s32 %s84, 1
      %s90 = ssub.s32 %s84, 2
      %s91 = sadd.s32 %s84, 1
      %s92 = ssub.s32 %s84, %s91
      %p93 = scmp.eq.s32.totalorder %s92, 0
      %s95 = sadd.s32 %s94, 1
      %s96 = scalar_select %p93, %s94, %s95
      %p99 = pneg %p93
      %p100 = scmp.eq.s32.totalorder %s84, 1
      %p101 = por %p99, %p100
      %p102 = scmp.ne.s32.totalorder %s94, %s97
      %p103 = scmp.eq.s32.totalorder %s84, 0
      %p104 = por %p102, %p103
      %p105 = scmp.ne.s32.totalorder %s94, %s97
      %p106 = scmp.eq.s32.totalorder %s89, 1
      %p107 = por %p105, %p106
      %p108 = scmp.ne.s32.totalorder %s97, %s98
      %p109 = scmp.eq.s32.totalorder %s89, 0
      %p110 = por %p108, %p109
      %p111 = scmp.ne.s32.totalorder %s97, %s98
      %p112 = scmp.eq.s32.totalorder %s90, 1
      %p113 = por %p111, %p112
      %p115 = scmp.ne.s32.totalorder %s98, %s114
      %p116 = scmp.eq.s32.totalorder %s90, 0
      %p117 = por %p115, %p116
      %s118 = ssub.s32 %s84, %s91
      %p119 = scmp.eq.s32.totalorder %s118, 0
      %s121 = sadd.s32 %s120, 1
      %s122 = scalar_select %p119, %s120, %s121
      %p125 = pneg %p119
      %p126 = scmp.eq.s32.totalorder %s84, 1
      %p127 = por %p125, %p126
      %p128 = scmp.ne.s32.totalorder %s120, %s123
      %p129 = scmp.eq.s32.totalorder %s84, 0
      %p130 = por %p128, %p129
      %p131 = scmp.ne.s32.totalorder %s120, %s123
      %p132 = scmp.eq.s32.totalorder %s89, 1
      %p133 = por %p131, %p132
      %p134 = scmp.ne.s32.totalorder %s123, %s124
      %p135 = scmp.eq.s32.totalorder %s89, 0
      %p136 = por %p134, %p135
      %p137 = scmp.ne.s32.totalorder %s123, %s124
      %p138 = scmp.eq.s32.totalorder %s90, 1
      %p139 = por %p137, %p138
      %p141 = scmp.ne.s32.totalorder %s124, %s140
      %p142 = scmp.eq.s32.totalorder %s90, 0
      %p143 = por %p141, %p142
      %s144 = ssub.s32 %s84, %s91
      %p145 = scmp.eq.s32.totalorder %s144, 0
      %s147 = sadd.s32 %s146, 1
      %s148 = scalar_select %p145, %s146, %s147
      %p151 = pneg %p145
      %p152 = scmp.eq.s32.totalorder %s84, 1
      %p153 = por %p151, %p152
      %p154 = scmp.ne.s32.totalorder %s146, %s149
      %p155 = scmp.eq.s32.totalorder %s84, 0
      %p156 = por %p154, %p155
      %p157 = scmp.ne.s32.totalorder %s146, %s149
      %p158 = scmp.eq.s32.totalorder %s89, 1
      %p159 = por %p157, %p158
      %p160 = scmp.ne.s32.totalorder %s149, %s150
      %p161 = scmp.eq.s32.totalorder %s89, 0
      %p162 = por %p160, %p161
      %p163 = scmp.ne.s32.totalorder %s149, %s150
      %p164 = scmp.eq.s32.totalorder %s90, 1
      %p165 = por %p163, %p164
      %p167 = scmp.ne.s32.totalorder %s150, %s166
      %p168 = scmp.eq.s32.totalorder %s90, 0
      %p169 = por %p167, %p168
      %s171 = sadd.s32 %s170, 1
      %p174 = scmp.eq.s32.totalorder %s84, 1
      %p175 = scmp.ne.s32.totalorder %s170, %s172
      %p176 = scmp.eq.s32.totalorder %s84, 0
      %p177 = por %p175, %p176
      %p178 = scmp.ne.s32.totalorder %s170, %s172
      %p179 = scmp.eq.s32.totalorder %s89, 1
      %p180 = por %p178, %p179
      %p181 = scmp.ne.s32.totalorder %s172, %s173
      %p182 = scmp.eq.s32.totalorder %s89, 0
      %p183 = por %p181, %p182
      %p184 = scmp.ne.s32.totalorder %s172, %s173
      %p185 = scmp.eq.s32.totalorder %s90, 1
      %p186 = por %p184, %p185
      %p188 = scmp.ne.s32.totalorder %s173, %s187
      %p189 = scmp.eq.s32.totalorder %s90, 0
      %p190 = por %p188, %p189
      %s192 = sadd.s32 %s191, 1
      %p195 = scmp.eq.s32.totalorder %s84, 1
      %p196 = scmp.ne.s32.totalorder %s191, %s193
      %p197 = scmp.eq.s32.totalorder %s84, 0
      %p198 = por %p196, %p197
      %p199 = scmp.ne.s32.totalorder %s191, %s193
      %p200 = scmp.eq.s32.totalorder %s89, 1
      %p201 = por %p199, %p200
      %p202 = scmp.ne.s32.totalorder %s193, %s194
      %p203 = scmp.eq.s32.totalorder %s89, 0
      %p204 = por %p202, %p203
      %p205 = scmp.ne.s32.totalorder %s193, %s194
      %p206 = scmp.eq.s32.totalorder %s90, 1
      %p207 = por %p205, %p206
      %p209 = scmp.ne.s32.totalorder %s194, %s208
      %p210 = scmp.eq.s32.totalorder %s90, 0
      %p211 = por %p209, %p210
      %s213 = sadd.s32 %s212, 1
      %p216 = scmp.eq.s32.totalorder %s84, 1
      %p217 = scmp.ne.s32.totalorder %s212, %s214
      %p218 = scmp.eq.s32.totalorder %s84, 0
      %p219 = por %p217, %p218
      %p220 = scmp.ne.s32.totalorder %s212, %s214
      %p221 = scmp.eq.s32.totalorder %s89, 1
      %p222 = por %p220, %p221
      %p223 = scmp.ne.s32.totalorder %s214, %s215
      %p224 = scmp.eq.s32.totalorder %s89, 0
      %p225 = por %p223, %p224
      %p226 = scmp.ne.s32.totalorder %s214, %s215
      %p227 = scmp.eq.s32.totalorder %s90, 1
      %p228 = por %p226, %p227
      %p230 = scmp.ne.s32.totalorder %s215, %s229
      %p231 = scmp.eq.s32.totalorder %s90, 0
      %p232 = por %p230, %p231
      %s234 = sadd.s32 %s233, 1
      %p237 = scmp.eq.s32.totalorder %s84, 1
      %p238 = scmp.ne.s32.totalorder %s233, %s235
      %p239 = scmp.eq.s32.totalorder %s84, 0
      %p240 = por %p238, %p239
      %p241 = scmp.ne.s32.totalorder %s233, %s235
      %p242 = scmp.eq.s32.totalorder %s89, 1
      %p243 = por %p241, %p242
      %p244 = scmp.ne.s32.totalorder %s235, %s236
      %p245 = scmp.eq.s32.totalorder %s89, 0
      %p246 = por %p244, %p245
      %p247 = scmp.ne.s32.totalorder %s235, %s236
      %p248 = scmp.eq.s32.totalorder %s90, 1
      %p249 = por %p247, %p248
      %p251 = scmp.ne.s32.totalorder %s236, %s250
      %p252 = scmp.eq.s32.totalorder %s90, 0
      %p253 = por %p251, %p252
      %s255 = sadd.s32 %s254, 1
      %p258 = scmp.eq.s32.totalorder %s84, 1
      %p259 = scmp.ne.s32.totalorder %s254, %s256
      %p260 = scmp.eq.s32.totalorder %s84, 0
      %p261 = por %p259, %p260
      %p262 = scmp.ne.s32.totalorder %s254, %s256
      %p263 = scmp.eq.s32.totalorder %s89, 1
      %p264 = por %p262, %p263
      %p265 = scmp.ne.s32.totalorder %s256, %s257
      %p266 = scmp.eq.s32.totalorder %s89, 0
      %p267 = por %p265, %p266
      %p268 = scmp.ne.s32.totalorder %s256, %s257
      %p269 = scmp.eq.s32.totalorder %s90, 1
      %p270 = por %p268, %p269
      %p272 = scmp.ne.s32.totalorder %s257, %s271
      %p273 = scmp.eq.s32.totalorder %s90, 0
      %p274 = por %p272, %p273
      %s276 = sadd.s32 %s275, 1
      %p279 = scmp.eq.s32.totalorder %s84, 1
      %p280 = scmp.ne.s32.totalorder %s275, %s277
      %p281 = scmp.eq.s32.totalorder %s84, 0
      %p282 = por %p280, %p281
      %p283 = scmp.ne.s32.totalorder %s275, %s277
      %p284 = scmp.eq.s32.totalorder %s89, 1
      %p285 = por %p283, %p284
      %p286 = scmp.ne.s32.totalorder %s277, %s278
      %p287 = scmp.eq.s32.totalorder %s89, 0
      %p288 = por %p286, %p287
      %p289 = scmp.ne.s32.totalorder %s277, %s278
      %p290 = scmp.eq.s32.totalorder %s90, 1
      %p291 = por %p289, %p290
      %p293 = scmp.ne.s32.totalorder %s278, %s292
      %p294 = scmp.eq.s32.totalorder %s90, 0
      %p295 = por %p293, %p294
      %s297 = sadd.s32 %s296, 1
      %p300 = scmp.eq.s32.totalorder %s84, 1
      %p301 = scmp.ne.s32.totalorder %s296, %s298
      %p302 = scmp.eq.s32.totalorder %s84, 0
      %p303 = por %p301, %p302
      %p304 = scmp.ne.s32.totalorder %s296, %s298
      %p305 = scmp.eq.s32.totalorder %s89, 1
      %p306 = por %p304, %p305
      %p307 = scmp.ne.s32.totalorder %s298, %s299
      %p308 = scmp.eq.s32.totalorder %s89, 0
      %p309 = por %p307, %p308
      %p310 = scmp.ne.s32.totalorder %s298, %s299
      %p311 = scmp.eq.s32.totalorder %s90, 1
      %p312 = por %p310, %p311
      %p314 = scmp.ne.s32.totalorder %s299, %s313
      %p315 = scmp.eq.s32.totalorder %s90, 0
      %p316 = por %p314, %p315
      %s318 = sadd.s32 %s317, 1
      %p321 = scmp.eq.s32.totalorder %s84, 1
      %p322 = scmp.ne.s32.totalorder %s317, %s319
      %p323 = scmp.eq.s32.totalorder %s84, 0
      %p324 = por %p322, %p323
      %p325 = scmp.ne.s32.totalorder %s317, %s319
      %p326 = scmp.eq.s32.totalorder %s89, 1
      %p327 = por %p325, %p326
      %p328 = scmp.ne.s32.totalorder %s319, %s320
      %p329 = scmp.eq.s32.totalorder %s89, 0
      %p330 = por %p328, %p329
      %p331 = scmp.ne.s32.totalorder %s319, %s320
      %p332 = scmp.eq.s32.totalorder %s90, 1
      %p333 = por %p331, %p332
      %p335 = scmp.ne.s32.totalorder %s320, %s334
      %p336 = scmp.eq.s32.totalorder %s90, 0
      %p337 = por %p335, %p336
      %s339 = sadd.s32 %s338, 1
      %p342 = scmp.eq.s32.totalorder %s84, 1
      %p343 = scmp.ne.s32.totalorder %s338, %s340
      %p344 = scmp.eq.s32.totalorder %s84, 0
      %p345 = por %p343, %p344
      %p346 = scmp.ne.s32.totalorder %s338, %s340
      %p347 = scmp.eq.s32.totalorder %s89, 1
      %p348 = por %p346, %p347
      %p349 = scmp.ne.s32.totalorder %s340, %s341
      %p350 = scmp.eq.s32.totalorder %s89, 0
      %p351 = por %p349, %p350
      %p352 = scmp.ne.s32.totalorder %s340, %s341
      %p353 = scmp.eq.s32.totalorder %s90, 1
      %p354 = por %p352, %p353
      %p356 = scmp.ne.s32.totalorder %s341, %s355
      %p357 = scmp.eq.s32.totalorder %s90, 0
      %p358 = por %p356, %p357
      %s360 = sadd.s32 %s359, 1
      %p363 = scmp.eq.s32.totalorder %s84, 1
      %p364 = scmp.ne.s32.totalorder %s359, %s361
      %p365 = scmp.eq.s32.totalorder %s84, 0
      %p366 = por %p364, %p365
      %p367 = scmp.ne.s32.totalorder %s359, %s361
      %p368 = scmp.eq.s32.totalorder %s89, 1
      %p369 = por %p367, %p368
      %p370 = scmp.ne.s32.totalorder %s361, %s362
      %p371 = scmp.eq.s32.totalorder %s89, 0
      %p372 = por %p370, %p371
      %p373 = scmp.ne.s32.totalorder %s361, %s362
      %p374 = scmp.eq.s32.totalorder %s90, 1
      %p375 = por %p373, %p374
      %p377 = scmp.ne.s32.totalorder %s362, %s376
      %p378 = scmp.eq.s32.totalorder %s90, 0
      %p379 = por %p377, %p378
      %s381 = sadd.s32 %s380, 1
      %p384 = scmp.eq.s32.totalorder %s84, 1
      %p385 = scmp.ne.s32.totalorder %s380, %s382
      %p386 = scmp.eq.s32.totalorder %s84, 0
      %p387 = por %p385, %p386
      %p388 = scmp.ne.s32.totalorder %s380, %s382
      %p389 = scmp.eq.s32.totalorder %s89, 1
      %p390 = por %p388, %p389
      %p391 = scmp.ne.s32.totalorder %s382, %s383
      %p392 = scmp.eq.s32.totalorder %s89, 0
      %p393 = por %p391, %p392
      %p394 = scmp.ne.s32.totalorder %s382, %s383
      %p395 = scmp.eq.s32.totalorder %s90, 1
      %p396 = por %p394, %p395
      %p398 = scmp.ne.s32.totalorder %s383, %s397
      %p399 = scmp.eq.s32.totalorder %s90, 0
      %p400 = por %p398, %p399
      %s402 = sadd.s32 %s401, 1
      %p405 = scmp.eq.s32.totalorder %s84, 1
      %p406 = scmp.ne.s32.totalorder %s401, %s403
      %p407 = scmp.eq.s32.totalorder %s84, 0
      %p408 = por %p406, %p407
      %p409 = scmp.ne.s32.totalorder %s401, %s403
      %p410 = scmp.eq.s32.totalorder %s89, 1
      %p411 = por %p409, %p410
      %p412 = scmp.ne.s32.totalorder %s403, %s404
      %p413 = scmp.eq.s32.totalorder %s89, 0
      %p414 = por %p412, %p413
      %p415 = scmp.ne.s32.totalorder %s403, %s404
      %p416 = scmp.eq.s32.totalorder %s90, 1
      %p417 = por %p415, %p416
      %p419 = scmp.ne.s32.totalorder %s404, %s418
      %p420 = scmp.eq.s32.totalorder %s90, 0
      %p421 = por %p419, %p420
      %s423 = sadd.s32 %s422, 1
      %p426 = scmp.eq.s32.totalorder %s84, 1
      %p427 = scmp.ne.s32.totalorder %s422, %s424
      %p428 = scmp.eq.s32.totalorder %s84, 0
      %p429 = por %p427, %p428
      %p430 = scmp.ne.s32.totalorder %s422, %s424
      %p431 = scmp.eq.s32.totalorder %s89, 1
      %p432 = por %p430, %p431
      %p433 = scmp.ne.s32.totalorder %s424, %s425
      %p434 = scmp.eq.s32.totalorder %s89, 0
      %p435 = por %p433, %p434
      %p436 = scmp.ne.s32.totalorder %s424, %s425
      %p437 = scmp.eq.s32.totalorder %s90, 1
      %p438 = por %p436, %p437
      %p440 = scmp.ne.s32.totalorder %s425, %s439
      %p441 = scmp.eq.s32.totalorder %s90, 0
      %p442 = por %p440, %p441
      %s444 = sadd.s32 %s443, 1
      %p447 = scmp.eq.s32.totalorder %s84, 1
      %p448 = scmp.ne.s32.totalorder %s443, %s445
      %p449 = scmp.eq.s32.totalorder %s84, 0
      %p450 = por %p448, %p449
      %p451 = scmp.ne.s32.totalorder %s443, %s445
      %p452 = scmp.eq.s32.totalorder %s89, 1
      %p453 = por %p451, %p452
      %p454 = scmp.ne.s32.totalorder %s445, %s446
      %p455 = scmp.eq.s32.totalorder %s89, 0
      %p456 = por %p454, %p455
      %p457 = scmp.ne.s32.totalorder %s445, %s446
      %p458 = scmp.eq.s32.totalorder %s90, 1
      %p459 = por %p457, %p458
      %p461 = scmp.ne.s32.totalorder %s446, %s460
      %p462 = scmp.eq.s32.totalorder %s90, 0
      %p463 = por %p461, %p462
      %s465 = sadd.s32 %s464, 1
      %p468 = scmp.eq.s32.totalorder %s84, 1
      %p469 = scmp.ne.s32.totalorder %s464, %s466
      %p470 = scmp.eq.s32.totalorder %s84, 0
      %p471 = por %p469, %p470
      %p472 = scmp.ne.s32.totalorder %s464, %s466
      %p473 = scmp.eq.s32.totalorder %s89, 1
      %p474 = por %p472, %p473
      %p475 = scmp.ne.s32.totalorder %s466, %s467
      %p476 = scmp.eq.s32.totalorder %s89, 0
      %p477 = por %p475, %p476
      %p478 = scmp.ne.s32.totalorder %s466, %s467
      %p479 = scmp.eq.s32.totalorder %s90, 1
      %p480 = por %p478, %p479
      %p482 = scmp.ne.s32.totalorder %s467, %s481
      %p483 = scmp.eq.s32.totalorder %s90, 0
      %p484 = por %p482, %p483
      %s486 = sadd.s32 %s485, 1
      %p489 = scmp.eq.s32.totalorder %s84, 1
      %p490 = scmp.ne.s32.totalorder %s485, %s487
      %p491 = scmp.eq.s32.totalorder %s84, 0
      %p492 = por %p490, %p491
      %p493 = scmp.ne.s32.totalorder %s485, %s487
      %p494 = scmp.eq.s32.totalorder %s89, 1
      %p495 = por %p493, %p494
      %p496 = scmp.ne.s32.totalorder %s487, %s488
      %p497 = scmp.eq.s32.totalorder %s89, 0
      %p498 = por %p496, %p497
      %p499 = scmp.ne.s32.totalorder %s487, %s488
      %p500 = scmp.eq.s32.totalorder %s90, 1
      %p501 = por %p499, %p500
      %p503 = scmp.ne.s32.totalorder %s488, %s502
      %p504 = scmp.eq.s32.totalorder %s90, 0
      %p505 = por %p503, %p504
      %s507 = sadd.s32 %s506, 1
      %p510 = scmp.eq.s32.totalorder %s84, 1
      %p511 = scmp.ne.s32.totalorder %s506, %s508
      %p512 = scmp.eq.s32.totalorder %s84, 0
      %p513 = por %p511, %p512
      %p514 = scmp.ne.s32.totalorder %s506, %s508
      %p515 = scmp.eq.s32.totalorder %s89, 1
      %p516 = por %p514, %p515
      %p517 = scmp.ne.s32.totalorder %s508, %s509
      %p518 = scmp.eq.s32.totalorder %s89, 0
      %p519 = por %p517, %p518
      %p520 = scmp.ne.s32.totalorder %s508, %s509
      %p521 = scmp.eq.s32.totalorder %s90, 1
      %p522 = por %p520, %p521
      %p524 = scmp.ne.s32.totalorder %s509, %s523
      %p525 = scmp.eq.s32.totalorder %s90, 0
      %p526 = por %p524, %p525
      %s528 = sadd.s32 %s527, 1
      %p531 = scmp.eq.s32.totalorder %s84, 1
      %p532 = scmp.ne.s32.totalorder %s527, %s529
      %p533 = scmp.eq.s32.totalorder %s84, 0
      %p534 = por %p532, %p533
      %p535 = scmp.ne.s32.totalorder %s527, %s529
      %p536 = scmp.eq.s32.totalorder %s89, 1
      %p537 = por %p535, %p536
      %p538 = scmp.ne.s32.totalorder %s529, %s530
      %p539 = scmp.eq.s32.totalorder %s89, 0
      %p540 = por %p538, %p539
      %p541 = scmp.ne.s32.totalorder %s529, %s530
      %p542 = scmp.eq.s32.totalorder %s90, 1
      %p543 = por %p541, %p542
      %p545 = scmp.ne.s32.totalorder %s530, %s544
      %p546 = scmp.eq.s32.totalorder %s90, 0
      %p547 = por %p545, %p546
      %s549 = sadd.s32 %s548, 1
      %p552 = scmp.eq.s32.totalorder %s84, 1
      %p553 = scmp.ne.s32.totalorder %s548, %s550
      %p554 = scmp.eq.s32.totalorder %s84, 0
      %p555 = por %p553, %p554
      %p556 = scmp.ne.s32.totalorder %s548, %s550
      %p557 = scmp.eq.s32.totalorder %s89, 1
      %p558 = por %p556, %p557
      %p559 = scmp.ne.s32.totalorder %s550, %s551
      %p560 = scmp.eq.s32.totalorder %s89, 0
      %p561 = por %p559, %p560
      %p562 = scmp.ne.s32.totalorder %s550, %s551
      %p563 = scmp.eq.s32.totalorder %s90, 1
      %p564 = por %p562, %p563
      %p566 = scmp.ne.s32.totalorder %s551, %s565
      %p567 = scmp.eq.s32.totalorder %s90, 0
      %p568 = por %p566, %p567
      %s570 = sadd.s32 %s569, 1
      %p573 = scmp.eq.s32.totalorder %s84, 1
      %p574 = scmp.ne.s32.totalorder %s569, %s571
      %p575 = scmp.eq.s32.totalorder %s84, 0
      %p576 = por %p574, %p575
      %p577 = scmp.ne.s32.totalorder %s569, %s571
      %p578 = scmp.eq.s32.totalorder %s89, 1
      %p579 = por %p577, %p578
      %p580 = scmp.ne.s32.totalorder %s571, %s572
      %p581 = scmp.eq.s32.totalorder %s89, 0
      %p582 = por %p580, %p581
      %p583 = scmp.ne.s32.totalorder %s571, %s572
      %p584 = scmp.eq.s32.totalorder %s90, 1
      %p585 = por %p583, %p584
      %p587 = scmp.ne.s32.totalorder %s572, %s586
      %p588 = scmp.eq.s32.totalorder %s90, 0
      %p589 = por %p587, %p588
      %s591 = sadd.s32 %s590, 1
      %p594 = scmp.eq.s32.totalorder %s84, 1
      %p595 = scmp.ne.s32.totalorder %s590, %s592
      %p596 = scmp.eq.s32.totalorder %s84, 0
      %p597 = por %p595, %p596
      %p598 = scmp.ne.s32.totalorder %s590, %s592
      %p599 = scmp.eq.s32.totalorder %s89, 1
      %p600 = por %p598, %p599
      %p601 = scmp.ne.s32.totalorder %s592, %s593
      %p602 = scmp.eq.s32.totalorder %s89, 0
      %p603 = por %p601, %p602
      %p604 = scmp.ne.s32.totalorder %s592, %s593
      %p605 = scmp.eq.s32.totalorder %s90, 1
      %p606 = por %p604, %p605
      %p608 = scmp.ne.s32.totalorder %s593, %s607
      %p609 = scmp.eq.s32.totalorder %s90, 0
      %p610 = por %p608, %p609
      %s612 = sadd.s32 %s611, 1
      %p615 = scmp.eq.s32.totalorder %s84, 1
      %p616 = scmp.ne.s32.totalorder %s611, %s613
      %p617 = scmp.eq.s32.totalorder %s84, 0
      %p618 = por %p616, %p617
      %p619 = scmp.ne.s32.totalorder %s611, %s613
      %p620 = scmp.eq.s32.totalorder %s89, 1
      %p621 = por %p619, %p620
      %p622 = scmp.ne.s32.totalorder %s613, %s614
      %p623 = scmp.eq.s32.totalorder %s89, 0
      %p624 = por %p622, %p623
      %p625 = scmp.ne.s32.totalorder %s613, %s614
      %p626 = scmp.eq.s32.totalorder %s90, 1
      %p627 = por %p625, %p626
      %p629 = scmp.ne.s32.totalorder %s614, %s628
      %p630 = scmp.eq.s32.totalorder %s90, 0
      %p631 = por %p629, %p630
      %s633 = sadd.s32 %s632, 1
      %p636 = scmp.eq.s32.totalorder %s84, 1
      %p637 = scmp.ne.s32.totalorder %s632, %s634
      %p638 = scmp.eq.s32.totalorder %s84, 0
      %p639 = por %p637, %p638
      %p640 = scmp.ne.s32.totalorder %s632, %s634
      %p641 = scmp.eq.s32.totalorder %s89, 1
      %p642 = por %p640, %p641
      %p643 = scmp.ne.s32.totalorder %s634, %s635
      %p644 = scmp.eq.s32.totalorder %s89, 0
      %p645 = por %p643, %p644
      %p646 = scmp.ne.s32.totalorder %s634, %s635
      %p647 = scmp.eq.s32.totalorder %s90, 1
      %p648 = por %p646, %p647
      %p650 = scmp.ne.s32.totalorder %s635, %s649
      %p651 = scmp.eq.s32.totalorder %s90, 0
      %p652 = por %p650, %p651
      %s654 = sadd.s32 %s653, 1
      %p657 = scmp.eq.s32.totalorder %s84, 1
      %p658 = scmp.ne.s32.totalorder %s653, %s655
      %p659 = scmp.eq.s32.totalorder %s84, 0
      %p660 = por %p658, %p659
      %p661 = scmp.ne.s32.totalorder %s653, %s655
      %p662 = scmp.eq.s32.totalorder %s89, 1
      %p663 = por %p661, %p662
      %p664 = scmp.ne.s32.totalorder %s655, %s656
      %p665 = scmp.eq.s32.totalorder %s89, 0
      %p666 = por %p664, %p665
      %p667 = scmp.ne.s32.totalorder %s655, %s656
      %p668 = scmp.eq.s32.totalorder %s90, 1
      %p669 = por %p667, %p668
      %p671 = scmp.ne.s32.totalorder %s656, %s670
      %p672 = scmp.eq.s32.totalorder %s90, 0
      %p673 = por %p671, %p672
      %s675 = sadd.s32 %s674, 1
      %p678 = scmp.eq.s32.totalorder %s84, 1
      %p679 = scmp.ne.s32.totalorder %s674, %s676
      %p680 = scmp.eq.s32.totalorder %s84, 0
      %p681 = por %p679, %p680
      %p682 = scmp.ne.s32.totalorder %s674, %s676
      %p683 = scmp.eq.s32.totalorder %s89, 1
      %p684 = por %p682, %p683
      %p685 = scmp.ne.s32.totalorder %s676, %s677
      %p686 = scmp.eq.s32.totalorder %s89, 0
      %p687 = por %p685, %p686
      %p688 = scmp.ne.s32.totalorder %s676, %s677
      %p689 = scmp.eq.s32.totalorder %s90, 1
      %p690 = por %p688, %p689
      %p692 = scmp.ne.s32.totalorder %s677, %s691
      %p693 = scmp.eq.s32.totalorder %s90, 0
      %p694 = por %p692, %p693
      %s696 = sadd.s32 %s695, 1
      %p699 = scmp.eq.s32.totalorder %s84, 1
      %p700 = scmp.ne.s32.totalorder %s695, %s697
      %p701 = scmp.eq.s32.totalorder %s84, 0
      %p702 = por %p700, %p701
      %p703 = scmp.ne.s32.totalorder %s695, %s697
      %p704 = scmp.eq.s32.totalorder %s89, 1
      %p705 = por %p703, %p704
      %p706 = scmp.ne.s32.totalorder %s697, %s698
      %p707 = scmp.eq.s32.totalorder %s89, 0
      %p708 = por %p706, %p707
      %p709 = scmp.ne.s32.totalorder %s697, %s698
      %p710 = scmp.eq.s32.totalorder %s90, 1
      %p711 = por %p709, %p710
      %p713 = scmp.ne.s32.totalorder %s698, %s712
      %p714 = scmp.eq.s32.totalorder %s90, 0
      %p715 = por %p713, %p714
      %s717 = sadd.s32 %s716, 1
      %p720 = scmp.eq.s32.totalorder %s84, 1
      %p721 = scmp.ne.s32.totalorder %s716, %s718
      %p722 = scmp.eq.s32.totalorder %s84, 0
      %p723 = por %p721, %p722
      %p724 = scmp.ne.s32.totalorder %s716, %s718
      %p725 = scmp.eq.s32.totalorder %s89, 1
      %p726 = por %p724, %p725
      %p727 = scmp.ne.s32.totalorder %s718, %s719
      %p728 = scmp.eq.s32.totalorder %s89, 0
      %p729 = por %p727, %p728
      %p730 = scmp.ne.s32.totalorder %s718, %s719
      %p731 = scmp.eq.s32.totalorder %s90, 1
      %p732 = por %p730, %p731
      %p734 = scmp.ne.s32.totalorder %s719, %s733
      %p735 = scmp.eq.s32.totalorder %s90, 0
      %p736 = por %p734, %p735
      %s738 = sadd.s32 %s737, 1
      %p741 = scmp.eq.s32.totalorder %s84, 1
      %p742 = scmp.ne.s32.totalorder %s737, %s739
      %p743 = scmp.eq.s32.totalorder %s84, 0
      %p744 = por %p742, %p743
      %p745 = scmp.ne.s32.totalorder %s737, %s739
      %p746 = scmp.eq.s32.totalorder %s89, 1
      %p747 = por %p745, %p746
      %p748 = scmp.ne.s32.totalorder %s739, %s740
      %p749 = scmp.eq.s32.totalorder %s89, 0
      %p750 = por %p748, %p749
      %p751 = scmp.ne.s32.totalorder %s739, %s740
      %p752 = scmp.eq.s32.totalorder %s90, 1
      %p753 = por %p751, %p752
      %p755 = scmp.ne.s32.totalorder %s740, %s754
      %p756 = scmp.eq.s32.totalorder %s90, 0
      %p757 = por %p755, %p756
      %s759 = sadd.s32 %s758, 1
      %p762 = scmp.eq.s32.totalorder %s84, 1
      %p763 = scmp.ne.s32.totalorder %s758, %s760
      %p764 = scmp.eq.s32.totalorder %s84, 0
      %p765 = por %p763, %p764
      %p766 = scmp.ne.s32.totalorder %s758, %s760
      %p767 = scmp.eq.s32.totalorder %s89, 1
      %p768 = por %p766, %p767
      %p769 = scmp.ne.s32.totalorder %s760, %s761
      %p770 = scmp.eq.s32.totalorder %s89, 0
      %p771 = por %p769, %p770
      %p772 = scmp.ne.s32.totalorder %s760, %s761
      %p773 = scmp.eq.s32.totalorder %s90, 1
      %p774 = por %p772, %p773
      %p776 = scmp.ne.s32.totalorder %s761, %s775
      %p777 = scmp.eq.s32.totalorder %s90, 0
      %p778 = por %p776, %p777
      %s780 = sadd.s32 %s779, 1
      %p783 = scmp.eq.s32.totalorder %s84, 1
      %p784 = scmp.ne.s32.totalorder %s779, %s781
      %p785 = scmp.eq.s32.totalorder %s84, 0
      %p786 = por %p784, %p785
      %p787 = scmp.ne.s32.totalorder %s779, %s781
      %p788 = scmp.eq.s32.totalorder %s89, 1
      %p789 = por %p787, %p788
      %p790 = scmp.ne.s32.totalorder %s781, %s782
      %p791 = scmp.eq.s32.totalorder %s89, 0
      %p792 = por %p790, %p791
      %p793 = scmp.ne.s32.totalorder %s781, %s782
      %p794 = scmp.eq.s32.totalorder %s90, 1
      %p795 = por %p793, %p794
      %p797 = scmp.ne.s32.totalorder %s782, %s796
      %p798 = scmp.eq.s32.totalorder %s90, 0
      %p799 = por %p797, %p798
      %s800 = ssub.s32 %s84, %s91
      %p801 = scmp.eq.s32.totalorder %s800, 0
      %s803 = sadd.s32 %s802, 1
      %s804 = scalar_select %p801, %s802, %s803
      %p807 = pneg %p801
      %p808 = scmp.eq.s32.totalorder %s84, 1
      %p809 = por %p807, %p808
      %p810 = scmp.ne.s32.totalorder %s802, %s805
      %p811 = scmp.eq.s32.totalorder %s84, 0
      %p812 = por %p810, %p811
      %p813 = scmp.ne.s32.totalorder %s802, %s805
      %p814 = scmp.eq.s32.totalorder %s89, 1
      %p815 = por %p813, %p814
      %p816 = scmp.ne.s32.totalorder %s805, %s806
      %p817 = scmp.eq.s32.totalorder %s89, 0
      %p818 = por %p816, %p817
      %p819 = scmp.ne.s32.totalorder %s805, %s806
      %p820 = scmp.eq.s32.totalorder %s90, 1
      %p821 = por %p819, %p820
      %p823 = scmp.ne.s32.totalorder %s806, %s822
      %p824 = scmp.eq.s32.totalorder %s90, 0
      %p825 = por %p823, %p824
      %p826 = scmp.le.s32.totalorder 1, %s84
      %p827 = scmp.lt.s32.totalorder %s84, 3
      %p828 = pnand %p826, %p827
      %p829 = pneg %p828
      // Predicated region
      $region9: #{tpu_custom_call.1} parent=5 // pred_check
        _
      $region10: #{tpu_custom_call.1} parent=5 // pred_check_branch
        %831 = sbr.rel (%p828) target = $region12
      $region11: #{tpu_custom_call.1} parent=5 // pred_region
        %s832 = ssub.s32 %s84, 1
        // Predicated region
        $region13: #{tpu_custom_call.1} parent=11 // pred_check
          %p833 = pneg %p183
        $region14: #{tpu_custom_call.1} parent=11 // pred_check_branch
          %835 = sbr.rel (%p833) target = $region16
        $region15: #{tpu_custom_call.1} parent=11 // pred_region
          %s837 = ssub.s32 8192, 8192
          %838 = vsyncadd [#allocation3], %s837
          %s839 = sshll.u32 [#allocation2], 4
          %s840 = int_to_ptr.vmem [resolvable:$true] %s839
          %845 = dma.hbm_to_vmem [thread:$0]  %s7, 8192, %s840, [#allocation3], 512, 512, 32
        $region16: #{tpu_custom_call.1} parent=11 // pred_fallthru
          _
        // Predicated region
        $region17: #{tpu_custom_call.1} parent=11 // pred_check
          %p846 = pneg %p204
        $region18: #{tpu_custom_call.1} parent=11 // pred_check_branch
          %848 = sbr.rel (%p846) target = $region20
        $region19: #{tpu_custom_call.1} parent=11 // pred_region
          _
        $region20: #{tpu_custom_call.1} parent=11 // pred_fallthru
          _
        // Predicated region
        $region21: #{tpu_custom_call.1} parent=11 // pred_check
          %p849 = pneg %p225
        $region22: #{tpu_custom_call.1} parent=11 // pred_check_branch
          %851 = sbr.rel (%p849) target = $region24
        $region23: #{tpu_custom_call.1} parent=11 // pred_region
          %s853 = ssub.s32 16384, 16384
          %854 = vsyncadd [#allocation6], %s853
          %s855 = sshll.u32 [#allocation5], 4
          %s856 = int_to_ptr.vmem [resolvable:$true] %s855
          %861 = dma.hbm_to_vmem [thread:$0]  %s11, 16384, %s856, [#allocation6], 256, 256, 16
        $region24: #{tpu_custom_call.1} parent=11 // pred_fallthru
          _
        // Predicated region
        $region25: #{tpu_custom_call.1} parent=11 // pred_check
          %p862 = pneg %p246
        $region26: #{tpu_custom_call.1} parent=11 // pred_check_branch
          %864 = sbr.rel (%p862) target = $region28
        $region27: #{tpu_custom_call.1} parent=11 // pred_region
          _
        $region28: #{tpu_custom_call.1} parent=11 // pred_fallthru
          _
        // Predicated region
        $region29: #{tpu_custom_call.1} parent=11 // pred_check
          %p865 = pneg %p267
        $region30: #{tpu_custom_call.1} parent=11 // pred_check_branch
          %867 = sbr.rel (%p865) target = $region32
        $region31: #{tpu_custom_call.1} parent=11 // pred_region
          %s869 = ssub.s32 4096, 4096
          %870 = vsyncadd [#allocation6], %s869
          %s871 = sshll.u32 [#allocation7], 4
          %s872 = int_to_ptr.vmem [resolvable:$true] %s871
          %877 = dma.hbm_to_vmem [thread:$0]  %s15, 4096, %s872, [#allocation6], 128, 128, 8
        $region32: #{tpu_custom_call.1} parent=11 // pred_fallthru
          _
        // Predicated region
        $region33: #{tpu_custom_call.1} parent=11 // pred_check
          %p878 = pneg %p288
        $region34: #{tpu_custom_call.1} parent=11 // pred_check_branch
          %880 = sbr.rel (%p878) target = $region36
        $region35: #{tpu_custom_call.1} parent=11 // pred_region
          _
        $region36: #{tpu_custom_call.1} parent=11 // pred_fallthru
          _
        // Predicated region
        $region37: #{tpu_custom_call.1} parent=11 // pred_check
          %p881 = pneg %p309
        $region38: #{tpu_custom_call.1} parent=11 // pred_check_branch
          %883 = sbr.rel (%p881) target = $region40
        $region39: #{tpu_custom_call.1} parent=11 // pred_region
          %s885 = ssub.s32 8192, 8192
          %886 = vsyncadd [#allocation9], %s885
          %s887 = sshll.u32 [#allocation8], 4
          %s888 = int_to_ptr.vmem [resolvable:$true] %s887
          %893 = dma.hbm_to_vmem [thread:$0]  %s19, 8192, %s888, [#allocation9], 512, 512, 32
        $region40: #{tpu_custom_call.1} parent=11 // pred_fallthru
          _
        // Predicated region
        $region41: #{tpu_custom_call.1} parent=11 // pred_check
          %p894 = pneg %p330
        $region42: #{tpu_custom_call.1} parent=11 // pred_check_branch
          %896 = sbr.rel (%p894) target = $region44
        $region43: #{tpu_custom_call.1} parent=11 // pred_region
          _
        $region44: #{tpu_custom_call.1} parent=11 // pred_fallthru
          _
        // Predicated region
        $region45: #{tpu_custom_call.1} parent=11 // pred_check
          %p897 = pneg %p351
        $region46: #{tpu_custom_call.1} parent=11 // pred_check_branch
          %899 = sbr.rel (%p897) target = $region48
        $region47: #{tpu_custom_call.1} parent=11 // pred_region
          %s901 = ssub.s32 16384, 16384
          %902 = vsyncadd [#allocation9], %s901
          %s903 = sshll.u32 [#allocation10], 4
          %s904 = int_to_ptr.vmem [resolvable:$true] %s903
          %909 = dma.hbm_to_vmem [thread:$0]  %s23, 16384, %s904, [#allocation9], 256, 256, 16
        $region48: #{tpu_custom_call.1} parent=11 // pred_fallthru
          _
        // Predicated region
        $region49: #{tpu_custom_call.1} parent=11 // pred_check
          %p910 = pneg %p372
        $region50: #{tpu_custom_call.1} parent=11 // pred_check_branch
          %912 = sbr.rel (%p910) target = $region52
        $region51: #{tpu_custom_call.1} parent=11 // pred_region
          _
        $region52: #{tpu_custom_call.1} parent=11 // pred_fallthru
          _
        // Predicated region
        $region53: #{tpu_custom_call.1} parent=11 // pred_check
          %p913 = pneg %p393
        $region54: #{tpu_custom_call.1} parent=11 // pred_check_branch
          %915 = sbr.rel (%p913) target = $region56
        $region55: #{tpu_custom_call.1} parent=11 // pred_region
          %s917 = ssub.s32 4096, 4096
          %918 = vsyncadd [#allocation12], %s917
          %s919 = sshll.u32 [#allocation11], 4
          %s920 = int_to_ptr.vmem [resolvable:$true] %s919
          %925 = dma.hbm_to_vmem [thread:$0]  %s27, 4096, %s920, [#allocation12], 128, 128, 8
        $region56: #{tpu_custom_call.1} parent=11 // pred_fallthru
          _
        // Predicated region
        $region57: #{tpu_custom_call.1} parent=11 // pred_check
          %p926 = pneg %p414
        $region58: #{tpu_custom_call.1} parent=11 // pred_check_branch
          %928 = sbr.rel (%p926) target = $region60
        $region59: #{tpu_custom_call.1} parent=11 // pred_region
          _
        $region60: #{tpu_custom_call.1} parent=11 // pred_fallthru
          _
        // Predicated region
        $region61: #{tpu_custom_call.1} parent=11 // pred_check
          %p929 = pneg %p435
        $region62: #{tpu_custom_call.1} parent=11 // pred_check_branch
          %931 = sbr.rel (%p929) target = $region64
        $region63: #{tpu_custom_call.1} parent=11 // pred_region
          %s933 = ssub.s32 4096, 4096
          %934 = vsyncadd [#allocation12], %s933
          %s935 = sshll.u32 [#allocation13], 4
          %s936 = int_to_ptr.vmem [resolvable:$true] %s935
          %941 = dma.hbm_to_vmem [thread:$0]  %s31, 4096, %s936, [#allocation12], 256, 256, 16
        $region64: #{tpu_custom_call.1} parent=11 // pred_fallthru
          _
        // Predicated region
        $region65: #{tpu_custom_call.1} parent=11 // pred_check
          %p942 = pneg %p456
        $region66: #{tpu_custom_call.1} parent=11 // pred_check_branch
          %944 = sbr.rel (%p942) target = $region68
        $region67: #{tpu_custom_call.1} parent=11 // pred_region
          _
        $region68: #{tpu_custom_call.1} parent=11 // pred_fallthru
          _
        // Predicated region
        $region69: #{tpu_custom_call.1} parent=11 // pred_check
          %p945 = pneg %p477
        $region70: #{tpu_custom_call.1} parent=11 // pred_check_branch
          %947 = sbr.rel (%p945) target = $region72
        $region71: #{tpu_custom_call.1} parent=11 // pred_region
          %s949 = ssub.s32 4096, 4096
          %950 = vsyncadd [#allocation15], %s949
          %s951 = sshll.u32 [#allocation14], 4
          %s952 = int_to_ptr.vmem [resolvable:$true] %s951
          %957 = dma.hbm_to_vmem [thread:$0]  %s35, 4096, %s952, [#allocation15], 128, 128, 8
        $region72: #{tpu_custom_call.1} parent=11 // pred_fallthru
          _
        // Predicated region
        $region73: #{tpu_custom_call.1} parent=11 // pred_check
          %p958 = pneg %p498
        $region74: #{tpu_custom_call.1} parent=11 // pred_check_branch
          %960 = sbr.rel (%p958) target = $region76
        $region75: #{tpu_custom_call.1} parent=11 // pred_region
          %s962 = ssub.s32 16, 16
          %963 = vsyncadd [#allocation15], %s962
          %s965 = sshll.u32 [#allocation16], 4
          %s966 = int_to_ptr.vmem [resolvable:$true] %s965
          %968 = dma.hbm_to_vmem [thread:$0]  %s37, 16, %s966, [#allocation15]
        $region76: #{tpu_custom_call.1} parent=11 // pred_fallthru
          _
        // Predicated region
        $region77: #{tpu_custom_call.1} parent=11 // pred_check
          %p969 = pneg %p519
        $region78: #{tpu_custom_call.1} parent=11 // pred_check_branch
          %971 = sbr.rel (%p969) target = $region80
        $region79: #{tpu_custom_call.1} parent=11 // pred_region
          _
        $region80: #{tpu_custom_call.1} parent=11 // pred_fallthru
          _
        // Predicated region
        $region81: #{tpu_custom_call.1} parent=11 // pred_check
          %p972 = pneg %p540
        $region82: #{tpu_custom_call.1} parent=11 // pred_check_branch
          %974 = sbr.rel (%p972) target = $region84
        $region83: #{tpu_custom_call.1} parent=11 // pred_region
          %s976 = ssub.s32 16, 16
          %977 = vsyncadd [#allocation18], %s976
          %s979 = sshll.u32 [#allocation17], 4
          %s980 = int_to_ptr.vmem [resolvable:$true] %s979
          %982 = dma.hbm_to_vmem [thread:$0]  %s41, 16, %s980, [#allocation18]
        $region84: #{tpu_custom_call.1} parent=11 // pred_fallthru
          _
        // Predicated region
        $region85: #{tpu_custom_call.1} parent=11 // pred_check
          %p983 = pneg %p561
        $region86: #{tpu_custom_call.1} parent=11 // pred_check_branch
          %985 = sbr.rel (%p983) target = $region88
        $region87: #{tpu_custom_call.1} parent=11 // pred_region
          %s987 = ssub.s32 6144, 6144
          %988 = vsyncadd [#allocation18], %s987
          %s989 = sshll.u32 [#allocation19], 4
          %s990 = int_to_ptr.vmem [resolvable:$true] %s989
          %995 = dma.hbm_to_vmem [thread:$0]  %s43, 6144, %s990, [#allocation18], 384, 384, 24
        $region88: #{tpu_custom_call.1} parent=11 // pred_fallthru
          _
        // Predicated region
        $region89: #{tpu_custom_call.1} parent=11 // pred_check
          %p996 = pneg %p582
        $region90: #{tpu_custom_call.1} parent=11 // pred_check_branch
          %998 = sbr.rel (%p996) target = $region92
        $region91: #{tpu_custom_call.1} parent=11 // pred_region
          _
        $region92: #{tpu_custom_call.1} parent=11 // pred_fallthru
          _
        // Predicated region
        $region93: #{tpu_custom_call.1} parent=11 // pred_check
          %p999 = pneg %p603
        $region94: #{tpu_custom_call.1} parent=11 // pred_check_branch
          %1001 = sbr.rel (%p999) target = $region96
        $region95: #{tpu_custom_call.1} parent=11 // pred_region
          %s1003 = ssub.s32 2048, 2048
          %1004 = vsyncadd [#allocation21], %s1003
          %s1005 = sshll.u32 [#allocation20], 4
          %s1006 = int_to_ptr.vmem [resolvable:$true] %s1005
          %1011 = dma.hbm_to_vmem [thread:$0]  %s47, 2048, %s1006, [#allocation21], 128, 128, 8
        $region96: #{tpu_custom_call.1} parent=11 // pred_fallthru
          _
        // Predicated region
        $region97: #{tpu_custom_call.1} parent=11 // pred_check
          %p1012 = pneg %p624
        $region98: #{tpu_custom_call.1} parent=11 // pred_check_branch
          %1014 = sbr.rel (%p1012) target = $region100
        $region99: #{tpu_custom_call.1} parent=11 // pred_region
          _
        $region100: #{tpu_custom_call.1} parent=11 // pred_fallthru
          _
        // Predicated region
        $region101: #{tpu_custom_call.1} parent=11 // pred_check
          %p1015 = pneg %p645
        $region102: #{tpu_custom_call.1} parent=11 // pred_check_branch
          %1017 = sbr.rel (%p1015) target = $region104
        $region103: #{tpu_custom_call.1} parent=11 // pred_region
          %s1019 = ssub.s32 2048, 2048
          %1020 = vsyncadd [#allocation21], %s1019
          %s1021 = sshll.u32 [#allocation22], 4
          %s1022 = int_to_ptr.vmem [resolvable:$true] %s1021
          %1027 = dma.hbm_to_vmem [thread:$0]  %s51, 2048, %s1022, [#allocation21], 128, 128, 8
        $region104: #{tpu_custom_call.1} parent=11 // pred_fallthru
          _
        // Predicated region
        $region105: #{tpu_custom_call.1} parent=11 // pred_check
          %p1028 = pneg %p666
        $region106: #{tpu_custom_call.1} parent=11 // pred_check_branch
          %1030 = sbr.rel (%p1028) target = $region108
        $region107: #{tpu_custom_call.1} parent=11 // pred_region
          _
        $region108: #{tpu_custom_call.1} parent=11 // pred_fallthru
          _
        // Predicated region
        $region109: #{tpu_custom_call.1} parent=11 // pred_check
          %p1031 = pneg %p687
        $region110: #{tpu_custom_call.1} parent=11 // pred_check_branch
          %1033 = sbr.rel (%p1031) target = $region112
        $region111: #{tpu_custom_call.1} parent=11 // pred_region
          %s1035 = ssub.s32 2048, 2048
          %1036 = vsyncadd [#allocation24], %s1035
          %s1037 = sshll.u32 [#allocation23], 4
          %s1038 = int_to_ptr.vmem [resolvable:$true] %s1037
          %1043 = dma.hbm_to_vmem [thread:$0]  %s55, 2048, %s1038, [#allocation24], 128, 128, 8
        $region112: #{tpu_custom_call.1} parent=11 // pred_fallthru
          _
        // Predicated region
        $region113: #{tpu_custom_call.1} parent=11 // pred_check
          %p1044 = pneg %p708
        $region114: #{tpu_custom_call.1} parent=11 // pred_check_branch
          %1046 = sbr.rel (%p1044) target = $region116
        $region115: #{tpu_custom_call.1} parent=11 // pred_region
          _
        $region116: #{tpu_custom_call.1} parent=11 // pred_fallthru
          _
        // Predicated region
        $region117: #{tpu_custom_call.1} parent=11 // pred_check
          %p1047 = pneg %p729
        $region118: #{tpu_custom_call.1} parent=11 // pred_check_branch
          %1049 = sbr.rel (%p1047) target = $region120
        $region119: #{tpu_custom_call.1} parent=11 // pred_region
          %s1051 = ssub.s32 2048, 2048
          %1052 = vsyncadd [#allocation24], %s1051
          %s1053 = sshll.u32 [#allocation25], 4
          %s1054 = int_to_ptr.vmem [resolvable:$true] %s1053
          %1059 = dma.hbm_to_vmem [thread:$0]  %s59, 2048, %s1054, [#allocation24], 128, 128, 8
        $region120: #{tpu_custom_call.1} parent=11 // pred_fallthru
          _
        // Predicated region
        $region121: #{tpu_custom_call.1} parent=11 // pred_check
          %p1060 = pneg %p750
        $region122: #{tpu_custom_call.1} parent=11 // pred_check_branch
          %1062 = sbr.rel (%p1060) target = $region124
        $region123: #{tpu_custom_call.1} parent=11 // pred_region
          _
        $region124: #{tpu_custom_call.1} parent=11 // pred_fallthru
          _
        // Predicated region
        $region125: #{tpu_custom_call.1} parent=11 // pred_check
          %p1063 = pneg %p771
        $region126: #{tpu_custom_call.1} parent=11 // pred_check_branch
          %1065 = sbr.rel (%p1063) target = $region128
        $region127: #{tpu_custom_call.1} parent=11 // pred_region
          _
        $region128: #{tpu_custom_call.1} parent=11 // pred_fallthru
          _
        // Predicated region
        $region129: #{tpu_custom_call.1} parent=11 // pred_check
          %p1066 = pneg %p792
        $region130: #{tpu_custom_call.1} parent=11 // pred_check_branch
          %1068 = sbr.rel (%p1066) target = $region132
        $region131: #{tpu_custom_call.1} parent=11 // pred_region
          _
        $region132: #{tpu_custom_call.1} parent=11 // pred_fallthru
          _
      $region12: #{tpu_custom_call.1} parent=5 // pred_fallthru
        _
      %p1069 = scmp.lt.s32.totalorder %s84, 2
      // Predicated region
      $region133: #{tpu_custom_call.1} parent=5 // pred_check
        %p1070 = pneg %p1069
      $region134: #{tpu_custom_call.1} parent=5 // pred_check_branch
        %1072 = sbr.rel (%p1070) target = $region136
      $region135: #{tpu_custom_call.1} parent=5 // pred_region
        // Predicated region
        $region137: #{tpu_custom_call.1} parent=135 // pred_check
          %p1073 = pneg %p104
        $region138: #{tpu_custom_call.1} parent=135 // pred_check_branch
          %1075 = sbr.rel (%p1073) target = $region140
        $region139: #{tpu_custom_call.1} parent=135 // pred_region
          %p1076 = scmp.lt.s32.totalorder %s84, 1
          %s1077 = scalar_select %p1076, %s84, 1
          %s1078 = smul.addr %s1077, 8
          %s1079 = scalar_lea.vmem %s1, %s1078
        $region140: #{tpu_custom_call.1} parent=135 // pred_fallthru
          _
        // Predicated region
        $region141: #{tpu_custom_call.1} parent=135 // pred_check
          %p1080 = pneg %p130
        $region142: #{tpu_custom_call.1} parent=135 // pred_check_branch
          %1082 = sbr.rel (%p1080) target = $region144
        $region143: #{tpu_custom_call.1} parent=135 // pred_region
          %p1083 = scmp.lt.s32.totalorder %s84, 1
          %s1084 = scalar_select %p1083, %s84, 1
          %s1085 = smul.addr %s1084, 8
          %s1086 = scalar_lea.vmem %s3, %s1085
        $region144: #{tpu_custom_call.1} parent=135 // pred_fallthru
          _
        // Predicated region
        $region145: #{tpu_custom_call.1} parent=135 // pred_check
          %p1087 = pneg %p156
        $region146: #{tpu_custom_call.1} parent=135 // pred_check_branch
          %1089 = sbr.rel (%p1087) target = $region148
        $region147: #{tpu_custom_call.1} parent=135 // pred_region
          %p1090 = scmp.lt.s32.totalorder %s84, 1
          %s1091 = scalar_select %p1090, %s84, 1
          %s1092 = smul.addr %s1091, 8
          %s1093 = scalar_lea.vmem %s5, %s1092
        $region148: #{tpu_custom_call.1} parent=135 // pred_fallthru
          _
      $region136: #{tpu_custom_call.1} parent=5 // pred_fallthru
        _
      %p1094 = scmp.le.s32.totalorder 1, %s84
      %p1095 = scmp.lt.s32.totalorder %s84, 3
      %p1096 = pnand %p1094, %p1095
      %p1097 = pneg %p1096
      // Predicated region
      $region149: #{tpu_custom_call.1} parent=5 // pred_check
        _
      $region150: #{tpu_custom_call.1} parent=5 // pred_check_branch
        %1099 = sbr.rel (%p1096) target = $region152
      $region151: #{tpu_custom_call.1} parent=5 // pred_region
        %s1100 = ssub.s32 %s84, 1
        // Predicated region
        $region153: #{tpu_custom_call.1} parent=151 // pred_check
          %p1101 = pneg %p183
        $region154: #{tpu_custom_call.1} parent=151 // pred_check_branch
          %1103 = sbr.rel (%p1101) target = $region156
        $region155: #{tpu_custom_call.1} parent=151 // pred_region
          %1104 = dma.done [#allocation3], 8192
        $region156: #{tpu_custom_call.1} parent=151 // pred_fallthru
          _
        // Predicated region
        $region157: #{tpu_custom_call.1} parent=151 // pred_check
          %p1105 = pneg %p225
        $region158: #{tpu_custom_call.1} parent=151 // pred_check_branch
          %1107 = sbr.rel (%p1105) target = $region160
        $region159: #{tpu_custom_call.1} parent=151 // pred_region
          %1108 = dma.done [#allocation6], 16384
        $region160: #{tpu_custom_call.1} parent=151 // pred_fallthru
          _
        // Predicated region
        $region161: #{tpu_custom_call.1} parent=151 // pred_check
          %p1109 = pneg %p267
        $region162: #{tpu_custom_call.1} parent=151 // pred_check_branch
          %1111 = sbr.rel (%p1109) target = $region164
        $region163: #{tpu_custom_call.1} parent=151 // pred_region
          %1112 = dma.done [#allocation6], 4096
        $region164: #{tpu_custom_call.1} parent=151 // pred_fallthru
          _
        // Predicated region
        $region165: #{tpu_custom_call.1} parent=151 // pred_check
          %p1113 = pneg %p309
        $region166: #{tpu_custom_call.1} parent=151 // pred_check_branch
          %1115 = sbr.rel (%p1113) target = $region168
        $region167: #{tpu_custom_call.1} parent=151 // pred_region
          %1116 = dma.done [#allocation9], 8192
        $region168: #{tpu_custom_call.1} parent=151 // pred_fallthru
          _
        // Predicated region
        $region169: #{tpu_custom_call.1} parent=151 // pred_check
          %p1117 = pneg %p351
        $region170: #{tpu_custom_call.1} parent=151 // pred_check_branch
          %1119 = sbr.rel (%p1117) target = $region172
        $region171: #{tpu_custom_call.1} parent=151 // pred_region
          %1120 = dma.done [#allocation9], 16384
        $region172: #{tpu_custom_call.1} parent=151 // pred_fallthru
          _
        // Predicated region
        $region173: #{tpu_custom_call.1} parent=151 // pred_check
          %p1121 = pneg %p393
        $region174: #{tpu_custom_call.1} parent=151 // pred_check_branch
          %1123 = sbr.rel (%p1121) target = $region176
        $region175: #{tpu_custom_call.1} parent=151 // pred_region
          %1124 = dma.done [#allocation12], 4096
        $region176: #{tpu_custom_call.1} parent=151 // pred_fallthru
          _
        // Predicated region
        $region177: #{tpu_custom_call.1} parent=151 // pred_check
          %p1125 = pneg %p435
        $region178: #{tpu_custom_call.1} parent=151 // pred_check_branch
          %1127 = sbr.rel (%p1125) target = $region180
        $region179: #{tpu_custom_call.1} parent=151 // pred_region
          %1128 = dma.done [#allocation12], 4096
        $region180: #{tpu_custom_call.1} parent=151 // pred_fallthru
          _
        // Predicated region
        $region181: #{tpu_custom_call.1} parent=151 // pred_check
          %p1129 = pneg %p477
        $region182: #{tpu_custom_call.1} parent=151 // pred_check_branch
          %1131 = sbr.rel (%p1129) target = $region184
        $region183: #{tpu_custom_call.1} parent=151 // pred_region
          %1132 = dma.done [#allocation15], 4096
        $region184: #{tpu_custom_call.1} parent=151 // pred_fallthru
          _
        // Predicated region
        $region185: #{tpu_custom_call.1} parent=151 // pred_check
          %p1133 = pneg %p498
        $region186: #{tpu_custom_call.1} parent=151 // pred_check_branch
          %1135 = sbr.rel (%p1133) target = $region188
        $region187: #{tpu_custom_call.1} parent=151 // pred_region
          %1136 = dma.done [#allocation15], 16
        $region188: #{tpu_custom_call.1} parent=151 // pred_fallthru
          _
        // Predicated region
        $region189: #{tpu_custom_call.1} parent=151 // pred_check
          %p1137 = pneg %p540
        $region190: #{tpu_custom_call.1} parent=151 // pred_check_branch
          %1139 = sbr.rel (%p1137) target = $region192
        $region191: #{tpu_custom_call.1} parent=151 // pred_region
          %1140 = dma.done [#allocation18], 16
        $region192: #{tpu_custom_call.1} parent=151 // pred_fallthru
          _
        // Predicated region
        $region193: #{tpu_custom_call.1} parent=151 // pred_check
          %p1141 = pneg %p561
        $region194: #{tpu_custom_call.1} parent=151 // pred_check_branch
          %1143 = sbr.rel (%p1141) target = $region196
        $region195: #{tpu_custom_call.1} parent=151 // pred_region
          %1144 = dma.done [#allocation18], 6144
        $region196: #{tpu_custom_call.1} parent=151 // pred_fallthru
          _
        // Predicated region
        $region197: #{tpu_custom_call.1} parent=151 // pred_check
          %p1145 = pneg %p603
        $region198: #{tpu_custom_call.1} parent=151 // pred_check_branch
          %1147 = sbr.rel (%p1145) target = $region200
        $region199: #{tpu_custom_call.1} parent=151 // pred_region
          %1148 = dma.done [#allocation21], 2048
        $region200: #{tpu_custom_call.1} parent=151 // pred_fallthru
          _
        // Predicated region
        $region201: #{tpu_custom_call.1} parent=151 // pred_check
          %p1149 = pneg %p645
        $region202: #{tpu_custom_call.1} parent=151 // pred_check_branch
          %1151 = sbr.rel (%p1149) target = $region204
        $region203: #{tpu_custom_call.1} parent=151 // pred_region
          %1152 = dma.done [#allocation21], 2048
        $region204: #{tpu_custom_call.1} parent=151 // pred_fallthru
          _
        // Predicated region
        $region205: #{tpu_custom_call.1} parent=151 // pred_check
          %p1153 = pneg %p687
        $region206: #{tpu_custom_call.1} parent=151 // pred_check_branch
          %1155 = sbr.rel (%p1153) target = $region208
        $region207: #{tpu_custom_call.1} parent=151 // pred_region
          %1156 = dma.done [#allocation24], 2048
        $region208: #{tpu_custom_call.1} parent=151 // pred_fallthru
          _
        // Predicated region
        $region209: #{tpu_custom_call.1} parent=151 // pred_check
          %p1157 = pneg %p729
        $region210: #{tpu_custom_call.1} parent=151 // pred_check_branch
          %1159 = sbr.rel (%p1157) target = $region212
        $region211: #{tpu_custom_call.1} parent=151 // pred_region
          %1160 = dma.done [#allocation24], 2048
        $region212: #{tpu_custom_call.1} parent=151 // pred_fallthru
          _
        %p1161 = scmp.lt.s32.totalorder %s89, 1
        %s1162 = scalar_select %p1161, %s89, 1
        %s1163 = smul.addr %s1162, 8
        %s1164 = scalar_lea.vmem %s1, %s1163
        %p1165 = pneg %p110
        %p1166 = pneg %p107
        %p1167 = scmp.lt.s32.totalorder %s89, 1
        %s1168 = scalar_select %p1167, %s89, 1
        %s1169 = smul.addr %s1168, 8
        %s1170 = scalar_lea.vmem %s3, %s1169
        %p1171 = pneg %p136
        %p1172 = pneg %p133
        %p1173 = scmp.lt.s32.totalorder %s89, 1
        %s1174 = scalar_select %p1173, %s89, 1
        %s1175 = smul.addr %s1174, 8
        %s1176 = scalar_lea.vmem %s5, %s1175
        %p1177 = pneg %p162
        %p1178 = pneg %p159
        %p1179 = pneg %p183
        %p1180 = pneg %p180
        %p1181 = pneg %p204
        %p1182 = pneg %p201
        %p1183 = pneg %p225
        %p1184 = pneg %p222
        %p1185 = pneg %p246
        %p1186 = pneg %p243
        %p1187 = pneg %p267
        %p1188 = pneg %p264
        %p1189 = pneg %p288
        %p1190 = pneg %p285
        %p1191 = pneg %p309
        %p1192 = pneg %p306
        %p1193 = pneg %p330
        %p1194 = pneg %p327
        %p1195 = pneg %p351
        %p1196 = pneg %p348
        %p1197 = pneg %p372
        %p1198 = pneg %p369
        %p1199 = pneg %p393
        %p1200 = pneg %p390
        %p1201 = pneg %p414
        %p1202 = pneg %p411
        %p1203 = pneg %p435
        %p1204 = pneg %p432
        %p1205 = pneg %p456
        %p1206 = pneg %p453
        %p1207 = pneg %p477
        %p1208 = pneg %p474
        %p1209 = pneg %p498
        %p1210 = pneg %p495
        %p1211 = pneg %p519
        %p1212 = pneg %p516
        %p1213 = pneg %p540
        %p1214 = pneg %p537
        %p1215 = pneg %p561
        %p1216 = pneg %p558
        %p1217 = pneg %p582
        %p1218 = pneg %p579
        %p1219 = pneg %p603
        %p1220 = pneg %p600
        %p1221 = pneg %p624
        %p1222 = pneg %p621
        %p1223 = pneg %p645
        %p1224 = pneg %p642
        %p1225 = pneg %p666
        %p1226 = pneg %p663
        %p1227 = pneg %p687
        %p1228 = pneg %p684
        %p1229 = pneg %p708
        %p1230 = pneg %p705
        %p1231 = pneg %p729
        %p1232 = pneg %p726
        %p1233 = pneg %p750
        %p1234 = pneg %p747
        %p1235 = pneg %p771
        %p1236 = pneg %p768
        %p1237 = pneg %p792
        %p1238 = pneg %p789
        %p1239 = pneg %p818
        %p1240 = pneg %p815
        %s1241 = sand.u32 %s805, 1
        %s1242 = scalar_lea.sflag [#allocation4], %s1241
        %s1243 = sand.u32 %s805, 1
        %s1244 = smul.addr %s1243, 40
        %s1245 = scalar_lea.vmem [#allocation26], %s1244
        %p1246 = scmp.lt.s32.totalorder %s89, 1
        %s1247 = scalar_select %p1246, %s89, 1
        %s1248 = smul.addr %s1247, 8
        %s1249 = scalar_lea.vmem %s1, %s1248
        %p1250 = scmp.lt.s32.totalorder %s89, 1
        %s1251 = scalar_select %p1250, %s89, 1
        %s1252 = smul.addr %s1251, 8
        %s1253 = scalar_lea.vmem %s3, %s1252
        %p1254 = scmp.lt.s32.totalorder %s89, 1
        %s1255 = scalar_select %p1254, %s89, 1
        %s1256 = smul.addr %s1255, 8
        %s1257 = scalar_lea.vmem %s5, %s1256
        %v1258 = vld [vmem:[%s1249] sm:$0xff]
        %v1259 = vld [vmem:[#allocation2] sm:$0xff]
        %v1260 = vld [vmem:[#allocation2 + $0x8] sm:$0xff]
        %v1261 = vld [vmem:[#allocation2 + $0x10] sm:$0xff]
        %v1262 = vld [vmem:[#allocation2 + $0x18] sm:$0xff]
        %v1263 = vld [vmem:[#allocation2 + $0x20] sm:$0xff]
        %v1264 = vld [vmem:[#allocation2 + $0x28] sm:$0xff]
        %v1265 = vld [vmem:[#allocation2 + $0x30] sm:$0xff]
        %v1266 = vld [vmem:[#allocation2 + $0x38] sm:$0xff]
        %v1267 = vld [vmem:[#allocation2 + $0x40] sm:$0xff]
        %v1268 = vld [vmem:[#allocation2 + $0x48] sm:$0xff]
        %v1269 = vld [vmem:[#allocation2 + $0x50] sm:$0xff]
        %v1270 = vld [vmem:[#allocation2 + $0x58] sm:$0xff]
        %v1271 = vld [vmem:[#allocation2 + $0x60] sm:$0xff]
        %v1272 = vld [vmem:[#allocation2 + $0x68] sm:$0xff]
        %v1273 = vld [vmem:[#allocation2 + $0x70] sm:$0xff]
        %v1274 = vld [vmem:[#allocation2 + $0x78] sm:$0xff]
        %v1275 = vld [vmem:[#allocation2 + $0x80] sm:$0xff]
        %v1276 = vld [vmem:[#allocation2 + $0x88] sm:$0xff]
        %v1277 = vld [vmem:[#allocation2 + $0x90] sm:$0xff]
        %v1278 = vld [vmem:[#allocation2 + $0x98] sm:$0xff]
        %v1279 = vld [vmem:[#allocation2 + $0xa0] sm:$0xff]
        %v1280 = vld [vmem:[#allocation2 + $0xa8] sm:$0xff]
        %v1281 = vld [vmem:[#allocation2 + $0xb0] sm:$0xff]
        %v1282 = vld [vmem:[#allocation2 + $0xb8] sm:$0xff]
        %v1283 = vld [vmem:[#allocation2 + $0xc0] sm:$0xff]
        %v1284 = vld [vmem:[#allocation2 + $0xc8] sm:$0xff]
        %v1285 = vld [vmem:[#allocation2 + $0xd0] sm:$0xff]
        %v1286 = vld [vmem:[#allocation2 + $0xd8] sm:$0xff]
        %v1287 = vld [vmem:[#allocation2 + $0xe0] sm:$0xff]
        %v1288 = vld [vmem:[#allocation2 + $0xe8] sm:$0xff]
        %v1289 = vld [vmem:[#allocation2 + $0xf0] sm:$0xff]
        %v1290 = vld [vmem:[#allocation2 + $0xf8] sm:$0xff]
        %v1291 = vld [vmem:[#allocation2 + $0x100] sm:$0xff]
        %v1292 = vld [vmem:[#allocation2 + $0x108] sm:$0xff]
        %v1293 = vld [vmem:[#allocation2 + $0x110] sm:$0xff]
        %v1294 = vld [vmem:[#allocation2 + $0x118] sm:$0xff]
        %v1295 = vld [vmem:[#allocation2 + $0x120] sm:$0xff]
        %v1296 = vld [vmem:[#allocation2 + $0x128] sm:$0xff]
        %v1297 = vld [vmem:[#allocation2 + $0x130] sm:$0xff]
        %v1298 = vld [vmem:[#allocation2 + $0x138] sm:$0xff]
        %v1299 = vld [vmem:[#allocation2 + $0x140] sm:$0xff]
        %v1300 = vld [vmem:[#allocation2 + $0x148] sm:$0xff]
        %v1301 = vld [vmem:[#allocation2 + $0x150] sm:$0xff]
        %v1302 = vld [vmem:[#allocation2 + $0x158] sm:$0xff]
        %v1303 = vld [vmem:[#allocation2 + $0x160] sm:$0xff]
        %v1304 = vld [vmem:[#allocation2 + $0x168] sm:$0xff]
        %v1305 = vld [vmem:[#allocation2 + $0x170] sm:$0xff]
        %v1306 = vld [vmem:[#allocation2 + $0x178] sm:$0xff]
        %v1307 = vld [vmem:[#allocation2 + $0x180] sm:$0xff]
        %v1308 = vld [vmem:[#allocation2 + $0x188] sm:$0xff]
        %v1309 = vld [vmem:[#allocation2 + $0x190] sm:$0xff]
        %v1310 = vld [vmem:[#allocation2 + $0x198] sm:$0xff]
        %v1311 = vld [vmem:[#allocation2 + $0x1a0] sm:$0xff]
        %v1312 = vld [vmem:[#allocation2 + $0x1a8] sm:$0xff]
        %v1313 = vld [vmem:[#allocation2 + $0x1b0] sm:$0xff]
        %v1314 = vld [vmem:[#allocation2 + $0x1b8] sm:$0xff]
        %v1315 = vld [vmem:[#allocation2 + $0x1c0] sm:$0xff]
        %v1316 = vld [vmem:[#allocation2 + $0x1c8] sm:$0xff]
        %v1317 = vld [vmem:[#allocation2 + $0x1d0] sm:$0xff]
        %v1318 = vld [vmem:[#allocation2 + $0x1d8] sm:$0xff]
        %v1319 = vld [vmem:[#allocation2 + $0x1e0] sm:$0xff]
        %v1320 = vld [vmem:[#allocation2 + $0x1e8] sm:$0xff]
        %v1321 = vld [vmem:[#allocation2 + $0x1f0] sm:$0xff]
        %v1322 = vld [vmem:[#allocation2 + $0x1f8] sm:$0xff]
        %v1323 = vld [vmem:[%s9] sm:$0xf]
        %v1325 = vlaneseq
        %v1326 = vshrl.u32 %v1325, 7
        %v1327 = vsub.s32 0, %v1326
        %v1328 = vrot.slane %v1323, %v1327
        %v1329 = vlaneseq
        %v1330 = vshrl.u32 %v1329, 7
        %v1331 = vsub.s32 1, %v1330
        %v1332 = vrot.slane %v1323, %v1331
        %v1333 = vlaneseq
        %v1334 = vshrl.u32 %v1333, 7
        %v1335 = vsub.s32 2, %v1334
        %v1336 = vrot.slane %v1323, %v1335
        %v1337 = vlaneseq
        %v1338 = vshrl.u32 %v1337, 7
        %v1339 = vsub.s32 3, %v1338
        %v1340 = vrot.slane %v1323, %v1339
        %1345 = vmatprep.subr.mxu0 %v1260
        %1346 = vmatpush1.msra.mxu0 %v1259
        %1347 = vmatprep.subr.mxu0 %v1264
        %1348 = vmatpush1.msra.mxu0 %v1263
        %1349 = vmatprep.subr.mxu0 %v1268
        %1350 = vmatpush1.msra.mxu0 %v1267
        %1351 = vmatprep.subr.mxu0 %v1272
        %1352 = vmatpush1.msra.mxu0 %v1271
        %1353 = vmatprep.subr.mxu0 %v1276
        %1354 = vmatpush1.msra.mxu0 %v1275
        %1355 = vmatprep.subr.mxu0 %v1280
        %1356 = vmatpush1.msra.mxu0 %v1279
        %1357 = vmatprep.subr.mxu0 %v1284
        %1358 = vmatpush1.msra.mxu0 %v1283
        %1359 = vmatprep.subr.mxu0 %v1288
        %1360 = vmatpush1.msra.mxu0 %v1287
        %1361 = vmatprep.subr.mxu0 %v1292
        %1362 = vmatpush1.msra.mxu0 %v1291
        %1363 = vmatprep.subr.mxu0 %v1296
        %1364 = vmatpush1.msra.mxu0 %v1295
        %1365 = vmatprep.subr.mxu0 %v1300
        %1366 = vmatpush1.msra.mxu0 %v1299
        %1367 = vmatprep.subr.mxu0 %v1304
        %1368 = vmatpush1.msra.mxu0 %v1303
        %1369 = vmatprep.subr.mxu0 %v1308
        %1370 = vmatpush1.msra.mxu0 %v1307
        %1371 = vmatprep.subr.mxu0 %v1312
        %1372 = vmatpush1.msra.mxu0 %v1311
        %1373 = vmatprep.subr.mxu0 %v1316
        %1374 = vmatpush1.msra.mxu0 %v1315
        %1375 = vmatprep.subr.mxu0 %v1320
        %1376 = vmatpush1.msra.mxu0 %v1319
        %1377 = vmatprep.subr.mxu0 0.0
        %1378 = vmatpush1.msra.mxu0 0.0
        %1379 = vmatprep.subr.mxu0 0.0
        %1380 = vmatpush1.msra.mxu0 0.0
        %1381 = vmatprep.subr.mxu0 0.0
        %1382 = vmatpush1.msra.mxu0 0.0
        %1383 = vmatprep.subr.mxu0 0.0
        %1384 = vmatpush1.msra.mxu0 0.0
        %1385 = vmatprep.subr.mxu0 0.0
        %1386 = vmatpush1.msra.mxu0 0.0
        %1387 = vmatprep.subr.mxu0 0.0
        %1388 = vmatpush1.msra.mxu0 0.0
        %1389 = vmatprep.subr.mxu0 0.0
        %1390 = vmatpush1.msra.mxu0 0.0
        %1391 = vmatprep.subr.mxu0 0.0
        %1392 = vmatpush1.msra.mxu0 0.0
        %1393 = vmatprep.subr.mxu0 0.0
        %1394 = vmatpush1.msra.mxu0 0.0
        %1395 = vmatprep.subr.mxu0 0.0
        %1396 = vmatpush1.msra.mxu0 0.0
        %1397 = vmatprep.subr.mxu0 0.0
        %1398 = vmatpush1.msra.mxu0 0.0
        %1399 = vmatprep.subr.mxu0 0.0
        %1400 = vmatpush1.msra.mxu0 0.0
        %1401 = vmatprep.subr.mxu0 0.0
        %1402 = vmatpush1.msra.mxu0 0.0
        %1403 = vmatprep.subr.mxu0 0.0
        %1404 = vmatpush1.msra.mxu0 0.0
        %1405 = vmatprep.subr.mxu0 0.0
        %1406 = vmatpush1.msra.mxu0 0.0
        %1407 = vmatprep.subr.mxu0 0.0
        %1408 = vmatpush1.msra.mxu0 0.0
        %1409 = vmatprep.mubr.f32.mxu0 0.0
        %1410 = vmatmul.mubr.f32.gmra.mrb[0].mxu0 %v1258
        %v1411 = vpop.f32.mrb[0].mxu0
        %v1412 = vadd.f32 %v1328, %v1411
        %v1413 = vpop.f32.mrb[0].mxu0
        %v1414 = vadd.f32 %v1332, %v1413
        %1415 = vdwg.mxu0
        %1416 = vmatprep.subr.mxu0 %v1262
        %1417 = vmatpush1.msra.mxu0 %v1261
        %1418 = vmatprep.subr.mxu0 %v1266
        %1419 = vmatpush1.msra.mxu0 %v1265
        %1420 = vmatprep.subr.mxu0 %v1270
        %1421 = vmatpush1.msra.mxu0 %v1269
        %1422 = vmatprep.subr.mxu0 %v1274
        %1423 = vmatpush1.msra.mxu0 %v1273
        %1424 = vmatprep.subr.mxu0 %v1278
        %1425 = vmatpush1.msra.mxu0 %v1277
        %1426 = vmatprep.subr.mxu0 %v1282
        %1427 = vmatpush1.msra.mxu0 %v1281
        %1428 = vmatprep.subr.mxu0 %v1286
        %1429 = vmatpush1.msra.mxu0 %v1285
        %1430 = vmatprep.subr.mxu0 %v1290
        %1431 = vmatpush1.msra.mxu0 %v1289
        %1432 = vmatprep.subr.mxu0 %v1294
        %1433 = vmatpush1.msra.mxu0 %v1293
        %1434 = vmatprep.subr.mxu0 %v1298
        %1435 = vmatpush1.msra.mxu0 %v1297
        %1436 = vmatprep.subr.mxu0 %v1302
        %1437 = vmatpush1.msra.mxu0 %v1301
        %1438 = vmatprep.subr.mxu0 %v1306
        %1439 = vmatpush1.msra.mxu0 %v1305
        %1440 = vmatprep.subr.mxu0 %v1310
        %1441 = vmatpush1.msra.mxu0 %v1309
        %1442 = vmatprep.subr.mxu0 %v1314
        %1443 = vmatpush1.msra.mxu0 %v1313
        %1444 = vmatprep.subr.mxu0 %v1318
        %1445 = vmatpush1.msra.mxu0 %v1317
        %1446 = vmatprep.subr.mxu0 %v1322
        %1447 = vmatpush1.msra.mxu0 %v1321
        %1448 = vmatprep.subr.mxu0 0.0
        %1449 = vmatpush1.msra.mxu0 0.0
        %1450 = vmatprep.subr.mxu0 0.0
        %1451 = vmatpush1.msra.mxu0 0.0
        %1452 = vmatprep.subr.mxu0 0.0
        %1453 = vmatpush1.msra.mxu0 0.0
        %1454 = vmatprep.subr.mxu0 0.0
        %1455 = vmatpush1.msra.mxu0 0.0
        %1456 = vmatprep.subr.mxu0 0.0
        %1457 = vmatpush1.msra.mxu0 0.0
        %1458 = vmatprep.subr.mxu0 0.0
        %1459 = vmatpush1.msra.mxu0 0.0
        %1460 = vmatprep.subr.mxu0 0.0
        %1461 = vmatpush1.msra.mxu0 0.0
        %1462 = vmatprep.subr.mxu0 0.0
        %1463 = vmatpush1.msra.mxu0 0.0
        %1464 = vmatprep.subr.mxu0 0.0
        %1465 = vmatpush1.msra.mxu0 0.0
        %1466 = vmatprep.subr.mxu0 0.0
        %1467 = vmatpush1.msra.mxu0 0.0
        %1468 = vmatprep.subr.mxu0 0.0
        %1469 = vmatpush1.msra.mxu0 0.0
        %1470 = vmatprep.subr.mxu0 0.0
        %1471 = vmatpush1.msra.mxu0 0.0
        %1472 = vmatprep.subr.mxu0 0.0
        %1473 = vmatpush1.msra.mxu0 0.0
        %1474 = vmatprep.subr.mxu0 0.0
        %1475 = vmatpush1.msra.mxu0 0.0
        %1476 = vmatprep.subr.mxu0 0.0
        %1477 = vmatpush1.msra.mxu0 0.0
        %1478 = vmatprep.subr.mxu0 0.0
        %1479 = vmatpush1.msra.mxu0 0.0
        %1480 = vmatprep.mubr.f32.mxu0 0.0
        %1481 = vmatmul.mubr.f32.gmra.mrb[0].mxu0 %v1258
        %v1482 = vpop.f32.mrb[0].mxu0
        %v1483 = vadd.f32 %v1336, %v1482
        %v1484 = vpop.f32.mrb[0].mxu0
        %v1485 = vadd.f32 %v1340, %v1484
        %1486 = vdwg.mxu0
        %v1487 = vmax.f32 %v1412, 0.0
        %v1488 = vmax.f32 %v1414, 0.0
        %v1489 = vmax.f32 %v1483, 0.0
        %v1490 = vmax.f32 %v1485, 0.0
        %v1491 = vld [vmem:[#allocation5] sm:$0xff]
        %v1492 = vld [vmem:[#allocation5 + $0x8] sm:$0xff]
        %v1493 = vld [vmem:[#allocation5 + $0x10] sm:$0xff]
        %v1494 = vld [vmem:[#allocation5 + $0x18] sm:$0xff]
        %v1495 = vld [vmem:[#allocation5 + $0x20] sm:$0xff]
        %v1496 = vld [vmem:[#allocation5 + $0x28] sm:$0xff]
        %v1497 = vld [vmem:[#allocation5 + $0x30] sm:$0xff]
        %v1498 = vld [vmem:[#allocation5 + $0x38] sm:$0xff]
        %v1499 = vld [vmem:[#allocation5 + $0x40] sm:$0xff]
        %v1500 = vld [vmem:[#allocation5 + $0x48] sm:$0xff]
        %v1501 = vld [vmem:[#allocation5 + $0x50] sm:$0xff]
        %v1502 = vld [vmem:[#allocation5 + $0x58] sm:$0xff]
        %v1503 = vld [vmem:[#allocation5 + $0x60] sm:$0xff]
        %v1504 = vld [vmem:[#allocation5 + $0x68] sm:$0xff]
        %v1505 = vld [vmem:[#allocation5 + $0x70] sm:$0xff]
        %v1506 = vld [vmem:[#allocation5 + $0x78] sm:$0xff]
        %v1507 = vld [vmem:[#allocation5 + $0x80] sm:$0xff]
        %v1508 = vld [vmem:[#allocation5 + $0x88] sm:$0xff]
        %v1509 = vld [vmem:[#allocation5 + $0x90] sm:$0xff]
        %v1510 = vld [vmem:[#allocation5 + $0x98] sm:$0xff]
        %v1511 = vld [vmem:[#allocation5 + $0xa0] sm:$0xff]
        %v1512 = vld [vmem:[#allocation5 + $0xa8] sm:$0xff]
        %v1513 = vld [vmem:[#allocation5 + $0xb0] sm:$0xff]
        %v1514 = vld [vmem:[#allocation5 + $0xb8] sm:$0xff]
        %v1515 = vld [vmem:[#allocation5 + $0xc0] sm:$0xff]
        %v1516 = vld [vmem:[#allocation5 + $0xc8] sm:$0xff]
        %v1517 = vld [vmem:[#allocation5 + $0xd0] sm:$0xff]
        %v1518 = vld [vmem:[#allocation5 + $0xd8] sm:$0xff]
        %v1519 = vld [vmem:[#allocation5 + $0xe0] sm:$0xff]
        %v1520 = vld [vmem:[#allocation5 + $0xe8] sm:$0xff]
        %v1521 = vld [vmem:[#allocation5 + $0xf0] sm:$0xff]
        %v1522 = vld [vmem:[#allocation5 + $0xf8] sm:$0xff]
        %v1523 = vld [vmem:[#allocation5 + $0x100] sm:$0xff]
        %v1524 = vld [vmem:[#allocation5 + $0x108] sm:$0xff]
        %v1525 = vld [vmem:[#allocation5 + $0x110] sm:$0xff]
        %v1526 = vld [vmem:[#allocation5 + $0x118] sm:$0xff]
        %v1527 = vld [vmem:[#allocation5 + $0x120] sm:$0xff]
        %v1528 = vld [vmem:[#allocation5 + $0x128] sm:$0xff]
        %v1529 = vld [vmem:[#allocation5 + $0x130] sm:$0xff]
        %v1530 = vld [vmem:[#allocation5 + $0x138] sm:$0xff]
        %v1531 = vld [vmem:[#allocation5 + $0x140] sm:$0xff]
        %v1532 = vld [vmem:[#allocation5 + $0x148] sm:$0xff]
        %v1533 = vld [vmem:[#allocation5 + $0x150] sm:$0xff]
        %v1534 = vld [vmem:[#allocation5 + $0x158] sm:$0xff]
        %v1535 = vld [vmem:[#allocation5 + $0x160] sm:$0xff]
        %v1536 = vld [vmem:[#allocation5 + $0x168] sm:$0xff]
        %v1537 = vld [vmem:[#allocation5 + $0x170] sm:$0xff]
        %v1538 = vld [vmem:[#allocation5 + $0x178] sm:$0xff]
        %v1539 = vld [vmem:[#allocation5 + $0x180] sm:$0xff]
        %v1540 = vld [vmem:[#allocation5 + $0x188] sm:$0xff]
        %v1541 = vld [vmem:[#allocation5 + $0x190] sm:$0xff]
        %v1542 = vld [vmem:[#allocation5 + $0x198] sm:$0xff]
        %v1543 = vld [vmem:[#allocation5 + $0x1a0] sm:$0xff]
        %v1544 = vld [vmem:[#allocation5 + $0x1a8] sm:$0xff]
        %v1545 = vld [vmem:[#allocation5 + $0x1b0] sm:$0xff]
        %v1546 = vld [vmem:[#allocation5 + $0x1b8] sm:$0xff]
        %v1547 = vld [vmem:[#allocation5 + $0x1c0] sm:$0xff]
        %v1548 = vld [vmem:[#allocation5 + $0x1c8] sm:$0xff]
        %v1549 = vld [vmem:[#allocation5 + $0x1d0] sm:$0xff]
        %v1550 = vld [vmem:[#allocation5 + $0x1d8] sm:$0xff]
        %v1551 = vld [vmem:[#allocation5 + $0x1e0] sm:$0xff]
        %v1552 = vld [vmem:[#allocation5 + $0x1e8] sm:$0xff]
        %v1553 = vld [vmem:[#allocation5 + $0x1f0] sm:$0xff]
        %v1554 = vld [vmem:[#allocation5 + $0x1f8] sm:$0xff]
        %v1555 = vld [vmem:[#allocation5 + $0x200] sm:$0xff]
        %v1556 = vld [vmem:[#allocation5 + $0x208] sm:$0xff]
        %v1557 = vld [vmem:[#allocation5 + $0x210] sm:$0xff]
        %v1558 = vld [vmem:[#allocation5 + $0x218] sm:$0xff]
        %v1559 = vld [vmem:[#allocation5 + $0x220] sm:$0xff]
        %v1560 = vld [vmem:[#allocation5 + $0x228] sm:$0xff]
        %v1561 = vld [vmem:[#allocation5 + $0x230] sm:$0xff]
        %v1562 = vld [vmem:[#allocation5 + $0x238] sm:$0xff]
        %v1563 = vld [vmem:[#allocation5 + $0x240] sm:$0xff]
        %v1564 = vld [vmem:[#allocation5 + $0x248] sm:$0xff]
        %v1565 = vld [vmem:[#allocation5 + $0x250] sm:$0xff]
        %v1566 = vld [vmem:[#allocation5 + $0x258] sm:$0xff]
        %v1567 = vld [vmem:[#allocation5 + $0x260] sm:$0xff]
        %v1568 = vld [vmem:[#allocation5 + $0x268] sm:$0xff]
        %v1569 = vld [vmem:[#allocation5 + $0x270] sm:$0xff]
        %v1570 = vld [vmem:[#allocation5 + $0x278] sm:$0xff]
        %v1571 = vld [vmem:[#allocation5 + $0x280] sm:$0xff]
        %v1572 = vld [vmem:[#allocation5 + $0x288] sm:$0xff]
        %v1573 = vld [vmem:[#allocation5 + $0x290] sm:$0xff]
        %v1574 = vld [vmem:[#allocation5 + $0x298] sm:$0xff]
        %v1575 = vld [vmem:[#allocation5 + $0x2a0] sm:$0xff]
        %v1576 = vld [vmem:[#allocation5 + $0x2a8] sm:$0xff]
        %v1577 = vld [vmem:[#allocation5 + $0x2b0] sm:$0xff]
        %v1578 = vld [vmem:[#allocation5 + $0x2b8] sm:$0xff]
        %v1579 = vld [vmem:[#allocation5 + $0x2c0] sm:$0xff]
        %v1580 = vld [vmem:[#allocation5 + $0x2c8] sm:$0xff]
        %v1581 = vld [vmem:[#allocation5 + $0x2d0] sm:$0xff]
        %v1582 = vld [vmem:[#allocation5 + $0x2d8] sm:$0xff]
        %v1583 = vld [vmem:[#allocation5 + $0x2e0] sm:$0xff]
        %v1584 = vld [vmem:[#allocation5 + $0x2e8] sm:$0xff]
        %v1585 = vld [vmem:[#allocation5 + $0x2f0] sm:$0xff]
        %v1586 = vld [vmem:[#allocation5 + $0x2f8] sm:$0xff]
        %v1587 = vld [vmem:[#allocation5 + $0x300] sm:$0xff]
        %v1588 = vld [vmem:[#allocation5 + $0x308] sm:$0xff]
        %v1589 = vld [vmem:[#allocation5 + $0x310] sm:$0xff]
        %v1590 = vld [vmem:[#allocation5 + $0x318] sm:$0xff]
        %v1591 = vld [vmem:[#allocation5 + $0x320] sm:$0xff]
        %v1592 = vld [vmem:[#allocation5 + $0x328] sm:$0xff]
        %v1593 = vld [vmem:[#allocation5 + $0x330] sm:$0xff]
        %v1594 = vld [vmem:[#allocation5 + $0x338] sm:$0xff]
        %v1595 = vld [vmem:[#allocation5 + $0x340] sm:$0xff]
        %v1596 = vld [vmem:[#allocation5 + $0x348] sm:$0xff]
        %v1597 = vld [vmem:[#allocation5 + $0x350] sm:$0xff]
        %v1598 = vld [vmem:[#allocation5 + $0x358] sm:$0xff]
        %v1599 = vld [vmem:[#allocation5 + $0x360] sm:$0xff]
        %v1600 = vld [vmem:[#allocation5 + $0x368] sm:$0xff]
        %v1601 = vld [vmem:[#allocation5 + $0x370] sm:$0xff]
        %v1602 = vld [vmem:[#allocation5 + $0x378] sm:$0xff]
        %v1603 = vld [vmem:[#allocation5 + $0x380] sm:$0xff]
        %v1604 = vld [vmem:[#allocation5 + $0x388] sm:$0xff]
        %v1605 = vld [vmem:[#allocation5 + $0x390] sm:$0xff]
        %v1606 = vld [vmem:[#allocation5 + $0x398] sm:$0xff]
        %v1607 = vld [vmem:[#allocation5 + $0x3a0] sm:$0xff]
        %v1608 = vld [vmem:[#allocation5 + $0x3a8] sm:$0xff]
        %v1609 = vld [vmem:[#allocation5 + $0x3b0] sm:$0xff]
        %v1610 = vld [vmem:[#allocation5 + $0x3b8] sm:$0xff]
        %v1611 = vld [vmem:[#allocation5 + $0x3c0] sm:$0xff]
        %v1612 = vld [vmem:[#allocation5 + $0x3c8] sm:$0xff]
        %v1613 = vld [vmem:[#allocation5 + $0x3d0] sm:$0xff]
        %v1614 = vld [vmem:[#allocation5 + $0x3d8] sm:$0xff]
        %v1615 = vld [vmem:[#allocation5 + $0x3e0] sm:$0xff]
        %v1616 = vld [vmem:[#allocation5 + $0x3e8] sm:$0xff]
        %v1617 = vld [vmem:[#allocation5 + $0x3f0] sm:$0xff]
        %v1618 = vld [vmem:[#allocation5 + $0x3f8] sm:$0xff]
        %v1619 = vld [vmem:[%s13] sm:$0x3]
        %v1621 = vlaneseq
        %v1622 = vshrl.u32 %v1621, 7
        %v1623 = vsub.s32 0, %v1622
        %v1624 = vrot.slane %v1619, %v1623
        %v1625 = vlaneseq
        %v1626 = vshrl.u32 %v1625, 7
        %v1627 = vsub.s32 1, %v1626
        %v1628 = vrot.slane %v1619, %v1627
        %1631 = vmatprep.subr.mxu0 %v1492
        %1632 = vmatpush1.msra.mxu0 %v1491
        %1633 = vmatprep.subr.mxu0 %v1494
        %1634 = vmatpush1.msra.mxu0 %v1493
        %1635 = vmatprep.subr.mxu0 %v1496
        %1636 = vmatpush1.msra.mxu0 %v1495
        %1637 = vmatprep.subr.mxu0 %v1498
        %1638 = vmatpush1.msra.mxu0 %v1497
        %1639 = vmatprep.subr.mxu0 %v1500
        %1640 = vmatpush1.msra.mxu0 %v1499
        %1641 = vmatprep.subr.mxu0 %v1502
        %1642 = vmatpush1.msra.mxu0 %v1501
        %1643 = vmatprep.subr.mxu0 %v1504
        %1644 = vmatpush1.msra.mxu0 %v1503
        %1645 = vmatprep.subr.mxu0 %v1506
        %1646 = vmatpush1.msra.mxu0 %v1505
        %1647 = vmatprep.subr.mxu0 %v1508
        %1648 = vmatpush1.msra.mxu0 %v1507
        %1649 = vmatprep.subr.mxu0 %v1510
        %1650 = vmatpush1.msra.mxu0 %v1509
        %1651 = vmatprep.subr.mxu0 %v1512
        %1652 = vmatpush1.msra.mxu0 %v1511
        %1653 = vmatprep.subr.mxu0 %v1514
        %1654 = vmatpush1.msra.mxu0 %v1513
        %1655 = vmatprep.subr.mxu0 %v1516
        %1656 = vmatpush1.msra.mxu0 %v1515
        %1657 = vmatprep.subr.mxu0 %v1518
        %1658 = vmatpush1.msra.mxu0 %v1517
        %1659 = vmatprep.subr.mxu0 %v1520
        %1660 = vmatpush1.msra.mxu0 %v1519
        %1661 = vmatprep.subr.mxu0 %v1522
        %1662 = vmatpush1.msra.mxu0 %v1521
        %1663 = vmatprep.subr.mxu0 %v1524
        %1664 = vmatpush1.msra.mxu0 %v1523
        %1665 = vmatprep.subr.mxu0 %v1526
        %1666 = vmatpush1.msra.mxu0 %v1525
        %1667 = vmatprep.subr.mxu0 %v1528
        %1668 = vmatpush1.msra.mxu0 %v1527
        %1669 = vmatprep.subr.mxu0 %v1530
        %1670 = vmatpush1.msra.mxu0 %v1529
        %1671 = vmatprep.subr.mxu0 %v1532
        %1672 = vmatpush1.msra.mxu0 %v1531
        %1673 = vmatprep.subr.mxu0 %v1534
        %1674 = vmatpush1.msra.mxu0 %v1533
        %1675 = vmatprep.subr.mxu0 %v1536
        %1676 = vmatpush1.msra.mxu0 %v1535
        %1677 = vmatprep.subr.mxu0 %v1538
        %1678 = vmatpush1.msra.mxu0 %v1537
        %1679 = vmatprep.subr.mxu0 %v1540
        %1680 = vmatpush1.msra.mxu0 %v1539
        %1681 = vmatprep.subr.mxu0 %v1542
        %1682 = vmatpush1.msra.mxu0 %v1541
        %1683 = vmatprep.subr.mxu0 %v1544
        %1684 = vmatpush1.msra.mxu0 %v1543
        %1685 = vmatprep.subr.mxu0 %v1546
        %1686 = vmatpush1.msra.mxu0 %v1545
        %1687 = vmatprep.subr.mxu0 %v1548
        %1688 = vmatpush1.msra.mxu0 %v1547
        %1689 = vmatprep.subr.mxu0 %v1550
        %1690 = vmatpush1.msra.mxu0 %v1549
        %1691 = vmatprep.subr.mxu0 %v1552
        %1692 = vmatpush1.msra.mxu0 %v1551
        %1693 = vmatprep.subr.mxu0 %v1554
        %1694 = vmatpush1.msra.mxu0 %v1553
        %1695 = vmatprep.mubr.f32.mxu0 %v1488
        %1696 = vmatmul.mubr.f32.gmra.mrb[0].mxu0 %v1487
        %v1697 = vpop.f32.mrb[0].mxu0
        %v1698 = vadd.f32 %v1624, %v1697
        %v1699 = vpop.f32.mrb[0].mxu0
        %v1700 = vadd.f32 %v1628, %v1699
        %1701 = vdwg.mxu0
        %1702 = vmatprep.subr.mxu0 %v1556
        %1703 = vmatpush1.msra.mxu0 %v1555
        %1704 = vmatprep.subr.mxu0 %v1558
        %1705 = vmatpush1.msra.mxu0 %v1557
        %1706 = vmatprep.subr.mxu0 %v1560
        %1707 = vmatpush1.msra.mxu0 %v1559
        %1708 = vmatprep.subr.mxu0 %v1562
        %1709 = vmatpush1.msra.mxu0 %v1561
        %1710 = vmatprep.subr.mxu0 %v1564
        %1711 = vmatpush1.msra.mxu0 %v1563
        %1712 = vmatprep.subr.mxu0 %v1566
        %1713 = vmatpush1.msra.mxu0 %v1565
        %1714 = vmatprep.subr.mxu0 %v1568
        %1715 = vmatpush1.msra.mxu0 %v1567
        %1716 = vmatprep.subr.mxu0 %v1570
        %1717 = vmatpush1.msra.mxu0 %v1569
        %1718 = vmatprep.subr.mxu0 %v1572
        %1719 = vmatpush1.msra.mxu0 %v1571
        %1720 = vmatprep.subr.mxu0 %v1574
        %1721 = vmatpush1.msra.mxu0 %v1573
        %1722 = vmatprep.subr.mxu0 %v1576
        %1723 = vmatpush1.msra.mxu0 %v1575
        %1724 = vmatprep.subr.mxu0 %v1578
        %1725 = vmatpush1.msra.mxu0 %v1577
        %1726 = vmatprep.subr.mxu0 %v1580
        %1727 = vmatpush1.msra.mxu0 %v1579
        %1728 = vmatprep.subr.mxu0 %v1582
        %1729 = vmatpush1.msra.mxu0 %v1581
        %1730 = vmatprep.subr.mxu0 %v1584
        %1731 = vmatpush1.msra.mxu0 %v1583
        %1732 = vmatprep.subr.mxu0 %v1586
        %1733 = vmatpush1.msra.mxu0 %v1585
        %1734 = vmatprep.subr.mxu0 %v1588
        %1735 = vmatpush1.msra.mxu0 %v1587
        %1736 = vmatprep.subr.mxu0 %v1590
        %1737 = vmatpush1.msra.mxu0 %v1589
        %1738 = vmatprep.subr.mxu0 %v1592
        %1739 = vmatpush1.msra.mxu0 %v1591
        %1740 = vmatprep.subr.mxu0 %v1594
        %1741 = vmatpush1.msra.mxu0 %v1593
        %1742 = vmatprep.subr.mxu0 %v1596
        %1743 = vmatpush1.msra.mxu0 %v1595
        %1744 = vmatprep.subr.mxu0 %v1598
        %1745 = vmatpush1.msra.mxu0 %v1597
        %1746 = vmatprep.subr.mxu0 %v1600
        %1747 = vmatpush1.msra.mxu0 %v1599
        %1748 = vmatprep.subr.mxu0 %v1602
        %1749 = vmatpush1.msra.mxu0 %v1601
        %1750 = vmatprep.subr.mxu0 %v1604
        %1751 = vmatpush1.msra.mxu0 %v1603
        %1752 = vmatprep.subr.mxu0 %v1606
        %1753 = vmatpush1.msra.mxu0 %v1605
        %1754 = vmatprep.subr.mxu0 %v1608
        %1755 = vmatpush1.msra.mxu0 %v1607
        %1756 = vmatprep.subr.mxu0 %v1610
        %1757 = vmatpush1.msra.mxu0 %v1609
        %1758 = vmatprep.subr.mxu0 %v1612
        %1759 = vmatpush1.msra.mxu0 %v1611
        %1760 = vmatprep.subr.mxu0 %v1614
        %1761 = vmatpush1.msra.mxu0 %v1613
        %1762 = vmatprep.subr.mxu0 %v1616
        %1763 = vmatpush1.msra.mxu0 %v1615
        %1764 = vmatprep.subr.mxu0 %v1618
        %1765 = vmatpush1.msra.mxu0 %v1617
        %1766 = vmatprep.mubr.f32.mxu0 %v1490
        %1767 = vmatmul.mubr.f32.gmra.mrb[0].mxu0 %v1489
        %v1768 = vpop.f32.mrb[0].mxu0
        %v1769 = vadd.f32 %v1698, %v1768
        %v1770 = vpop.f32.mrb[0].mxu0
        %v1771 = vadd.f32 %v1700, %v1770
        %1772 = vdwg.mxu0
        %v1773 = vmax.f32 %v1769, 0.0
        %v1774 = vmax.f32 %v1771, 0.0
        %v1775 = vld [vmem:[#allocation7] sm:$0xff]
        %v1776 = vld [vmem:[#allocation7 + $0x8] sm:$0xff]
        %v1777 = vld [vmem:[#allocation7 + $0x10] sm:$0xff]
        %v1778 = vld [vmem:[#allocation7 + $0x18] sm:$0xff]
        %v1779 = vld [vmem:[#allocation7 + $0x20] sm:$0xff]
        %v1780 = vld [vmem:[#allocation7 + $0x28] sm:$0xff]
        %v1781 = vld [vmem:[#allocation7 + $0x30] sm:$0xff]
        %v1782 = vld [vmem:[#allocation7 + $0x38] sm:$0xff]
        %v1783 = vld [vmem:[#allocation7 + $0x40] sm:$0xff]
        %v1784 = vld [vmem:[#allocation7 + $0x48] sm:$0xff]
        %v1785 = vld [vmem:[#allocation7 + $0x50] sm:$0xff]
        %v1786 = vld [vmem:[#allocation7 + $0x58] sm:$0xff]
        %v1787 = vld [vmem:[#allocation7 + $0x60] sm:$0xff]
        %v1788 = vld [vmem:[#allocation7 + $0x68] sm:$0xff]
        %v1789 = vld [vmem:[#allocation7 + $0x70] sm:$0xff]
        %v1790 = vld [vmem:[#allocation7 + $0x78] sm:$0xff]
        %v1791 = vld [vmem:[#allocation7 + $0x80] sm:$0xff]
        %v1792 = vld [vmem:[#allocation7 + $0x88] sm:$0xff]
        %v1793 = vld [vmem:[#allocation7 + $0x90] sm:$0xff]
        %v1794 = vld [vmem:[#allocation7 + $0x98] sm:$0xff]
        %v1795 = vld [vmem:[#allocation7 + $0xa0] sm:$0xff]
        %v1796 = vld [vmem:[#allocation7 + $0xa8] sm:$0xff]
        %v1797 = vld [vmem:[#allocation7 + $0xb0] sm:$0xff]
        %v1798 = vld [vmem:[#allocation7 + $0xb8] sm:$0xff]
        %v1799 = vld [vmem:[#allocation7 + $0xc0] sm:$0xff]
        %v1800 = vld [vmem:[#allocation7 + $0xc8] sm:$0xff]
        %v1801 = vld [vmem:[#allocation7 + $0xd0] sm:$0xff]
        %v1802 = vld [vmem:[#allocation7 + $0xd8] sm:$0xff]
        %v1803 = vld [vmem:[#allocation7 + $0xe0] sm:$0xff]
        %v1804 = vld [vmem:[#allocation7 + $0xe8] sm:$0xff]
        %v1805 = vld [vmem:[#allocation7 + $0xf0] sm:$0xff]
        %v1806 = vld [vmem:[#allocation7 + $0xf8] sm:$0xff]
        %v1807 = vld [vmem:[%s17] sm:$0x1]
        %v1809 = vlaneseq
        %v1810 = vshrl.u32 %v1809, 7
        %v1811 = vsub.s32 0, %v1810
        %v1812 = vrot.slane %v1807, %v1811
        %1814 = vmatprep.subr.mxu0 0.0
        %1815 = vmatpush1.msra.mxu0 %v1775
        %1816 = vmatprep.subr.mxu0 0.0
        %1817 = vmatpush1.msra.mxu0 %v1776
        %1818 = vmatprep.subr.mxu0 0.0
        %1819 = vmatpush1.msra.mxu0 %v1777
        %1820 = vmatprep.subr.mxu0 0.0
        %1821 = vmatpush1.msra.mxu0 %v1778
        %1822 = vmatprep.subr.mxu0 0.0
        %1823 = vmatpush1.msra.mxu0 %v1779
        %1824 = vmatprep.subr.mxu0 0.0
        %1825 = vmatpush1.msra.mxu0 %v1780
        %1826 = vmatprep.subr.mxu0 0.0
        %1827 = vmatpush1.msra.mxu0 %v1781
        %1828 = vmatprep.subr.mxu0 0.0
        %1829 = vmatpush1.msra.mxu0 %v1782
        %1830 = vmatprep.subr.mxu0 0.0
        %1831 = vmatpush1.msra.mxu0 %v1783
        %1832 = vmatprep.subr.mxu0 0.0
        %1833 = vmatpush1.msra.mxu0 %v1784
        %1834 = vmatprep.subr.mxu0 0.0
        %1835 = vmatpush1.msra.mxu0 %v1785
        %1836 = vmatprep.subr.mxu0 0.0
        %1837 = vmatpush1.msra.mxu0 %v1786
        %1838 = vmatprep.subr.mxu0 0.0
        %1839 = vmatpush1.msra.mxu0 %v1787
        %1840 = vmatprep.subr.mxu0 0.0
        %1841 = vmatpush1.msra.mxu0 %v1788
        %1842 = vmatprep.subr.mxu0 0.0
        %1843 = vmatpush1.msra.mxu0 %v1789
        %1844 = vmatprep.subr.mxu0 0.0
        %1845 = vmatpush1.msra.mxu0 %v1790
        %1846 = vmatprep.subr.mxu0 0.0
        %1847 = vmatpush1.msra.mxu0 %v1791
        %1848 = vmatprep.subr.mxu0 0.0
        %1849 = vmatpush1.msra.mxu0 %v1792
        %1850 = vmatprep.subr.mxu0 0.0
        %1851 = vmatpush1.msra.mxu0 %v1793
        %1852 = vmatprep.subr.mxu0 0.0
        %1853 = vmatpush1.msra.mxu0 %v1794
        %1854 = vmatprep.subr.mxu0 0.0
        %1855 = vmatpush1.msra.mxu0 %v1795
        %1856 = vmatprep.subr.mxu0 0.0
        %1857 = vmatpush1.msra.mxu0 %v1796
        %1858 = vmatprep.subr.mxu0 0.0
        %1859 = vmatpush1.msra.mxu0 %v1797
        %1860 = vmatprep.subr.mxu0 0.0
        %1861 = vmatpush1.msra.mxu0 %v1798
        %1862 = vmatprep.subr.mxu0 0.0
        %1863 = vmatpush1.msra.mxu0 %v1799
        %1864 = vmatprep.subr.mxu0 0.0
        %1865 = vmatpush1.msra.mxu0 %v1800
        %1866 = vmatprep.subr.mxu0 0.0
        %1867 = vmatpush1.msra.mxu0 %v1801
        %1868 = vmatprep.subr.mxu0 0.0
        %1869 = vmatpush1.msra.mxu0 %v1802
        %1870 = vmatprep.subr.mxu0 0.0
        %1871 = vmatpush1.msra.mxu0 %v1803
        %1872 = vmatprep.subr.mxu0 0.0
        %1873 = vmatpush1.msra.mxu0 %v1804
        %1874 = vmatprep.subr.mxu0 0.0
        %1875 = vmatpush1.msra.mxu0 %v1805
        %1876 = vmatprep.subr.mxu0 0.0
        %1877 = vmatpush1.msra.mxu0 %v1806
        %1878 = vmatprep.mubr.f32.mxu0 %v1774
        %1879 = vmatmul.mubr.f32.gmra.mrb[0].mxu0 %v1773
        %v1880 = vpop.f32.mrb[0].mxu0
        %v1881 = vadd.f32 %v1812, %v1880
        %v1882 = vpop.f32.mrb[0].mxu0
        %1883 = vdwg.mxu0
        %v1884 = vld [vmem:[%s1253] sm:$0xff]
        %v1885 = vld [vmem:[#allocation8] sm:$0xff]
        %v1886 = vld [vmem:[#allocation8 + $0x8] sm:$0xff]
        %v1887 = vld [vmem:[#allocation8 + $0x10] sm:$0xff]
        %v1888 = vld [vmem:[#allocation8 + $0x18] sm:$0xff]
        %v1889 = vld [vmem:[#allocation8 + $0x20] sm:$0xff]
        %v1890 = vld [vmem:[#allocation8 + $0x28] sm:$0xff]
        %v1891 = vld [vmem:[#allocation8 + $0x30] sm:$0xff]
        %v1892 = vld [vmem:[#allocation8 + $0x38] sm:$0xff]
        %v1893 = vld [vmem:[#allocation8 + $0x40] sm:$0xff]
        %v1894 = vld [vmem:[#allocation8 + $0x48] sm:$0xff]
        %v1895 = vld [vmem:[#allocation8 + $0x50] sm:$0xff]
        %v1896 = vld [vmem:[#allocation8 + $0x58] sm:$0xff]
        %v1897 = vld [vmem:[#allocation8 + $0x60] sm:$0xff]
        %v1898 = vld [vmem:[#allocation8 + $0x68] sm:$0xff]
        %v1899 = vld [vmem:[#allocation8 + $0x70] sm:$0xff]
        %v1900 = vld [vmem:[#allocation8 + $0x78] sm:$0xff]
        %v1901 = vld [vmem:[#allocation8 + $0x80] sm:$0xff]
        %v1902 = vld [vmem:[#allocation8 + $0x88] sm:$0xff]
        %v1903 = vld [vmem:[#allocation8 + $0x90] sm:$0xff]
        %v1904 = vld [vmem:[#allocation8 + $0x98] sm:$0xff]
        %v1905 = vld [vmem:[#allocation8 + $0xa0] sm:$0xff]
        %v1906 = vld [vmem:[#allocation8 + $0xa8] sm:$0xff]
        %v1907 = vld [vmem:[#allocation8 + $0xb0] sm:$0xff]
        %v1908 = vld [vmem:[#allocation8 + $0xb8] sm:$0xff]
        %v1909 = vld [vmem:[#allocation8 + $0xc0] sm:$0xff]
        %v1910 = vld [vmem:[#allocation8 + $0xc8] sm:$0xff]
        %v1911 = vld [vmem:[#allocation8 + $0xd0] sm:$0xff]
        %v1912 = vld [vmem:[#allocation8 + $0xd8] sm:$0xff]
        %v1913 = vld [vmem:[#allocation8 + $0xe0] sm:$0xff]
        %v1914 = vld [vmem:[#allocation8 + $0xe8] sm:$0xff]
        %v1915 = vld [vmem:[#allocation8 + $0xf0] sm:$0xff]
        %v1916 = vld [vmem:[#allocation8 + $0xf8] sm:$0xff]
        %v1917 = vld [vmem:[#allocation8 + $0x100] sm:$0xff]
        %v1918 = vld [vmem:[#allocation8 + $0x108] sm:$0xff]
        %v1919 = vld [vmem:[#allocation8 + $0x110] sm:$0xff]
        %v1920 = vld [vmem:[#allocation8 + $0x118] sm:$0xff]
        %v1921 = vld [vmem:[#allocation8 + $0x120] sm:$0xff]
        %v1922 = vld [vmem:[#allocation8 + $0x128] sm:$0xff]
        %v1923 = vld [vmem:[#allocation8 + $0x130] sm:$0xff]
        %v1924 = vld [vmem:[#allocation8 + $0x138] sm:$0xff]
        %v1925 = vld [vmem:[#allocation8 + $0x140] sm:$0xff]
        %v1926 = vld [vmem:[#allocation8 + $0x148] sm:$0xff]
        %v1927 = vld [vmem:[#allocation8 + $0x150] sm:$0xff]
        %v1928 = vld [vmem:[#allocation8 + $0x158] sm:$0xff]
        %v1929 = vld [vmem:[#allocation8 + $0x160] sm:$0xff]
        %v1930 = vld [vmem:[#allocation8 + $0x168] sm:$0xff]
        %v1931 = vld [vmem:[#allocation8 + $0x170] sm:$0xff]
        %v1932 = vld [vmem:[#allocation8 + $0x178] sm:$0xff]
        %v1933 = vld [vmem:[#allocation8 + $0x180] sm:$0xff]
        %v1934 = vld [vmem:[#allocation8 + $0x188] sm:$0xff]
        %v1935 = vld [vmem:[#allocation8 + $0x190] sm:$0xff]
        %v1936 = vld [vmem:[#allocation8 + $0x198] sm:$0xff]
        %v1937 = vld [vmem:[#allocation8 + $0x1a0] sm:$0xff]
        %v1938 = vld [vmem:[#allocation8 + $0x1a8] sm:$0xff]
        %v1939 = vld [vmem:[#allocation8 + $0x1b0] sm:$0xff]
        %v1940 = vld [vmem:[#allocation8 + $0x1b8] sm:$0xff]
        %v1941 = vld [vmem:[#allocation8 + $0x1c0] sm:$0xff]
        %v1942 = vld [vmem:[#allocation8 + $0x1c8] sm:$0xff]
        %v1943 = vld [vmem:[#allocation8 + $0x1d0] sm:$0xff]
        %v1944 = vld [vmem:[#allocation8 + $0x1d8] sm:$0xff]
        %v1945 = vld [vmem:[#allocation8 + $0x1e0] sm:$0xff]
        %v1946 = vld [vmem:[#allocation8 + $0x1e8] sm:$0xff]
        %v1947 = vld [vmem:[#allocation8 + $0x1f0] sm:$0xff]
        %v1948 = vld [vmem:[#allocation8 + $0x1f8] sm:$0xff]
        %v1949 = vld [vmem:[%s21] sm:$0xf]
        %v1951 = vlaneseq
        %v1952 = vshrl.u32 %v1951, 7
        %v1953 = vsub.s32 0, %v1952
        %v1954 = vrot.slane %v1949, %v1953
        %v1955 = vlaneseq
        %v1956 = vshrl.u32 %v1955, 7
        %v1957 = vsub.s32 1, %v1956
        %v1958 = vrot.slane %v1949, %v1957
        %v1959 = vlaneseq
        %v1960 = vshrl.u32 %v1959, 7
        %v1961 = vsub.s32 2, %v1960
        %v1962 = vrot.slane %v1949, %v1961
        %v1963 = vlaneseq
        %v1964 = vshrl.u32 %v1963, 7
        %v1965 = vsub.s32 3, %v1964
        %v1966 = vrot.slane %v1949, %v1965
        %1971 = vmatprep.subr.mxu0 %v1886
        %1972 = vmatpush1.msra.mxu0 %v1885
        %1973 = vmatprep.subr.mxu0 %v1890
        %1974 = vmatpush1.msra.mxu0 %v1889
        %1975 = vmatprep.subr.mxu0 %v1894
        %1976 = vmatpush1.msra.mxu0 %v1893
        %1977 = vmatprep.subr.mxu0 %v1898
        %1978 = vmatpush1.msra.mxu0 %v1897
        %1979 = vmatprep.subr.mxu0 %v1902
        %1980 = vmatpush1.msra.mxu0 %v1901
        %1981 = vmatprep.subr.mxu0 %v1906
        %1982 = vmatpush1.msra.mxu0 %v1905
        %1983 = vmatprep.subr.mxu0 %v1910
        %1984 = vmatpush1.msra.mxu0 %v1909
        %1985 = vmatprep.subr.mxu0 %v1914
        %1986 = vmatpush1.msra.mxu0 %v1913
        %1987 = vmatprep.subr.mxu0 %v1918
        %1988 = vmatpush1.msra.mxu0 %v1917
        %1989 = vmatprep.subr.mxu0 %v1922
        %1990 = vmatpush1.msra.mxu0 %v1921
        %1991 = vmatprep.subr.mxu0 %v1926
        %1992 = vmatpush1.msra.mxu0 %v1925
        %1993 = vmatprep.subr.mxu0 %v1930
        %1994 = vmatpush1.msra.mxu0 %v1929
        %1995 = vmatprep.subr.mxu0 %v1934
        %1996 = vmatpush1.msra.mxu0 %v1933
        %1997 = vmatprep.subr.mxu0 %v1938
        %1998 = vmatpush1.msra.mxu0 %v1937
        %1999 = vmatprep.subr.mxu0 %v1942
        %2000 = vmatpush1.msra.mxu0 %v1941
        %2001 = vmatprep.subr.mxu0 %v1946
        %2002 = vmatpush1.msra.mxu0 %v1945
        %2003 = vmatprep.subr.mxu0 0.0
        %2004 = vmatpush1.msra.mxu0 0.0
        %2005 = vmatprep.subr.mxu0 0.0
        %2006 = vmatpush1.msra.mxu0 0.0
        %2007 = vmatprep.subr.mxu0 0.0
        %2008 = vmatpush1.msra.mxu0 0.0
        %2009 = vmatprep.subr.mxu0 0.0
        %2010 = vmatpush1.msra.mxu0 0.0
        %2011 = vmatprep.subr.mxu0 0.0
        %2012 = vmatpush1.msra.mxu0 0.0
        %2013 = vmatprep.subr.mxu0 0.0
        %2014 = vmatpush1.msra.mxu0 0.0
        %2015 = vmatprep.subr.mxu0 0.0
        %2016 = vmatpush1.msra.mxu0 0.0
        %2017 = vmatprep.subr.mxu0 0.0
        %2018 = vmatpush1.msra.mxu0 0.0
        %2019 = vmatprep.subr.mxu0 0.0
        %2020 = vmatpush1.msra.mxu0 0.0
        %2021 = vmatprep.subr.mxu0 0.0
        %2022 = vmatpush1.msra.mxu0 0.0
        %2023 = vmatprep.subr.mxu0 0.0
        %2024 = vmatpush1.msra.mxu0 0.0
        %2025 = vmatprep.subr.mxu0 0.0
        %2026 = vmatpush1.msra.mxu0 0.0
        %2027 = vmatprep.subr.mxu0 0.0
        %2028 = vmatpush1.msra.mxu0 0.0
        %2029 = vmatprep.subr.mxu0 0.0
        %2030 = vmatpush1.msra.mxu0 0.0
        %2031 = vmatprep.subr.mxu0 0.0
        %2032 = vmatpush1.msra.mxu0 0.0
        %2033 = vmatprep.subr.mxu0 0.0
        %2034 = vmatpush1.msra.mxu0 0.0
        %2035 = vmatprep.mubr.f32.mxu0 0.0
        %2036 = vmatmul.mubr.f32.gmra.mrb[0].mxu0 %v1884
        %v2037 = vpop.f32.mrb[0].mxu0
        %v2038 = vadd.f32 %v1954, %v2037
        %v2039 = vpop.f32.mrb[0].mxu0
        %v2040 = vadd.f32 %v1958, %v2039
        %2041 = vdwg.mxu0
        %2042 = vmatprep.subr.mxu0 %v1888
        %2043 = vmatpush1.msra.mxu0 %v1887
        %2044 = vmatprep.subr.mxu0 %v1892
        %2045 = vmatpush1.msra.mxu0 %v1891
        %2046 = vmatprep.subr.mxu0 %v1896
        %2047 = vmatpush1.msra.mxu0 %v1895
        %2048 = vmatprep.subr.mxu0 %v1900
        %2049 = vmatpush1.msra.mxu0 %v1899
        %2050 = vmatprep.subr.mxu0 %v1904
        %2051 = vmatpush1.msra.mxu0 %v1903
        %2052 = vmatprep.subr.mxu0 %v1908
        %2053 = vmatpush1.msra.mxu0 %v1907
        %2054 = vmatprep.subr.mxu0 %v1912
        %2055 = vmatpush1.msra.mxu0 %v1911
        %2056 = vmatprep.subr.mxu0 %v1916
        %2057 = vmatpush1.msra.mxu0 %v1915
        %2058 = vmatprep.subr.mxu0 %v1920
        %2059 = vmatpush1.msra.mxu0 %v1919
        %2060 = vmatprep.subr.mxu0 %v1924
        %2061 = vmatpush1.msra.mxu0 %v1923
        %2062 = vmatprep.subr.mxu0 %v1928
        %2063 = vmatpush1.msra.mxu0 %v1927
        %2064 = vmatprep.subr.mxu0 %v1932
        %2065 = vmatpush1.msra.mxu0 %v1931
        %2066 = vmatprep.subr.mxu0 %v1936
        %2067 = vmatpush1.msra.mxu0 %v1935
        %2068 = vmatprep.subr.mxu0 %v1940
        %2069 = vmatpush1.msra.mxu0 %v1939
        %2070 = vmatprep.subr.mxu0 %v1944
        %2071 = vmatpush1.msra.mxu0 %v1943
        %2072 = vmatprep.subr.mxu0 %v1948
        %2073 = vmatpush1.msra.mxu0 %v1947
        %2074 = vmatprep.subr.mxu0 0.0
        %2075 = vmatpush1.msra.mxu0 0.0
        %2076 = vmatprep.subr.mxu0 0.0
        %2077 = vmatpush1.msra.mxu0 0.0
        %2078 = vmatprep.subr.mxu0 0.0
        %2079 = vmatpush1.msra.mxu0 0.0
        %2080 = vmatprep.subr.mxu0 0.0
        %2081 = vmatpush1.msra.mxu0 0.0
        %2082 = vmatprep.subr.mxu0 0.0
        %2083 = vmatpush1.msra.mxu0 0.0
        %2084 = vmatprep.subr.mxu0 0.0
        %2085 = vmatpush1.msra.mxu0 0.0
        %2086 = vmatprep.subr.mxu0 0.0
        %2087 = vmatpush1.msra.mxu0 0.0
        %2088 = vmatprep.subr.mxu0 0.0
        %2089 = vmatpush1.msra.mxu0 0.0
        %2090 = vmatprep.subr.mxu0 0.0
        %2091 = vmatpush1.msra.mxu0 0.0
        %2092 = vmatprep.subr.mxu0 0.0
        %2093 = vmatpush1.msra.mxu0 0.0
        %2094 = vmatprep.subr.mxu0 0.0
        %2095 = vmatpush1.msra.mxu0 0.0
        %2096 = vmatprep.subr.mxu0 0.0
        %2097 = vmatpush1.msra.mxu0 0.0
        %2098 = vmatprep.subr.mxu0 0.0
        %2099 = vmatpush1.msra.mxu0 0.0
        %2100 = vmatprep.subr.mxu0 0.0
        %2101 = vmatpush1.msra.mxu0 0.0
        %2102 = vmatprep.subr.mxu0 0.0
        %2103 = vmatpush1.msra.mxu0 0.0
        %2104 = vmatprep.subr.mxu0 0.0
        %2105 = vmatpush1.msra.mxu0 0.0
        %2106 = vmatprep.mubr.f32.mxu0 0.0
        %2107 = vmatmul.mubr.f32.gmra.mrb[0].mxu0 %v1884
        %v2108 = vpop.f32.mrb[0].mxu0
        %v2109 = vadd.f32 %v1962, %v2108
        %v2110 = vpop.f32.mrb[0].mxu0
        %v2111 = vadd.f32 %v1966, %v2110
        %2112 = vdwg.mxu0
        %v2113 = vmax.f32 %v2038, 0.0
        %v2114 = vmax.f32 %v2040, 0.0
        %v2115 = vmax.f32 %v2109, 0.0
        %v2116 = vmax.f32 %v2111, 0.0
        %v2117 = vld [vmem:[#allocation10] sm:$0xff]
        %v2118 = vld [vmem:[#allocation10 + $0x8] sm:$0xff]
        %v2119 = vld [vmem:[#allocation10 + $0x10] sm:$0xff]
        %v2120 = vld [vmem:[#allocation10 + $0x18] sm:$0xff]
        %v2121 = vld [vmem:[#allocation10 + $0x20] sm:$0xff]
        %v2122 = vld [vmem:[#allocation10 + $0x28] sm:$0xff]
        %v2123 = vld [vmem:[#allocation10 + $0x30] sm:$0xff]
        %v2124 = vld [vmem:[#allocation10 + $0x38] sm:$0xff]
        %v2125 = vld [vmem:[#allocation10 + $0x40] sm:$0xff]
        %v2126 = vld [vmem:[#allocation10 + $0x48] sm:$0xff]
        %v2127 = vld [vmem:[#allocation10 + $0x50] sm:$0xff]
        %v2128 = vld [vmem:[#allocation10 + $0x58] sm:$0xff]
        %v2129 = vld [vmem:[#allocation10 + $0x60] sm:$0xff]
        %v2130 = vld [vmem:[#allocation10 + $0x68] sm:$0xff]
        %v2131 = vld [vmem:[#allocation10 + $0x70] sm:$0xff]
        %v2132 = vld [vmem:[#allocation10 + $0x78] sm:$0xff]
        %v2133 = vld [vmem:[#allocation10 + $0x80] sm:$0xff]
        %v2134 = vld [vmem:[#allocation10 + $0x88] sm:$0xff]
        %v2135 = vld [vmem:[#allocation10 + $0x90] sm:$0xff]
        %v2136 = vld [vmem:[#allocation10 + $0x98] sm:$0xff]
        %v2137 = vld [vmem:[#allocation10 + $0xa0] sm:$0xff]
        %v2138 = vld [vmem:[#allocation10 + $0xa8] sm:$0xff]
        %v2139 = vld [vmem:[#allocation10 + $0xb0] sm:$0xff]
        %v2140 = vld [vmem:[#allocation10 + $0xb8] sm:$0xff]
        %v2141 = vld [vmem:[#allocation10 + $0xc0] sm:$0xff]
        %v2142 = vld [vmem:[#allocation10 + $0xc8] sm:$0xff]
        %v2143 = vld [vmem:[#allocation10 + $0xd0] sm:$0xff]
        %v2144 = vld [vmem:[#allocation10 + $0xd8] sm:$0xff]
        %v2145 = vld [vmem:[#allocation10 + $0xe0] sm:$0xff]
        %v2146 = vld [vmem:[#allocation10 + $0xe8] sm:$0xff]
        %v2147 = vld [vmem:[#allocation10 + $0xf0] sm:$0xff]
        %v2148 = vld [vmem:[#allocation10 + $0xf8] sm:$0xff]
        %v2149 = vld [vmem:[#allocation10 + $0x100] sm:$0xff]
        %v2150 = vld [vmem:[#allocation10 + $0x108] sm:$0xff]
        %v2151 = vld [vmem:[#allocation10 + $0x110] sm:$0xff]
        %v2152 = vld [vmem:[#allocation10 + $0x118] sm:$0xff]
        %v2153 = vld [vmem:[#allocation10 + $0x120] sm:$0xff]
        %v2154 = vld [vmem:[#allocation10 + $0x128] sm:$0xff]
        %v2155 = vld [vmem:[#allocation10 + $0x130] sm:$0xff]
        %v2156 = vld [vmem:[#allocation10 + $0x138] sm:$0xff]
        %v2157 = vld [vmem:[#allocation10 + $0x140] sm:$0xff]
        %v2158 = vld [vmem:[#allocation10 + $0x148] sm:$0xff]
        %v2159 = vld [vmem:[#allocation10 + $0x150] sm:$0xff]
        %v2160 = vld [vmem:[#allocation10 + $0x158] sm:$0xff]
        %v2161 = vld [vmem:[#allocation10 + $0x160] sm:$0xff]
        %v2162 = vld [vmem:[#allocation10 + $0x168] sm:$0xff]
        %v2163 = vld [vmem:[#allocation10 + $0x170] sm:$0xff]
        %v2164 = vld [vmem:[#allocation10 + $0x178] sm:$0xff]
        %v2165 = vld [vmem:[#allocation10 + $0x180] sm:$0xff]
        %v2166 = vld [vmem:[#allocation10 + $0x188] sm:$0xff]
        %v2167 = vld [vmem:[#allocation10 + $0x190] sm:$0xff]
        %v2168 = vld [vmem:[#allocation10 + $0x198] sm:$0xff]
        %v2169 = vld [vmem:[#allocation10 + $0x1a0] sm:$0xff]
        %v2170 = vld [vmem:[#allocation10 + $0x1a8] sm:$0xff]
        %v2171 = vld [vmem:[#allocation10 + $0x1b0] sm:$0xff]
        %v2172 = vld [vmem:[#allocation10 + $0x1b8] sm:$0xff]
        %v2173 = vld [vmem:[#allocation10 + $0x1c0] sm:$0xff]
        %v2174 = vld [vmem:[#allocation10 + $0x1c8] sm:$0xff]
        %v2175 = vld [vmem:[#allocation10 + $0x1d0] sm:$0xff]
        %v2176 = vld [vmem:[#allocation10 + $0x1d8] sm:$0xff]
        %v2177 = vld [vmem:[#allocation10 + $0x1e0] sm:$0xff]
        %v2178 = vld [vmem:[#allocation10 + $0x1e8] sm:$0xff]
        %v2179 = vld [vmem:[#allocation10 + $0x1f0] sm:$0xff]
        %v2180 = vld [vmem:[#allocation10 + $0x1f8] sm:$0xff]
        %v2181 = vld [vmem:[#allocation10 + $0x200] sm:$0xff]
        %v2182 = vld [vmem:[#allocation10 + $0x208] sm:$0xff]
        %v2183 = vld [vmem:[#allocation10 + $0x210] sm:$0xff]
        %v2184 = vld [vmem:[#allocation10 + $0x218] sm:$0xff]
        %v2185 = vld [vmem:[#allocation10 + $0x220] sm:$0xff]
        %v2186 = vld [vmem:[#allocation10 + $0x228] sm:$0xff]
        %v2187 = vld [vmem:[#allocation10 + $0x230] sm:$0xff]
        %v2188 = vld [vmem:[#allocation10 + $0x238] sm:$0xff]
        %v2189 = vld [vmem:[#allocation10 + $0x240] sm:$0xff]
        %v2190 = vld [vmem:[#allocation10 + $0x248] sm:$0xff]
        %v2191 = vld [vmem:[#allocation10 + $0x250] sm:$0xff]
        %v2192 = vld [vmem:[#allocation10 + $0x258] sm:$0xff]
        %v2193 = vld [vmem:[#allocation10 + $0x260] sm:$0xff]
        %v2194 = vld [vmem:[#allocation10 + $0x268] sm:$0xff]
        %v2195 = vld [vmem:[#allocation10 + $0x270] sm:$0xff]
        %v2196 = vld [vmem:[#allocation10 + $0x278] sm:$0xff]
        %v2197 = vld [vmem:[#allocation10 + $0x280] sm:$0xff]
        %v2198 = vld [vmem:[#allocation10 + $0x288] sm:$0xff]
        %v2199 = vld [vmem:[#allocation10 + $0x290] sm:$0xff]
        %v2200 = vld [vmem:[#allocation10 + $0x298] sm:$0xff]
        %v2201 = vld [vmem:[#allocation10 + $0x2a0] sm:$0xff]
        %v2202 = vld [vmem:[#allocation10 + $0x2a8] sm:$0xff]
        %v2203 = vld [vmem:[#allocation10 + $0x2b0] sm:$0xff]
        %v2204 = vld [vmem:[#allocation10 + $0x2b8] sm:$0xff]
        %v2205 = vld [vmem:[#allocation10 + $0x2c0] sm:$0xff]
        %v2206 = vld [vmem:[#allocation10 + $0x2c8] sm:$0xff]
        %v2207 = vld [vmem:[#allocation10 + $0x2d0] sm:$0xff]
        %v2208 = vld [vmem:[#allocation10 + $0x2d8] sm:$0xff]
        %v2209 = vld [vmem:[#allocation10 + $0x2e0] sm:$0xff]
        %v2210 = vld [vmem:[#allocation10 + $0x2e8] sm:$0xff]
        %v2211 = vld [vmem:[#allocation10 + $0x2f0] sm:$0xff]
        %v2212 = vld [vmem:[#allocation10 + $0x2f8] sm:$0xff]
        %v2213 = vld [vmem:[#allocation10 + $0x300] sm:$0xff]
        %v2214 = vld [vmem:[#allocation10 + $0x308] sm:$0xff]
        %v2215 = vld [vmem:[#allocation10 + $0x310] sm:$0xff]
        %v2216 = vld [vmem:[#allocation10 + $0x318] sm:$0xff]
        %v2217 = vld [vmem:[#allocation10 + $0x320] sm:$0xff]
        %v2218 = vld [vmem:[#allocation10 + $0x328] sm:$0xff]
        %v2219 = vld [vmem:[#allocation10 + $0x330] sm:$0xff]
        %v2220 = vld [vmem:[#allocation10 + $0x338] sm:$0xff]
        %v2221 = vld [vmem:[#allocation10 + $0x340] sm:$0xff]
        %v2222 = vld [vmem:[#allocation10 + $0x348] sm:$0xff]
        %v2223 = vld [vmem:[#allocation10 + $0x350] sm:$0xff]
        %v2224 = vld [vmem:[#allocation10 + $0x358] sm:$0xff]
        %v2225 = vld [vmem:[#allocation10 + $0x360] sm:$0xff]
        %v2226 = vld [vmem:[#allocation10 + $0x368] sm:$0xff]
        %v2227 = vld [vmem:[#allocation10 + $0x370] sm:$0xff]
        %v2228 = vld [vmem:[#allocation10 + $0x378] sm:$0xff]
        %v2229 = vld [vmem:[#allocation10 + $0x380] sm:$0xff]
        %v2230 = vld [vmem:[#allocation10 + $0x388] sm:$0xff]
        %v2231 = vld [vmem:[#allocation10 + $0x390] sm:$0xff]
        %v2232 = vld [vmem:[#allocation10 + $0x398] sm:$0xff]
        %v2233 = vld [vmem:[#allocation10 + $0x3a0] sm:$0xff]
        %v2234 = vld [vmem:[#allocation10 + $0x3a8] sm:$0xff]
        %v2235 = vld [vmem:[#allocation10 + $0x3b0] sm:$0xff]
        %v2236 = vld [vmem:[#allocation10 + $0x3b8] sm:$0xff]
        %v2237 = vld [vmem:[#allocation10 + $0x3c0] sm:$0xff]
        %v2238 = vld [vmem:[#allocation10 + $0x3c8] sm:$0xff]
        %v2239 = vld [vmem:[#allocation10 + $0x3d0] sm:$0xff]
        %v2240 = vld [vmem:[#allocation10 + $0x3d8] sm:$0xff]
        %v2241 = vld [vmem:[#allocation10 + $0x3e0] sm:$0xff]
        %v2242 = vld [vmem:[#allocation10 + $0x3e8] sm:$0xff]
        %v2243 = vld [vmem:[#allocation10 + $0x3f0] sm:$0xff]
        %v2244 = vld [vmem:[#allocation10 + $0x3f8] sm:$0xff]
        %v2245 = vld [vmem:[%s25] sm:$0x3]
        %v2247 = vlaneseq
        %v2248 = vshrl.u32 %v2247, 7
        %v2249 = vsub.s32 0, %v2248
        %v2250 = vrot.slane %v2245, %v2249
        %v2251 = vlaneseq
        %v2252 = vshrl.u32 %v2251, 7
        %v2253 = vsub.s32 1, %v2252
        %v2254 = vrot.slane %v2245, %v2253
        %2257 = vmatprep.subr.mxu0 %v2118
        %2258 = vmatpush1.msra.mxu0 %v2117
        %2259 = vmatprep.subr.mxu0 %v2120
        %2260 = vmatpush1.msra.mxu0 %v2119
        %2261 = vmatprep.subr.mxu0 %v2122
        %2262 = vmatpush1.msra.mxu0 %v2121
        %2263 = vmatprep.subr.mxu0 %v2124
        %2264 = vmatpush1.msra.mxu0 %v2123
        %2265 = vmatprep.subr.mxu0 %v2126
        %2266 = vmatpush1.msra.mxu0 %v2125
        %2267 = vmatprep.subr.mxu0 %v2128
        %2268 = vmatpush1.msra.mxu0 %v2127
        %2269 = vmatprep.subr.mxu0 %v2130
        %2270 = vmatpush1.msra.mxu0 %v2129
        %2271 = vmatprep.subr.mxu0 %v2132
        %2272 = vmatpush1.msra.mxu0 %v2131
        %2273 = vmatprep.subr.mxu0 %v2134
        %2274 = vmatpush1.msra.mxu0 %v2133
        %2275 = vmatprep.subr.mxu0 %v2136
        %2276 = vmatpush1.msra.mxu0 %v2135
        %2277 = vmatprep.subr.mxu0 %v2138
        %2278 = vmatpush1.msra.mxu0 %v2137
        %2279 = vmatprep.subr.mxu0 %v2140
        %2280 = vmatpush1.msra.mxu0 %v2139
        %2281 = vmatprep.subr.mxu0 %v2142
        %2282 = vmatpush1.msra.mxu0 %v2141
        %2283 = vmatprep.subr.mxu0 %v2144
        %2284 = vmatpush1.msra.mxu0 %v2143
        %2285 = vmatprep.subr.mxu0 %v2146
        %2286 = vmatpush1.msra.mxu0 %v2145
        %2287 = vmatprep.subr.mxu0 %v2148
        %2288 = vmatpush1.msra.mxu0 %v2147
        %2289 = vmatprep.subr.mxu0 %v2150
        %2290 = vmatpush1.msra.mxu0 %v2149
        %2291 = vmatprep.subr.mxu0 %v2152
        %2292 = vmatpush1.msra.mxu0 %v2151
        %2293 = vmatprep.subr.mxu0 %v2154
        %2294 = vmatpush1.msra.mxu0 %v2153
        %2295 = vmatprep.subr.mxu0 %v2156
        %2296 = vmatpush1.msra.mxu0 %v2155
        %2297 = vmatprep.subr.mxu0 %v2158
        %2298 = vmatpush1.msra.mxu0 %v2157
        %2299 = vmatprep.subr.mxu0 %v2160
        %2300 = vmatpush1.msra.mxu0 %v2159
        %2301 = vmatprep.subr.mxu0 %v2162
        %2302 = vmatpush1.msra.mxu0 %v2161
        %2303 = vmatprep.subr.mxu0 %v2164
        %2304 = vmatpush1.msra.mxu0 %v2163
        %2305 = vmatprep.subr.mxu0 %v2166
        %2306 = vmatpush1.msra.mxu0 %v2165
        %2307 = vmatprep.subr.mxu0 %v2168
        %2308 = vmatpush1.msra.mxu0 %v2167
        %2309 = vmatprep.subr.mxu0 %v2170
        %2310 = vmatpush1.msra.mxu0 %v2169
        %2311 = vmatprep.subr.mxu0 %v2172
        %2312 = vmatpush1.msra.mxu0 %v2171
        %2313 = vmatprep.subr.mxu0 %v2174
        %2314 = vmatpush1.msra.mxu0 %v2173
        %2315 = vmatprep.subr.mxu0 %v2176
        %2316 = vmatpush1.msra.mxu0 %v2175
        %2317 = vmatprep.subr.mxu0 %v2178
        %2318 = vmatpush1.msra.mxu0 %v2177
        %2319 = vmatprep.subr.mxu0 %v2180
        %2320 = vmatpush1.msra.mxu0 %v2179
        %2321 = vmatprep.mubr.f32.mxu0 %v2114
        %2322 = vmatmul.mubr.f32.gmra.mrb[0].mxu0 %v2113
        %v2323 = vpop.f32.mrb[0].mxu0
        %v2324 = vadd.f32 %v2250, %v2323
        %v2325 = vpop.f32.mrb[0].mxu0
        %v2326 = vadd.f32 %v2254, %v2325
        %2327 = vdwg.mxu0
        %2328 = vmatprep.subr.mxu0 %v2182
        %2329 = vmatpush1.msra.mxu0 %v2181
        %2330 = vmatprep.subr.mxu0 %v2184
        %2331 = vmatpush1.msra.mxu0 %v2183
        %2332 = vmatprep.subr.mxu0 %v2186
        %2333 = vmatpush1.msra.mxu0 %v2185
        %2334 = vmatprep.subr.mxu0 %v2188
        %2335 = vmatpush1.msra.mxu0 %v2187
        %2336 = vmatprep.subr.mxu0 %v2190
        %2337 = vmatpush1.msra.mxu0 %v2189
        %2338 = vmatprep.subr.mxu0 %v2192
        %2339 = vmatpush1.msra.mxu0 %v2191
        %2340 = vmatprep.subr.mxu0 %v2194
        %2341 = vmatpush1.msra.mxu0 %v2193
        %2342 = vmatprep.subr.mxu0 %v2196
        %2343 = vmatpush1.msra.mxu0 %v2195
        %2344 = vmatprep.subr.mxu0 %v2198
        %2345 = vmatpush1.msra.mxu0 %v2197
        %2346 = vmatprep.subr.mxu0 %v2200
        %2347 = vmatpush1.msra.mxu0 %v2199
        %2348 = vmatprep.subr.mxu0 %v2202
        %2349 = vmatpush1.msra.mxu0 %v2201
        %2350 = vmatprep.subr.mxu0 %v2204
        %2351 = vmatpush1.msra.mxu0 %v2203
        %2352 = vmatprep.subr.mxu0 %v2206
        %2353 = vmatpush1.msra.mxu0 %v2205
        %2354 = vmatprep.subr.mxu0 %v2208
        %2355 = vmatpush1.msra.mxu0 %v2207
        %2356 = vmatprep.subr.mxu0 %v2210
        %2357 = vmatpush1.msra.mxu0 %v2209
        %2358 = vmatprep.subr.mxu0 %v2212
        %2359 = vmatpush1.msra.mxu0 %v2211
        %2360 = vmatprep.subr.mxu0 %v2214
        %2361 = vmatpush1.msra.mxu0 %v2213
        %2362 = vmatprep.subr.mxu0 %v2216
        %2363 = vmatpush1.msra.mxu0 %v2215
        %2364 = vmatprep.subr.mxu0 %v2218
        %2365 = vmatpush1.msra.mxu0 %v2217
        %2366 = vmatprep.subr.mxu0 %v2220
        %2367 = vmatpush1.msra.mxu0 %v2219
        %2368 = vmatprep.subr.mxu0 %v2222
        %2369 = vmatpush1.msra.mxu0 %v2221
        %2370 = vmatprep.subr.mxu0 %v2224
        %2371 = vmatpush1.msra.mxu0 %v2223
        %2372 = vmatprep.subr.mxu0 %v2226
        %2373 = vmatpush1.msra.mxu0 %v2225
        %2374 = vmatprep.subr.mxu0 %v2228
        %2375 = vmatpush1.msra.mxu0 %v2227
        %2376 = vmatprep.subr.mxu0 %v2230
        %2377 = vmatpush1.msra.mxu0 %v2229
        %2378 = vmatprep.subr.mxu0 %v2232
        %2379 = vmatpush1.msra.mxu0 %v2231
        %2380 = vmatprep.subr.mxu0 %v2234
        %2381 = vmatpush1.msra.mxu0 %v2233
        %2382 = vmatprep.subr.mxu0 %v2236
        %2383 = vmatpush1.msra.mxu0 %v2235
        %2384 = vmatprep.subr.mxu0 %v2238
        %2385 = vmatpush1.msra.mxu0 %v2237
        %2386 = vmatprep.subr.mxu0 %v2240
        %2387 = vmatpush1.msra.mxu0 %v2239
        %2388 = vmatprep.subr.mxu0 %v2242
        %2389 = vmatpush1.msra.mxu0 %v2241
        %2390 = vmatprep.subr.mxu0 %v2244
        %2391 = vmatpush1.msra.mxu0 %v2243
        %2392 = vmatprep.mubr.f32.mxu0 %v2116
        %2393 = vmatmul.mubr.f32.gmra.mrb[0].mxu0 %v2115
        %v2394 = vpop.f32.mrb[0].mxu0
        %v2395 = vadd.f32 %v2324, %v2394
        %v2396 = vpop.f32.mrb[0].mxu0
        %v2397 = vadd.f32 %v2326, %v2396
        %2398 = vdwg.mxu0
        %v2399 = vmax.f32 %v2395, 0.0
        %v2400 = vmax.f32 %v2397, 0.0
        %v2401 = vld [vmem:[#allocation11] sm:$0xff]
        %v2402 = vld [vmem:[#allocation11 + $0x8] sm:$0xff]
        %v2403 = vld [vmem:[#allocation11 + $0x10] sm:$0xff]
        %v2404 = vld [vmem:[#allocation11 + $0x18] sm:$0xff]
        %v2405 = vld [vmem:[#allocation11 + $0x20] sm:$0xff]
        %v2406 = vld [vmem:[#allocation11 + $0x28] sm:$0xff]
        %v2407 = vld [vmem:[#allocation11 + $0x30] sm:$0xff]
        %v2408 = vld [vmem:[#allocation11 + $0x38] sm:$0xff]
        %v2409 = vld [vmem:[#allocation11 + $0x40] sm:$0xff]
        %v2410 = vld [vmem:[#allocation11 + $0x48] sm:$0xff]
        %v2411 = vld [vmem:[#allocation11 + $0x50] sm:$0xff]
        %v2412 = vld [vmem:[#allocation11 + $0x58] sm:$0xff]
        %v2413 = vld [vmem:[#allocation11 + $0x60] sm:$0xff]
        %v2414 = vld [vmem:[#allocation11 + $0x68] sm:$0xff]
        %v2415 = vld [vmem:[#allocation11 + $0x70] sm:$0xff]
        %v2416 = vld [vmem:[#allocation11 + $0x78] sm:$0xff]
        %v2417 = vld [vmem:[#allocation11 + $0x80] sm:$0xff]
        %v2418 = vld [vmem:[#allocation11 + $0x88] sm:$0xff]
        %v2419 = vld [vmem:[#allocation11 + $0x90] sm:$0xff]
        %v2420 = vld [vmem:[#allocation11 + $0x98] sm:$0xff]
        %v2421 = vld [vmem:[#allocation11 + $0xa0] sm:$0xff]
        %v2422 = vld [vmem:[#allocation11 + $0xa8] sm:$0xff]
        %v2423 = vld [vmem:[#allocation11 + $0xb0] sm:$0xff]
        %v2424 = vld [vmem:[#allocation11 + $0xb8] sm:$0xff]
        %v2425 = vld [vmem:[#allocation11 + $0xc0] sm:$0xff]
        %v2426 = vld [vmem:[#allocation11 + $0xc8] sm:$0xff]
        %v2427 = vld [vmem:[#allocation11 + $0xd0] sm:$0xff]
        %v2428 = vld [vmem:[#allocation11 + $0xd8] sm:$0xff]
        %v2429 = vld [vmem:[#allocation11 + $0xe0] sm:$0xff]
        %v2430 = vld [vmem:[#allocation11 + $0xe8] sm:$0xff]
        %v2431 = vld [vmem:[#allocation11 + $0xf0] sm:$0xff]
        %v2432 = vld [vmem:[#allocation11 + $0xf8] sm:$0xff]
        %v2433 = vld [vmem:[%s29] sm:$0x1]
        %v2435 = vlaneseq
        %v2436 = vshrl.u32 %v2435, 7
        %v2437 = vsub.s32 0, %v2436
        %v2438 = vrot.slane %v2433, %v2437
        %2440 = vmatprep.subr.mxu0 0.0
        %2441 = vmatpush1.msra.mxu0 %v2401
        %2442 = vmatprep.subr.mxu0 0.0
        %2443 = vmatpush1.msra.mxu0 %v2402
        %2444 = vmatprep.subr.mxu0 0.0
        %2445 = vmatpush1.msra.mxu0 %v2403
        %2446 = vmatprep.subr.mxu0 0.0
        %2447 = vmatpush1.msra.mxu0 %v2404
        %2448 = vmatprep.subr.mxu0 0.0
        %2449 = vmatpush1.msra.mxu0 %v2405
        %2450 = vmatprep.subr.mxu0 0.0
        %2451 = vmatpush1.msra.mxu0 %v2406
        %2452 = vmatprep.subr.mxu0 0.0
        %2453 = vmatpush1.msra.mxu0 %v2407
        %2454 = vmatprep.subr.mxu0 0.0
        %2455 = vmatpush1.msra.mxu0 %v2408
        %2456 = vmatprep.subr.mxu0 0.0
        %2457 = vmatpush1.msra.mxu0 %v2409
        %2458 = vmatprep.subr.mxu0 0.0
        %2459 = vmatpush1.msra.mxu0 %v2410
        %2460 = vmatprep.subr.mxu0 0.0
        %2461 = vmatpush1.msra.mxu0 %v2411
        %2462 = vmatprep.subr.mxu0 0.0
        %2463 = vmatpush1.msra.mxu0 %v2412
        %2464 = vmatprep.subr.mxu0 0.0
        %2465 = vmatpush1.msra.mxu0 %v2413
        %2466 = vmatprep.subr.mxu0 0.0
        %2467 = vmatpush1.msra.mxu0 %v2414
        %2468 = vmatprep.subr.mxu0 0.0
        %2469 = vmatpush1.msra.mxu0 %v2415
        %2470 = vmatprep.subr.mxu0 0.0
        %2471 = vmatpush1.msra.mxu0 %v2416
        %2472 = vmatprep.subr.mxu0 0.0
        %2473 = vmatpush1.msra.mxu0 %v2417
        %2474 = vmatprep.subr.mxu0 0.0
        %2475 = vmatpush1.msra.mxu0 %v2418
        %2476 = vmatprep.subr.mxu0 0.0
        %2477 = vmatpush1.msra.mxu0 %v2419
        %2478 = vmatprep.subr.mxu0 0.0
        %2479 = vmatpush1.msra.mxu0 %v2420
        %2480 = vmatprep.subr.mxu0 0.0
        %2481 = vmatpush1.msra.mxu0 %v2421
        %2482 = vmatprep.subr.mxu0 0.0
        %2483 = vmatpush1.msra.mxu0 %v2422
        %2484 = vmatprep.subr.mxu0 0.0
        %2485 = vmatpush1.msra.mxu0 %v2423
        %2486 = vmatprep.subr.mxu0 0.0
        %2487 = vmatpush1.msra.mxu0 %v2424
        %2488 = vmatprep.subr.mxu0 0.0
        %2489 = vmatpush1.msra.mxu0 %v2425
        %2490 = vmatprep.subr.mxu0 0.0
        %2491 = vmatpush1.msra.mxu0 %v2426
        %2492 = vmatprep.subr.mxu0 0.0
        %2493 = vmatpush1.msra.mxu0 %v2427
        %2494 = vmatprep.subr.mxu0 0.0
        %2495 = vmatpush1.msra.mxu0 %v2428
        %2496 = vmatprep.subr.mxu0 0.0
        %2497 = vmatpush1.msra.mxu0 %v2429
        %2498 = vmatprep.subr.mxu0 0.0
        %2499 = vmatpush1.msra.mxu0 %v2430
        %2500 = vmatprep.subr.mxu0 0.0
        %2501 = vmatpush1.msra.mxu0 %v2431
        %2502 = vmatprep.subr.mxu0 0.0
        %2503 = vmatpush1.msra.mxu0 %v2432
        %2504 = vmatprep.mubr.f32.mxu0 %v2400
        %2505 = vmatmul.mubr.f32.gmra.mrb[0].mxu0 %v2399
        %v2506 = vpop.f32.mrb[0].mxu0
        %v2507 = vadd.f32 %v2438, %v2506
        %v2508 = vpop.f32.mrb[0].mxu0
        %2509 = vdwg.mxu0
        %v2510 = vld [vmem:[%s1257] sm:$0xff]
        %v2511 = vld [vmem:[#allocation13] sm:$0xff]
        %v2512 = vld [vmem:[#allocation13 + $0x8] sm:$0xff]
        %v2513 = vld [vmem:[#allocation13 + $0x10] sm:$0xff]
        %v2514 = vld [vmem:[#allocation13 + $0x18] sm:$0xff]
        %v2515 = vld [vmem:[#allocation13 + $0x20] sm:$0xff]
        %v2516 = vld [vmem:[#allocation13 + $0x28] sm:$0xff]
        %v2517 = vld [vmem:[#allocation13 + $0x30] sm:$0xff]
        %v2518 = vld [vmem:[#allocation13 + $0x38] sm:$0xff]
        %v2519 = vld [vmem:[#allocation13 + $0x40] sm:$0xff]
        %v2520 = vld [vmem:[#allocation13 + $0x48] sm:$0xff]
        %v2521 = vld [vmem:[#allocation13 + $0x50] sm:$0xff]
        %v2522 = vld [vmem:[#allocation13 + $0x58] sm:$0xff]
        %v2523 = vld [vmem:[#allocation13 + $0x60] sm:$0xff]
        %v2524 = vld [vmem:[#allocation13 + $0x68] sm:$0xff]
        %v2525 = vld [vmem:[#allocation13 + $0x70] sm:$0xff]
        %v2526 = vld [vmem:[#allocation13 + $0x78] sm:$0xff]
        %v2527 = vld [vmem:[#allocation13 + $0x80] sm:$0xff]
        %v2528 = vld [vmem:[#allocation13 + $0x88] sm:$0xff]
        %v2529 = vld [vmem:[#allocation13 + $0x90] sm:$0xff]
        %v2530 = vld [vmem:[#allocation13 + $0x98] sm:$0xff]
        %v2531 = vld [vmem:[#allocation13 + $0xa0] sm:$0xff]
        %v2532 = vld [vmem:[#allocation13 + $0xa8] sm:$0xff]
        %v2533 = vld [vmem:[#allocation13 + $0xb0] sm:$0xff]
        %v2534 = vld [vmem:[#allocation13 + $0xb8] sm:$0xff]
        %v2535 = vld [vmem:[#allocation13 + $0xc0] sm:$0xff]
        %v2536 = vld [vmem:[#allocation13 + $0xc8] sm:$0xff]
        %v2537 = vld [vmem:[#allocation13 + $0xd0] sm:$0xff]
        %v2538 = vld [vmem:[#allocation13 + $0xd8] sm:$0xff]
        %v2539 = vld [vmem:[#allocation13 + $0xe0] sm:$0xff]
        %v2540 = vld [vmem:[#allocation13 + $0xe8] sm:$0xff]
        %v2541 = vld [vmem:[#allocation13 + $0xf0] sm:$0xff]
        %v2542 = vld [vmem:[#allocation13 + $0xf8] sm:$0xff]
        %v2543 = vld [vmem:[%s33] sm:$0x3]
        %v2545 = vlaneseq
        %v2546 = vshrl.u32 %v2545, 7
        %v2547 = vsub.s32 0, %v2546
        %v2548 = vrot.slane %v2543, %v2547
        %v2549 = vlaneseq
        %v2550 = vshrl.u32 %v2549, 7
        %v2551 = vsub.s32 1, %v2550
        %v2552 = vrot.slane %v2543, %v2551
        %2555 = vmatprep.subr.mxu0 %v2512
        %2556 = vmatpush1.msra.mxu0 %v2511
        %2557 = vmatprep.subr.mxu0 %v2514
        %2558 = vmatpush1.msra.mxu0 %v2513
        %2559 = vmatprep.subr.mxu0 %v2516
        %2560 = vmatpush1.msra.mxu0 %v2515
        %2561 = vmatprep.subr.mxu0 %v2518
        %2562 = vmatpush1.msra.mxu0 %v2517
        %2563 = vmatprep.subr.mxu0 %v2520
        %2564 = vmatpush1.msra.mxu0 %v2519
        %2565 = vmatprep.subr.mxu0 %v2522
        %2566 = vmatpush1.msra.mxu0 %v2521
        %2567 = vmatprep.subr.mxu0 %v2524
        %2568 = vmatpush1.msra.mxu0 %v2523
        %2569 = vmatprep.subr.mxu0 %v2526
        %2570 = vmatpush1.msra.mxu0 %v2525
        %2571 = vmatprep.subr.mxu0 %v2528
        %2572 = vmatpush1.msra.mxu0 %v2527
        %2573 = vmatprep.subr.mxu0 %v2530
        %2574 = vmatpush1.msra.mxu0 %v2529
        %2575 = vmatprep.subr.mxu0 %v2532
        %2576 = vmatpush1.msra.mxu0 %v2531
        %2577 = vmatprep.subr.mxu0 %v2534
        %2578 = vmatpush1.msra.mxu0 %v2533
        %2579 = vmatprep.subr.mxu0 %v2536
        %2580 = vmatpush1.msra.mxu0 %v2535
        %2581 = vmatprep.subr.mxu0 %v2538
        %2582 = vmatpush1.msra.mxu0 %v2537
        %2583 = vmatprep.subr.mxu0 %v2540
        %2584 = vmatpush1.msra.mxu0 %v2539
        %2585 = vmatprep.subr.mxu0 %v2542
        %2586 = vmatpush1.msra.mxu0 %v2541
        %2587 = vmatprep.subr.mxu0 0.0
        %2588 = vmatpush1.msra.mxu0 0.0
        %2589 = vmatprep.subr.mxu0 0.0
        %2590 = vmatpush1.msra.mxu0 0.0
        %2591 = vmatprep.subr.mxu0 0.0
        %2592 = vmatpush1.msra.mxu0 0.0
        %2593 = vmatprep.subr.mxu0 0.0
        %2594 = vmatpush1.msra.mxu0 0.0
        %2595 = vmatprep.subr.mxu0 0.0
        %2596 = vmatpush1.msra.mxu0 0.0
        %2597 = vmatprep.subr.mxu0 0.0
        %2598 = vmatpush1.msra.mxu0 0.0
        %2599 = vmatprep.subr.mxu0 0.0
        %2600 = vmatpush1.msra.mxu0 0.0
        %2601 = vmatprep.subr.mxu0 0.0
        %2602 = vmatpush1.msra.mxu0 0.0
        %2603 = vmatprep.subr.mxu0 0.0
        %2604 = vmatpush1.msra.mxu0 0.0
        %2605 = vmatprep.subr.mxu0 0.0
        %2606 = vmatpush1.msra.mxu0 0.0
        %2607 = vmatprep.subr.mxu0 0.0
        %2608 = vmatpush1.msra.mxu0 0.0
        %2609 = vmatprep.subr.mxu0 0.0
        %2610 = vmatpush1.msra.mxu0 0.0
        %2611 = vmatprep.subr.mxu0 0.0
        %2612 = vmatpush1.msra.mxu0 0.0
        %2613 = vmatprep.subr.mxu0 0.0
        %2614 = vmatpush1.msra.mxu0 0.0
        %2615 = vmatprep.subr.mxu0 0.0
        %2616 = vmatpush1.msra.mxu0 0.0
        %2617 = vmatprep.subr.mxu0 0.0
        %2618 = vmatpush1.msra.mxu0 0.0
        %2619 = vmatprep.mubr.f32.mxu0 0.0
        %2620 = vmatmul.mubr.f32.gmra.mrb[0].mxu0 %v2510
        %v2621 = vpop.f32.mrb[0].mxu0
        %v2622 = vadd.f32 %v2548, %v2621
        %v2623 = vpop.f32.mrb[0].mxu0
        %v2624 = vadd.f32 %v2552, %v2623
        %2625 = vdwg.mxu0
        %v2626 = vmax.f32 %v2622, 0.0
        %v2627 = vmax.f32 %v2624, 0.0
        %v2628 = vld [vmem:[#allocation14] sm:$0xff]
        %v2629 = vld [vmem:[#allocation14 + $0x8] sm:$0xff]
        %v2630 = vld [vmem:[#allocation14 + $0x10] sm:$0xff]
        %v2631 = vld [vmem:[#allocation14 + $0x18] sm:$0xff]
        %v2632 = vld [vmem:[#allocation14 + $0x20] sm:$0xff]
        %v2633 = vld [vmem:[#allocation14 + $0x28] sm:$0xff]
        %v2634 = vld [vmem:[#allocation14 + $0x30] sm:$0xff]
        %v2635 = vld [vmem:[#allocation14 + $0x38] sm:$0xff]
        %v2636 = vld [vmem:[#allocation14 + $0x40] sm:$0xff]
        %v2637 = vld [vmem:[#allocation14 + $0x48] sm:$0xff]
        %v2638 = vld [vmem:[#allocation14 + $0x50] sm:$0xff]
        %v2639 = vld [vmem:[#allocation14 + $0x58] sm:$0xff]
        %v2640 = vld [vmem:[#allocation14 + $0x60] sm:$0xff]
        %v2641 = vld [vmem:[#allocation14 + $0x68] sm:$0xff]
        %v2642 = vld [vmem:[#allocation14 + $0x70] sm:$0xff]
        %v2643 = vld [vmem:[#allocation14 + $0x78] sm:$0xff]
        %v2644 = vld [vmem:[#allocation14 + $0x80] sm:$0xff]
        %v2645 = vld [vmem:[#allocation14 + $0x88] sm:$0xff]
        %v2646 = vld [vmem:[#allocation14 + $0x90] sm:$0xff]
        %v2647 = vld [vmem:[#allocation14 + $0x98] sm:$0xff]
        %v2648 = vld [vmem:[#allocation14 + $0xa0] sm:$0xff]
        %v2649 = vld [vmem:[#allocation14 + $0xa8] sm:$0xff]
        %v2650 = vld [vmem:[#allocation14 + $0xb0] sm:$0xff]
        %v2651 = vld [vmem:[#allocation14 + $0xb8] sm:$0xff]
        %v2652 = vld [vmem:[#allocation14 + $0xc0] sm:$0xff]
        %v2653 = vld [vmem:[#allocation14 + $0xc8] sm:$0xff]
        %v2654 = vld [vmem:[#allocation14 + $0xd0] sm:$0xff]
        %v2655 = vld [vmem:[#allocation14 + $0xd8] sm:$0xff]
        %v2656 = vld [vmem:[#allocation14 + $0xe0] sm:$0xff]
        %v2657 = vld [vmem:[#allocation14 + $0xe8] sm:$0xff]
        %v2658 = vld [vmem:[#allocation14 + $0xf0] sm:$0xff]
        %v2659 = vld [vmem:[#allocation14 + $0xf8] sm:$0xff]
        %v2660 = vld [vmem:[#allocation16] sm:$0x1]
        %v2662 = vlaneseq
        %v2663 = vshrl.u32 %v2662, 7
        %v2664 = vsub.s32 0, %v2663
        %v2665 = vrot.slane %v2660, %v2664
        %2667 = vmatprep.subr.mxu0 0.0
        %2668 = vmatpush1.msra.mxu0 %v2628
        %2669 = vmatprep.subr.mxu0 0.0
        %2670 = vmatpush1.msra.mxu0 %v2629
        %2671 = vmatprep.subr.mxu0 0.0
        %2672 = vmatpush1.msra.mxu0 %v2630
        %2673 = vmatprep.subr.mxu0 0.0
        %2674 = vmatpush1.msra.mxu0 %v2631
        %2675 = vmatprep.subr.mxu0 0.0
        %2676 = vmatpush1.msra.mxu0 %v2632
        %2677 = vmatprep.subr.mxu0 0.0
        %2678 = vmatpush1.msra.mxu0 %v2633
        %2679 = vmatprep.subr.mxu0 0.0
        %2680 = vmatpush1.msra.mxu0 %v2634
        %2681 = vmatprep.subr.mxu0 0.0
        %2682 = vmatpush1.msra.mxu0 %v2635
        %2683 = vmatprep.subr.mxu0 0.0
        %2684 = vmatpush1.msra.mxu0 %v2636
        %2685 = vmatprep.subr.mxu0 0.0
        %2686 = vmatpush1.msra.mxu0 %v2637
        %2687 = vmatprep.subr.mxu0 0.0
        %2688 = vmatpush1.msra.mxu0 %v2638
        %2689 = vmatprep.subr.mxu0 0.0
        %2690 = vmatpush1.msra.mxu0 %v2639
        %2691 = vmatprep.subr.mxu0 0.0
        %2692 = vmatpush1.msra.mxu0 %v2640
        %2693 = vmatprep.subr.mxu0 0.0
        %2694 = vmatpush1.msra.mxu0 %v2641
        %2695 = vmatprep.subr.mxu0 0.0
        %2696 = vmatpush1.msra.mxu0 %v2642
        %2697 = vmatprep.subr.mxu0 0.0
        %2698 = vmatpush1.msra.mxu0 %v2643
        %2699 = vmatprep.subr.mxu0 0.0
        %2700 = vmatpush1.msra.mxu0 %v2644
        %2701 = vmatprep.subr.mxu0 0.0
        %2702 = vmatpush1.msra.mxu0 %v2645
        %2703 = vmatprep.subr.mxu0 0.0
        %2704 = vmatpush1.msra.mxu0 %v2646
        %2705 = vmatprep.subr.mxu0 0.0
        %2706 = vmatpush1.msra.mxu0 %v2647
        %2707 = vmatprep.subr.mxu0 0.0
        %2708 = vmatpush1.msra.mxu0 %v2648
        %2709 = vmatprep.subr.mxu0 0.0
        %2710 = vmatpush1.msra.mxu0 %v2649
        %2711 = vmatprep.subr.mxu0 0.0
        %2712 = vmatpush1.msra.mxu0 %v2650
        %2713 = vmatprep.subr.mxu0 0.0
        %2714 = vmatpush1.msra.mxu0 %v2651
        %2715 = vmatprep.subr.mxu0 0.0
        %2716 = vmatpush1.msra.mxu0 %v2652
        %2717 = vmatprep.subr.mxu0 0.0
        %2718 = vmatpush1.msra.mxu0 %v2653
        %2719 = vmatprep.subr.mxu0 0.0
        %2720 = vmatpush1.msra.mxu0 %v2654
        %2721 = vmatprep.subr.mxu0 0.0
        %2722 = vmatpush1.msra.mxu0 %v2655
        %2723 = vmatprep.subr.mxu0 0.0
        %2724 = vmatpush1.msra.mxu0 %v2656
        %2725 = vmatprep.subr.mxu0 0.0
        %2726 = vmatpush1.msra.mxu0 %v2657
        %2727 = vmatprep.subr.mxu0 0.0
        %2728 = vmatpush1.msra.mxu0 %v2658
        %2729 = vmatprep.subr.mxu0 0.0
        %2730 = vmatpush1.msra.mxu0 %v2659
        %2731 = vmatprep.mubr.f32.mxu0 %v2627
        %2732 = vmatmul.mubr.f32.gmra.mrb[0].mxu0 %v2626
        %v2733 = vpop.f32.mrb[0].mxu0
        %v2734 = vadd.f32 %v2665, %v2733
        %v2735 = vpop.f32.mrb[0].mxu0
        %2736 = vdwg.mxu0
        %v2737 = vmax.f32 %v2734, 0.0
        %v2738 = vld [vmem:[%s39] sm:$0xff]
        %v2739 = vld [vmem:[%s39 + $0x8] sm:$0xff]
        %v2740 = vld [vmem:[%s39 + $0x10] sm:$0xff]
        %v2741 = vld [vmem:[%s39 + $0x18] sm:$0xff]
        %v2742 = vld [vmem:[%s39 + $0x20] sm:$0xff]
        %v2743 = vld [vmem:[%s39 + $0x28] sm:$0xff]
        %v2744 = vld [vmem:[%s39 + $0x30] sm:$0xff]
        %v2745 = vld [vmem:[%s39 + $0x38] sm:$0xff]
        %v2746 = vld [vmem:[%s39 + $0x40] sm:$0xff]
        %v2747 = vld [vmem:[%s39 + $0x48] sm:$0xff]
        %v2748 = vld [vmem:[%s39 + $0x50] sm:$0xff]
        %v2749 = vld [vmem:[%s39 + $0x58] sm:$0xff]
        %v2750 = vld [vmem:[%s39 + $0x60] sm:$0xff]
        %v2751 = vld [vmem:[%s39 + $0x68] sm:$0xff]
        %v2752 = vld [vmem:[%s39 + $0x70] sm:$0xff]
        %v2753 = vld [vmem:[%s39 + $0x78] sm:$0xff]
        %v2754 = vld [vmem:[#allocation17] sm:$0x1]
        %v2756 = vlaneseq
        %v2757 = vshrl.u32 %v2756, 7
        %v2758 = vsub.s32 0, %v2757
        %v2759 = vrot.slane %v2754, %v2758
        %2761 = vmatprep.subr.mxu0 0.0
        %2762 = vmatpush1.msra.mxu0 %v2738
        %2763 = vmatprep.subr.mxu0 0.0
        %2764 = vmatpush1.msra.mxu0 %v2739
        %2765 = vmatprep.subr.mxu0 0.0
        %2766 = vmatpush1.msra.mxu0 %v2740
        %2767 = vmatprep.subr.mxu0 0.0
        %2768 = vmatpush1.msra.mxu0 %v2741
        %2769 = vmatprep.subr.mxu0 0.0
        %2770 = vmatpush1.msra.mxu0 %v2742
        %2771 = vmatprep.subr.mxu0 0.0
        %2772 = vmatpush1.msra.mxu0 %v2743
        %2773 = vmatprep.subr.mxu0 0.0
        %2774 = vmatpush1.msra.mxu0 %v2744
        %2775 = vmatprep.subr.mxu0 0.0
        %2776 = vmatpush1.msra.mxu0 %v2745
        %2777 = vmatprep.subr.mxu0 0.0
        %2778 = vmatpush1.msra.mxu0 %v2746
        %2779 = vmatprep.subr.mxu0 0.0
        %2780 = vmatpush1.msra.mxu0 %v2747
        %2781 = vmatprep.subr.mxu0 0.0
        %2782 = vmatpush1.msra.mxu0 %v2748
        %2783 = vmatprep.subr.mxu0 0.0
        %2784 = vmatpush1.msra.mxu0 %v2749
        %2785 = vmatprep.subr.mxu0 0.0
        %2786 = vmatpush1.msra.mxu0 %v2750
        %2787 = vmatprep.subr.mxu0 0.0
        %2788 = vmatpush1.msra.mxu0 %v2751
        %2789 = vmatprep.subr.mxu0 0.0
        %2790 = vmatpush1.msra.mxu0 %v2752
        %2791 = vmatprep.subr.mxu0 0.0
        %2792 = vmatpush1.msra.mxu0 %v2753
        %2793 = vmatprep.subr.mxu0 0.0
        %2794 = vmatpush1.msra.mxu0 0.0
        %2795 = vmatprep.subr.mxu0 0.0
        %2796 = vmatpush1.msra.mxu0 0.0
        %2797 = vmatprep.subr.mxu0 0.0
        %2798 = vmatpush1.msra.mxu0 0.0
        %2799 = vmatprep.subr.mxu0 0.0
        %2800 = vmatpush1.msra.mxu0 0.0
        %2801 = vmatprep.subr.mxu0 0.0
        %2802 = vmatpush1.msra.mxu0 0.0
        %2803 = vmatprep.subr.mxu0 0.0
        %2804 = vmatpush1.msra.mxu0 0.0
        %2805 = vmatprep.subr.mxu0 0.0
        %2806 = vmatpush1.msra.mxu0 0.0
        %2807 = vmatprep.subr.mxu0 0.0
        %2808 = vmatpush1.msra.mxu0 0.0
        %2809 = vmatprep.subr.mxu0 0.0
        %2810 = vmatpush1.msra.mxu0 0.0
        %2811 = vmatprep.subr.mxu0 0.0
        %2812 = vmatpush1.msra.mxu0 0.0
        %2813 = vmatprep.subr.mxu0 0.0
        %2814 = vmatpush1.msra.mxu0 0.0
        %2815 = vmatprep.subr.mxu0 0.0
        %2816 = vmatpush1.msra.mxu0 0.0
        %2817 = vmatprep.subr.mxu0 0.0
        %2818 = vmatpush1.msra.mxu0 0.0
        %2819 = vmatprep.subr.mxu0 0.0
        %2820 = vmatpush1.msra.mxu0 0.0
        %2821 = vmatprep.subr.mxu0 0.0
        %2822 = vmatpush1.msra.mxu0 0.0
        %2823 = vmatprep.subr.mxu0 0.0
        %2824 = vmatpush1.msra.mxu0 0.0
        %2825 = vmatprep.mubr.f32.mxu0 0.0
        %2826 = vmatmul.mubr.f32.gmra.mrb[0].mxu0 %v2737
        %v2827 = vpop.f32.mrb[0].mxu0
        %v2828 = vadd.f32 %v2759, %v2827
        %v2829 = vpop.f32.mrb[0].mxu0
        %2830 = vdwg.mxu0
        %v2831 = vld [vmem:[#allocation19] sm:$0xff]
        %v2832 = vld [vmem:[#allocation19 + $0x8] sm:$0xff]
        %v2833 = vld [vmem:[#allocation19 + $0x10] sm:$0xff]
        %v2834 = vld [vmem:[#allocation19 + $0x18] sm:$0xff]
        %v2835 = vld [vmem:[#allocation19 + $0x20] sm:$0xff]
        %v2836 = vld [vmem:[#allocation19 + $0x28] sm:$0xff]
        %v2837 = vld [vmem:[#allocation19 + $0x30] sm:$0xff]
        %v2838 = vld [vmem:[#allocation19 + $0x38] sm:$0xff]
        %v2839 = vld [vmem:[#allocation19 + $0x40] sm:$0xff]
        %v2840 = vld [vmem:[#allocation19 + $0x48] sm:$0xff]
        %v2841 = vld [vmem:[#allocation19 + $0x50] sm:$0xff]
        %v2842 = vld [vmem:[#allocation19 + $0x58] sm:$0xff]
        %v2843 = vld [vmem:[#allocation19 + $0x60] sm:$0xff]
        %v2844 = vld [vmem:[#allocation19 + $0x68] sm:$0xff]
        %v2845 = vld [vmem:[#allocation19 + $0x70] sm:$0xff]
        %v2846 = vld [vmem:[#allocation19 + $0x78] sm:$0xff]
        %v2847 = vld [vmem:[#allocation19 + $0x80] sm:$0xff]
        %v2848 = vld [vmem:[#allocation19 + $0x88] sm:$0xff]
        %v2849 = vld [vmem:[#allocation19 + $0x90] sm:$0xff]
        %v2850 = vld [vmem:[#allocation19 + $0x98] sm:$0xff]
        %v2851 = vld [vmem:[#allocation19 + $0xa0] sm:$0xff]
        %v2852 = vld [vmem:[#allocation19 + $0xa8] sm:$0xff]
        %v2853 = vld [vmem:[#allocation19 + $0xb0] sm:$0xff]
        %v2854 = vld [vmem:[#allocation19 + $0xb8] sm:$0xff]
        %v2855 = vld [vmem:[#allocation19 + $0xc0] sm:$0xff]
        %v2856 = vld [vmem:[#allocation19 + $0xc8] sm:$0xff]
        %v2857 = vld [vmem:[#allocation19 + $0xd0] sm:$0xff]
        %v2858 = vld [vmem:[#allocation19 + $0xd8] sm:$0xff]
        %v2859 = vld [vmem:[#allocation19 + $0xe0] sm:$0xff]
        %v2860 = vld [vmem:[#allocation19 + $0xe8] sm:$0xff]
        %v2861 = vld [vmem:[#allocation19 + $0xf0] sm:$0xff]
        %v2862 = vld [vmem:[#allocation19 + $0xf8] sm:$0xff]
        %v2863 = vld [vmem:[#allocation19 + $0x100] sm:$0xff]
        %v2864 = vld [vmem:[#allocation19 + $0x108] sm:$0xff]
        %v2865 = vld [vmem:[#allocation19 + $0x110] sm:$0xff]
        %v2866 = vld [vmem:[#allocation19 + $0x118] sm:$0xff]
        %v2867 = vld [vmem:[#allocation19 + $0x120] sm:$0xff]
        %v2868 = vld [vmem:[#allocation19 + $0x128] sm:$0xff]
        %v2869 = vld [vmem:[#allocation19 + $0x130] sm:$0xff]
        %v2870 = vld [vmem:[#allocation19 + $0x138] sm:$0xff]
        %v2871 = vld [vmem:[#allocation19 + $0x140] sm:$0xff]
        %v2872 = vld [vmem:[#allocation19 + $0x148] sm:$0xff]
        %v2873 = vld [vmem:[#allocation19 + $0x150] sm:$0xff]
        %v2874 = vld [vmem:[#allocation19 + $0x158] sm:$0xff]
        %v2875 = vld [vmem:[#allocation19 + $0x160] sm:$0xff]
        %v2876 = vld [vmem:[#allocation19 + $0x168] sm:$0xff]
        %v2877 = vld [vmem:[#allocation19 + $0x170] sm:$0xff]
        %v2878 = vld [vmem:[#allocation19 + $0x178] sm:$0xff]
        %v2879 = vld [vmem:[%s45] sm:$0x7]
        %v2881 = vlaneseq
        %v2882 = vshrl.u32 %v2881, 7
        %v2883 = vsub.s32 0, %v2882
        %v2884 = vrot.slane %v2879, %v2883
        %v2885 = vlaneseq
        %v2886 = vshrl.u32 %v2885, 7
        %v2887 = vsub.s32 1, %v2886
        %v2888 = vrot.slane %v2879, %v2887
        %v2889 = vlaneseq
        %v2890 = vshrl.u32 %v2889, 7
        %v2891 = vsub.s32 2, %v2890
        %v2892 = vrot.slane %v2879, %v2891
        %2896 = vmatprep.subr.mxu0 %v2832
        %2897 = vmatpush1.msra.mxu0 %v2831
        %2898 = vmatprep.subr.mxu0 %v2835
        %2899 = vmatpush1.msra.mxu0 %v2834
        %2900 = vmatprep.subr.mxu0 %v2838
        %2901 = vmatpush1.msra.mxu0 %v2837
        %2902 = vmatprep.subr.mxu0 %v2841
        %2903 = vmatpush1.msra.mxu0 %v2840
        %2904 = vmatprep.subr.mxu0 %v2844
        %2905 = vmatpush1.msra.mxu0 %v2843
        %2906 = vmatprep.subr.mxu0 %v2847
        %2907 = vmatpush1.msra.mxu0 %v2846
        %2908 = vmatprep.subr.mxu0 %v2850
        %2909 = vmatpush1.msra.mxu0 %v2849
        %2910 = vmatprep.subr.mxu0 %v2853
        %2911 = vmatpush1.msra.mxu0 %v2852
        %2912 = vmatprep.subr.mxu0 %v2856
        %2913 = vmatpush1.msra.mxu0 %v2855
        %2914 = vmatprep.subr.mxu0 %v2859
        %2915 = vmatpush1.msra.mxu0 %v2858
        %2916 = vmatprep.subr.mxu0 %v2862
        %2917 = vmatpush1.msra.mxu0 %v2861
        %2918 = vmatprep.subr.mxu0 %v2865
        %2919 = vmatpush1.msra.mxu0 %v2864
        %2920 = vmatprep.subr.mxu0 %v2868
        %2921 = vmatpush1.msra.mxu0 %v2867
        %2922 = vmatprep.subr.mxu0 %v2871
        %2923 = vmatpush1.msra.mxu0 %v2870
        %2924 = vmatprep.subr.mxu0 %v2874
        %2925 = vmatpush1.msra.mxu0 %v2873
        %2926 = vmatprep.subr.mxu0 %v2877
        %2927 = vmatpush1.msra.mxu0 %v2876
        %2928 = vmatprep.subr.mxu0 0.0
        %2929 = vmatpush1.msra.mxu0 0.0
        %2930 = vmatprep.subr.mxu0 0.0
        %2931 = vmatpush1.msra.mxu0 0.0
        %2932 = vmatprep.subr.mxu0 0.0
        %2933 = vmatpush1.msra.mxu0 0.0
        %2934 = vmatprep.subr.mxu0 0.0
        %2935 = vmatpush1.msra.mxu0 0.0
        %2936 = vmatprep.subr.mxu0 0.0
        %2937 = vmatpush1.msra.mxu0 0.0
        %2938 = vmatprep.subr.mxu0 0.0
        %2939 = vmatpush1.msra.mxu0 0.0
        %2940 = vmatprep.subr.mxu0 0.0
        %2941 = vmatpush1.msra.mxu0 0.0
        %2942 = vmatprep.subr.mxu0 0.0
        %2943 = vmatpush1.msra.mxu0 0.0
        %2944 = vmatprep.subr.mxu0 0.0
        %2945 = vmatpush1.msra.mxu0 0.0
        %2946 = vmatprep.subr.mxu0 0.0
        %2947 = vmatpush1.msra.mxu0 0.0
        %2948 = vmatprep.subr.mxu0 0.0
        %2949 = vmatpush1.msra.mxu0 0.0
        %2950 = vmatprep.subr.mxu0 0.0
        %2951 = vmatpush1.msra.mxu0 0.0
        %2952 = vmatprep.subr.mxu0 0.0
        %2953 = vmatpush1.msra.mxu0 0.0
        %2954 = vmatprep.subr.mxu0 0.0
        %2955 = vmatpush1.msra.mxu0 0.0
        %2956 = vmatprep.subr.mxu0 0.0
        %2957 = vmatpush1.msra.mxu0 0.0
        %2958 = vmatprep.subr.mxu0 0.0
        %2959 = vmatpush1.msra.mxu0 0.0
        %2960 = vmatprep.mubr.f32.mxu0 0.0
        %2961 = vmatmul.mubr.f32.gmra.mrb[0].mxu0 %v1881
        %v2962 = vpop.f32.mrb[0].mxu0
        %v2963 = vadd.f32 %v2884, %v2962
        %v2964 = vpop.f32.mrb[0].mxu0
        %v2965 = vadd.f32 %v2888, %v2964
        %2966 = vmatprep.mubr.f32.mxu0 0.0
        %2967 = vmatmul.mubr.f32.gmra.mrb[0].mxu0 %v2507
        %v2968 = vpop.f32.mrb[0].mxu0
        %v2969 = vadd.f32 %v2884, %v2968
        %v2970 = vpop.f32.mrb[0].mxu0
        %v2971 = vadd.f32 %v2888, %v2970
        %2972 = vmatprep.mubr.f32.mxu0 0.0
        %2973 = vmatmul.mubr.f32.gmra.mrb[0].mxu0 %v2828
        %v2974 = vpop.f32.mrb[0].mxu0
        %v2975 = vadd.f32 %v2884, %v2974
        %v2976 = vpop.f32.mrb[0].mxu0
        %v2977 = vadd.f32 %v2888, %v2976
        %2978 = vdwg.mxu0
        %2979 = vmatprep.subr.mxu0 0.0
        %2980 = vmatpush1.msra.mxu0 %v2833
        %2981 = vmatprep.subr.mxu0 0.0
        %2982 = vmatpush1.msra.mxu0 %v2836
        %2983 = vmatprep.subr.mxu0 0.0
        %2984 = vmatpush1.msra.mxu0 %v2839
        %2985 = vmatprep.subr.mxu0 0.0
        %2986 = vmatpush1.msra.mxu0 %v2842
        %2987 = vmatprep.subr.mxu0 0.0
        %2988 = vmatpush1.msra.mxu0 %v2845
        %2989 = vmatprep.subr.mxu0 0.0
        %2990 = vmatpush1.msra.mxu0 %v2848
        %2991 = vmatprep.subr.mxu0 0.0
        %2992 = vmatpush1.msra.mxu0 %v2851
        %2993 = vmatprep.subr.mxu0 0.0
        %2994 = vmatpush1.msra.mxu0 %v2854
        %2995 = vmatprep.subr.mxu0 0.0
        %2996 = vmatpush1.msra.mxu0 %v2857
        %2997 = vmatprep.subr.mxu0 0.0
        %2998 = vmatpush1.msra.mxu0 %v2860
        %2999 = vmatprep.subr.mxu0 0.0
        %3000 = vmatpush1.msra.mxu0 %v2863
        %3001 = vmatprep.subr.mxu0 0.0
        %3002 = vmatpush1.msra.mxu0 %v2866
        %3003 = vmatprep.subr.mxu0 0.0
        %3004 = vmatpush1.msra.mxu0 %v2869
        %3005 = vmatprep.subr.mxu0 0.0
        %3006 = vmatpush1.msra.mxu0 %v2872
        %3007 = vmatprep.subr.mxu0 0.0
        %3008 = vmatpush1.msra.mxu0 %v2875
        %3009 = vmatprep.subr.mxu0 0.0
        %3010 = vmatpush1.msra.mxu0 %v2878
        %3011 = vmatprep.subr.mxu0 0.0
        %3012 = vmatpush1.msra.mxu0 0.0
        %3013 = vmatprep.subr.mxu0 0.0
        %3014 = vmatpush1.msra.mxu0 0.0
        %3015 = vmatprep.subr.mxu0 0.0
        %3016 = vmatpush1.msra.mxu0 0.0
        %3017 = vmatprep.subr.mxu0 0.0
        %3018 = vmatpush1.msra.mxu0 0.0
        %3019 = vmatprep.subr.mxu0 0.0
        %3020 = vmatpush1.msra.mxu0 0.0
        %3021 = vmatprep.subr.mxu0 0.0
        %3022 = vmatpush1.msra.mxu0 0.0
        %3023 = vmatprep.subr.mxu0 0.0
        %3024 = vmatpush1.msra.mxu0 0.0
        %3025 = vmatprep.subr.mxu0 0.0
        %3026 = vmatpush1.msra.mxu0 0.0
        %3027 = vmatprep.subr.mxu0 0.0
        %3028 = vmatpush1.msra.mxu0 0.0
        %3029 = vmatprep.subr.mxu0 0.0
        %3030 = vmatpush1.msra.mxu0 0.0
        %3031 = vmatprep.subr.mxu0 0.0
        %3032 = vmatpush1.msra.mxu0 0.0
        %3033 = vmatprep.subr.mxu0 0.0
        %3034 = vmatpush1.msra.mxu0 0.0
        %3035 = vmatprep.subr.mxu0 0.0
        %3036 = vmatpush1.msra.mxu0 0.0
        %3037 = vmatprep.subr.mxu0 0.0
        %3038 = vmatpush1.msra.mxu0 0.0
        %3039 = vmatprep.subr.mxu0 0.0
        %3040 = vmatpush1.msra.mxu0 0.0
        %3041 = vmatprep.subr.mxu0 0.0
        %3042 = vmatpush1.msra.mxu0 0.0
        %3043 = vmatprep.mubr.f32.mxu0 0.0
        %3044 = vmatmul.mubr.f32.gmra.mrb[0].mxu0 %v1881
        %v3045 = vpop.f32.mrb[0].mxu0
        %v3046 = vadd.f32 %v2892, %v3045
        %v3047 = vpop.f32.mrb[0].mxu0
        %3048 = vmatprep.mubr.f32.mxu0 0.0
        %3049 = vmatmul.mubr.f32.gmra.mrb[0].mxu0 %v2507
        %v3050 = vpop.f32.mrb[0].mxu0
        %v3051 = vadd.f32 %v2892, %v3050
        %v3052 = vpop.f32.mrb[0].mxu0
        %3053 = vmatprep.mubr.f32.mxu0 0.0
        %3054 = vmatmul.mubr.f32.gmra.mrb[0].mxu0 %v2828
        %v3055 = vpop.f32.mrb[0].mxu0
        %v3056 = vadd.f32 %v2892, %v3055
        %v3057 = vpop.f32.mrb[0].mxu0
        %3058 = vdwg.mxu0
        %v3059 = vld [vmem:[%s63] sm:$0xff]
        %v3060 = vld [vmem:[%s63 + $0x8] sm:$0xff]
        %v3061 = vld [vmem:[%s63 + $0x10] sm:$0xff]
        %v3062 = vld [vmem:[%s63 + $0x18] sm:$0xff]
        %v3063 = vld [vmem:[%s63 + $0x20] sm:$0xff]
        %v3064 = vld [vmem:[%s63 + $0x28] sm:$0xff]
        %v3065 = vld [vmem:[%s63 + $0x30] sm:$0xff]
        %v3066 = vld [vmem:[%s63 + $0x38] sm:$0xff]
        %v3067 = vld [vmem:[%s63 + $0x40] sm:$0xff]
        %v3068 = vld [vmem:[%s63 + $0x48] sm:$0xff]
        %v3069 = vld [vmem:[%s63 + $0x50] sm:$0xff]
        %v3070 = vld [vmem:[%s63 + $0x58] sm:$0xff]
        %v3071 = vld [vmem:[%s63 + $0x60] sm:$0xff]
        %v3072 = vld [vmem:[%s63 + $0x68] sm:$0xff]
        %v3073 = vld [vmem:[%s63 + $0x70] sm:$0xff]
        %v3074 = vld [vmem:[%s63 + $0x78] sm:$0xff]
        %v3075 = vld [vmem:[%s65] sm:$0xff]
        %v3076 = vmul.f32 %v2963, %v2965
        %v3077 = vmul.f32 %v2969, %v2971
        %v3078 = vmul.f32 %v2975, %v2977
        %3079 = vmatprep.subr.mxu0 0.0
        %3080 = vmatpush1.msra.mxu0 %v3059
        %3081 = vmatprep.subr.mxu0 0.0
        %3082 = vmatpush1.msra.mxu0 %v3060
        %3083 = vmatprep.subr.mxu0 0.0
        %3084 = vmatpush1.msra.mxu0 %v3061
        %3085 = vmatprep.subr.mxu0 0.0
        %3086 = vmatpush1.msra.mxu0 %v3062
        %3087 = vmatprep.subr.mxu0 0.0
        %3088 = vmatpush1.msra.mxu0 %v3063
        %3089 = vmatprep.subr.mxu0 0.0
        %3090 = vmatpush1.msra.mxu0 %v3064
        %3091 = vmatprep.subr.mxu0 0.0
        %3092 = vmatpush1.msra.mxu0 %v3065
        %3093 = vmatprep.subr.mxu0 0.0
        %3094 = vmatpush1.msra.mxu0 %v3066
        %3095 = vmatprep.subr.mxu0 0.0
        %3096 = vmatpush1.msra.mxu0 %v3067
        %3097 = vmatprep.subr.mxu0 0.0
        %3098 = vmatpush1.msra.mxu0 %v3068
        %3099 = vmatprep.subr.mxu0 0.0
        %3100 = vmatpush1.msra.mxu0 %v3069
        %3101 = vmatprep.subr.mxu0 0.0
        %3102 = vmatpush1.msra.mxu0 %v3070
        %3103 = vmatprep.subr.mxu0 0.0
        %3104 = vmatpush1.msra.mxu0 %v3071
        %3105 = vmatprep.subr.mxu0 0.0
        %3106 = vmatpush1.msra.mxu0 %v3072
        %3107 = vmatprep.subr.mxu0 0.0
        %3108 = vmatpush1.msra.mxu0 %v3073
        %3109 = vmatprep.subr.mxu0 0.0
        %3110 = vmatpush1.msra.mxu0 %v3074
        %3111 = vmatprep.subr.mxu0 0.0
        %3112 = vmatpush1.msra.mxu0 0.0
        %3113 = vmatprep.subr.mxu0 0.0
        %3114 = vmatpush1.msra.mxu0 0.0
        %3115 = vmatprep.subr.mxu0 0.0
        %3116 = vmatpush1.msra.mxu0 0.0
        %3117 = vmatprep.subr.mxu0 0.0
        %3118 = vmatpush1.msra.mxu0 0.0
        %3119 = vmatprep.subr.mxu0 0.0
        %3120 = vmatpush1.msra.mxu0 0.0
        %3121 = vmatprep.subr.mxu0 0.0
        %3122 = vmatpush1.msra.mxu0 0.0
        %3123 = vmatprep.subr.mxu0 0.0
        %3124 = vmatpush1.msra.mxu0 0.0
        %3125 = vmatprep.subr.mxu0 0.0
        %3126 = vmatpush1.msra.mxu0 0.0
        %3127 = vmatprep.subr.mxu0 0.0
        %3128 = vmatpush1.msra.mxu0 0.0
        %3129 = vmatprep.subr.mxu0 0.0
        %3130 = vmatpush1.msra.mxu0 0.0
        %3131 = vmatprep.subr.mxu0 0.0
        %3132 = vmatpush1.msra.mxu0 0.0
        %3133 = vmatprep.subr.mxu0 0.0
        %3134 = vmatpush1.msra.mxu0 0.0
        %3135 = vmatprep.subr.mxu0 0.0
        %3136 = vmatpush1.msra.mxu0 0.0
        %3137 = vmatprep.subr.mxu0 0.0
        %3138 = vmatpush1.msra.mxu0 0.0
        %3139 = vmatprep.subr.mxu0 0.0
        %3140 = vmatpush1.msra.mxu0 0.0
        %3141 = vmatprep.subr.mxu0 0.0
        %3142 = vmatpush1.msra.mxu0 0.0
        %3143 = vmatprep.mubr.f32.mxu0 0.0
        %3144 = vmatmul.mubr.f32.gmra.mrb[0].mxu0 %v3076
        %v3145 = vpop.f32.mrb[0].mxu0
        %v3146 = vadd.f32 0.0, %v3145
        %v3147 = vpop.f32.mrb[0].mxu0
        %3148 = vmatprep.mubr.f32.mxu0 0.0
        %3149 = vmatmul.mubr.f32.gmra.mrb[0].mxu0 %v3077
        %v3150 = vpop.f32.mrb[0].mxu0
        %v3151 = vadd.f32 0.0, %v3150
        %v3152 = vpop.f32.mrb[0].mxu0
        %3153 = vmatprep.mubr.f32.mxu0 0.0
        %3154 = vmatmul.mubr.f32.gmra.mrb[0].mxu0 %v3078
        %v3155 = vpop.f32.mrb[0].mxu0
        %v3156 = vadd.f32 0.0, %v3155
        %v3157 = vpop.f32.mrb[0].mxu0
        %3158 = vdwg.mxu0
        %v3159 = vmul.f32 %v3146, 0.35355338
        %v3160 = vmul.f32 %v3151, 0.35355338
        %v3161 = vmul.f32 %v3156, 0.35355338
        %v3162 = vmul.f32 %v2963, %v2971
        %v3163 = vmul.f32 %v2969, %v2977
        %v3164 = vmul.f32 %v2975, %v2965
        %3165 = vmatprep.subr.mxu0 0.0
        %3166 = vmatpush1.msra.mxu0 %v3059
        %3167 = vmatprep.subr.mxu0 0.0
        %3168 = vmatpush1.msra.mxu0 %v3060
        %3169 = vmatprep.subr.mxu0 0.0
        %3170 = vmatpush1.msra.mxu0 %v3061
        %3171 = vmatprep.subr.mxu0 0.0
        %3172 = vmatpush1.msra.mxu0 %v3062
        %3173 = vmatprep.subr.mxu0 0.0
        %3174 = vmatpush1.msra.mxu0 %v3063
        %3175 = vmatprep.subr.mxu0 0.0
        %3176 = vmatpush1.msra.mxu0 %v3064
        %3177 = vmatprep.subr.mxu0 0.0
        %3178 = vmatpush1.msra.mxu0 %v3065
        %3179 = vmatprep.subr.mxu0 0.0
        %3180 = vmatpush1.msra.mxu0 %v3066
        %3181 = vmatprep.subr.mxu0 0.0
        %3182 = vmatpush1.msra.mxu0 %v3067
        %3183 = vmatprep.subr.mxu0 0.0
        %3184 = vmatpush1.msra.mxu0 %v3068
        %3185 = vmatprep.subr.mxu0 0.0
        %3186 = vmatpush1.msra.mxu0 %v3069
        %3187 = vmatprep.subr.mxu0 0.0
        %3188 = vmatpush1.msra.mxu0 %v3070
        %3189 = vmatprep.subr.mxu0 0.0
        %3190 = vmatpush1.msra.mxu0 %v3071
        %3191 = vmatprep.subr.mxu0 0.0
        %3192 = vmatpush1.msra.mxu0 %v3072
        %3193 = vmatprep.subr.mxu0 0.0
        %3194 = vmatpush1.msra.mxu0 %v3073
        %3195 = vmatprep.subr.mxu0 0.0
        %3196 = vmatpush1.msra.mxu0 %v3074
        %3197 = vmatprep.subr.mxu0 0.0
        %3198 = vmatpush1.msra.mxu0 0.0
        %3199 = vmatprep.subr.mxu0 0.0
        %3200 = vmatpush1.msra.mxu0 0.0
        %3201 = vmatprep.subr.mxu0 0.0
        %3202 = vmatpush1.msra.mxu0 0.0
        %3203 = vmatprep.subr.mxu0 0.0
        %3204 = vmatpush1.msra.mxu0 0.0
        %3205 = vmatprep.subr.mxu0 0.0
        %3206 = vmatpush1.msra.mxu0 0.0
        %3207 = vmatprep.subr.mxu0 0.0
        %3208 = vmatpush1.msra.mxu0 0.0
        %3209 = vmatprep.subr.mxu0 0.0
        %3210 = vmatpush1.msra.mxu0 0.0
        %3211 = vmatprep.subr.mxu0 0.0
        %3212 = vmatpush1.msra.mxu0 0.0
        %3213 = vmatprep.subr.mxu0 0.0
        %3214 = vmatpush1.msra.mxu0 0.0
        %3215 = vmatprep.subr.mxu0 0.0
        %3216 = vmatpush1.msra.mxu0 0.0
        %3217 = vmatprep.subr.mxu0 0.0
        %3218 = vmatpush1.msra.mxu0 0.0
        %3219 = vmatprep.subr.mxu0 0.0
        %3220 = vmatpush1.msra.mxu0 0.0
        %3221 = vmatprep.subr.mxu0 0.0
        %3222 = vmatpush1.msra.mxu0 0.0
        %3223 = vmatprep.subr.mxu0 0.0
        %3224 = vmatpush1.msra.mxu0 0.0
        %3225 = vmatprep.subr.mxu0 0.0
        %3226 = vmatpush1.msra.mxu0 0.0
        %3227 = vmatprep.subr.mxu0 0.0
        %3228 = vmatpush1.msra.mxu0 0.0
        %3229 = vmatprep.mubr.f32.mxu0 0.0
        %3230 = vmatmul.mubr.f32.gmra.mrb[0].mxu0 %v3162
        %v3231 = vpop.f32.mrb[0].mxu0
        %v3232 = vadd.f32 0.0, %v3231
        %v3233 = vpop.f32.mrb[0].mxu0
        %3234 = vmatprep.mubr.f32.mxu0 0.0
        %3235 = vmatmul.mubr.f32.gmra.mrb[0].mxu0 %v3163
        %v3236 = vpop.f32.mrb[0].mxu0
        %v3237 = vadd.f32 0.0, %v3236
        %v3238 = vpop.f32.mrb[0].mxu0
        %3239 = vmatprep.mubr.f32.mxu0 0.0
        %3240 = vmatmul.mubr.f32.gmra.mrb[0].mxu0 %v3164
        %v3241 = vpop.f32.mrb[0].mxu0
        %v3242 = vadd.f32 0.0, %v3241
        %v3243 = vpop.f32.mrb[0].mxu0
        %3244 = vdwg.mxu0
        %v3245 = vmul.f32 %v3232, 0.35355338
        %v3246 = vmul.f32 %v3237, 0.35355338
        %v3247 = vmul.f32 %v3242, 0.35355338
        %v3248 = vmul.f32 %v2963, %v2977
        %v3249 = vmul.f32 %v2969, %v2965
        %v3250 = vmul.f32 %v2975, %v2971
        %3251 = vmatprep.subr.mxu0 0.0
        %3252 = vmatpush1.msra.mxu0 %v3059
        %3253 = vmatprep.subr.mxu0 0.0
        %3254 = vmatpush1.msra.mxu0 %v3060
        %3255 = vmatprep.subr.mxu0 0.0
        %3256 = vmatpush1.msra.mxu0 %v3061
        %3257 = vmatprep.subr.mxu0 0.0
        %3258 = vmatpush1.msra.mxu0 %v3062
        %3259 = vmatprep.subr.mxu0 0.0
        %3260 = vmatpush1.msra.mxu0 %v3063
        %3261 = vmatprep.subr.mxu0 0.0
        %3262 = vmatpush1.msra.mxu0 %v3064
        %3263 = vmatprep.subr.mxu0 0.0
        %3264 = vmatpush1.msra.mxu0 %v3065
        %3265 = vmatprep.subr.mxu0 0.0
        %3266 = vmatpush1.msra.mxu0 %v3066
        %3267 = vmatprep.subr.mxu0 0.0
        %3268 = vmatpush1.msra.mxu0 %v3067
        %3269 = vmatprep.subr.mxu0 0.0
        %3270 = vmatpush1.msra.mxu0 %v3068
        %3271 = vmatprep.subr.mxu0 0.0
        %3272 = vmatpush1.msra.mxu0 %v3069
        %3273 = vmatprep.subr.mxu0 0.0
        %3274 = vmatpush1.msra.mxu0 %v3070
        %3275 = vmatprep.subr.mxu0 0.0
        %3276 = vmatpush1.msra.mxu0 %v3071
        %3277 = vmatprep.subr.mxu0 0.0
        %3278 = vmatpush1.msra.mxu0 %v3072
        %3279 = vmatprep.subr.mxu0 0.0
        %3280 = vmatpush1.msra.mxu0 %v3073
        %3281 = vmatprep.subr.mxu0 0.0
        %3282 = vmatpush1.msra.mxu0 %v3074
        %3283 = vmatprep.subr.mxu0 0.0
        %3284 = vmatpush1.msra.mxu0 0.0
        %3285 = vmatprep.subr.mxu0 0.0
        %3286 = vmatpush1.msra.mxu0 0.0
        %3287 = vmatprep.subr.mxu0 0.0
        %3288 = vmatpush1.msra.mxu0 0.0
        %3289 = vmatprep.subr.mxu0 0.0
        %3290 = vmatpush1.msra.mxu0 0.0
        %3291 = vmatprep.subr.mxu0 0.0
        %3292 = vmatpush1.msra.mxu0 0.0
        %3293 = vmatprep.subr.mxu0 0.0
        %3294 = vmatpush1.msra.mxu0 0.0
        %3295 = vmatprep.subr.mxu0 0.0
        %3296 = vmatpush1.msra.mxu0 0.0
        %3297 = vmatprep.subr.mxu0 0.0
        %3298 = vmatpush1.msra.mxu0 0.0
        %3299 = vmatprep.subr.mxu0 0.0
        %3300 = vmatpush1.msra.mxu0 0.0
        %3301 = vmatprep.subr.mxu0 0.0
        %3302 = vmatpush1.msra.mxu0 0.0
        %3303 = vmatprep.subr.mxu0 0.0
        %3304 = vmatpush1.msra.mxu0 0.0
        %3305 = vmatprep.subr.mxu0 0.0
        %3306 = vmatpush1.msra.mxu0 0.0
        %3307 = vmatprep.subr.mxu0 0.0
        %3308 = vmatpush1.msra.mxu0 0.0
        %3309 = vmatprep.subr.mxu0 0.0
        %3310 = vmatpush1.msra.mxu0 0.0
        %3311 = vmatprep.subr.mxu0 0.0
        %3312 = vmatpush1.msra.mxu0 0.0
        %3313 = vmatprep.subr.mxu0 0.0
        %3314 = vmatpush1.msra.mxu0 0.0
        %3315 = vmatprep.mubr.f32.mxu0 0.0
        %3316 = vmatmul.mubr.f32.gmra.mrb[0].mxu0 %v3248
        %v3317 = vpop.f32.mrb[0].mxu0
        %v3318 = vadd.f32 0.0, %v3317
        %v3319 = vpop.f32.mrb[0].mxu0
        %3320 = vmatprep.mubr.f32.mxu0 0.0
        %3321 = vmatmul.mubr.f32.gmra.mrb[0].mxu0 %v3249
        %v3322 = vpop.f32.mrb[0].mxu0
        %v3323 = vadd.f32 0.0, %v3322
        %v3324 = vpop.f32.mrb[0].mxu0
        %3325 = vmatprep.mubr.f32.mxu0 0.0
        %3326 = vmatmul.mubr.f32.gmra.mrb[0].mxu0 %v3250
        %v3327 = vpop.f32.mrb[0].mxu0
        %v3328 = vadd.f32 0.0, %v3327
        %v3329 = vpop.f32.mrb[0].mxu0
        %3330 = vdwg.mxu0
        %v3331 = vmul.f32 %v3318, 0.35355338
        %v3332 = vmul.f32 %v3323, 0.35355338
        %v3333 = vmul.f32 %v3328, 0.35355338
        %v3334 = vmax.f32 %v3159, %v3245
        %v3335 = vmax.f32 %v3160, %v3246
        %v3336 = vmax.f32 %v3161, %v3247
        %v3337 = vmax.f32 %v3334, %v3331
        %v3338 = vmax.f32 %v3335, %v3332
        %v3339 = vmax.f32 %v3336, %v3333
        %v3340 = vsub.f32 %v3159, %v3337
        %v3341 = vsub.f32 %v3160, %v3338
        %v3342 = vsub.f32 %v3161, %v3339
        %v3343 = vmul.f32 %v3340, 1.442695
        %v3344 = vpow.pop %v3343
        %v3345 = vmul.f32 %v3341, 1.442695
        %v3346 = vpow.pop %v3345
        %v3347 = vmul.f32 %v3342, 1.442695
        %v3348 = vpow.pop %v3347
        %v3349 = vsub.f32 %v3245, %v3337
        %v3350 = vsub.f32 %v3246, %v3338
        %v3351 = vsub.f32 %v3247, %v3339
        %v3352 = vmul.f32 %v3349, 1.442695
        %v3353 = vpow.pop %v3352
        %v3354 = vmul.f32 %v3350, 1.442695
        %v3355 = vpow.pop %v3354
        %v3356 = vmul.f32 %v3351, 1.442695
        %v3357 = vpow.pop %v3356
        %v3358 = vsub.f32 %v3331, %v3337
        %v3359 = vsub.f32 %v3332, %v3338
        %v3360 = vsub.f32 %v3333, %v3339
        %v3361 = vmul.f32 %v3358, 1.442695
        %v3362 = vpow.pop %v3361
        %v3363 = vmul.f32 %v3359, 1.442695
        %v3364 = vpow.pop %v3363
        %v3365 = vmul.f32 %v3360, 1.442695
        %v3366 = vpow.pop %v3365
        %v3367 = vadd.f32 %v3344, %v3353
        %v3368 = vadd.f32 %v3346, %v3355
        %v3369 = vadd.f32 %v3348, %v3357
        %v3370 = vadd.f32 %v3367, %v3362
        %v3371 = vadd.f32 %v3368, %v3364
        %v3372 = vadd.f32 %v3369, %v3366
        %v3373 = vrcp.pop %v3370
        %v3374 = vmul.f32 1.0, %v3373
        %v3375 = vrcp.pop %v3371
        %v3376 = vmul.f32 1.0, %v3375
        %v3377 = vrcp.pop %v3372
        %v3378 = vmul.f32 1.0, %v3377
        %v3379 = vmul.f32 %v3344, %v3374
        %v3380 = vmul.f32 %v3346, %v3376
        %v3381 = vmul.f32 %v3348, %v3378
        %vm3382 = vcmask 64512
        %v3384 = vsel %vm3382, %v3379, 0
        %v3387 = vsel %vm3382, %v3380, 0
        %v3390 = vsel %vm3382, %v3381, 0
        %3392 = vmatprep.subr.mxu0 0.0
        %3393 = vmatpush1.msra.mxu0 %v3075
        %3394 = vmatprep.subr.mxu0 0.0
        %3395 = vmatpush1.msra.mxu0 0.0
        %3396 = vmatprep.subr.mxu0 0.0
        %3397 = vmatpush1.msra.mxu0 0.0
        %3398 = vmatprep.subr.mxu0 0.0
        %3399 = vmatpush1.msra.mxu0 0.0
        %3400 = vmatprep.subr.mxu0 0.0
        %3401 = vmatpush1.msra.mxu0 0.0
        %3402 = vmatprep.subr.mxu0 0.0
        %3403 = vmatpush1.msra.mxu0 0.0
        %3404 = vmatprep.subr.mxu0 0.0
        %3405 = vmatpush1.msra.mxu0 0.0
        %3406 = vmatprep.subr.mxu0 0.0
        %3407 = vmatpush1.msra.mxu0 0.0
        %3408 = vmatprep.subr.mxu0 0.0
        %3409 = vmatpush1.msra.mxu0 0.0
        %3410 = vmatprep.subr.mxu0 0.0
        %3411 = vmatpush1.msra.mxu0 0.0
        %3412 = vmatprep.subr.mxu0 0.0
        %3413 = vmatpush1.msra.mxu0 0.0
        %3414 = vmatprep.subr.mxu0 0.0
        %3415 = vmatpush1.msra.mxu0 0.0
        %3416 = vmatprep.subr.mxu0 0.0
        %3417 = vmatpush1.msra.mxu0 0.0
        %3418 = vmatprep.subr.mxu0 0.0
        %3419 = vmatpush1.msra.mxu0 0.0
        %3420 = vmatprep.subr.mxu0 0.0
        %3421 = vmatpush1.msra.mxu0 0.0
        %3422 = vmatprep.subr.mxu0 0.0
        %3423 = vmatpush1.msra.mxu0 0.0
        %3424 = vmatprep.subr.mxu0 0.0
        %3425 = vmatpush1.msra.mxu0 0.0
        %3426 = vmatprep.subr.mxu0 0.0
        %3427 = vmatpush1.msra.mxu0 0.0
        %3428 = vmatprep.subr.mxu0 0.0
        %3429 = vmatpush1.msra.mxu0 0.0
        %3430 = vmatprep.subr.mxu0 0.0
        %3431 = vmatpush1.msra.mxu0 0.0
        %3432 = vmatprep.subr.mxu0 0.0
        %3433 = vmatpush1.msra.mxu0 0.0
        %3434 = vmatprep.subr.mxu0 0.0
        %3435 = vmatpush1.msra.mxu0 0.0
        %3436 = vmatprep.subr.mxu0 0.0
        %3437 = vmatpush1.msra.mxu0 0.0
        %3438 = vmatprep.subr.mxu0 0.0
        %3439 = vmatpush1.msra.mxu0 0.0
        %3440 = vmatprep.subr.mxu0 0.0
        %3441 = vmatpush1.msra.mxu0 0.0
        %3442 = vmatprep.subr.mxu0 0.0
        %3443 = vmatpush1.msra.mxu0 0.0
        %3444 = vmatprep.subr.mxu0 0.0
        %3445 = vmatpush1.msra.mxu0 0.0
        %3446 = vmatprep.subr.mxu0 0.0
        %3447 = vmatpush1.msra.mxu0 0.0
        %3448 = vmatprep.subr.mxu0 0.0
        %3449 = vmatpush1.msra.mxu0 0.0
        %3450 = vmatprep.subr.mxu0 0.0
        %3451 = vmatpush1.msra.mxu0 0.0
        %3452 = vmatprep.subr.mxu0 0.0
        %3453 = vmatpush1.msra.mxu0 0.0
        %3454 = vmatprep.subr.mxu0 0.0
        %3455 = vmatpush1.msra.mxu0 0.0
        %3456 = vmatprep.mubr.f32.mxu0 0.0
        %3457 = vmatmul.mubr.f32.gmra.mrb[0].mxu0 %v3384
        %v3458 = vpop.f32.mrb[0].mxu0
        %v3459 = vadd.f32 0.0, %v3458
        %v3460 = vpop.f32.mrb[0].mxu0
        %3461 = vmatprep.mubr.f32.mxu0 0.0
        %3462 = vmatmul.mubr.f32.gmra.mrb[0].mxu0 %v3387
        %v3463 = vpop.f32.mrb[0].mxu0
        %v3464 = vadd.f32 0.0, %v3463
        %v3465 = vpop.f32.mrb[0].mxu0
        %3466 = vmatprep.mubr.f32.mxu0 0.0
        %3467 = vmatmul.mubr.f32.gmra.mrb[0].mxu0 %v3390
        %v3468 = vpop.f32.mrb[0].mxu0
        %v3469 = vadd.f32 0.0, %v3468
        %v3470 = vpop.f32.mrb[0].mxu0
        %3471 = vdwg.mxu0
        %v3472 = vmul.f32 %v3459, %v3046
        %v3473 = vmul.f32 %v3464, %v3051
        %v3474 = vmul.f32 %v3469, %v3056
        %v3475 = vadd.f32 %v3472, 0.0
        %v3476 = vadd.f32 %v3473, 0.0
        %v3477 = vadd.f32 %v3474, 0.0
        %v3478 = vmul.f32 %v3353, %v3374
        %v3479 = vmul.f32 %v3355, %v3376
        %v3480 = vmul.f32 %v3357, %v3378
        %v3482 = vsel %vm3382, %v3478, 0
        %v3485 = vsel %vm3382, %v3479, 0
        %v3488 = vsel %vm3382, %v3480, 0
        %3490 = vmatprep.subr.mxu0 0.0
        %3491 = vmatpush1.msra.mxu0 %v3075
        %3492 = vmatprep.subr.mxu0 0.0
        %3493 = vmatpush1.msra.mxu0 0.0
        %3494 = vmatprep.subr.mxu0 0.0
        %3495 = vmatpush1.msra.mxu0 0.0
        %3496 = vmatprep.subr.mxu0 0.0
        %3497 = vmatpush1.msra.mxu0 0.0
        %3498 = vmatprep.subr.mxu0 0.0
        %3499 = vmatpush1.msra.mxu0 0.0
        %3500 = vmatprep.subr.mxu0 0.0
        %3501 = vmatpush1.msra.mxu0 0.0
        %3502 = vmatprep.subr.mxu0 0.0
        %3503 = vmatpush1.msra.mxu0 0.0
        %3504 = vmatprep.subr.mxu0 0.0
        %3505 = vmatpush1.msra.mxu0 0.0
        %3506 = vmatprep.subr.mxu0 0.0
        %3507 = vmatpush1.msra.mxu0 0.0
        %3508 = vmatprep.subr.mxu0 0.0
        %3509 = vmatpush1.msra.mxu0 0.0
        %3510 = vmatprep.subr.mxu0 0.0
        %3511 = vmatpush1.msra.mxu0 0.0
        %3512 = vmatprep.subr.mxu0 0.0
        %3513 = vmatpush1.msra.mxu0 0.0
        %3514 = vmatprep.subr.mxu0 0.0
        %3515 = vmatpush1.msra.mxu0 0.0
        %3516 = vmatprep.subr.mxu0 0.0
        %3517 = vmatpush1.msra.mxu0 0.0
        %3518 = vmatprep.subr.mxu0 0.0
        %3519 = vmatpush1.msra.mxu0 0.0
        %3520 = vmatprep.subr.mxu0 0.0
        %3521 = vmatpush1.msra.mxu0 0.0
        %3522 = vmatprep.subr.mxu0 0.0
        %3523 = vmatpush1.msra.mxu0 0.0
        %3524 = vmatprep.subr.mxu0 0.0
        %3525 = vmatpush1.msra.mxu0 0.0
        %3526 = vmatprep.subr.mxu0 0.0
        %3527 = vmatpush1.msra.mxu0 0.0
        %3528 = vmatprep.subr.mxu0 0.0
        %3529 = vmatpush1.msra.mxu0 0.0
        %3530 = vmatprep.subr.mxu0 0.0
        %3531 = vmatpush1.msra.mxu0 0.0
        %3532 = vmatprep.subr.mxu0 0.0
        %3533 = vmatpush1.msra.mxu0 0.0
        %3534 = vmatprep.subr.mxu0 0.0
        %3535 = vmatpush1.msra.mxu0 0.0
        %3536 = vmatprep.subr.mxu0 0.0
        %3537 = vmatpush1.msra.mxu0 0.0
        %3538 = vmatprep.subr.mxu0 0.0
        %3539 = vmatpush1.msra.mxu0 0.0
        %3540 = vmatprep.subr.mxu0 0.0
        %3541 = vmatpush1.msra.mxu0 0.0
        %3542 = vmatprep.subr.mxu0 0.0
        %3543 = vmatpush1.msra.mxu0 0.0
        %3544 = vmatprep.subr.mxu0 0.0
        %3545 = vmatpush1.msra.mxu0 0.0
        %3546 = vmatprep.subr.mxu0 0.0
        %3547 = vmatpush1.msra.mxu0 0.0
        %3548 = vmatprep.subr.mxu0 0.0
        %3549 = vmatpush1.msra.mxu0 0.0
        %3550 = vmatprep.subr.mxu0 0.0
        %3551 = vmatpush1.msra.mxu0 0.0
        %3552 = vmatprep.subr.mxu0 0.0
        %3553 = vmatpush1.msra.mxu0 0.0
        %3554 = vmatprep.mubr.f32.mxu0 0.0
        %3555 = vmatmul.mubr.f32.gmra.mrb[0].mxu0 %v3482
        %v3556 = vpop.f32.mrb[0].mxu0
        %v3557 = vadd.f32 0.0, %v3556
        %v3558 = vpop.f32.mrb[0].mxu0
        %3559 = vmatprep.mubr.f32.mxu0 0.0
        %3560 = vmatmul.mubr.f32.gmra.mrb[0].mxu0 %v3485
        %v3561 = vpop.f32.mrb[0].mxu0
        %v3562 = vadd.f32 0.0, %v3561
        %v3563 = vpop.f32.mrb[0].mxu0
        %3564 = vmatprep.mubr.f32.mxu0 0.0
        %3565 = vmatmul.mubr.f32.gmra.mrb[0].mxu0 %v3488
        %v3566 = vpop.f32.mrb[0].mxu0
        %v3567 = vadd.f32 0.0, %v3566
        %v3568 = vpop.f32.mrb[0].mxu0
        %3569 = vdwg.mxu0
        %v3570 = vmul.f32 %v3557, %v3051
        %v3571 = vmul.f32 %v3562, %v3056
        %v3572 = vmul.f32 %v3567, %v3046
        %v3573 = vadd.f32 %v3475, %v3570
        %v3574 = vadd.f32 %v3476, %v3571
        %v3575 = vadd.f32 %v3477, %v3572
        %v3576 = vmul.f32 %v3362, %v3374
        %v3577 = vmul.f32 %v3364, %v3376
        %v3578 = vmul.f32 %v3366, %v3378
        %v3580 = vsel %vm3382, %v3576, 0
        %v3583 = vsel %vm3382, %v3577, 0
        %v3586 = vsel %vm3382, %v3578, 0
        %3588 = vmatprep.subr.mxu0 0.0
        %3589 = vmatpush1.msra.mxu0 %v3075
        %3590 = vmatprep.subr.mxu0 0.0
        %3591 = vmatpush1.msra.mxu0 0.0
        %3592 = vmatprep.subr.mxu0 0.0
        %3593 = vmatpush1.msra.mxu0 0.0
        %3594 = vmatprep.subr.mxu0 0.0
        %3595 = vmatpush1.msra.mxu0 0.0
        %3596 = vmatprep.subr.mxu0 0.0
        %3597 = vmatpush1.msra.mxu0 0.0
        %3598 = vmatprep.subr.mxu0 0.0
        %3599 = vmatpush1.msra.mxu0 0.0
        %3600 = vmatprep.subr.mxu0 0.0
        %3601 = vmatpush1.msra.mxu0 0.0
        %3602 = vmatprep.subr.mxu0 0.0
        %3603 = vmatpush1.msra.mxu0 0.0
        %3604 = vmatprep.subr.mxu0 0.0
        %3605 = vmatpush1.msra.mxu0 0.0
        %3606 = vmatprep.subr.mxu0 0.0
        %3607 = vmatpush1.msra.mxu0 0.0
        %3608 = vmatprep.subr.mxu0 0.0
        %3609 = vmatpush1.msra.mxu0 0.0
        %3610 = vmatprep.subr.mxu0 0.0
        %3611 = vmatpush1.msra.mxu0 0.0
        %3612 = vmatprep.subr.mxu0 0.0
        %3613 = vmatpush1.msra.mxu0 0.0
        %3614 = vmatprep.subr.mxu0 0.0
        %3615 = vmatpush1.msra.mxu0 0.0
        %3616 = vmatprep.subr.mxu0 0.0
        %3617 = vmatpush1.msra.mxu0 0.0
        %3618 = vmatprep.subr.mxu0 0.0
        %3619 = vmatpush1.msra.mxu0 0.0
        %3620 = vmatprep.subr.mxu0 0.0
        %3621 = vmatpush1.msra.mxu0 0.0
        %3622 = vmatprep.subr.mxu0 0.0
        %3623 = vmatpush1.msra.mxu0 0.0
        %3624 = vmatprep.subr.mxu0 0.0
        %3625 = vmatpush1.msra.mxu0 0.0
        %3626 = vmatprep.subr.mxu0 0.0
        %3627 = vmatpush1.msra.mxu0 0.0
        %3628 = vmatprep.subr.mxu0 0.0
        %3629 = vmatpush1.msra.mxu0 0.0
        %3630 = vmatprep.subr.mxu0 0.0
        %3631 = vmatpush1.msra.mxu0 0.0
        %3632 = vmatprep.subr.mxu0 0.0
        %3633 = vmatpush1.msra.mxu0 0.0
        %3634 = vmatprep.subr.mxu0 0.0
        %3635 = vmatpush1.msra.mxu0 0.0
        %3636 = vmatprep.subr.mxu0 0.0
        %3637 = vmatpush1.msra.mxu0 0.0
        %3638 = vmatprep.subr.mxu0 0.0
        %3639 = vmatpush1.msra.mxu0 0.0
        %3640 = vmatprep.subr.mxu0 0.0
        %3641 = vmatpush1.msra.mxu0 0.0
        %3642 = vmatprep.subr.mxu0 0.0
        %3643 = vmatpush1.msra.mxu0 0.0
        %3644 = vmatprep.subr.mxu0 0.0
        %3645 = vmatpush1.msra.mxu0 0.0
        %3646 = vmatprep.subr.mxu0 0.0
        %3647 = vmatpush1.msra.mxu0 0.0
        %3648 = vmatprep.subr.mxu0 0.0
        %3649 = vmatpush1.msra.mxu0 0.0
        %3650 = vmatprep.subr.mxu0 0.0
        %3651 = vmatpush1.msra.mxu0 0.0
        %3652 = vmatprep.mubr.f32.mxu0 0.0
        %3653 = vmatmul.mubr.f32.gmra.mrb[0].mxu0 %v3580
        %v3654 = vpop.f32.mrb[0].mxu0
        %v3655 = vadd.f32 0.0, %v3654
        %v3656 = vpop.f32.mrb[0].mxu0
        %3657 = vmatprep.mubr.f32.mxu0 0.0
        %3658 = vmatmul.mubr.f32.gmra.mrb[0].mxu0 %v3583
        %v3659 = vpop.f32.mrb[0].mxu0
        %v3660 = vadd.f32 0.0, %v3659
        %v3661 = vpop.f32.mrb[0].mxu0
        %3662 = vmatprep.mubr.f32.mxu0 0.0
        %3663 = vmatmul.mubr.f32.gmra.mrb[0].mxu0 %v3586
        %v3664 = vpop.f32.mrb[0].mxu0
        %v3665 = vadd.f32 0.0, %v3664
        %v3666 = vpop.f32.mrb[0].mxu0
        %3667 = vdwg.mxu0
        %v3668 = vmul.f32 %v3655, %v3056
        %v3669 = vmul.f32 %v3660, %v3046
        %v3670 = vmul.f32 %v3665, %v3051
        %v3671 = vadd.f32 %v3573, %v3668
        %v3672 = vadd.f32 %v3574, %v3669
        %v3673 = vadd.f32 %v3575, %v3670
        %v3674 = vadd.f32 %v3671, %v3672
        %v3675 = vadd.f32 %v3674, %v3673
        %v3676 = vmul.f32 %v3675, 0.33333334
        %v3677 = vld [vmem:[#allocation20] sm:$0xff]
        %v3678 = vld [vmem:[#allocation20 + $0x8] sm:$0xff]
        %v3679 = vld [vmem:[#allocation20 + $0x10] sm:$0xff]
        %v3680 = vld [vmem:[#allocation20 + $0x18] sm:$0xff]
        %v3681 = vld [vmem:[#allocation20 + $0x20] sm:$0xff]
        %v3682 = vld [vmem:[#allocation20 + $0x28] sm:$0xff]
        %v3683 = vld [vmem:[#allocation20 + $0x30] sm:$0xff]
        %v3684 = vld [vmem:[#allocation20 + $0x38] sm:$0xff]
        %v3685 = vld [vmem:[#allocation20 + $0x40] sm:$0xff]
        %v3686 = vld [vmem:[#allocation20 + $0x48] sm:$0xff]
        %v3687 = vld [vmem:[#allocation20 + $0x50] sm:$0xff]
        %v3688 = vld [vmem:[#allocation20 + $0x58] sm:$0xff]
        %v3689 = vld [vmem:[#allocation20 + $0x60] sm:$0xff]
        %v3690 = vld [vmem:[#allocation20 + $0x68] sm:$0xff]
        %v3691 = vld [vmem:[#allocation20 + $0x70] sm:$0xff]
        %v3692 = vld [vmem:[#allocation20 + $0x78] sm:$0xff]
        %v3693 = vld [vmem:[%s49] sm:$0x1]
        %v3695 = vlaneseq
        %v3696 = vshrl.u32 %v3695, 7
        %v3697 = vsub.s32 0, %v3696
        %v3698 = vrot.slane %v3693, %v3697
        %3700 = vmatprep.subr.mxu0 0.0
        %3701 = vmatpush1.msra.mxu0 %v3677
        %3702 = vmatprep.subr.mxu0 0.0
        %3703 = vmatpush1.msra.mxu0 %v3678
        %3704 = vmatprep.subr.mxu0 0.0
        %3705 = vmatpush1.msra.mxu0 %v3679
        %3706 = vmatprep.subr.mxu0 0.0
        %3707 = vmatpush1.msra.mxu0 %v3680
        %3708 = vmatprep.subr.mxu0 0.0
        %3709 = vmatpush1.msra.mxu0 %v3681
        %3710 = vmatprep.subr.mxu0 0.0
        %3711 = vmatpush1.msra.mxu0 %v3682
        %3712 = vmatprep.subr.mxu0 0.0
        %3713 = vmatpush1.msra.mxu0 %v3683
        %3714 = vmatprep.subr.mxu0 0.0
        %3715 = vmatpush1.msra.mxu0 %v3684
        %3716 = vmatprep.subr.mxu0 0.0
        %3717 = vmatpush1.msra.mxu0 %v3685
        %3718 = vmatprep.subr.mxu0 0.0
        %3719 = vmatpush1.msra.mxu0 %v3686
        %3720 = vmatprep.subr.mxu0 0.0
        %3721 = vmatpush1.msra.mxu0 %v3687
        %3722 = vmatprep.subr.mxu0 0.0
        %3723 = vmatpush1.msra.mxu0 %v3688
        %3724 = vmatprep.subr.mxu0 0.0
        %3725 = vmatpush1.msra.mxu0 %v3689
        %3726 = vmatprep.subr.mxu0 0.0
        %3727 = vmatpush1.msra.mxu0 %v3690
        %3728 = vmatprep.subr.mxu0 0.0
        %3729 = vmatpush1.msra.mxu0 %v3691
        %3730 = vmatprep.subr.mxu0 0.0
        %3731 = vmatpush1.msra.mxu0 %v3692
        %3732 = vmatprep.subr.mxu0 0.0
        %3733 = vmatpush1.msra.mxu0 0.0
        %3734 = vmatprep.subr.mxu0 0.0
        %3735 = vmatpush1.msra.mxu0 0.0
        %3736 = vmatprep.subr.mxu0 0.0
        %3737 = vmatpush1.msra.mxu0 0.0
        %3738 = vmatprep.subr.mxu0 0.0
        %3739 = vmatpush1.msra.mxu0 0.0
        %3740 = vmatprep.subr.mxu0 0.0
        %3741 = vmatpush1.msra.mxu0 0.0
        %3742 = vmatprep.subr.mxu0 0.0
        %3743 = vmatpush1.msra.mxu0 0.0
        %3744 = vmatprep.subr.mxu0 0.0
        %3745 = vmatpush1.msra.mxu0 0.0
        %3746 = vmatprep.subr.mxu0 0.0
        %3747 = vmatpush1.msra.mxu0 0.0
        %3748 = vmatprep.subr.mxu0 0.0
        %3749 = vmatpush1.msra.mxu0 0.0
        %3750 = vmatprep.subr.mxu0 0.0
        %3751 = vmatpush1.msra.mxu0 0.0
        %3752 = vmatprep.subr.mxu0 0.0
        %3753 = vmatpush1.msra.mxu0 0.0
        %3754 = vmatprep.subr.mxu0 0.0
        %3755 = vmatpush1.msra.mxu0 0.0
        %3756 = vmatprep.subr.mxu0 0.0
        %3757 = vmatpush1.msra.mxu0 0.0
        %3758 = vmatprep.subr.mxu0 0.0
        %3759 = vmatpush1.msra.mxu0 0.0
        %3760 = vmatprep.subr.mxu0 0.0
        %3761 = vmatpush1.msra.mxu0 0.0
        %3762 = vmatprep.subr.mxu0 0.0
        %3763 = vmatpush1.msra.mxu0 0.0
        %3764 = vmatprep.mubr.f32.mxu0 0.0
        %3765 = vmatmul.mubr.f32.gmra.mrb[0].mxu0 %v3676
        %v3766 = vpop.f32.mrb[0].mxu0
        %v3767 = vadd.f32 %v3698, %v3766
        %v3768 = vpop.f32.mrb[0].mxu0
        %3769 = vdwg.mxu0
        %v3770 = vld [vmem:[#allocation22] sm:$0xff]
        %v3771 = vld [vmem:[#allocation22 + $0x8] sm:$0xff]
        %v3772 = vld [vmem:[#allocation22 + $0x10] sm:$0xff]
        %v3773 = vld [vmem:[#allocation22 + $0x18] sm:$0xff]
        %v3774 = vld [vmem:[#allocation22 + $0x20] sm:$0xff]
        %v3775 = vld [vmem:[#allocation22 + $0x28] sm:$0xff]
        %v3776 = vld [vmem:[#allocation22 + $0x30] sm:$0xff]
        %v3777 = vld [vmem:[#allocation22 + $0x38] sm:$0xff]
        %v3778 = vld [vmem:[#allocation22 + $0x40] sm:$0xff]
        %v3779 = vld [vmem:[#allocation22 + $0x48] sm:$0xff]
        %v3780 = vld [vmem:[#allocation22 + $0x50] sm:$0xff]
        %v3781 = vld [vmem:[#allocation22 + $0x58] sm:$0xff]
        %v3782 = vld [vmem:[#allocation22 + $0x60] sm:$0xff]
        %v3783 = vld [vmem:[#allocation22 + $0x68] sm:$0xff]
        %v3784 = vld [vmem:[#allocation22 + $0x70] sm:$0xff]
        %v3785 = vld [vmem:[#allocation22 + $0x78] sm:$0xff]
        %v3786 = vld [vmem:[%s53] sm:$0x1]
        %v3788 = vlaneseq
        %v3789 = vshrl.u32 %v3788, 7
        %v3790 = vsub.s32 0, %v3789
        %v3791 = vrot.slane %v3786, %v3790
        %3793 = vmatprep.subr.mxu0 0.0
        %3794 = vmatpush1.msra.mxu0 %v3770
        %3795 = vmatprep.subr.mxu0 0.0
        %3796 = vmatpush1.msra.mxu0 %v3771
        %3797 = vmatprep.subr.mxu0 0.0
        %3798 = vmatpush1.msra.mxu0 %v3772
        %3799 = vmatprep.subr.mxu0 0.0
        %3800 = vmatpush1.msra.mxu0 %v3773
        %3801 = vmatprep.subr.mxu0 0.0
        %3802 = vmatpush1.msra.mxu0 %v3774
        %3803 = vmatprep.subr.mxu0 0.0
        %3804 = vmatpush1.msra.mxu0 %v3775
        %3805 = vmatprep.subr.mxu0 0.0
        %3806 = vmatpush1.msra.mxu0 %v3776
        %3807 = vmatprep.subr.mxu0 0.0
        %3808 = vmatpush1.msra.mxu0 %v3777
        %3809 = vmatprep.subr.mxu0 0.0
        %3810 = vmatpush1.msra.mxu0 %v3778
        %3811 = vmatprep.subr.mxu0 0.0
        %3812 = vmatpush1.msra.mxu0 %v3779
        %3813 = vmatprep.subr.mxu0 0.0
        %3814 = vmatpush1.msra.mxu0 %v3780
        %3815 = vmatprep.subr.mxu0 0.0
        %3816 = vmatpush1.msra.mxu0 %v3781
        %3817 = vmatprep.subr.mxu0 0.0
        %3818 = vmatpush1.msra.mxu0 %v3782
        %3819 = vmatprep.subr.mxu0 0.0
        %3820 = vmatpush1.msra.mxu0 %v3783
        %3821 = vmatprep.subr.mxu0 0.0
        %3822 = vmatpush1.msra.mxu0 %v3784
        %3823 = vmatprep.subr.mxu0 0.0
        %3824 = vmatpush1.msra.mxu0 %v3785
        %3825 = vmatprep.subr.mxu0 0.0
        %3826 = vmatpush1.msra.mxu0 0.0
        %3827 = vmatprep.subr.mxu0 0.0
        %3828 = vmatpush1.msra.mxu0 0.0
        %3829 = vmatprep.subr.mxu0 0.0
        %3830 = vmatpush1.msra.mxu0 0.0
        %3831 = vmatprep.subr.mxu0 0.0
        %3832 = vmatpush1.msra.mxu0 0.0
        %3833 = vmatprep.subr.mxu0 0.0
        %3834 = vmatpush1.msra.mxu0 0.0
        %3835 = vmatprep.subr.mxu0 0.0
        %3836 = vmatpush1.msra.mxu0 0.0
        %3837 = vmatprep.subr.mxu0 0.0
        %3838 = vmatpush1.msra.mxu0 0.0
        %3839 = vmatprep.subr.mxu0 0.0
        %3840 = vmatpush1.msra.mxu0 0.0
        %3841 = vmatprep.subr.mxu0 0.0
        %3842 = vmatpush1.msra.mxu0 0.0
        %3843 = vmatprep.subr.mxu0 0.0
        %3844 = vmatpush1.msra.mxu0 0.0
        %3845 = vmatprep.subr.mxu0 0.0
        %3846 = vmatpush1.msra.mxu0 0.0
        %3847 = vmatprep.subr.mxu0 0.0
        %3848 = vmatpush1.msra.mxu0 0.0
        %3849 = vmatprep.subr.mxu0 0.0
        %3850 = vmatpush1.msra.mxu0 0.0
        %3851 = vmatprep.subr.mxu0 0.0
        %3852 = vmatpush1.msra.mxu0 0.0
        %3853 = vmatprep.subr.mxu0 0.0
        %3854 = vmatpush1.msra.mxu0 0.0
        %3855 = vmatprep.subr.mxu0 0.0
        %3856 = vmatpush1.msra.mxu0 0.0
        %3857 = vmatprep.mubr.f32.mxu0 0.0
        %3858 = vmatmul.mubr.f32.gmra.mrb[0].mxu0 %v3767
        %v3859 = vpop.f32.mrb[0].mxu0
        %v3860 = vadd.f32 %v3791, %v3859
        %v3861 = vpop.f32.mrb[0].mxu0
        %3862 = vdwg.mxu0
        %v3863 = vmax.f32 %v3860, 0.0
        %v3864 = vld [vmem:[#allocation23] sm:$0xff]
        %v3865 = vld [vmem:[#allocation23 + $0x8] sm:$0xff]
        %v3866 = vld [vmem:[#allocation23 + $0x10] sm:$0xff]
        %v3867 = vld [vmem:[#allocation23 + $0x18] sm:$0xff]
        %v3868 = vld [vmem:[#allocation23 + $0x20] sm:$0xff]
        %v3869 = vld [vmem:[#allocation23 + $0x28] sm:$0xff]
        %v3870 = vld [vmem:[#allocation23 + $0x30] sm:$0xff]
        %v3871 = vld [vmem:[#allocation23 + $0x38] sm:$0xff]
        %v3872 = vld [vmem:[#allocation23 + $0x40] sm:$0xff]
        %v3873 = vld [vmem:[#allocation23 + $0x48] sm:$0xff]
        %v3874 = vld [vmem:[#allocation23 + $0x50] sm:$0xff]
        %v3875 = vld [vmem:[#allocation23 + $0x58] sm:$0xff]
        %v3876 = vld [vmem:[#allocation23 + $0x60] sm:$0xff]
        %v3877 = vld [vmem:[#allocation23 + $0x68] sm:$0xff]
        %v3878 = vld [vmem:[#allocation23 + $0x70] sm:$0xff]
        %v3879 = vld [vmem:[#allocation23 + $0x78] sm:$0xff]
        %v3880 = vld [vmem:[%s57] sm:$0x1]
        %v3882 = vlaneseq
        %v3883 = vshrl.u32 %v3882, 7
        %v3884 = vsub.s32 0, %v3883
        %v3885 = vrot.slane %v3880, %v3884
        %3887 = vmatprep.subr.mxu0 0.0
        %3888 = vmatpush1.msra.mxu0 %v3864
        %3889 = vmatprep.subr.mxu0 0.0
        %3890 = vmatpush1.msra.mxu0 %v3865
        %3891 = vmatprep.subr.mxu0 0.0
        %3892 = vmatpush1.msra.mxu0 %v3866
        %3893 = vmatprep.subr.mxu0 0.0
        %3894 = vmatpush1.msra.mxu0 %v3867
        %3895 = vmatprep.subr.mxu0 0.0
        %3896 = vmatpush1.msra.mxu0 %v3868
        %3897 = vmatprep.subr.mxu0 0.0
        %3898 = vmatpush1.msra.mxu0 %v3869
        %3899 = vmatprep.subr.mxu0 0.0
        %3900 = vmatpush1.msra.mxu0 %v3870
        %3901 = vmatprep.subr.mxu0 0.0
        %3902 = vmatpush1.msra.mxu0 %v3871
        %3903 = vmatprep.subr.mxu0 0.0
        %3904 = vmatpush1.msra.mxu0 %v3872
        %3905 = vmatprep.subr.mxu0 0.0
        %3906 = vmatpush1.msra.mxu0 %v3873
        %3907 = vmatprep.subr.mxu0 0.0
        %3908 = vmatpush1.msra.mxu0 %v3874
        %3909 = vmatprep.subr.mxu0 0.0
        %3910 = vmatpush1.msra.mxu0 %v3875
        %3911 = vmatprep.subr.mxu0 0.0
        %3912 = vmatpush1.msra.mxu0 %v3876
        %3913 = vmatprep.subr.mxu0 0.0
        %3914 = vmatpush1.msra.mxu0 %v3877
        %3915 = vmatprep.subr.mxu0 0.0
        %3916 = vmatpush1.msra.mxu0 %v3878
        %3917 = vmatprep.subr.mxu0 0.0
        %3918 = vmatpush1.msra.mxu0 %v3879
        %3919 = vmatprep.subr.mxu0 0.0
        %3920 = vmatpush1.msra.mxu0 0.0
        %3921 = vmatprep.subr.mxu0 0.0
        %3922 = vmatpush1.msra.mxu0 0.0
        %3923 = vmatprep.subr.mxu0 0.0
        %3924 = vmatpush1.msra.mxu0 0.0
        %3925 = vmatprep.subr.mxu0 0.0
        %3926 = vmatpush1.msra.mxu0 0.0
        %3927 = vmatprep.subr.mxu0 0.0
        %3928 = vmatpush1.msra.mxu0 0.0
        %3929 = vmatprep.subr.mxu0 0.0
        %3930 = vmatpush1.msra.mxu0 0.0
        %3931 = vmatprep.subr.mxu0 0.0
        %3932 = vmatpush1.msra.mxu0 0.0
        %3933 = vmatprep.subr.mxu0 0.0
        %3934 = vmatpush1.msra.mxu0 0.0
        %3935 = vmatprep.subr.mxu0 0.0
        %3936 = vmatpush1.msra.mxu0 0.0
        %3937 = vmatprep.subr.mxu0 0.0
        %3938 = vmatpush1.msra.mxu0 0.0
        %3939 = vmatprep.subr.mxu0 0.0
        %3940 = vmatpush1.msra.mxu0 0.0
        %3941 = vmatprep.subr.mxu0 0.0
        %3942 = vmatpush1.msra.mxu0 0.0
        %3943 = vmatprep.subr.mxu0 0.0
        %3944 = vmatpush1.msra.mxu0 0.0
        %3945 = vmatprep.subr.mxu0 0.0
        %3946 = vmatpush1.msra.mxu0 0.0
        %3947 = vmatprep.subr.mxu0 0.0
        %3948 = vmatpush1.msra.mxu0 0.0
        %3949 = vmatprep.subr.mxu0 0.0
        %3950 = vmatpush1.msra.mxu0 0.0
        %3951 = vmatprep.mubr.f32.mxu0 0.0
        %3952 = vmatmul.mubr.f32.gmra.mrb[0].mxu0 %v3863
        %v3953 = vpop.f32.mrb[0].mxu0
        %v3954 = vadd.f32 %v3885, %v3953
        %v3955 = vpop.f32.mrb[0].mxu0
        %3956 = vdwg.mxu0
        %v3957 = vmax.f32 %v3954, 0.0
        %v3958 = vld [vmem:[#allocation25] sm:$0xff]
        %v3959 = vld [vmem:[#allocation25 + $0x8] sm:$0xff]
        %v3960 = vld [vmem:[#allocation25 + $0x10] sm:$0xff]
        %v3961 = vld [vmem:[#allocation25 + $0x18] sm:$0xff]
        %v3962 = vld [vmem:[#allocation25 + $0x20] sm:$0xff]
        %v3963 = vld [vmem:[#allocation25 + $0x28] sm:$0xff]
        %v3964 = vld [vmem:[#allocation25 + $0x30] sm:$0xff]
        %v3965 = vld [vmem:[#allocation25 + $0x38] sm:$0xff]
        %v3966 = vld [vmem:[#allocation25 + $0x40] sm:$0xff]
        %v3967 = vld [vmem:[#allocation25 + $0x48] sm:$0xff]
        %v3968 = vld [vmem:[#allocation25 + $0x50] sm:$0xff]
        %v3969 = vld [vmem:[#allocation25 + $0x58] sm:$0xff]
        %v3970 = vld [vmem:[#allocation25 + $0x60] sm:$0xff]
        %v3971 = vld [vmem:[#allocation25 + $0x68] sm:$0xff]
        %v3972 = vld [vmem:[#allocation25 + $0x70] sm:$0xff]
        %v3973 = vld [vmem:[#allocation25 + $0x78] sm:$0xff]
        %v3974 = vld [vmem:[%s61] sm:$0x1]
        %v3976 = vlaneseq
        %v3977 = vshrl.u32 %v3976, 7
        %v3978 = vsub.s32 0, %v3977
        %v3979 = vrot.slane %v3974, %v3978
        %3981 = vmatprep.subr.mxu0 0.0
        %3982 = vmatpush1.msra.mxu0 %v3958
        %3983 = vmatprep.subr.mxu0 0.0
        %3984 = vmatpush1.msra.mxu0 %v3959
        %3985 = vmatprep.subr.mxu0 0.0
        %3986 = vmatpush1.msra.mxu0 %v3960
        %3987 = vmatprep.subr.mxu0 0.0
        %3988 = vmatpush1.msra.mxu0 %v3961
        %3989 = vmatprep.subr.mxu0 0.0
        %3990 = vmatpush1.msra.mxu0 %v3962
        %3991 = vmatprep.subr.mxu0 0.0
        %3992 = vmatpush1.msra.mxu0 %v3963
        %3993 = vmatprep.subr.mxu0 0.0
        %3994 = vmatpush1.msra.mxu0 %v3964
        %3995 = vmatprep.subr.mxu0 0.0
        %3996 = vmatpush1.msra.mxu0 %v3965
        %3997 = vmatprep.subr.mxu0 0.0
        %3998 = vmatpush1.msra.mxu0 %v3966
        %3999 = vmatprep.subr.mxu0 0.0
        %4000 = vmatpush1.msra.mxu0 %v3967
        %4001 = vmatprep.subr.mxu0 0.0
        %4002 = vmatpush1.msra.mxu0 %v3968
        %4003 = vmatprep.subr.mxu0 0.0
        %4004 = vmatpush1.msra.mxu0 %v3969
        %4005 = vmatprep.subr.mxu0 0.0
        %4006 = vmatpush1.msra.mxu0 %v3970
        %4007 = vmatprep.subr.mxu0 0.0
        %4008 = vmatpush1.msra.mxu0 %v3971
        %4009 = vmatprep.subr.mxu0 0.0
        %4010 = vmatpush1.msra.mxu0 %v3972
        %4011 = vmatprep.subr.mxu0 0.0
        %4012 = vmatpush1.msra.mxu0 %v3973
        %4013 = vmatprep.subr.mxu0 0.0
        %4014 = vmatpush1.msra.mxu0 0.0
        %4015 = vmatprep.subr.mxu0 0.0
        %4016 = vmatpush1.msra.mxu0 0.0
        %4017 = vmatprep.subr.mxu0 0.0
        %4018 = vmatpush1.msra.mxu0 0.0
        %4019 = vmatprep.subr.mxu0 0.0
        %4020 = vmatpush1.msra.mxu0 0.0
        %4021 = vmatprep.subr.mxu0 0.0
        %4022 = vmatpush1.msra.mxu0 0.0
        %4023 = vmatprep.subr.mxu0 0.0
        %4024 = vmatpush1.msra.mxu0 0.0
        %4025 = vmatprep.subr.mxu0 0.0
        %4026 = vmatpush1.msra.mxu0 0.0
        %4027 = vmatprep.subr.mxu0 0.0
        %4028 = vmatpush1.msra.mxu0 0.0
        %4029 = vmatprep.subr.mxu0 0.0
        %4030 = vmatpush1.msra.mxu0 0.0
        %4031 = vmatprep.subr.mxu0 0.0
        %4032 = vmatpush1.msra.mxu0 0.0
        %4033 = vmatprep.subr.mxu0 0.0
        %4034 = vmatpush1.msra.mxu0 0.0
        %4035 = vmatprep.subr.mxu0 0.0
        %4036 = vmatpush1.msra.mxu0 0.0
        %4037 = vmatprep.subr.mxu0 0.0
        %4038 = vmatpush1.msra.mxu0 0.0
        %4039 = vmatprep.subr.mxu0 0.0
        %4040 = vmatpush1.msra.mxu0 0.0
        %4041 = vmatprep.subr.mxu0 0.0
        %4042 = vmatpush1.msra.mxu0 0.0
        %4043 = vmatprep.subr.mxu0 0.0
        %4044 = vmatpush1.msra.mxu0 0.0
        %4045 = vmatprep.mubr.f32.mxu0 0.0
        %4046 = vmatmul.mubr.f32.gmra.mrb[0].mxu0 %v3957
        %v4047 = vpop.f32.mrb[0].mxu0
        %v4048 = vadd.f32 %v3979, %v4047
        %v4049 = vpop.f32.mrb[0].mxu0
        %4050 = vdwg.mxu0
        %4051 = vst [vmem:[%s1245] sm:$0xff] %v4048
        %4052 = vst [vmem:[%s1245 + $0x8] sm:$0xff] %v1881
        %4053 = vst [vmem:[%s1245 + $0x10] sm:$0xff] %v2507
        %4054 = vst [vmem:[%s1245 + $0x18] sm:$0xff] %v2828
        %4055 = vst [vmem:[%s1245 + $0x20] sm:$0xff] %v3957
        %s4056 = sand.u32 %s805, 1
        %s4057 = scalar_lea.sflag [#allocation4], %s4056
        %s4058 = sand.u32 %s805, 1
        %s4059 = smul.addr %s4058, 40
        %s4060 = scalar_lea.vmem [#allocation26], %s4059
        // Predicated region
        $region213: #{tpu_custom_call.1} parent=151 // pred_check
          %p4061 = pneg %p815
        $region214: #{tpu_custom_call.1} parent=151 // pred_check_branch
          %4063 = sbr.rel (%p4061) target = $region216
        $region215: #{tpu_custom_call.1} parent=151 // pred_region
          %s4065 = ssub.s32 640, 640
          %4066 = vsyncadd %s4057, %s4065
          %s4067 = smul.addr %s89, 5
          %s4068 = smul.addr %s4067, 128
          %s4069 = scalar_lea.hbm %s67, %s4068
          %s4071 = sshll.u32 %s4060, 4
          %s4072 = int_to_ptr.vmem [resolvable:$true] %s4071
          %4074 = dma.vmem_to_hbm [thread:$0]  %s4072, 640, %s4069, %s4057
        $region216: #{tpu_custom_call.1} parent=151 // pred_fallthru
          _
      $region152: #{tpu_custom_call.1} parent=5 // pred_fallthru
        _
      %p4075 = scmp.le.s32.totalorder 2, %s84
      // Predicated region
      $region217: #{tpu_custom_call.1} parent=5 // pred_check
        %p4076 = pneg %p4075
      $region218: #{tpu_custom_call.1} parent=5 // pred_check_branch
        %4078 = sbr.rel (%p4076) target = $region220
      $region219: #{tpu_custom_call.1} parent=5 // pred_region
        %s4079 = ssub.s32 %s84, 2
        // Predicated region
        $region221: #{tpu_custom_call.1} parent=219 // pred_check
          %p4080 = pneg %p821
        $region222: #{tpu_custom_call.1} parent=219 // pred_check_branch
          %4082 = sbr.rel (%p4080) target = $region224
        $region223: #{tpu_custom_call.1} parent=219 // pred_region
          %s4083 = sand.u32 %s806, 1
          %s4084 = scalar_lea.sflag [#allocation4], %s4083
          %s4085 = sand.u32 %s806, 1
          %s4086 = smul.addr %s4085, 40
          %s4087 = scalar_lea.vmem [#allocation26], %s4086
          %4088 = dma.done %s4084, 640
        $region224: #{tpu_custom_call.1} parent=219 // pred_fallthru
          _
      $region220: #{tpu_custom_call.1} parent=5 // pred_fallthru
        _
    $region6: #{tpu_custom_call.1} parent=1 // loop_footer
      %s88 = sadd.s32 1, %s84
    $region7: #{tpu_custom_call.1} parent=1 // loop_footer_branch
      %83 = sbr.rel target = $region3
    $region8: #{tpu_custom_call.1} parent=1 // loop_exit
      _
    %4089 = vsyncpa [#allocation3], 1
    %s4090 = scalar_lea.sflag [#allocation3], 1
    %4091 = vsyncpa %s4090, 1
    %4092 = vsyncpa [#allocation6], 1
    %4093 = vsyncpa [#allocation9], 1
    %4094 = vsyncpa [#allocation12], 1
    %4095 = vsyncpa [#allocation15], 1
    %4096 = vsyncpa [#allocation18], 1
    %4097 = vsyncpa [#allocation21], 1
    %4098 = vsyncpa [#allocation24], 1
    %4099 = vsyncpa [#allocation4], 1
    %s4100 = scalar_lea.sflag [#allocation4], 1
    %4101 = vsyncpa %s4100, 1

// kernel: tpu_custom_call.1
$region0: #{tpu_custom_call.1}
  #allocation0 [shape = 'u32[]', space=smem, size = 0x4, offset = 0x4, fixed_abs, tag = 'smem constant byte address 0x4 - core index']
  #allocation1 [shape = 'u32[144,128]{1,0:T(1,128)}', space=vmem, size = 0x12000, scoped, tag = 'internal scratch']
  %s0 = inlined_call_operand.smem [shape: u32[34], index: -1, kind: input, shape index: {}]
  %s1 = sld [smem:[%s0]]
  %s2 = scalar_lea.smem %s0, 1
  %s3 = sld [smem:[%s2]]
  %s4 = scalar_lea.smem %s0, 2
  %s5 = sld [smem:[%s4]]
  %s6 = scalar_lea.smem %s0, 3
  %s7 = sld [smem:[%s6]]
  %s8 = scalar_lea.smem %s0, 4
  %s9 = sld [smem:[%s8]]
  %s10 = scalar_lea.smem %s0, 5
  %s11 = sld [smem:[%s10]]
  %s12 = scalar_lea.smem %s0, 6
  %s13 = sld [smem:[%s12]]
  %s14 = scalar_lea.smem %s0, 7
  %s15 = sld [smem:[%s14]]
  %s16 = scalar_lea.smem %s0, 8
  %s17 = sld [smem:[%s16]]
  %s18 = scalar_lea.smem %s0, 9
  %s19 = sld [smem:[%s18]]
  %s20 = scalar_lea.smem %s0, 10
  %s21 = sld [smem:[%s20]]
  %s22 = scalar_lea.smem %s0, 11
  %s23 = sld [smem:[%s22]]
  %s24 = scalar_lea.smem %s0, 12
  %s25 = sld [smem:[%s24]]
  %s26 = scalar_lea.smem %s0, 13
  %s27 = sld [smem:[%s26]]
  %s28 = scalar_lea.smem %s0, 14
  %s29 = sld [smem:[%s28]]
  %s30 = scalar_lea.smem %s0, 15
  %s31 = sld [smem:[%s30]]
  %s32 = scalar_lea.smem %s0, 16
  %s33 = sld [smem:[%s32]]
  %s34 = scalar_lea.smem %s0, 17
  %s35 = sld [smem:[%s34]]
  %s36 = scalar_lea.smem %s0, 18
  %s37 = sld [smem:[%s36]]
  %s38 = scalar_lea.smem %s0, 19
  %s39 = sld [smem:[%s38]]
  %s40 = scalar_lea.smem %s0, 20
  %s41 = sld [smem:[%s40]]
  %s42 = scalar_lea.smem %s0, 21
  %s43 = sld [smem:[%s42]]
  %s44 = scalar_lea.smem %s0, 22
  %s45 = sld [smem:[%s44]]
  %s46 = scalar_lea.smem %s0, 23
  %s47 = sld [smem:[%s46]]
  %s48 = scalar_lea.smem %s0, 24
  %s49 = sld [smem:[%s48]]
  %s50 = scalar_lea.smem %s0, 25
  %s51 = sld [smem:[%s50]]
  %s52 = scalar_lea.smem %s0, 26
  %s53 = sld [smem:[%s52]]
  %s54 = scalar_lea.smem %s0, 27
  %s55 = sld [smem:[%s54]]
  %s56 = scalar_lea.smem %s0, 28
  %s57 = sld [smem:[%s56]]
  %s58 = scalar_lea.smem %s0, 29
  %s59 = sld [smem:[%s58]]
  %s60 = scalar_lea.smem %s0, 30
  %s61 = sld [smem:[%s60]]
  %s62 = scalar_lea.smem %s0, 31
  %s63 = sld [smem:[%s62]]
  %s64 = scalar_lea.smem %s0, 32
  %s65 = sld [smem:[%s64]]
  %s66 = scalar_lea.smem %s0, 33
  %s67 = sld [smem:[%s66]]
  %s68 = sld [smem:[#allocation0]]
  $region225: #{tpu_custom_call.1} parent=0
    _
  %s70 = ssub.s32 1, %s68
  %s71 = scalar_select 0, %s70, %s68
  $region1: #{tpu_custom_call.1} parent=0
    #allocation2 [shape = 'u8[262144]{0}', space=vmem, size = 0x40000, scoped, tag = 'input window, operand 3, single buffered']
    #allocation3 [shape = 's32[2]{0}', space=sflag, size = 0x8, scoped, tag = 'scoped memory for tpu_custom_call.1']
    #allocation4 [shape = 's32[2]{0}', space=sflag, size = 0x8, scoped, tag = 'scoped memory for tpu_custom_call.1']
    #allocation5 [shape = 'u8[524288]{0}', space=vmem, size = 0x80000, scoped, tag = 'input window, operand 5, single buffered']
    #allocation6 [shape = 's32[1]{0}', space=sflag, size = 0x4, scoped, tag = 'scoped memory for tpu_custom_call.1']
    #allocation7 [shape = 'u8[131072]{0}', space=vmem, size = 0x20000, scoped, tag = 'input window, operand 7, single buffered']
    #allocation8 [shape = 'u8[262144]{0}', space=vmem, size = 0x40000, scoped, tag = 'input window, operand 9, single buffered']
    #allocation9 [shape = 's32[1]{0}', space=sflag, size = 0x4, scoped, tag = 'scoped memory for tpu_custom_call.1']
    #allocation10 [shape = 'u8[524288]{0}', space=vmem, size = 0x80000, scoped, tag = 'input window, operand 11, single buffered']
    #allocation11 [shape = 'u8[131072]{0}', space=vmem, size = 0x20000, scoped, tag = 'input window, operand 13, single buffered']
    #allocation12 [shape = 's32[1]{0}', space=sflag, size = 0x4, scoped, tag = 'scoped memory for tpu_custom_call.1']
    #allocation13 [shape = 'u8[131072]{0}', space=vmem, size = 0x20000, scoped, tag = 'input window, operand 15, single buffered']
    #allocation14 [shape = 'u8[131072]{0}', space=vmem, size = 0x20000, scoped, tag = 'input window, operand 17, single buffered']
    #allocation15 [shape = 's32[1]{0}', space=sflag, size = 0x4, scoped, tag = 'scoped memory for tpu_custom_call.1']
    #allocation16 [shape = 'u8[512]{0}', space=vmem, size = 0x400, scoped, tag = 'input window, operand 18, single buffered']
    #allocation17 [shape = 'u8[512]{0}', space=vmem, size = 0x400, scoped, tag = 'input window, operand 20, single buffered']
    #allocation18 [shape = 's32[1]{0}', space=sflag, size = 0x4, scoped, tag = 'scoped memory for tpu_custom_call.1']
    #allocation19 [shape = 'u8[196608]{0}', space=vmem, size = 0x30000, scoped, tag = 'input window, operand 21, single buffered']
    #allocation20 [shape = 'u8[65536]{0}', space=vmem, size = 0x10000, scoped, tag = 'input window, operand 23, single buffered']
    #allocation21 [shape = 's32[1]{0}', space=sflag, size = 0x4, scoped, tag = 'scoped memory for tpu_custom_call.1']
    #allocation22 [shape = 'u8[65536]{0}', space=vmem, size = 0x10000, scoped, tag = 'input window, operand 25, single buffered']
    #allocation23 [shape = 'u8[65536]{0}', space=vmem, size = 0x10000, scoped, tag = 'input window, operand 27, single buffered']
    #allocation24 [shape = 's32[1]{0}', space=sflag, size = 0x4, scoped, tag = 'scoped memory for tpu_custom_call.1']
    #allocation25 [shape = 'u8[65536]{0}', space=vmem, size = 0x10000, scoped, tag = 'input window, operand 29, single buffered']
    #allocation26 [shape = 'u8[40960]{0}', space=vmem, size = 0xa000, scoped, tag = 'output window, operand 0']
    %72 = vsyncpa [#allocation3], 0
    %73 = vsyncpa [#allocation6], 0
    %74 = vsyncpa [#allocation9], 0
    %75 = vsyncpa [#allocation12], 0
    %76 = vsyncpa [#allocation15], 0
    %77 = vsyncpa [#allocation18], 0
    %78 = vsyncpa [#allocation21], 0
    %79 = vsyncpa [#allocation24], 0
    %80 = vsyncpa [#allocation4], 0
    %s81 = scalar_lea.sflag [#allocation4], 1
    %82 = vsyncpa %s81, 0
    loop: start=0, step=1, limit=4
    $region2: #{tpu_custom_call.1} parent=1 // loop_pre_header
      _
    $region3: #{tpu_custom_call.1} parent=1 // loop_header
      %s84 = sphi 0, %s88
      %p85 = scmp.ge.s32.totalorder %s84, 4
      %s94 = sphi 0, %s96
      %s97 = sphi 0, %s94
      %s98 = sphi 0, %s97
      %s114 = sphi 0, %s98
      %s120 = sphi 0, %s122
      %s123 = sphi 0, %s120
      %s124 = sphi 0, %s123
      %s140 = sphi 0, %s124
      %s146 = sphi 0, %s148
      %s149 = sphi 0, %s146
      %s150 = sphi 0, %s149
      %s166 = sphi 0, %s150
      %s170 = sphi 0, %s170
      %s172 = sphi 0, %s170
      %s173 = sphi 0, %s172
      %s187 = sphi 0, %s173
      %s191 = sphi 0, %s191
      %s193 = sphi 0, %s191
      %s194 = sphi 0, %s193
      %s208 = sphi 0, %s194
      %s212 = sphi 0, %s212
      %s214 = sphi 0, %s212
      %s215 = sphi 0, %s214
      %s229 = sphi 0, %s215
      %s233 = sphi 0, %s233
      %s235 = sphi 0, %s233
      %s236 = sphi 0, %s235
      %s250 = sphi 0, %s236
      %s254 = sphi 0, %s254
      %s256 = sphi 0, %s254
      %s257 = sphi 0, %s256
      %s271 = sphi 0, %s257
      %s275 = sphi 0, %s275
      %s277 = sphi 0, %s275
      %s278 = sphi 0, %s277
      %s292 = sphi 0, %s278
      %s296 = sphi 0, %s296
      %s298 = sphi 0, %s296
      %s299 = sphi 0, %s298
      %s313 = sphi 0, %s299
      %s317 = sphi 0, %s317
      %s319 = sphi 0, %s317
      %s320 = sphi 0, %s319
      %s334 = sphi 0, %s320
      %s338 = sphi 0, %s338
      %s340 = sphi 0, %s338
      %s341 = sphi 0, %s340
      %s355 = sphi 0, %s341
      %s359 = sphi 0, %s359
      %s361 = sphi 0, %s359
      %s362 = sphi 0, %s361
      %s376 = sphi 0, %s362
      %s380 = sphi 0, %s380
      %s382 = sphi 0, %s380
      %s383 = sphi 0, %s382
      %s397 = sphi 0, %s383
      %s401 = sphi 0, %s401
      %s403 = sphi 0, %s401
      %s404 = sphi 0, %s403
      %s418 = sphi 0, %s404
      %s422 = sphi 0, %s422
      %s424 = sphi 0, %s422
      %s425 = sphi 0, %s424
      %s439 = sphi 0, %s425
      %s443 = sphi 0, %s443
      %s445 = sphi 0, %s443
      %s446 = sphi 0, %s445
      %s460 = sphi 0, %s446
      %s464 = sphi 0, %s464
      %s466 = sphi 0, %s464
      %s467 = sphi 0, %s466
      %s481 = sphi 0, %s467
      %s485 = sphi 0, %s485
      %s487 = sphi 0, %s485
      %s488 = sphi 0, %s487
      %s502 = sphi 0, %s488
      %s506 = sphi 0, %s506
      %s508 = sphi 0, %s506
      %s509 = sphi 0, %s508
      %s523 = sphi 0, %s509
      %s527 = sphi 0, %s527
      %s529 = sphi 0, %s527
      %s530 = sphi 0, %s529
      %s544 = sphi 0, %s530
      %s548 = sphi 0, %s548
      %s550 = sphi 0, %s548
      %s551 = sphi 0, %s550
      %s565 = sphi 0, %s551
      %s569 = sphi 0, %s569
      %s571 = sphi 0, %s569
      %s572 = sphi 0, %s571
      %s586 = sphi 0, %s572
      %s590 = sphi 0, %s590
      %s592 = sphi 0, %s590
      %s593 = sphi 0, %s592
      %s607 = sphi 0, %s593
      %s611 = sphi 0, %s611
      %s613 = sphi 0, %s611
      %s614 = sphi 0, %s613
      %s628 = sphi 0, %s614
      %s632 = sphi 0, %s632
      %s634 = sphi 0, %s632
      %s635 = sphi 0, %s634
      %s649 = sphi 0, %s635
      %s653 = sphi 0, %s653
      %s655 = sphi 0, %s653
      %s656 = sphi 0, %s655
      %s670 = sphi 0, %s656
      %s674 = sphi 0, %s674
      %s676 = sphi 0, %s674
      %s677 = sphi 0, %s676
      %s691 = sphi 0, %s677
      %s695 = sphi 0, %s695
      %s697 = sphi 0, %s695
      %s698 = sphi 0, %s697
      %s712 = sphi 0, %s698
      %s716 = sphi 0, %s716
      %s718 = sphi 0, %s716
      %s719 = sphi 0, %s718
      %s733 = sphi 0, %s719
      %s737 = sphi 0, %s737
      %s739 = sphi 0, %s737
      %s740 = sphi 0, %s739
      %s754 = sphi 0, %s740
      %s758 = sphi 0, %s758
      %s760 = sphi 0, %s758
      %s761 = sphi 0, %s760
      %s775 = sphi 0, %s761
      %s779 = sphi 0, %s779
      %s781 = sphi 0, %s779
      %s782 = sphi 0, %s781
      %s796 = sphi 0, %s782
      %s802 = sphi 0, %s804
      %s805 = sphi 0, %s802
      %s806 = sphi 0, %s805
      %s822 = sphi 0, %s806
    $region4: #{tpu_custom_call.1} parent=1 // loop_header_branch
      %87 = sbr.rel (%p85) target = $region8
    $region5: #{tpu_custom_call.1} parent=1 // loop_body
      %s89 = ssub.s32 %s84, 1
      %s90 = ssub.s32 %s84, 2
      %s91 = sadd.s32 %s84, 1
      %s92 = ssub.s32 %s84, %s91
      %p93 = scmp.eq.s32.totalorder %s92, 0
      %s95 = sadd.s32 %s94, 1
      %s96 = scalar_select %p93, %s94, %s95
      %p99 = pneg %p93
      %p100 = scmp.eq.s32.totalorder %s84, 1
      %p101 = por %p99, %p100
      %p102 = scmp.ne.s32.totalorder %s94, %s97
      %p103 = scmp.eq.s32.totalorder %s84, 0
      %p104 = por %p102, %p103
      %p105 = scmp.ne.s32.totalorder %s94, %s97
      %p106 = scmp.eq.s32.totalorder %s89, 1
      %p107 = por %p105, %p106
      %p108 = scmp.ne.s32.totalorder %s97, %s98
      %p109 = scmp.eq.s32.totalorder %s89, 0
      %p110 = por %p108, %p109
      %p111 = scmp.ne.s32.totalorder %s97, %s98
      %p112 = scmp.eq.s32.totalorder %s90, 1
      %p113 = por %p111, %p112
      %p115 = scmp.ne.s32.totalorder %s98, %s114
      %p116 = scmp.eq.s32.totalorder %s90, 0
      %p117 = por %p115, %p116
      %s118 = ssub.s32 %s84, %s91
      %p119 = scmp.eq.s32.totalorder %s118, 0
      %s121 = sadd.s32 %s120, 1
      %s122 = scalar_select %p119, %s120, %s121
      %p125 = pneg %p119
      %p126 = scmp.eq.s32.totalorder %s84, 1
      %p127 = por %p125, %p126
      %p128 = scmp.ne.s32.totalorder %s120, %s123
      %p129 = scmp.eq.s32.totalorder %s84, 0
      %p130 = por %p128, %p129
      %p131 = scmp.ne.s32.totalorder %s120, %s123
      %p132 = scmp.eq.s32.totalorder %s89, 1
      %p133 = por %p131, %p132
      %p134 = scmp.ne.s32.totalorder %s123, %s124
      %p135 = scmp.eq.s32.totalorder %s89, 0
      %p136 = por %p134, %p135
      %p137 = scmp.ne.s32.totalorder %s123, %s124
      %p138 = scmp.eq.s32.totalorder %s90, 1
      %p139 = por %p137, %p138
      %p141 = scmp.ne.s32.totalorder %s124, %s140
      %p142 = scmp.eq.s32.totalorder %s90, 0
      %p143 = por %p141, %p142
      %s144 = ssub.s32 %s84, %s91
      %p145 = scmp.eq.s32.totalorder %s144, 0
      %s147 = sadd.s32 %s146, 1
      %s148 = scalar_select %p145, %s146, %s147
      %p151 = pneg %p145
      %p152 = scmp.eq.s32.totalorder %s84, 1
      %p153 = por %p151, %p152
      %p154 = scmp.ne.s32.totalorder %s146, %s149
      %p155 = scmp.eq.s32.totalorder %s84, 0
      %p156 = por %p154, %p155
      %p157 = scmp.ne.s32.totalorder %s146, %s149
      %p158 = scmp.eq.s32.totalorder %s89, 1
      %p159 = por %p157, %p158
      %p160 = scmp.ne.s32.totalorder %s149, %s150
      %p161 = scmp.eq.s32.totalorder %s89, 0
      %p162 = por %p160, %p161
      %p163 = scmp.ne.s32.totalorder %s149, %s150
      %p164 = scmp.eq.s32.totalorder %s90, 1
      %p165 = por %p163, %p164
      %p167 = scmp.ne.s32.totalorder %s150, %s166
      %p168 = scmp.eq.s32.totalorder %s90, 0
      %p169 = por %p167, %p168
      %s171 = sadd.s32 %s170, 1
      %p174 = scmp.eq.s32.totalorder %s84, 1
      %p175 = scmp.ne.s32.totalorder %s170, %s172
      %p176 = scmp.eq.s32.totalorder %s84, 0
      %p177 = por %p175, %p176
      %p178 = scmp.ne.s32.totalorder %s170, %s172
      %p179 = scmp.eq.s32.totalorder %s89, 1
      %p180 = por %p178, %p179
      %p181 = scmp.ne.s32.totalorder %s172, %s173
      %p182 = scmp.eq.s32.totalorder %s89, 0
      %p183 = por %p181, %p182
      %p184 = scmp.ne.s32.totalorder %s172, %s173
      %p185 = scmp.eq.s32.totalorder %s90, 1
      %p186 = por %p184, %p185
      %p188 = scmp.ne.s32.totalorder %s173, %s187
      %p189 = scmp.eq.s32.totalorder %s90, 0
      %p190 = por %p188, %p189
      %s192 = sadd.s32 %s191, 1
      %p195 = scmp.eq.s32.totalorder %s84, 1
      %p196 = scmp.ne.s32.totalorder %s191, %s193
      %p197 = scmp.eq.s32.totalorder %s84, 0
      %p198 = por %p196, %p197
      %p199 = scmp.ne.s32.totalorder %s191, %s193
      %p200 = scmp.eq.s32.totalorder %s89, 1
      %p201 = por %p199, %p200
      %p202 = scmp.ne.s32.totalorder %s193, %s194
      %p203 = scmp.eq.s32.totalorder %s89, 0
      %p204 = por %p202, %p203
      %p205 = scmp.ne.s32.totalorder %s193, %s194
      %p206 = scmp.eq.s32.totalorder %s90, 1
      %p207 = por %p205, %p206
      %p209 = scmp.ne.s32.totalorder %s194, %s208
      %p210 = scmp.eq.s32.totalorder %s90, 0
      %p211 = por %p209, %p210
      %s213 = sadd.s32 %s212, 1
      %p216 = scmp.eq.s32.totalorder %s84, 1
      %p217 = scmp.ne.s32.totalorder %s212, %s214
      %p218 = scmp.eq.s32.totalorder %s84, 0
      %p219 = por %p217, %p218
      %p220 = scmp.ne.s32.totalorder %s212, %s214
      %p221 = scmp.eq.s32.totalorder %s89, 1
      %p222 = por %p220, %p221
      %p223 = scmp.ne.s32.totalorder %s214, %s215
      %p224 = scmp.eq.s32.totalorder %s89, 0
      %p225 = por %p223, %p224
      %p226 = scmp.ne.s32.totalorder %s214, %s215
      %p227 = scmp.eq.s32.totalorder %s90, 1
      %p228 = por %p226, %p227
      %p230 = scmp.ne.s32.totalorder %s215, %s229
      %p231 = scmp.eq.s32.totalorder %s90, 0
      %p232 = por %p230, %p231
      %s234 = sadd.s32 %s233, 1
      %p237 = scmp.eq.s32.totalorder %s84, 1
      %p238 = scmp.ne.s32.totalorder %s233, %s235
      %p239 = scmp.eq.s32.totalorder %s84, 0
      %p240 = por %p238, %p239
      %p241 = scmp.ne.s32.totalorder %s233, %s235
      %p242 = scmp.eq.s32.totalorder %s89, 1
      %p243 = por %p241, %p242
      %p244 = scmp.ne.s32.totalorder %s235, %s236
      %p245 = scmp.eq.s32.totalorder %s89, 0
      %p246 = por %p244, %p245
      %p247 = scmp.ne.s32.totalorder %s235, %s236
      %p248 = scmp.eq.s32.totalorder %s90, 1
      %p249 = por %p247, %p248
      %p251 = scmp.ne.s32.totalorder %s236, %s250
      %p252 = scmp.eq.s32.totalorder %s90, 0
      %p253 = por %p251, %p252
      %s255 = sadd.s32 %s254, 1
      %p258 = scmp.eq.s32.totalorder %s84, 1
      %p259 = scmp.ne.s32.totalorder %s254, %s256
      %p260 = scmp.eq.s32.totalorder %s84, 0
      %p261 = por %p259, %p260
      %p262 = scmp.ne.s32.totalorder %s254, %s256
      %p263 = scmp.eq.s32.totalorder %s89, 1
      %p264 = por %p262, %p263
      %p265 = scmp.ne.s32.totalorder %s256, %s257
      %p266 = scmp.eq.s32.totalorder %s89, 0
      %p267 = por %p265, %p266
      %p268 = scmp.ne.s32.totalorder %s256, %s257
      %p269 = scmp.eq.s32.totalorder %s90, 1
      %p270 = por %p268, %p269
      %p272 = scmp.ne.s32.totalorder %s257, %s271
      %p273 = scmp.eq.s32.totalorder %s90, 0
      %p274 = por %p272, %p273
      %s276 = sadd.s32 %s275, 1
      %p279 = scmp.eq.s32.totalorder %s84, 1
      %p280 = scmp.ne.s32.totalorder %s275, %s277
      %p281 = scmp.eq.s32.totalorder %s84, 0
      %p282 = por %p280, %p281
      %p283 = scmp.ne.s32.totalorder %s275, %s277
      %p284 = scmp.eq.s32.totalorder %s89, 1
      %p285 = por %p283, %p284
      %p286 = scmp.ne.s32.totalorder %s277, %s278
      %p287 = scmp.eq.s32.totalorder %s89, 0
      %p288 = por %p286, %p287
      %p289 = scmp.ne.s32.totalorder %s277, %s278
      %p290 = scmp.eq.s32.totalorder %s90, 1
      %p291 = por %p289, %p290
      %p293 = scmp.ne.s32.totalorder %s278, %s292
      %p294 = scmp.eq.s32.totalorder %s90, 0
      %p295 = por %p293, %p294
      %s297 = sadd.s32 %s296, 1
      %p300 = scmp.eq.s32.totalorder %s84, 1
      %p301 = scmp.ne.s32.totalorder %s296, %s298
      %p302 = scmp.eq.s32.totalorder %s84, 0
      %p303 = por %p301, %p302
      %p304 = scmp.ne.s32.totalorder %s296, %s298
      %p305 = scmp.eq.s32.totalorder %s89, 1
      %p306 = por %p304, %p305
      %p307 = scmp.ne.s32.totalorder %s298, %s299
      %p308 = scmp.eq.s32.totalorder %s89, 0
      %p309 = por %p307, %p308
      %p310 = scmp.ne.s32.totalorder %s298, %s299
      %p311 = scmp.eq.s32.totalorder %s90, 1
      %p312 = por %p310, %p311
      %p314 = scmp.ne.s32.totalorder %s299, %s313
      %p315 = scmp.eq.s32.totalorder %s90, 0
      %p316 = por %p314, %p315
      %s318 = sadd.s32 %s317, 1
      %p321 = scmp.eq.s32.totalorder %s84, 1
      %p322 = scmp.ne.s32.totalorder %s317, %s319
      %p323 = scmp.eq.s32.totalorder %s84, 0
      %p324 = por %p322, %p323
      %p325 = scmp.ne.s32.totalorder %s317, %s319
      %p326 = scmp.eq.s32.totalorder %s89, 1
      %p327 = por %p325, %p326
      %p328 = scmp.ne.s32.totalorder %s319, %s320
      %p329 = scmp.eq.s32.totalorder %s89, 0
      %p330 = por %p328, %p329
      %p331 = scmp.ne.s32.totalorder %s319, %s320
      %p332 = scmp.eq.s32.totalorder %s90, 1
      %p333 = por %p331, %p332
      %p335 = scmp.ne.s32.totalorder %s320, %s334
      %p336 = scmp.eq.s32.totalorder %s90, 0
      %p337 = por %p335, %p336
      %s339 = sadd.s32 %s338, 1
      %p342 = scmp.eq.s32.totalorder %s84, 1
      %p343 = scmp.ne.s32.totalorder %s338, %s340
      %p344 = scmp.eq.s32.totalorder %s84, 0
      %p345 = por %p343, %p344
      %p346 = scmp.ne.s32.totalorder %s338, %s340
      %p347 = scmp.eq.s32.totalorder %s89, 1
      %p348 = por %p346, %p347
      %p349 = scmp.ne.s32.totalorder %s340, %s341
      %p350 = scmp.eq.s32.totalorder %s89, 0
      %p351 = por %p349, %p350
      %p352 = scmp.ne.s32.totalorder %s340, %s341
      %p353 = scmp.eq.s32.totalorder %s90, 1
      %p354 = por %p352, %p353
      %p356 = scmp.ne.s32.totalorder %s341, %s355
      %p357 = scmp.eq.s32.totalorder %s90, 0
      %p358 = por %p356, %p357
      %s360 = sadd.s32 %s359, 1
      %p363 = scmp.eq.s32.totalorder %s84, 1
      %p364 = scmp.ne.s32.totalorder %s359, %s361
      %p365 = scmp.eq.s32.totalorder %s84, 0
      %p366 = por %p364, %p365
      %p367 = scmp.ne.s32.totalorder %s359, %s361
      %p368 = scmp.eq.s32.totalorder %s89, 1
      %p369 = por %p367, %p368
      %p370 = scmp.ne.s32.totalorder %s361, %s362
      %p371 = scmp.eq.s32.totalorder %s89, 0
      %p372 = por %p370, %p371
      %p373 = scmp.ne.s32.totalorder %s361, %s362
      %p374 = scmp.eq.s32.totalorder %s90, 1
      %p375 = por %p373, %p374
      %p377 = scmp.ne.s32.totalorder %s362, %s376
      %p378 = scmp.eq.s32.totalorder %s90, 0
      %p379 = por %p377, %p378
      %s381 = sadd.s32 %s380, 1
      %p384 = scmp.eq.s32.totalorder %s84, 1
      %p385 = scmp.ne.s32.totalorder %s380, %s382
      %p386 = scmp.eq.s32.totalorder %s84, 0
      %p387 = por %p385, %p386
      %p388 = scmp.ne.s32.totalorder %s380, %s382
      %p389 = scmp.eq.s32.totalorder %s89, 1
      %p390 = por %p388, %p389
      %p391 = scmp.ne.s32.totalorder %s382, %s383
      %p392 = scmp.eq.s32.totalorder %s89, 0
      %p393 = por %p391, %p392
      %p394 = scmp.ne.s32.totalorder %s382, %s383
      %p395 = scmp.eq.s32.totalorder %s90, 1
      %p396 = por %p394, %p395
      %p398 = scmp.ne.s32.totalorder %s383, %s397
      %p399 = scmp.eq.s32.totalorder %s90, 0
      %p400 = por %p398, %p399
      %s402 = sadd.s32 %s401, 1
      %p405 = scmp.eq.s32.totalorder %s84, 1
      %p406 = scmp.ne.s32.totalorder %s401, %s403
      %p407 = scmp.eq.s32.totalorder %s84, 0
      %p408 = por %p406, %p407
      %p409 = scmp.ne.s32.totalorder %s401, %s403
      %p410 = scmp.eq.s32.totalorder %s89, 1
      %p411 = por %p409, %p410
      %p412 = scmp.ne.s32.totalorder %s403, %s404
      %p413 = scmp.eq.s32.totalorder %s89, 0
      %p414 = por %p412, %p413
      %p415 = scmp.ne.s32.totalorder %s403, %s404
      %p416 = scmp.eq.s32.totalorder %s90, 1
      %p417 = por %p415, %p416
      %p419 = scmp.ne.s32.totalorder %s404, %s418
      %p420 = scmp.eq.s32.totalorder %s90, 0
      %p421 = por %p419, %p420
      %s423 = sadd.s32 %s422, 1
      %p426 = scmp.eq.s32.totalorder %s84, 1
      %p427 = scmp.ne.s32.totalorder %s422, %s424
      %p428 = scmp.eq.s32.totalorder %s84, 0
      %p429 = por %p427, %p428
      %p430 = scmp.ne.s32.totalorder %s422, %s424
      %p431 = scmp.eq.s32.totalorder %s89, 1
      %p432 = por %p430, %p431
      %p433 = scmp.ne.s32.totalorder %s424, %s425
      %p434 = scmp.eq.s32.totalorder %s89, 0
      %p435 = por %p433, %p434
      %p436 = scmp.ne.s32.totalorder %s424, %s425
      %p437 = scmp.eq.s32.totalorder %s90, 1
      %p438 = por %p436, %p437
      %p440 = scmp.ne.s32.totalorder %s425, %s439
      %p441 = scmp.eq.s32.totalorder %s90, 0
      %p442 = por %p440, %p441
      %s444 = sadd.s32 %s443, 1
      %p447 = scmp.eq.s32.totalorder %s84, 1
      %p448 = scmp.ne.s32.totalorder %s443, %s445
      %p449 = scmp.eq.s32.totalorder %s84, 0
      %p450 = por %p448, %p449
      %p451 = scmp.ne.s32.totalorder %s443, %s445
      %p452 = scmp.eq.s32.totalorder %s89, 1
      %p453 = por %p451, %p452
      %p454 = scmp.ne.s32.totalorder %s445, %s446
      %p455 = scmp.eq.s32.totalorder %s89, 0
      %p456 = por %p454, %p455
      %p457 = scmp.ne.s32.totalorder %s445, %s446
      %p458 = scmp.eq.s32.totalorder %s90, 1
      %p459 = por %p457, %p458
      %p461 = scmp.ne.s32.totalorder %s446, %s460
      %p462 = scmp.eq.s32.totalorder %s90, 0
      %p463 = por %p461, %p462
      %s465 = sadd.s32 %s464, 1
      %p468 = scmp.eq.s32.totalorder %s84, 1
      %p469 = scmp.ne.s32.totalorder %s464, %s466
      %p470 = scmp.eq.s32.totalorder %s84, 0
      %p471 = por %p469, %p470
      %p472 = scmp.ne.s32.totalorder %s464, %s466
      %p473 = scmp.eq.s32.totalorder %s89, 1
      %p474 = por %p472, %p473
      %p475 = scmp.ne.s32.totalorder %s466, %s467
      %p476 = scmp.eq.s32.totalorder %s89, 0
      %p477 = por %p475, %p476
      %p478 = scmp.ne.s32.totalorder %s466, %s467
      %p479 = scmp.eq.s32.totalorder %s90, 1
      %p480 = por %p478, %p479
      %p482 = scmp.ne.s32.totalorder %s467, %s481
      %p483 = scmp.eq.s32.totalorder %s90, 0
      %p484 = por %p482, %p483
      %s486 = sadd.s32 %s485, 1
      %p489 = scmp.eq.s32.totalorder %s84, 1
      %p490 = scmp.ne.s32.totalorder %s485, %s487
      %p491 = scmp.eq.s32.totalorder %s84, 0
      %p492 = por %p490, %p491
      %p493 = scmp.ne.s32.totalorder %s485, %s487
      %p494 = scmp.eq.s32.totalorder %s89, 1
      %p495 = por %p493, %p494
      %p496 = scmp.ne.s32.totalorder %s487, %s488
      %p497 = scmp.eq.s32.totalorder %s89, 0
      %p498 = por %p496, %p497
      %p499 = scmp.ne.s32.totalorder %s487, %s488
      %p500 = scmp.eq.s32.totalorder %s90, 1
      %p501 = por %p499, %p500
      %p503 = scmp.ne.s32.totalorder %s488, %s502
      %p504 = scmp.eq.s32.totalorder %s90, 0
      %p505 = por %p503, %p504
      %s507 = sadd.s32 %s506, 1
      %p510 = scmp.eq.s32.totalorder %s84, 1
      %p511 = scmp.ne.s32.totalorder %s506, %s508
      %p512 = scmp.eq.s32.totalorder %s84, 0
      %p513 = por %p511, %p512
      %p514 = scmp.ne.s32.totalorder %s506, %s508
      %p515 = scmp.eq.s32.totalorder %s89, 1
      %p516 = por %p514, %p515
      %p517 = scmp.ne.s32.totalorder %s508, %s509
      %p518 = scmp.eq.s32.totalorder %s89, 0
      %p519 = por %p517, %p518
      %p520 = scmp.ne.s32.totalorder %s508, %s509
      %p521 = scmp.eq.s32.totalorder %s90, 1
      %p522 = por %p520, %p521
      %p524 = scmp.ne.s32.totalorder %s509, %s523
      %p525 = scmp.eq.s32.totalorder %s90, 0
      %p526 = por %p524, %p525
      %s528 = sadd.s32 %s527, 1
      %p531 = scmp.eq.s32.totalorder %s84, 1
      %p532 = scmp.ne.s32.totalorder %s527, %s529
      %p533 = scmp.eq.s32.totalorder %s84, 0
      %p534 = por %p532, %p533
      %p535 = scmp.ne.s32.totalorder %s527, %s529
      %p536 = scmp.eq.s32.totalorder %s89, 1
      %p537 = por %p535, %p536
      %p538 = scmp.ne.s32.totalorder %s529, %s530
      %p539 = scmp.eq.s32.totalorder %s89, 0
      %p540 = por %p538, %p539
      %p541 = scmp.ne.s32.totalorder %s529, %s530
      %p542 = scmp.eq.s32.totalorder %s90, 1
      %p543 = por %p541, %p542
      %p545 = scmp.ne.s32.totalorder %s530, %s544
      %p546 = scmp.eq.s32.totalorder %s90, 0
      %p547 = por %p545, %p546
      %s549 = sadd.s32 %s548, 1
      %p552 = scmp.eq.s32.totalorder %s84, 1
      %p553 = scmp.ne.s32.totalorder %s548, %s550
      %p554 = scmp.eq.s32.totalorder %s84, 0
      %p555 = por %p553, %p554
      %p556 = scmp.ne.s32.totalorder %s548, %s550
      %p557 = scmp.eq.s32.totalorder %s89, 1
      %p558 = por %p556, %p557
      %p559 = scmp.ne.s32.totalorder %s550, %s551
      %p560 = scmp.eq.s32.totalorder %s89, 0
      %p561 = por %p559, %p560
      %p562 = scmp.ne.s32.totalorder %s550, %s551
      %p563 = scmp.eq.s32.totalorder %s90, 1
      %p564 = por %p562, %p563
      %p566 = scmp.ne.s32.totalorder %s551, %s565
      %p567 = scmp.eq.s32.totalorder %s90, 0
      %p568 = por %p566, %p567
      %s570 = sadd.s32 %s569, 1
      %p573 = scmp.eq.s32.totalorder %s84, 1
      %p574 = scmp.ne.s32.totalorder %s569, %s571
      %p575 = scmp.eq.s32.totalorder %s84, 0
      %p576 = por %p574, %p575
      %p577 = scmp.ne.s32.totalorder %s569, %s571
      %p578 = scmp.eq.s32.totalorder %s89, 1
      %p579 = por %p577, %p578
      %p580 = scmp.ne.s32.totalorder %s571, %s572
      %p581 = scmp.eq.s32.totalorder %s89, 0
      %p582 = por %p580, %p581
      %p583 = scmp.ne.s32.totalorder %s571, %s572
      %p584 = scmp.eq.s32.totalorder %s90, 1
      %p585 = por %p583, %p584
      %p587 = scmp.ne.s32.totalorder %s572, %s586
      %p588 = scmp.eq.s32.totalorder %s90, 0
      %p589 = por %p587, %p588
      %s591 = sadd.s32 %s590, 1
      %p594 = scmp.eq.s32.totalorder %s84, 1
      %p595 = scmp.ne.s32.totalorder %s590, %s592
      %p596 = scmp.eq.s32.totalorder %s84, 0
      %p597 = por %p595, %p596
      %p598 = scmp.ne.s32.totalorder %s590, %s592
      %p599 = scmp.eq.s32.totalorder %s89, 1
      %p600 = por %p598, %p599
      %p601 = scmp.ne.s32.totalorder %s592, %s593
      %p602 = scmp.eq.s32.totalorder %s89, 0
      %p603 = por %p601, %p602
      %p604 = scmp.ne.s32.totalorder %s592, %s593
      %p605 = scmp.eq.s32.totalorder %s90, 1
      %p606 = por %p604, %p605
      %p608 = scmp.ne.s32.totalorder %s593, %s607
      %p609 = scmp.eq.s32.totalorder %s90, 0
      %p610 = por %p608, %p609
      %s612 = sadd.s32 %s611, 1
      %p615 = scmp.eq.s32.totalorder %s84, 1
      %p616 = scmp.ne.s32.totalorder %s611, %s613
      %p617 = scmp.eq.s32.totalorder %s84, 0
      %p618 = por %p616, %p617
      %p619 = scmp.ne.s32.totalorder %s611, %s613
      %p620 = scmp.eq.s32.totalorder %s89, 1
      %p621 = por %p619, %p620
      %p622 = scmp.ne.s32.totalorder %s613, %s614
      %p623 = scmp.eq.s32.totalorder %s89, 0
      %p624 = por %p622, %p623
      %p625 = scmp.ne.s32.totalorder %s613, %s614
      %p626 = scmp.eq.s32.totalorder %s90, 1
      %p627 = por %p625, %p626
      %p629 = scmp.ne.s32.totalorder %s614, %s628
      %p630 = scmp.eq.s32.totalorder %s90, 0
      %p631 = por %p629, %p630
      %s633 = sadd.s32 %s632, 1
      %p636 = scmp.eq.s32.totalorder %s84, 1
      %p637 = scmp.ne.s32.totalorder %s632, %s634
      %p638 = scmp.eq.s32.totalorder %s84, 0
      %p639 = por %p637, %p638
      %p640 = scmp.ne.s32.totalorder %s632, %s634
      %p641 = scmp.eq.s32.totalorder %s89, 1
      %p642 = por %p640, %p641
      %p643 = scmp.ne.s32.totalorder %s634, %s635
      %p644 = scmp.eq.s32.totalorder %s89, 0
      %p645 = por %p643, %p644
      %p646 = scmp.ne.s32.totalorder %s634, %s635
      %p647 = scmp.eq.s32.totalorder %s90, 1
      %p648 = por %p646, %p647
      %p650 = scmp.ne.s32.totalorder %s635, %s649
      %p651 = scmp.eq.s32.totalorder %s90, 0
      %p652 = por %p650, %p651
      %s654 = sadd.s32 %s653, 1
      %p657 = scmp.eq.s32.totalorder %s84, 1
      %p658 = scmp.ne.s32.totalorder %s653, %s655
      %p659 = scmp.eq.s32.totalorder %s84, 0
      %p660 = por %p658, %p659
      %p661 = scmp.ne.s32.totalorder %s653, %s655
      %p662 = scmp.eq.s32.totalorder %s89, 1
      %p663 = por %p661, %p662
      %p664 = scmp.ne.s32.totalorder %s655, %s656
      %p665 = scmp.eq.s32.totalorder %s89, 0
      %p666 = por %p664, %p665
      %p667 = scmp.ne.s32.totalorder %s655, %s656
      %p668 = scmp.eq.s32.totalorder %s90, 1
      %p669 = por %p667, %p668
      %p671 = scmp.ne.s32.totalorder %s656, %s670
      %p672 = scmp.eq.s32.totalorder %s90, 0
      %p673 = por %p671, %p672
      %s675 = sadd.s32 %s674, 1
      %p678 = scmp.eq.s32.totalorder %s84, 1
      %p679 = scmp.ne.s32.totalorder %s674, %s676
      %p680 = scmp.eq.s32.totalorder %s84, 0
      %p681 = por %p679, %p680
      %p682 = scmp.ne.s32.totalorder %s674, %s676
      %p683 = scmp.eq.s32.totalorder %s89, 1
      %p684 = por %p682, %p683
      %p685 = scmp.ne.s32.totalorder %s676, %s677
      %p686 = scmp.eq.s32.totalorder %s89, 0
      %p687 = por %p685, %p686
      %p688 = scmp.ne.s32.totalorder %s676, %s677
      %p689 = scmp.eq.s32.totalorder %s90, 1
      %p690 = por %p688, %p689
      %p692 = scmp.ne.s32.totalorder %s677, %s691
      %p693 = scmp.eq.s32.totalorder %s90, 0
      %p694 = por %p692, %p693
      %s696 = sadd.s32 %s695, 1
      %p699 = scmp.eq.s32.totalorder %s84, 1
      %p700 = scmp.ne.s32.totalorder %s695, %s697
      %p701 = scmp.eq.s32.totalorder %s84, 0
      %p702 = por %p700, %p701
      %p703 = scmp.ne.s32.totalorder %s695, %s697
      %p704 = scmp.eq.s32.totalorder %s89, 1
      %p705 = por %p703, %p704
      %p706 = scmp.ne.s32.totalorder %s697, %s698
      %p707 = scmp.eq.s32.totalorder %s89, 0
      %p708 = por %p706, %p707
      %p709 = scmp.ne.s32.totalorder %s697, %s698
      %p710 = scmp.eq.s32.totalorder %s90, 1
      %p711 = por %p709, %p710
      %p713 = scmp.ne.s32.totalorder %s698, %s712
      %p714 = scmp.eq.s32.totalorder %s90, 0
      %p715 = por %p713, %p714
      %s717 = sadd.s32 %s716, 1
      %p720 = scmp.eq.s32.totalorder %s84, 1
      %p721 = scmp.ne.s32.totalorder %s716, %s718
      %p722 = scmp.eq.s32.totalorder %s84, 0
      %p723 = por %p721, %p722
      %p724 = scmp.ne.s32.totalorder %s716, %s718
      %p725 = scmp.eq.s32.totalorder %s89, 1
      %p726 = por %p724, %p725
      %p727 = scmp.ne.s32.totalorder %s718, %s719
      %p728 = scmp.eq.s32.totalorder %s89, 0
      %p729 = por %p727, %p728
      %p730 = scmp.ne.s32.totalorder %s718, %s719
      %p731 = scmp.eq.s32.totalorder %s90, 1
      %p732 = por %p730, %p731
      %p734 = scmp.ne.s32.totalorder %s719, %s733
      %p735 = scmp.eq.s32.totalorder %s90, 0
      %p736 = por %p734, %p735
      %s738 = sadd.s32 %s737, 1
      %p741 = scmp.eq.s32.totalorder %s84, 1
      %p742 = scmp.ne.s32.totalorder %s737, %s739
      %p743 = scmp.eq.s32.totalorder %s84, 0
      %p744 = por %p742, %p743
      %p745 = scmp.ne.s32.totalorder %s737, %s739
      %p746 = scmp.eq.s32.totalorder %s89, 1
      %p747 = por %p745, %p746
      %p748 = scmp.ne.s32.totalorder %s739, %s740
      %p749 = scmp.eq.s32.totalorder %s89, 0
      %p750 = por %p748, %p749
      %p751 = scmp.ne.s32.totalorder %s739, %s740
      %p752 = scmp.eq.s32.totalorder %s90, 1
      %p753 = por %p751, %p752
      %p755 = scmp.ne.s32.totalorder %s740, %s754
      %p756 = scmp.eq.s32.totalorder %s90, 0
      %p757 = por %p755, %p756
      %s759 = sadd.s32 %s758, 1
      %p762 = scmp.eq.s32.totalorder %s84, 1
      %p763 = scmp.ne.s32.totalorder %s758, %s760
      %p764 = scmp.eq.s32.totalorder %s84, 0
      %p765 = por %p763, %p764
      %p766 = scmp.ne.s32.totalorder %s758, %s760
      %p767 = scmp.eq.s32.totalorder %s89, 1
      %p768 = por %p766, %p767
      %p769 = scmp.ne.s32.totalorder %s760, %s761
      %p770 = scmp.eq.s32.totalorder %s89, 0
      %p771 = por %p769, %p770
      %p772 = scmp.ne.s32.totalorder %s760, %s761
      %p773 = scmp.eq.s32.totalorder %s90, 1
      %p774 = por %p772, %p773
      %p776 = scmp.ne.s32.totalorder %s761, %s775
      %p777 = scmp.eq.s32.totalorder %s90, 0
      %p778 = por %p776, %p777
      %s780 = sadd.s32 %s779, 1
      %p783 = scmp.eq.s32.totalorder %s84, 1
      %p784 = scmp.ne.s32.totalorder %s779, %s781
      %p785 = scmp.eq.s32.totalorder %s84, 0
      %p786 = por %p784, %p785
      %p787 = scmp.ne.s32.totalorder %s779, %s781
      %p788 = scmp.eq.s32.totalorder %s89, 1
      %p789 = por %p787, %p788
      %p790 = scmp.ne.s32.totalorder %s781, %s782
      %p791 = scmp.eq.s32.totalorder %s89, 0
      %p792 = por %p790, %p791
      %p793 = scmp.ne.s32.totalorder %s781, %s782
      %p794 = scmp.eq.s32.totalorder %s90, 1
      %p795 = por %p793, %p794
      %p797 = scmp.ne.s32.totalorder %s782, %s796
      %p798 = scmp.eq.s32.totalorder %s90, 0
      %p799 = por %p797, %p798
      %s800 = ssub.s32 %s84, %s91
      %p801 = scmp.eq.s32.totalorder %s800, 0
      %s803 = sadd.s32 %s802, 1
      %s804 = scalar_select %p801, %s802, %s803
      %p807 = pneg %p801
      %p808 = scmp.eq.s32.totalorder %s84, 1
      %p809 = por %p807, %p808
      %p810 = scmp.ne.s32.totalorder %s802, %s805
      %p811 = scmp.eq.s32.totalorder %s84, 0
      %p812 = por %p810, %p811
      %p813 = scmp.ne.s32.totalorder %s802, %s805
      %p814 = scmp.eq.s32.totalorder %s89, 1
      %p815 = por %p813, %p814
      %p816 = scmp.ne.s32.totalorder %s805, %s806
      %p817 = scmp.eq.s32.totalorder %s89, 0
      %p818 = por %p816, %p817
      %p819 = scmp.ne.s32.totalorder %s805, %s806
      %p820 = scmp.eq.s32.totalorder %s90, 1
      %p821 = por %p819, %p820
      %p823 = scmp.ne.s32.totalorder %s806, %s822
      %p824 = scmp.eq.s32.totalorder %s90, 0
      %p825 = por %p823, %p824
      %p826 = scmp.le.s32.totalorder 1, %s84
      %p827 = scmp.lt.s32.totalorder %s84, 3
      %p828 = pnand %p826, %p827
      %p829 = pneg %p828
      // Predicated region
      $region9: #{tpu_custom_call.1} parent=5 // pred_check
        _
      $region10: #{tpu_custom_call.1} parent=5 // pred_check_branch
        %831 = sbr.rel (%p828) target = $region12
      $region11: #{tpu_custom_call.1} parent=5 // pred_region
        %s832 = ssub.s32 %s84, 1
        // Predicated region
        $region13: #{tpu_custom_call.1} parent=11 // pred_check
          %p833 = pneg %p183
        $region14: #{tpu_custom_call.1} parent=11 // pred_check_branch
          %835 = sbr.rel (%p833) target = $region16
        $region15: #{tpu_custom_call.1} parent=11 // pred_region
          %s837 = ssub.s32 8192, 8192
          %838 = vsyncadd [#allocation3], %s837
          %s839 = sshll.u32 [#allocation2], 4
          %s840 = int_to_ptr.vmem [resolvable:$true] %s839
          %845 = dma.hbm_to_vmem [thread:$0]  %s7, 8192, %s840, [#allocation3], 512, 512, 32
        $region16: #{tpu_custom_call.1} parent=11 // pred_fallthru
          _
        // Predicated region
        $region17: #{tpu_custom_call.1} parent=11 // pred_check
          %p846 = pneg %p204
        $region18: #{tpu_custom_call.1} parent=11 // pred_check_branch
          %848 = sbr.rel (%p846) target = $region20
        $region19: #{tpu_custom_call.1} parent=11 // pred_region
          _
        $region20: #{tpu_custom_call.1} parent=11 // pred_fallthru
          _
        // Predicated region
        $region21: #{tpu_custom_call.1} parent=11 // pred_check
          %p849 = pneg %p225
        $region22: #{tpu_custom_call.1} parent=11 // pred_check_branch
          %851 = sbr.rel (%p849) target = $region24
        $region23: #{tpu_custom_call.1} parent=11 // pred_region
          %s853 = ssub.s32 16384, 16384
          %854 = vsyncadd [#allocation6], %s853
          %s855 = sshll.u32 [#allocation5], 4
          %s856 = int_to_ptr.vmem [resolvable:$true] %s855
          %861 = dma.hbm_to_vmem [thread:$0]  %s11, 16384, %s856, [#allocation6], 256, 256, 16
        $region24: #{tpu_custom_call.1} parent=11 // pred_fallthru
          _
        // Predicated region
        $region25: #{tpu_custom_call.1} parent=11 // pred_check
          %p862 = pneg %p246
        $region26: #{tpu_custom_call.1} parent=11 // pred_check_branch
          %864 = sbr.rel (%p862) target = $region28
        $region27: #{tpu_custom_call.1} parent=11 // pred_region
          _
        $region28: #{tpu_custom_call.1} parent=11 // pred_fallthru
          _
        // Predicated region
        $region29: #{tpu_custom_call.1} parent=11 // pred_check
          %p865 = pneg %p267
        $region30: #{tpu_custom_call.1} parent=11 // pred_check_branch
          %867 = sbr.rel (%p865) target = $region32
        $region31: #{tpu_custom_call.1} parent=11 // pred_region
          %s869 = ssub.s32 4096, 4096
          %870 = vsyncadd [#allocation6], %s869
          %s871 = sshll.u32 [#allocation7], 4
          %s872 = int_to_ptr.vmem [resolvable:$true] %s871
          %877 = dma.hbm_to_vmem [thread:$0]  %s15, 4096, %s872, [#allocation6], 128, 128, 8
        $region32: #{tpu_custom_call.1} parent=11 // pred_fallthru
          _
        // Predicated region
        $region33: #{tpu_custom_call.1} parent=11 // pred_check
          %p878 = pneg %p288
        $region34: #{tpu_custom_call.1} parent=11 // pred_check_branch
          %880 = sbr.rel (%p878) target = $region36
        $region35: #{tpu_custom_call.1} parent=11 // pred_region
          _
        $region36: #{tpu_custom_call.1} parent=11 // pred_fallthru
          _
        // Predicated region
        $region37: #{tpu_custom_call.1} parent=11 // pred_check
          %p881 = pneg %p309
        $region38: #{tpu_custom_call.1} parent=11 // pred_check_branch
          %883 = sbr.rel (%p881) target = $region40
        $region39: #{tpu_custom_call.1} parent=11 // pred_region
          %s885 = ssub.s32 8192, 8192
          %886 = vsyncadd [#allocation9], %s885
          %s887 = sshll.u32 [#allocation8], 4
          %s888 = int_to_ptr.vmem [resolvable:$true] %s887
          %893 = dma.hbm_to_vmem [thread:$0]  %s19, 8192, %s888, [#allocation9], 512, 512, 32
        $region40: #{tpu_custom_call.1} parent=11 // pred_fallthru
          _
        // Predicated region
        $region41: #{tpu_custom_call.1} parent=11 // pred_check
          %p894 = pneg %p330
        $region42: #{tpu_custom_call.1} parent=11 // pred_check_branch
          %896 = sbr.rel (%p894) target = $region44
        $region43: #{tpu_custom_call.1} parent=11 // pred_region
          _
        $region44: #{tpu_custom_call.1} parent=11 // pred_fallthru
          _
        // Predicated region
        $region45: #{tpu_custom_call.1} parent=11 // pred_check
          %p897 = pneg %p351
        $region46: #{tpu_custom_call.1} parent=11 // pred_check_branch
          %899 = sbr.rel (%p897) target = $region48
        $region47: #{tpu_custom_call.1} parent=11 // pred_region
          %s901 = ssub.s32 16384, 16384
          %902 = vsyncadd [#allocation9], %s901
          %s903 = sshll.u32 [#allocation10], 4
          %s904 = int_to_ptr.vmem [resolvable:$true] %s903
          %909 = dma.hbm_to_vmem [thread:$0]  %s23, 16384, %s904, [#allocation9], 256, 256, 16
        $region48: #{tpu_custom_call.1} parent=11 // pred_fallthru
          _
        // Predicated region
        $region49: #{tpu_custom_call.1} parent=11 // pred_check
          %p910 = pneg %p372
        $region50: #{tpu_custom_call.1} parent=11 // pred_check_branch
          %912 = sbr.rel (%p910) target = $region52
        $region51: #{tpu_custom_call.1} parent=11 // pred_region
          _
        $region52: #{tpu_custom_call.1} parent=11 // pred_fallthru
          _
        // Predicated region
        $region53: #{tpu_custom_call.1} parent=11 // pred_check
          %p913 = pneg %p393
        $region54: #{tpu_custom_call.1} parent=11 // pred_check_branch
          %915 = sbr.rel (%p913) target = $region56
        $region55: #{tpu_custom_call.1} parent=11 // pred_region
          %s917 = ssub.s32 4096, 4096
          %918 = vsyncadd [#allocation12], %s917
          %s919 = sshll.u32 [#allocation11], 4
          %s920 = int_to_ptr.vmem [resolvable:$true] %s919
          %925 = dma.hbm_to_vmem [thread:$0]  %s27, 4096, %s920, [#allocation12], 128, 128, 8
        $region56: #{tpu_custom_call.1} parent=11 // pred_fallthru
          _
        // Predicated region
        $region57: #{tpu_custom_call.1} parent=11 // pred_check
          %p926 = pneg %p414
        $region58: #{tpu_custom_call.1} parent=11 // pred_check_branch
          %928 = sbr.rel (%p926) target = $region60
        $region59: #{tpu_custom_call.1} parent=11 // pred_region
          _
        $region60: #{tpu_custom_call.1} parent=11 // pred_fallthru
          _
        // Predicated region
        $region61: #{tpu_custom_call.1} parent=11 // pred_check
          %p929 = pneg %p435
        $region62: #{tpu_custom_call.1} parent=11 // pred_check_branch
          %931 = sbr.rel (%p929) target = $region64
        $region63: #{tpu_custom_call.1} parent=11 // pred_region
          %s933 = ssub.s32 4096, 4096
          %934 = vsyncadd [#allocation12], %s933
          %s935 = sshll.u32 [#allocation13], 4
          %s936 = int_to_ptr.vmem [resolvable:$true] %s935
          %941 = dma.hbm_to_vmem [thread:$0]  %s31, 4096, %s936, [#allocation12], 256, 256, 16
        $region64: #{tpu_custom_call.1} parent=11 // pred_fallthru
          _
        // Predicated region
        $region65: #{tpu_custom_call.1} parent=11 // pred_check
          %p942 = pneg %p456
        $region66: #{tpu_custom_call.1} parent=11 // pred_check_branch
          %944 = sbr.rel (%p942) target = $region68
        $region67: #{tpu_custom_call.1} parent=11 // pred_region
          _
        $region68: #{tpu_custom_call.1} parent=11 // pred_fallthru
          _
        // Predicated region
        $region69: #{tpu_custom_call.1} parent=11 // pred_check
          %p945 = pneg %p477
        $region70: #{tpu_custom_call.1} parent=11 // pred_check_branch
          %947 = sbr.rel (%p945) target = $region72
        $region71: #{tpu_custom_call.1} parent=11 // pred_region
          %s949 = ssub.s32 4096, 4096
          %950 = vsyncadd [#allocation15], %s949
          %s951 = sshll.u32 [#allocation14], 4
          %s952 = int_to_ptr.vmem [resolvable:$true] %s951
          %957 = dma.hbm_to_vmem [thread:$0]  %s35, 4096, %s952, [#allocation15], 128, 128, 8
        $region72: #{tpu_custom_call.1} parent=11 // pred_fallthru
          _
        // Predicated region
        $region73: #{tpu_custom_call.1} parent=11 // pred_check
          %p958 = pneg %p498
        $region74: #{tpu_custom_call.1} parent=11 // pred_check_branch
          %960 = sbr.rel (%p958) target = $region76
        $region75: #{tpu_custom_call.1} parent=11 // pred_region
          %s962 = ssub.s32 16, 16
          %963 = vsyncadd [#allocation15], %s962
          %s965 = sshll.u32 [#allocation16], 4
          %s966 = int_to_ptr.vmem [resolvable:$true] %s965
          %968 = dma.hbm_to_vmem [thread:$0]  %s37, 16, %s966, [#allocation15]
        $region76: #{tpu_custom_call.1} parent=11 // pred_fallthru
          _
        // Predicated region
        $region77: #{tpu_custom_call.1} parent=11 // pred_check
          %p969 = pneg %p519
        $region78: #{tpu_custom_call.1} parent=11 // pred_check_branch
          %971 = sbr.rel (%p969) target = $region80
        $region79: #{tpu_custom_call.1} parent=11 // pred_region
          _
        $region80: #{tpu_custom_call.1} parent=11 // pred_fallthru
          _
        // Predicated region
        $region81: #{tpu_custom_call.1} parent=11 // pred_check
          %p972 = pneg %p540
        $region82: #{tpu_custom_call.1} parent=11 // pred_check_branch
          %974 = sbr.rel (%p972) target = $region84
        $region83: #{tpu_custom_call.1} parent=11 // pred_region
          %s976 = ssub.s32 16, 16
          %977 = vsyncadd [#allocation18], %s976
          %s979 = sshll.u32 [#allocation17], 4
          %s980 = int_to_ptr.vmem [resolvable:$true] %s979
          %982 = dma.hbm_to_vmem [thread:$0]  %s41, 16, %s980, [#allocation18]
        $region84: #{tpu_custom_call.1} parent=11 // pred_fallthru
          _
        // Predicated region
        $region85: #{tpu_custom_call.1} parent=11 // pred_check
          %p983 = pneg %p561
        $region86: #{tpu_custom_call.1} parent=11 // pred_check_branch
          %985 = sbr.rel (%p983) target = $region88
        $region87: #{tpu_custom_call.1} parent=11 // pred_region
          %s987 = ssub.s32 6144, 6144
          %988 = vsyncadd [#allocation18], %s987
          %s989 = sshll.u32 [#allocation19], 4
          %s990 = int_to_ptr.vmem [resolvable:$true] %s989
          %995 = dma.hbm_to_vmem [thread:$0]  %s43, 6144, %s990, [#allocation18], 384, 384, 24
        $region88: #{tpu_custom_call.1} parent=11 // pred_fallthru
          _
        // Predicated region
        $region89: #{tpu_custom_call.1} parent=11 // pred_check
          %p996 = pneg %p582
        $region90: #{tpu_custom_call.1} parent=11 // pred_check_branch
          %998 = sbr.rel (%p996) target = $region92
        $region91: #{tpu_custom_call.1} parent=11 // pred_region
          _
        $region92: #{tpu_custom_call.1} parent=11 // pred_fallthru
          _
        // Predicated region
        $region93: #{tpu_custom_call.1} parent=11 // pred_check
          %p999 = pneg %p603
        $region94: #{tpu_custom_call.1} parent=11 // pred_check_branch
          %1001 = sbr.rel (%p999) target = $region96
        $region95: #{tpu_custom_call.1} parent=11 // pred_region
          %s1003 = ssub.s32 2048, 2048
          %1004 = vsyncadd [#allocation21], %s1003
          %s1005 = sshll.u32 [#allocation20], 4
          %s1006 = int_to_ptr.vmem [resolvable:$true] %s1005
          %1011 = dma.hbm_to_vmem [thread:$0]  %s47, 2048, %s1006, [#allocation21], 128, 128, 8
        $region96: #{tpu_custom_call.1} parent=11 // pred_fallthru
          _
        // Predicated region
        $region97: #{tpu_custom_call.1} parent=11 // pred_check
          %p1012 = pneg %p624
        $region98: #{tpu_custom_call.1} parent=11 // pred_check_branch
          %1014 = sbr.rel (%p1012) target = $region100
        $region99: #{tpu_custom_call.1} parent=11 // pred_region
          _
        $region100: #{tpu_custom_call.1} parent=11 // pred_fallthru
          _
        // Predicated region
        $region101: #{tpu_custom_call.1} parent=11 // pred_check
          %p1015 = pneg %p645
        $region102: #{tpu_custom_call.1} parent=11 // pred_check_branch
          %1017 = sbr.rel (%p1015) target = $region104
        $region103: #{tpu_custom_call.1} parent=11 // pred_region
          %s1019 = ssub.s32 2048, 2048
          %1020 = vsyncadd [#allocation21], %s1019
          %s1021 = sshll.u32 [#allocation22], 4
          %s1022 = int_to_ptr.vmem [resolvable:$true] %s1021
          %1027 = dma.hbm_to_vmem [thread:$0]  %s51, 2048, %s1022, [#allocation21], 128, 128, 8
        $region104: #{tpu_custom_call.1} parent=11 // pred_fallthru
          _
        // Predicated region
        $region105: #{tpu_custom_call.1} parent=11 // pred_check
          %p1028 = pneg %p666
        $region106: #{tpu_custom_call.1} parent=11 // pred_check_branch
          %1030 = sbr.rel (%p1028) target = $region108
        $region107: #{tpu_custom_call.1} parent=11 // pred_region
          _
        $region108: #{tpu_custom_call.1} parent=11 // pred_fallthru
          _
        // Predicated region
        $region109: #{tpu_custom_call.1} parent=11 // pred_check
          %p1031 = pneg %p687
        $region110: #{tpu_custom_call.1} parent=11 // pred_check_branch
          %1033 = sbr.rel (%p1031) target = $region112
        $region111: #{tpu_custom_call.1} parent=11 // pred_region
          %s1035 = ssub.s32 2048, 2048
          %1036 = vsyncadd [#allocation24], %s1035
          %s1037 = sshll.u32 [#allocation23], 4
          %s1038 = int_to_ptr.vmem [resolvable:$true] %s1037
          %1043 = dma.hbm_to_vmem [thread:$0]  %s55, 2048, %s1038, [#allocation24], 128, 128, 8
        $region112: #{tpu_custom_call.1} parent=11 // pred_fallthru
          _
        // Predicated region
        $region113: #{tpu_custom_call.1} parent=11 // pred_check
          %p1044 = pneg %p708
        $region114: #{tpu_custom_call.1} parent=11 // pred_check_branch
          %1046 = sbr.rel (%p1044) target = $region116
        $region115: #{tpu_custom_call.1} parent=11 // pred_region
          _
        $region116: #{tpu_custom_call.1} parent=11 // pred_fallthru
          _
        // Predicated region
        $region117: #{tpu_custom_call.1} parent=11 // pred_check
          %p1047 = pneg %p729
        $region118: #{tpu_custom_call.1} parent=11 // pred_check_branch
          %1049 = sbr.rel (%p1047) target = $region120
        $region119: #{tpu_custom_call.1} parent=11 // pred_region
          %s1051 = ssub.s32 2048, 2048
          %1052 = vsyncadd [#allocation24], %s1051
          %s1053 = sshll.u32 [#allocation25], 4
          %s1054 = int_to_ptr.vmem [resolvable:$true] %s1053
          %1059 = dma.hbm_to_vmem [thread:$0]  %s59, 2048, %s1054, [#allocation24], 128, 128, 8
        $region120: #{tpu_custom_call.1} parent=11 // pred_fallthru
          _
        // Predicated region
        $region121: #{tpu_custom_call.1} parent=11 // pred_check
          %p1060 = pneg %p750
        $region122: #{tpu_custom_call.1} parent=11 // pred_check_branch
          %1062 = sbr.rel (%p1060) target = $region124
        $region123: #{tpu_custom_call.1} parent=11 // pred_region
          _
        $region124: #{tpu_custom_call.1} parent=11 // pred_fallthru
          _
        // Predicated region
        $region125: #{tpu_custom_call.1} parent=11 // pred_check
          %p1063 = pneg %p771
        $region126: #{tpu_custom_call.1} parent=11 // pred_check_branch
          %1065 = sbr.rel (%p1063) target = $region128
        $region127: #{tpu_custom_call.1} parent=11 // pred_region
          _
        $region128: #{tpu_custom_call.1} parent=11 // pred_fallthru
          _
        // Predicated region
        $region129: #{tpu_custom_call.1} parent=11 // pred_check
          %p1066 = pneg %p792
        $region130: #{tpu_custom_call.1} parent=11 // pred_check_branch
          %1068 = sbr.rel (%p1066) target = $region132
        $region131: #{tpu_custom_call.1} parent=11 // pred_region
          _
        $region132: #{tpu_custom_call.1} parent=11 // pred_fallthru
          _
      $region12: #{tpu_custom_call.1} parent=5 // pred_fallthru
        _
      %p1069 = scmp.lt.s32.totalorder %s84, 2
      // Predicated region
      $region133: #{tpu_custom_call.1} parent=5 // pred_check
        %p1070 = pneg %p1069
      $region134: #{tpu_custom_call.1} parent=5 // pred_check_branch
        %1072 = sbr.rel (%p1070) target = $region136
      $region135: #{tpu_custom_call.1} parent=5 // pred_region
        // Predicated region
        $region137: #{tpu_custom_call.1} parent=135 // pred_check
          %p1073 = pneg %p104
        $region138: #{tpu_custom_call.1} parent=135 // pred_check_branch
          %1075 = sbr.rel (%p1073) target = $region140
        $region139: #{tpu_custom_call.1} parent=135 // pred_region
          %p1076 = scmp.lt.s32.totalorder %s84, 1
          %s1077 = scalar_select %p1076, %s84, 1
          %s1078 = smul.addr %s1077, 8
          %s1079 = scalar_lea.vmem %s1, %s1078
        $region140: #{tpu_custom_call.1} parent=135 // pred_fallthru
          _
        // Predicated region
        $region141: #{tpu_custom_call.1} parent=135 // pred_check
          %p1080 = pneg %p130
        $region142: #{tpu_custom_call.1} parent=135 // pred_check_branch
          %1082 = sbr.rel (%p1080) target = $region144
        $region143: #{tpu_custom_call.1} parent=135 // pred_region
          %p1083 = scmp.lt.s32.totalorder %s84, 1
          %s1084 = scalar_select %p1083, %s84, 1
          %s1085 = smul.addr %s1084, 8
          %s1086 = scalar_lea.vmem %s3, %s1085
        $region144: #{tpu_custom_call.1} parent=135 // pred_fallthru
          _
        // Predicated region
        $region145: #{tpu_custom_call.1} parent=135 // pred_check
          %p1087 = pneg %p156
        $region146: #{tpu_custom_call.1} parent=135 // pred_check_branch
          %1089 = sbr.rel (%p1087) target = $region148
        $region147: #{tpu_custom_call.1} parent=135 // pred_region
          %p1090 = scmp.lt.s32.totalorder %s84, 1
          %s1091 = scalar_select %p1090, %s84, 1
          %s1092 = smul.addr %s1091, 8
          %s1093 = scalar_lea.vmem %s5, %s1092
        $region148: #{tpu_custom_call.1} parent=135 // pred_fallthru
          _
      $region136: #{tpu_custom_call.1} parent=5 // pred_fallthru
        _
      %p1094 = scmp.le.s32.totalorder 1, %s84
      %p1095 = scmp.lt.s32.totalorder %s84, 3
      %p1096 = pnand %p1094, %p1095
      %p1097 = pneg %p1096
      // Predicated region
      $region149: #{tpu_custom_call.1} parent=5 // pred_check
        _
      $region150: #{tpu_custom_call.1} parent=5 // pred_check_branch
        %1099 = sbr.rel (%p1096) target = $region152
      $region151: #{tpu_custom_call.1} parent=5 // pred_region
        %s1100 = ssub.s32 %s84, 1
        // Predicated region
        $region153: #{tpu_custom_call.1} parent=151 // pred_check
          %p1101 = pneg %p183
        $region154: #{tpu_custom_call.1} parent=151 // pred_check_branch
          %1103 = sbr.rel (%p1101) target = $region156
        $region155: #{tpu_custom_call.1} parent=151 // pred_region
          %1104 = dma.done [#allocation3], 8192
        $region156: #{tpu_custom_call.1} parent=151 // pred_fallthru
          _
        // Predicated region
        $region157: #{tpu_custom_call.1} parent=151 // pred_check
          %p1105 = pneg %p225
        $region158: #{tpu_custom_call.1} parent=151 // pred_check_branch
          %1107 = sbr.rel (%p1105) target = $region160
        $region159: #{tpu_custom_call.1} parent=151 // pred_region
          %1108 = dma.done [#allocation6], 16384
        $region160: #{tpu_custom_call.1} parent=151 // pred_fallthru
          _
        // Predicated region
        $region161: #{tpu_custom_call.1} parent=151 // pred_check
          %p1109 = pneg %p267
        $region162: #{tpu_custom_call.1} parent=151 // pred_check_branch
          %1111 = sbr.rel (%p1109) target = $region164
        $region163: #{tpu_custom_call.1} parent=151 // pred_region
          %1112 = dma.done [#allocation6], 4096
        $region164: #{tpu_custom_call.1} parent=151 // pred_fallthru
          _
        // Predicated region
        $region165: #{tpu_custom_call.1} parent=151 // pred_check
          %p1113 = pneg %p309
        $region166: #{tpu_custom_call.1} parent=151 // pred_check_branch
          %1115 = sbr.rel (%p1113) target = $region168
        $region167: #{tpu_custom_call.1} parent=151 // pred_region
          %1116 = dma.done [#allocation9], 8192
        $region168: #{tpu_custom_call.1} parent=151 // pred_fallthru
          _
        // Predicated region
        $region169: #{tpu_custom_call.1} parent=151 // pred_check
          %p1117 = pneg %p351
        $region170: #{tpu_custom_call.1} parent=151 // pred_check_branch
          %1119 = sbr.rel (%p1117) target = $region172
        $region171: #{tpu_custom_call.1} parent=151 // pred_region
          %1120 = dma.done [#allocation9], 16384
        $region172: #{tpu_custom_call.1} parent=151 // pred_fallthru
          _
        // Predicated region
        $region173: #{tpu_custom_call.1} parent=151 // pred_check
          %p1121 = pneg %p393
        $region174: #{tpu_custom_call.1} parent=151 // pred_check_branch
          %1123 = sbr.rel (%p1121) target = $region176
        $region175: #{tpu_custom_call.1} parent=151 // pred_region
          %1124 = dma.done [#allocation12], 4096
        $region176: #{tpu_custom_call.1} parent=151 // pred_fallthru
          _
        // Predicated region
        $region177: #{tpu_custom_call.1} parent=151 // pred_check
          %p1125 = pneg %p435
        $region178: #{tpu_custom_call.1} parent=151 // pred_check_branch
          %1127 = sbr.rel (%p1125) target = $region180
        $region179: #{tpu_custom_call.1} parent=151 // pred_region
          %1128 = dma.done [#allocation12], 4096
        $region180: #{tpu_custom_call.1} parent=151 // pred_fallthru
          _
        // Predicated region
        $region181: #{tpu_custom_call.1} parent=151 // pred_check
          %p1129 = pneg %p477
        $region182: #{tpu_custom_call.1} parent=151 // pred_check_branch
          %1131 = sbr.rel (%p1129) target = $region184
        $region183: #{tpu_custom_call.1} parent=151 // pred_region
          %1132 = dma.done [#allocation15], 4096
        $region184: #{tpu_custom_call.1} parent=151 // pred_fallthru
          _
        // Predicated region
        $region185: #{tpu_custom_call.1} parent=151 // pred_check
          %p1133 = pneg %p498
        $region186: #{tpu_custom_call.1} parent=151 // pred_check_branch
          %1135 = sbr.rel (%p1133) target = $region188
        $region187: #{tpu_custom_call.1} parent=151 // pred_region
          %1136 = dma.done [#allocation15], 16
        $region188: #{tpu_custom_call.1} parent=151 // pred_fallthru
          _
        // Predicated region
        $region189: #{tpu_custom_call.1} parent=151 // pred_check
          %p1137 = pneg %p540
        $region190: #{tpu_custom_call.1} parent=151 // pred_check_branch
          %1139 = sbr.rel (%p1137) target = $region192
        $region191: #{tpu_custom_call.1} parent=151 // pred_region
          %1140 = dma.done [#allocation18], 16
        $region192: #{tpu_custom_call.1} parent=151 // pred_fallthru
          _
        // Predicated region
        $region193: #{tpu_custom_call.1} parent=151 // pred_check
          %p1141 = pneg %p561
        $region194: #{tpu_custom_call.1} parent=151 // pred_check_branch
          %1143 = sbr.rel (%p1141) target = $region196
        $region195: #{tpu_custom_call.1} parent=151 // pred_region
          %1144 = dma.done [#allocation18], 6144
        $region196: #{tpu_custom_call.1} parent=151 // pred_fallthru
          _
        // Predicated region
        $region197: #{tpu_custom_call.1} parent=151 // pred_check
          %p1145 = pneg %p603
        $region198: #{tpu_custom_call.1} parent=151 // pred_check_branch
          %1147 = sbr.rel (%p1145) target = $region200
        $region199: #{tpu_custom_call.1} parent=151 // pred_region
          %1148 = dma.done [#allocation21], 2048
        $region200: #{tpu_custom_call.1} parent=151 // pred_fallthru
          _
        // Predicated region
        $region201: #{tpu_custom_call.1} parent=151 // pred_check
          %p1149 = pneg %p645
        $region202: #{tpu_custom_call.1} parent=151 // pred_check_branch
          %1151 = sbr.rel (%p1149) target = $region204
        $region203: #{tpu_custom_call.1} parent=151 // pred_region
          %1152 = dma.done [#allocation21], 2048
        $region204: #{tpu_custom_call.1} parent=151 // pred_fallthru
          _
        // Predicated region
        $region205: #{tpu_custom_call.1} parent=151 // pred_check
          %p1153 = pneg %p687
        $region206: #{tpu_custom_call.1} parent=151 // pred_check_branch
          %1155 = sbr.rel (%p1153) target = $region208
        $region207: #{tpu_custom_call.1} parent=151 // pred_region
          %1156 = dma.done [#allocation24], 2048
        $region208: #{tpu_custom_call.1} parent=151 // pred_fallthru
          _
        // Predicated region
        $region209: #{tpu_custom_call.1} parent=151 // pred_check
          %p1157 = pneg %p729
        $region210: #{tpu_custom_call.1} parent=151 // pred_check_branch
          %1159 = sbr.rel (%p1157) target = $region212
        $region211: #{tpu_custom_call.1} parent=151 // pred_region
          %1160 = dma.done [#allocation24], 2048
        $region212: #{tpu_custom_call.1} parent=151 // pred_fallthru
          _
        %p1161 = scmp.lt.s32.totalorder %s89, 1
        %s1162 = scalar_select %p1161, %s89, 1
        %s1163 = smul.addr %s1162, 8
        %s1164 = scalar_lea.vmem %s1, %s1163
        %p1165 = pneg %p110
        %p1166 = pneg %p107
        %p1167 = scmp.lt.s32.totalorder %s89, 1
        %s1168 = scalar_select %p1167, %s89, 1
        %s1169 = smul.addr %s1168, 8
        %s1170 = scalar_lea.vmem %s3, %s1169
        %p1171 = pneg %p136
        %p1172 = pneg %p133
        %p1173 = scmp.lt.s32.totalorder %s89, 1
        %s1174 = scalar_select %p1173, %s89, 1
        %s1175 = smul.addr %s1174, 8
        %s1176 = scalar_lea.vmem %s5, %s1175
        %p1177 = pneg %p162
        %p1178 = pneg %p159
        %p1179 = pneg %p183
        %p1180 = pneg %p180
        %p1181 = pneg %p204
        %p1182 = pneg %p201
        %p1183 = pneg %p225
        %p1184 = pneg %p222
        %p1185 = pneg %p246
        %p1186 = pneg %p243
        %p1187 = pneg %p267
        %p1188 = pneg %p264
        %p1189 = pneg %p288
        %p1190 = pneg %p285
        %p1191 = pneg %p309
        %p1192 = pneg %p306
        %p1193 = pneg %p330
        %p1194 = pneg %p327
        %p1195 = pneg %p351
        %p1196 = pneg %p348
        %p1197 = pneg %p372
        %p1198 = pneg %p369
        %p1199 = pneg %p393
        %p1200 = pneg %p390
        %p1201 = pneg %p414
        %p1202 = pneg %p411
        %p1203 = pneg %p435
        %p1204 = pneg %p432
        %p1205 = pneg %p456
        %p1206 = pneg %p453
        %p1207 = pneg %p477
        %p1208 = pneg %p474
        %p1209 = pneg %p498
        %p1210 = pneg %p495
        %p1211 = pneg %p519
        %p1212 = pneg %p516
        %p1213 = pneg %p540
        %p1214 = pneg %p537
        %p1215 = pneg %p561
        %p1216 = pneg %p558
        %p1217 = pneg %p582
        %p1218 = pneg %p579
        %p1219 = pneg %p603
        %p1220 = pneg %p600
        %p1221 = pneg %p624
        %p1222 = pneg %p621
        %p1223 = pneg %p645
        %p1224 = pneg %p642
        %p1225 = pneg %p666
        %p1226 = pneg %p663
        %p1227 = pneg %p687
        %p1228 = pneg %p684
        %p1229 = pneg %p708
        %p1230 = pneg %p705
        %p1231 = pneg %p729
        %p1232 = pneg %p726
        %p1233 = pneg %p750
        %p1234 = pneg %p747
        %p1235 = pneg %p771
        %p1236 = pneg %p768
        %p1237 = pneg %p792
        %p1238 = pneg %p789
        %p1239 = pneg %p818
        %p1240 = pneg %p815
        %s1241 = sand.u32 %s805, 1
        %s1242 = scalar_lea.sflag [#allocation4], %s1241
        %s1243 = sand.u32 %s805, 1
        %s1244 = smul.addr %s1243, 40
        %s1245 = scalar_lea.vmem [#allocation26], %s1244
        %p1246 = scmp.lt.s32.totalorder %s89, 1
        %s1247 = scalar_select %p1246, %s89, 1
        %s1248 = smul.addr %s1247, 8
        %s1249 = scalar_lea.vmem %s1, %s1248
        %p1250 = scmp.lt.s32.totalorder %s89, 1
        %s1251 = scalar_select %p1250, %s89, 1
        %s1252 = smul.addr %s1251, 8
        %s1253 = scalar_lea.vmem %s3, %s1252
        %p1254 = scmp.lt.s32.totalorder %s89, 1
        %s1255 = scalar_select %p1254, %s89, 1
        %s1256 = smul.addr %s1255, 8
        %s1257 = scalar_lea.vmem %s5, %s1256
        %v1258 = vld [vmem:[%s1249] sm:$0xff]
        %v1259 = vld [vmem:[#allocation2] sm:$0xff]
        %v1260 = vld [vmem:[#allocation2 + $0x8] sm:$0xff]
        %v1261 = vld [vmem:[#allocation2 + $0x10] sm:$0xff]
        %v1262 = vld [vmem:[#allocation2 + $0x18] sm:$0xff]
        %v1263 = vld [vmem:[#allocation2 + $0x20] sm:$0xff]
        %v1264 = vld [vmem:[#allocation2 + $0x28] sm:$0xff]
        %v1265 = vld [vmem:[#allocation2 + $0x30] sm:$0xff]
        %v1266 = vld [vmem:[#allocation2 + $0x38] sm:$0xff]
        %v1267 = vld [vmem:[#allocation2 + $0x40] sm:$0xff]
        %v1268 = vld [vmem:[#allocation2 + $0x48] sm:$0xff]
        %v1269 = vld [vmem:[#allocation2 + $0x50] sm:$0xff]
        %v1270 = vld [vmem:[#allocation2 + $0x58] sm:$0xff]
        %v1271 = vld [vmem:[#allocation2 + $0x60] sm:$0xff]
        %v1272 = vld [vmem:[#allocation2 + $0x68] sm:$0xff]
        %v1273 = vld [vmem:[#allocation2 + $0x70] sm:$0xff]
        %v1274 = vld [vmem:[#allocation2 + $0x78] sm:$0xff]
        %v1275 = vld [vmem:[#allocation2 + $0x80] sm:$0xff]
        %v1276 = vld [vmem:[#allocation2 + $0x88] sm:$0xff]
        %v1277 = vld [vmem:[#allocation2 + $0x90] sm:$0xff]
        %v1278 = vld [vmem:[#allocation2 + $0x98] sm:$0xff]
        %v1279 = vld [vmem:[#allocation2 + $0xa0] sm:$0xff]
        %v1280 = vld [vmem:[#allocation2 + $0xa8] sm:$0xff]
        %v1281 = vld [vmem:[#allocation2 + $0xb0] sm:$0xff]
        %v1282 = vld [vmem:[#allocation2 + $0xb8] sm:$0xff]
        %v1283 = vld [vmem:[#allocation2 + $0xc0] sm:$0xff]
        %v1284 = vld [vmem:[#allocation2 + $0xc8] sm:$0xff]
        %v1285 = vld [vmem:[#allocation2 + $0xd0] sm:$0xff]
        %v1286 = vld [vmem:[#allocation2 + $0xd8] sm:$0xff]
        %v1287 = vld [vmem:[#allocation2 + $0xe0] sm:$0xff]
        %v1288 = vld [vmem:[#allocation2 + $0xe8] sm:$0xff]
        %v1289 = vld [vmem:[#allocation2 + $0xf0] sm:$0xff]
        %v1290 = vld [vmem:[#allocation2 + $0xf8] sm:$0xff]
        %v1291 = vld [vmem:[#allocation2 + $0x100] sm:$0xff]
        %v1292 = vld [vmem:[#allocation2 + $0x108] sm:$0xff]
        %v1293 = vld [vmem:[#allocation2 + $0x110] sm:$0xff]
        %v1294 = vld [vmem:[#allocation2 + $0x118] sm:$0xff]
        %v1295 = vld [vmem:[#allocation2 + $0x120] sm:$0xff]
        %v1296 = vld [vmem:[#allocation2 + $0x128] sm:$0xff]
        %v1297 = vld [vmem:[#allocation2 + $0x130] sm:$0xff]
        %v1298 = vld [vmem:[#allocation2 + $0x138] sm:$0xff]
        %v1299 = vld [vmem:[#allocation2 + $0x140] sm:$0xff]
        %v1300 = vld [vmem:[#allocation2 + $0x148] sm:$0xff]
        %v1301 = vld [vmem:[#allocation2 + $0x150] sm:$0xff]
        %v1302 = vld [vmem:[#allocation2 + $0x158] sm:$0xff]
        %v1303 = vld [vmem:[#allocation2 + $0x160] sm:$0xff]
        %v1304 = vld [vmem:[#allocation2 + $0x168] sm:$0xff]
        %v1305 = vld [vmem:[#allocation2 + $0x170] sm:$0xff]
        %v1306 = vld [vmem:[#allocation2 + $0x178] sm:$0xff]
        %v1307 = vld [vmem:[#allocation2 + $0x180] sm:$0xff]
        %v1308 = vld [vmem:[#allocation2 + $0x188] sm:$0xff]
        %v1309 = vld [vmem:[#allocation2 + $0x190] sm:$0xff]
        %v1310 = vld [vmem:[#allocation2 + $0x198] sm:$0xff]
        %v1311 = vld [vmem:[#allocation2 + $0x1a0] sm:$0xff]
        %v1312 = vld [vmem:[#allocation2 + $0x1a8] sm:$0xff]
        %v1313 = vld [vmem:[#allocation2 + $0x1b0] sm:$0xff]
        %v1314 = vld [vmem:[#allocation2 + $0x1b8] sm:$0xff]
        %v1315 = vld [vmem:[#allocation2 + $0x1c0] sm:$0xff]
        %v1316 = vld [vmem:[#allocation2 + $0x1c8] sm:$0xff]
        %v1317 = vld [vmem:[#allocation2 + $0x1d0] sm:$0xff]
        %v1318 = vld [vmem:[#allocation2 + $0x1d8] sm:$0xff]
        %v1319 = vld [vmem:[#allocation2 + $0x1e0] sm:$0xff]
        %v1320 = vld [vmem:[#allocation2 + $0x1e8] sm:$0xff]
        %v1321 = vld [vmem:[#allocation2 + $0x1f0] sm:$0xff]
        %v1322 = vld [vmem:[#allocation2 + $0x1f8] sm:$0xff]
        %v1323 = vld [vmem:[%s9] sm:$0xf]
        %v1325 = vlaneseq
        %v1326 = vshrl.u32 %v1325, 7
        %v1327 = vsub.s32 0, %v1326
        %v1328 = vrot.slane %v1323, %v1327
        %v1329 = vlaneseq
        %v1330 = vshrl.u32 %v1329, 7
        %v1331 = vsub.s32 1, %v1330
        %v1332 = vrot.slane %v1323, %v1331
        %v1333 = vlaneseq
        %v1334 = vshrl.u32 %v1333, 7
        %v1335 = vsub.s32 2, %v1334
        %v1336 = vrot.slane %v1323, %v1335
        %v1337 = vlaneseq
        %v1338 = vshrl.u32 %v1337, 7
        %v1339 = vsub.s32 3, %v1338
        %v1340 = vrot.slane %v1323, %v1339
        %1345 = vmatprep.subr.mxu0 %v1260
        %1346 = vmatpush1.msra.mxu0 %v1259
        %1347 = vmatprep.subr.mxu0 %v1264
        %1348 = vmatpush1.msra.mxu0 %v1263
        %1349 = vmatprep.subr.mxu0 %v1268
        %1350 = vmatpush1.msra.mxu0 %v1267
        %1351 = vmatprep.subr.mxu0 %v1272
        %1352 = vmatpush1.msra.mxu0 %v1271
        %1353 = vmatprep.subr.mxu0 %v1276
        %1354 = vmatpush1.msra.mxu0 %v1275
        %1355 = vmatprep.subr.mxu0 %v1280
        %1356 = vmatpush1.msra.mxu0 %v1279
        %1357 = vmatprep.subr.mxu0 %v1284
        %1358 = vmatpush1.msra.mxu0 %v1283
        %1359 = vmatprep.subr.mxu0 %v1288
        %1360 = vmatpush1.msra.mxu0 %v1287
        %1361 = vmatprep.subr.mxu0 %v1292
        %1362 = vmatpush1.msra.mxu0 %v1291
        %1363 = vmatprep.subr.mxu0 %v1296
        %1364 = vmatpush1.msra.mxu0 %v1295
        %1365 = vmatprep.subr.mxu0 %v1300
        %1366 = vmatpush1.msra.mxu0 %v1299
        %1367 = vmatprep.subr.mxu0 %v1304
        %1368 = vmatpush1.msra.mxu0 %v1303
        %1369 = vmatprep.subr.mxu0 %v1308
        %1370 = vmatpush1.msra.mxu0 %v1307
        %1371 = vmatprep.subr.mxu0 %v1312
        %1372 = vmatpush1.msra.mxu0 %v1311
        %1373 = vmatprep.subr.mxu0 %v1316
        %1374 = vmatpush1.msra.mxu0 %v1315
        %1375 = vmatprep.subr.mxu0 %v1320
        %1376 = vmatpush1.msra.mxu0 %v1319
        %1377 = vmatprep.subr.mxu0 0.0
        %1378 = vmatpush1.msra.mxu0 0.0
        %1379 = vmatprep.subr.mxu0 0.0
        %1380 = vmatpush1.msra.mxu0 0.0
        %1381 = vmatprep.subr.mxu0 0.0
        %1382 = vmatpush1.msra.mxu0 0.0
        %1383 = vmatprep.subr.mxu0 0.0
        %1384 = vmatpush1.msra.mxu0 0.0
        %1385 = vmatprep.subr.mxu0 0.0
        %1386 = vmatpush1.msra.mxu0 0.0
        %1387 = vmatprep.subr.mxu0 0.0
        %1388 = vmatpush1.msra.mxu0 0.0
        %1389 = vmatprep.subr.mxu0 0.0
        %1390 = vmatpush1.msra.mxu0 0.0
        %1391 = vmatprep.subr.mxu0 0.0
        %1392 = vmatpush1.msra.mxu0 0.0
        %1393 = vmatprep.subr.mxu0 0.0
        %1394 = vmatpush1.msra.mxu0 0.0
        %1395 = vmatprep.subr.mxu0 0.0
        %1396 = vmatpush1.msra.mxu0 0.0
        %1397 = vmatprep.subr.mxu0 0.0
        %1398 = vmatpush1.msra.mxu0 0.0
        %1399 = vmatprep.subr.mxu0 0.0
        %1400 = vmatpush1.msra.mxu0 0.0
        %1401 = vmatprep.subr.mxu0 0.0
        %1402 = vmatpush1.msra.mxu0 0.0
        %1403 = vmatprep.subr.mxu0 0.0
        %1404 = vmatpush1.msra.mxu0 0.0
        %1405 = vmatprep.subr.mxu0 0.0
        %1406 = vmatpush1.msra.mxu0 0.0
        %1407 = vmatprep.subr.mxu0 0.0
        %1408 = vmatpush1.msra.mxu0 0.0
        %1409 = vmatprep.mubr.f32.mxu0 0.0
        %1410 = vmatmul.mubr.f32.gmra.mrb[0].mxu0 %v1258
        %v1411 = vpop.f32.mrb[0].mxu0
        %v1412 = vadd.f32 %v1328, %v1411
        %v1413 = vpop.f32.mrb[0].mxu0
        %v1414 = vadd.f32 %v1332, %v1413
        %1415 = vdwg.mxu0
        %1416 = vmatprep.subr.mxu0 %v1262
        %1417 = vmatpush1.msra.mxu0 %v1261
        %1418 = vmatprep.subr.mxu0 %v1266
        %1419 = vmatpush1.msra.mxu0 %v1265
        %1420 = vmatprep.subr.mxu0 %v1270
        %1421 = vmatpush1.msra.mxu0 %v1269
        %1422 = vmatprep.subr.mxu0 %v1274
        %1423 = vmatpush1.msra.mxu0 %v1273
        %1424 = vmatprep.subr.mxu0 %v1278
        %1425 = vmatpush1.msra.mxu0 %v1277
        %1426 = vmatprep.subr.mxu0 %v1282
        %1427 = vmatpush1.msra.mxu0 %v1281
        %1428 = vmatprep.subr.mxu0 %v1286
        %1429 = vmatpush1.msra.mxu0 %v1285
        %1430 = vmatprep.subr.mxu0 %v1290
        %1431 = vmatpush1.msra.mxu0 %v1289
        %1432 = vmatprep.subr.mxu0 %v1294
        %1433 = vmatpush1.msra.mxu0 %v1293
        %1434 = vmatprep.subr.mxu0 %v1298
        %1435 = vmatpush1.msra.mxu0 %v1297
        %1436 = vmatprep.subr.mxu0 %v1302
        %1437 = vmatpush1.msra.mxu0 %v1301
        %1438 = vmatprep.subr.mxu0 %v1306
        %1439 = vmatpush1.msra.mxu0 %v1305
        %1440 = vmatprep.subr.mxu0 %v1310
        %1441 = vmatpush1.msra.mxu0 %v1309
        %1442 = vmatprep.subr.mxu0 %v1314
        %1443 = vmatpush1.msra.mxu0 %v1313
        %1444 = vmatprep.subr.mxu0 %v1318
        %1445 = vmatpush1.msra.mxu0 %v1317
        %1446 = vmatprep.subr.mxu0 %v1322
        %1447 = vmatpush1.msra.mxu0 %v1321
        %1448 = vmatprep.subr.mxu0 0.0
        %1449 = vmatpush1.msra.mxu0 0.0
        %1450 = vmatprep.subr.mxu0 0.0
        %1451 = vmatpush1.msra.mxu0 0.0
        %1452 = vmatprep.subr.mxu0 0.0
        %1453 = vmatpush1.msra.mxu0 0.0
        %1454 = vmatprep.subr.mxu0 0.0
        %1455 = vmatpush1.msra.mxu0 0.0
        %1456 = vmatprep.subr.mxu0 0.0
        %1457 = vmatpush1.msra.mxu0 0.0
        %1458 = vmatprep.subr.mxu0 0.0
        %1459 = vmatpush1.msra.mxu0 0.0
        %1460 = vmatprep.subr.mxu0 0.0
        %1461 = vmatpush1.msra.mxu0 0.0
        %1462 = vmatprep.subr.mxu0 0.0
        %1463 = vmatpush1.msra.mxu0 0.0
        %1464 = vmatprep.subr.mxu0 0.0
        %1465 = vmatpush1.msra.mxu0 0.0
        %1466 = vmatprep.subr.mxu0 0.0
        %1467 = vmatpush1.msra.mxu0 0.0
        %1468 = vmatprep.subr.mxu0 0.0
        %1469 = vmatpush1.msra.mxu0 0.0
        %1470 = vmatprep.subr.mxu0 0.0
        %1471 = vmatpush1.msra.mxu0 0.0
        %1472 = vmatprep.subr.mxu0 0.0
        %1473 = vmatpush1.msra.mxu0 0.0
        %1474 = vmatprep.subr.mxu0 0.0
        %1475 = vmatpush1.msra.mxu0 0.0
        %1476 = vmatprep.subr.mxu0 0.0
        %1477 = vmatpush1.msra.mxu0 0.0
        %1478 = vmatprep.subr.mxu0 0.0
        %1479 = vmatpush1.msra.mxu0 0.0
        %1480 = vmatprep.mubr.f32.mxu0 0.0
        %1481 = vmatmul.mubr.f32.gmra.mrb[0].mxu0 %v1258
        %v1482 = vpop.f32.mrb[0].mxu0
        %v1483 = vadd.f32 %v1336, %v1482
        %v1484 = vpop.f32.mrb[0].mxu0
        %v1485 = vadd.f32 %v1340, %v1484
        %1486 = vdwg.mxu0
        %v1487 = vmax.f32 %v1412, 0.0
        %v1488 = vmax.f32 %v1414, 0.0
        %v1489 = vmax.f32 %v1483, 0.0
        %v1490 = vmax.f32 %v1485, 0.0
        %v1491 = vld [vmem:[#allocation5] sm:$0xff]
        %v1492 = vld [vmem:[#allocation5 + $0x8] sm:$0xff]
        %v1493 = vld [vmem:[#allocation5 + $0x10] sm:$0xff]
        %v1494 = vld [vmem:[#allocation5 + $0x18] sm:$0xff]
        %v1495 = vld [vmem:[#allocation5 + $0x20] sm:$0xff]
        %v1496 = vld [vmem:[#allocation5 + $0x28] sm:$0xff]
        %v1497 = vld [vmem:[#allocation5 + $0x30] sm:$0xff]
        %v1498 = vld [vmem:[#allocation5 + $0x38] sm:$0xff]
        %v1499 = vld [vmem:[#allocation5 + $0x40] sm:$0xff]
        %v1500 = vld [vmem:[#allocation5 + $0x48] sm:$0xff]
        %v1501 = vld [vmem:[#allocation5 + $0x50] sm:$0xff]
        %v1502 = vld [vmem:[#allocation5 + $0x58] sm:$0xff]
        %v1503 = vld [vmem:[#allocation5 + $0x60] sm:$0xff]
        %v1504 = vld [vmem:[#allocation5 + $0x68] sm:$0xff]
        %v1505 = vld [vmem:[#allocation5 + $0x70] sm:$0xff]
        %v1506 = vld [vmem:[#allocation5 + $0x78] sm:$0xff]
        %v1507 = vld [vmem:[#allocation5 + $0x80] sm:$0xff]
        %v1508 = vld [vmem:[#allocation5 + $0x88] sm:$0xff]
        %v1509 = vld [vmem:[#allocation5 + $0x90] sm:$0xff]
        %v1510 = vld [vmem:[#allocation5 + $0x98] sm:$0xff]
        %v1511 = vld [vmem:[#allocation5 + $0xa0] sm:$0xff]
        %v1512 = vld [vmem:[#allocation5 + $0xa8] sm:$0xff]
        %v1513 = vld [vmem:[#allocation5 + $0xb0] sm:$0xff]
        %v1514 = vld [vmem:[#allocation5 + $0xb8] sm:$0xff]
        %v1515 = vld [vmem:[#allocation5 + $0xc0] sm:$0xff]
        %v1516 = vld [vmem:[#allocation5 + $0xc8] sm:$0xff]
        %v1517 = vld [vmem:[#allocation5 + $0xd0] sm:$0xff]
        %v1518 = vld [vmem:[#allocation5 + $0xd8] sm:$0xff]
        %v1519 = vld [vmem:[#allocation5 + $0xe0] sm:$0xff]
        %v1520 = vld [vmem:[#allocation5 + $0xe8] sm:$0xff]
        %v1521 = vld [vmem:[#allocation5 + $0xf0] sm:$0xff]
        %v1522 = vld [vmem:[#allocation5 + $0xf8] sm:$0xff]
        %v1523 = vld [vmem:[#allocation5 + $0x100] sm:$0xff]
        %v1524 = vld [vmem:[#allocation5 + $0x108] sm:$0xff]
        %v1525 = vld [vmem:[#allocation5 + $0x110] sm:$0xff]
        %v1526 = vld [vmem:[#allocation5 + $0x118] sm:$0xff]
        %v1527 = vld [vmem:[#allocation5 + $0x120] sm:$0xff]
        %v1528 = vld [vmem:[#allocation5 + $0x128] sm:$0xff]
        %v1529 = vld [vmem:[#allocation5 + $0x130] sm:$0xff]
        %v1530 = vld [vmem:[#allocation5 + $0x138] sm:$0xff]
        %v1531 = vld [vmem:[#allocation5 + $0x140] sm:$0xff]
        %v1532 = vld [vmem:[#allocation5 + $0x148] sm:$0xff]
        %v1533 = vld [vmem:[#allocation5 + $0x150] sm:$0xff]
        %v1534 = vld [vmem:[#allocation5 + $0x158] sm:$0xff]
        %v1535 = vld [vmem:[#allocation5 + $0x160] sm:$0xff]
        %v1536 = vld [vmem:[#allocation5 + $0x168] sm:$0xff]
        %v1537 = vld [vmem:[#allocation5 + $0x170] sm:$0xff]
        %v1538 = vld [vmem:[#allocation5 + $0x178] sm:$0xff]
        %v1539 = vld [vmem:[#allocation5 + $0x180] sm:$0xff]
        %v1540 = vld [vmem:[#allocation5 + $0x188] sm:$0xff]
        %v1541 = vld [vmem:[#allocation5 + $0x190] sm:$0xff]
        %v1542 = vld [vmem:[#allocation5 + $0x198] sm:$0xff]
        %v1543 = vld [vmem:[#allocation5 + $0x1a0] sm:$0xff]
        %v1544 = vld [vmem:[#allocation5 + $0x1a8] sm:$0xff]
        %v1545 = vld [vmem:[#allocation5 + $0x1b0] sm:$0xff]
        %v1546 = vld [vmem:[#allocation5 + $0x1b8] sm:$0xff]
        %v1547 = vld [vmem:[#allocation5 + $0x1c0] sm:$0xff]
        %v1548 = vld [vmem:[#allocation5 + $0x1c8] sm:$0xff]
        %v1549 = vld [vmem:[#allocation5 + $0x1d0] sm:$0xff]
        %v1550 = vld [vmem:[#allocation5 + $0x1d8] sm:$0xff]
        %v1551 = vld [vmem:[#allocation5 + $0x1e0] sm:$0xff]
        %v1552 = vld [vmem:[#allocation5 + $0x1e8] sm:$0xff]
        %v1553 = vld [vmem:[#allocation5 + $0x1f0] sm:$0xff]
        %v1554 = vld [vmem:[#allocation5 + $0x1f8] sm:$0xff]
        %v1555 = vld [vmem:[#allocation5 + $0x200] sm:$0xff]
        %v1556 = vld [vmem:[#allocation5 + $0x208] sm:$0xff]
        %v1557 = vld [vmem:[#allocation5 + $0x210] sm:$0xff]
        %v1558 = vld [vmem:[#allocation5 + $0x218] sm:$0xff]
        %v1559 = vld [vmem:[#allocation5 + $0x220] sm:$0xff]
        %v1560 = vld [vmem:[#allocation5 + $0x228] sm:$0xff]
        %v1561 = vld [vmem:[#allocation5 + $0x230] sm:$0xff]
        %v1562 = vld [vmem:[#allocation5 + $0x238] sm:$0xff]
        %v1563 = vld [vmem:[#allocation5 + $0x240] sm:$0xff]
        %v1564 = vld [vmem:[#allocation5 + $0x248] sm:$0xff]
        %v1565 = vld [vmem:[#allocation5 + $0x250] sm:$0xff]
        %v1566 = vld [vmem:[#allocation5 + $0x258] sm:$0xff]
        %v1567 = vld [vmem:[#allocation5 + $0x260] sm:$0xff]
        %v1568 = vld [vmem:[#allocation5 + $0x268] sm:$0xff]
        %v1569 = vld [vmem:[#allocation5 + $0x270] sm:$0xff]
        %v1570 = vld [vmem:[#allocation5 + $0x278] sm:$0xff]
        %v1571 = vld [vmem:[#allocation5 + $0x280] sm:$0xff]
        %v1572 = vld [vmem:[#allocation5 + $0x288] sm:$0xff]
        %v1573 = vld [vmem:[#allocation5 + $0x290] sm:$0xff]
        %v1574 = vld [vmem:[#allocation5 + $0x298] sm:$0xff]
        %v1575 = vld [vmem:[#allocation5 + $0x2a0] sm:$0xff]
        %v1576 = vld [vmem:[#allocation5 + $0x2a8] sm:$0xff]
        %v1577 = vld [vmem:[#allocation5 + $0x2b0] sm:$0xff]
        %v1578 = vld [vmem:[#allocation5 + $0x2b8] sm:$0xff]
        %v1579 = vld [vmem:[#allocation5 + $0x2c0] sm:$0xff]
        %v1580 = vld [vmem:[#allocation5 + $0x2c8] sm:$0xff]
        %v1581 = vld [vmem:[#allocation5 + $0x2d0] sm:$0xff]
        %v1582 = vld [vmem:[#allocation5 + $0x2d8] sm:$0xff]
        %v1583 = vld [vmem:[#allocation5 + $0x2e0] sm:$0xff]
        %v1584 = vld [vmem:[#allocation5 + $0x2e8] sm:$0xff]
        %v1585 = vld [vmem:[#allocation5 + $0x2f0] sm:$0xff]
        %v1586 = vld [vmem:[#allocation5 + $0x2f8] sm:$0xff]
        %v1587 = vld [vmem:[#allocation5 + $0x300] sm:$0xff]
        %v1588 = vld [vmem:[#allocation5 + $0x308] sm:$0xff]
        %v1589 = vld [vmem:[#allocation5 + $0x310] sm:$0xff]
        %v1590 = vld [vmem:[#allocation5 + $0x318] sm:$0xff]
        %v1591 = vld [vmem:[#allocation5 + $0x320] sm:$0xff]
        %v1592 = vld [vmem:[#allocation5 + $0x328] sm:$0xff]
        %v1593 = vld [vmem:[#allocation5 + $0x330] sm:$0xff]
        %v1594 = vld [vmem:[#allocation5 + $0x338] sm:$0xff]
        %v1595 = vld [vmem:[#allocation5 + $0x340] sm:$0xff]
        %v1596 = vld [vmem:[#allocation5 + $0x348] sm:$0xff]
        %v1597 = vld [vmem:[#allocation5 + $0x350] sm:$0xff]
        %v1598 = vld [vmem:[#allocation5 + $0x358] sm:$0xff]
        %v1599 = vld [vmem:[#allocation5 + $0x360] sm:$0xff]
        %v1600 = vld [vmem:[#allocation5 + $0x368] sm:$0xff]
        %v1601 = vld [vmem:[#allocation5 + $0x370] sm:$0xff]
        %v1602 = vld [vmem:[#allocation5 + $0x378] sm:$0xff]
        %v1603 = vld [vmem:[#allocation5 + $0x380] sm:$0xff]
        %v1604 = vld [vmem:[#allocation5 + $0x388] sm:$0xff]
        %v1605 = vld [vmem:[#allocation5 + $0x390] sm:$0xff]
        %v1606 = vld [vmem:[#allocation5 + $0x398] sm:$0xff]
        %v1607 = vld [vmem:[#allocation5 + $0x3a0] sm:$0xff]
        %v1608 = vld [vmem:[#allocation5 + $0x3a8] sm:$0xff]
        %v1609 = vld [vmem:[#allocation5 + $0x3b0] sm:$0xff]
        %v1610 = vld [vmem:[#allocation5 + $0x3b8] sm:$0xff]
        %v1611 = vld [vmem:[#allocation5 + $0x3c0] sm:$0xff]
        %v1612 = vld [vmem:[#allocation5 + $0x3c8] sm:$0xff]
        %v1613 = vld [vmem:[#allocation5 + $0x3d0] sm:$0xff]
        %v1614 = vld [vmem:[#allocation5 + $0x3d8] sm:$0xff]
        %v1615 = vld [vmem:[#allocation5 + $0x3e0] sm:$0xff]
        %v1616 = vld [vmem:[#allocation5 + $0x3e8] sm:$0xff]
        %v1617 = vld [vmem:[#allocation5 + $0x3f0] sm:$0xff]
        %v1618 = vld [vmem:[#allocation5 + $0x3f8] sm:$0xff]
        %v1619 = vld [vmem:[%s13] sm:$0x3]
        %v1621 = vlaneseq
        %v1622 = vshrl.u32 %v1621, 7
        %v1623 = vsub.s32 0, %v1622
        %v1624 = vrot.slane %v1619, %v1623
        %v1625 = vlaneseq
        %v1626 = vshrl.u32 %v1625, 7
        %v1627 = vsub.s32 1, %v1626
        %v1628 = vrot.slane %v1619, %v1627
        %1631 = vmatprep.subr.mxu0 %v1492
        %1632 = vmatpush1.msra.mxu0 %v1491
        %1633 = vmatprep.subr.mxu0 %v1494
        %1634 = vmatpush1.msra.mxu0 %v1493
        %1635 = vmatprep.subr.mxu0 %v1496
        %1636 = vmatpush1.msra.mxu0 %v1495
        %1637 = vmatprep.subr.mxu0 %v1498
        %1638 = vmatpush1.msra.mxu0 %v1497
        %1639 = vmatprep.subr.mxu0 %v1500
        %1640 = vmatpush1.msra.mxu0 %v1499
        %1641 = vmatprep.subr.mxu0 %v1502
        %1642 = vmatpush1.msra.mxu0 %v1501
        %1643 = vmatprep.subr.mxu0 %v1504
        %1644 = vmatpush1.msra.mxu0 %v1503
        %1645 = vmatprep.subr.mxu0 %v1506
        %1646 = vmatpush1.msra.mxu0 %v1505
        %1647 = vmatprep.subr.mxu0 %v1508
        %1648 = vmatpush1.msra.mxu0 %v1507
        %1649 = vmatprep.subr.mxu0 %v1510
        %1650 = vmatpush1.msra.mxu0 %v1509
        %1651 = vmatprep.subr.mxu0 %v1512
        %1652 = vmatpush1.msra.mxu0 %v1511
        %1653 = vmatprep.subr.mxu0 %v1514
        %1654 = vmatpush1.msra.mxu0 %v1513
        %1655 = vmatprep.subr.mxu0 %v1516
        %1656 = vmatpush1.msra.mxu0 %v1515
        %1657 = vmatprep.subr.mxu0 %v1518
        %1658 = vmatpush1.msra.mxu0 %v1517
        %1659 = vmatprep.subr.mxu0 %v1520
        %1660 = vmatpush1.msra.mxu0 %v1519
        %1661 = vmatprep.subr.mxu0 %v1522
        %1662 = vmatpush1.msra.mxu0 %v1521
        %1663 = vmatprep.subr.mxu0 %v1524
        %1664 = vmatpush1.msra.mxu0 %v1523
        %1665 = vmatprep.subr.mxu0 %v1526
        %1666 = vmatpush1.msra.mxu0 %v1525
        %1667 = vmatprep.subr.mxu0 %v1528
        %1668 = vmatpush1.msra.mxu0 %v1527
        %1669 = vmatprep.subr.mxu0 %v1530
        %1670 = vmatpush1.msra.mxu0 %v1529
        %1671 = vmatprep.subr.mxu0 %v1532
        %1672 = vmatpush1.msra.mxu0 %v1531
        %1673 = vmatprep.subr.mxu0 %v1534
        %1674 = vmatpush1.msra.mxu0 %v1533
        %1675 = vmatprep.subr.mxu0 %v1536
        %1676 = vmatpush1.msra.mxu0 %v1535
        %1677 = vmatprep.subr.mxu0 %v1538
        %1678 = vmatpush1.msra.mxu0 %v1537
        %1679 = vmatprep.subr.mxu0 %v1540
        %1680 = vmatpush1.msra.mxu0 %v1539
        %1681 = vmatprep.subr.mxu0 %v1542
        %1682 = vmatpush1.msra.mxu0 %v1541
        %1683 = vmatprep.subr.mxu0 %v1544
        %1684 = vmatpush1.msra.mxu0 %v1543
        %1685 = vmatprep.subr.mxu0 %v1546
        %1686 = vmatpush1.msra.mxu0 %v1545
        %1687 = vmatprep.subr.mxu0 %v1548
        %1688 = vmatpush1.msra.mxu0 %v1547
        %1689 = vmatprep.subr.mxu0 %v1550
        %1690 = vmatpush1.msra.mxu0 %v1549
        %1691 = vmatprep.subr.mxu0 %v1552
        %1692 = vmatpush1.msra.mxu0 %v1551
        %1693 = vmatprep.subr.mxu0 %v1554
        %1694 = vmatpush1.msra.mxu0 %v1553
        %1695 = vmatprep.mubr.f32.mxu0 %v1488
        %1696 = vmatmul.mubr.f32.gmra.mrb[0].mxu0 %v1487
        %v1697 = vpop.f32.mrb[0].mxu0
        %v1698 = vadd.f32 %v1624, %v1697
        %v1699 = vpop.f32.mrb[0].mxu0
        %v1700 = vadd.f32 %v1628, %v1699
        %1701 = vdwg.mxu0
        %1702 = vmatprep.subr.mxu0 %v1556
        %1703 = vmatpush1.msra.mxu0 %v1555
        %1704 = vmatprep.subr.mxu0 %v1558
        %1705 = vmatpush1.msra.mxu0 %v1557
        %1706 = vmatprep.subr.mxu0 %v1560
        %1707 = vmatpush1.msra.mxu0 %v1559
        %1708 = vmatprep.subr.mxu0 %v1562
        %1709 = vmatpush1.msra.mxu0 %v1561
        %1710 = vmatprep.subr.mxu0 %v1564
        %1711 = vmatpush1.msra.mxu0 %v1563
        %1712 = vmatprep.subr.mxu0 %v1566
        %1713 = vmatpush1.msra.mxu0 %v1565
        %1714 = vmatprep.subr.mxu0 %v1568
        %1715 = vmatpush1.msra.mxu0 %v1567
        %1716 = vmatprep.subr.mxu0 %v1570
        %1717 = vmatpush1.msra.mxu0 %v1569
        %1718 = vmatprep.subr.mxu0 %v1572
        %1719 = vmatpush1.msra.mxu0 %v1571
        %1720 = vmatprep.subr.mxu0 %v1574
        %1721 = vmatpush1.msra.mxu0 %v1573
        %1722 = vmatprep.subr.mxu0 %v1576
        %1723 = vmatpush1.msra.mxu0 %v1575
        %1724 = vmatprep.subr.mxu0 %v1578
        %1725 = vmatpush1.msra.mxu0 %v1577
        %1726 = vmatprep.subr.mxu0 %v1580
        %1727 = vmatpush1.msra.mxu0 %v1579
        %1728 = vmatprep.subr.mxu0 %v1582
        %1729 = vmatpush1.msra.mxu0 %v1581
        %1730 = vmatprep.subr.mxu0 %v1584
        %1731 = vmatpush1.msra.mxu0 %v1583
        %1732 = vmatprep.subr.mxu0 %v1586
        %1733 = vmatpush1.msra.mxu0 %v1585
        %1734 = vmatprep.subr.mxu0 %v1588
        %1735 = vmatpush1.msra.mxu0 %v1587
        %1736 = vmatprep.subr.mxu0 %v1590
        %1737 = vmatpush1.msra.mxu0 %v1589
        %1738 = vmatprep.subr.mxu0 %v1592
        %1739 = vmatpush1.msra.mxu0 %v1591
        %1740 = vmatprep.subr.mxu0 %v1594
        %1741 = vmatpush1.msra.mxu0 %v1593
        %1742 = vmatprep.subr.mxu0 %v1596
        %1743 = vmatpush1.msra.mxu0 %v1595
        %1744 = vmatprep.subr.mxu0 %v1598
        %1745 = vmatpush1.msra.mxu0 %v1597
        %1746 = vmatprep.subr.mxu0 %v1600
        %1747 = vmatpush1.msra.mxu0 %v1599
        %1748 = vmatprep.subr.mxu0 %v1602
        %1749 = vmatpush1.msra.mxu0 %v1601
        %1750 = vmatprep.subr.mxu0 %v1604
        %1751 = vmatpush1.msra.mxu0 %v1603
        %1752 = vmatprep.subr.mxu0 %v1606
        %1753 = vmatpush1.msra.mxu0 %v1605
        %1754 = vmatprep.subr.mxu0 %v1608
        %1755 = vmatpush1.msra.mxu0 %v1607
        %1756 = vmatprep.subr.mxu0 %v1610
        %1757 = vmatpush1.msra.mxu0 %v1609
        %1758 = vmatprep.subr.mxu0 %v1612
        %1759 = vmatpush1.msra.mxu0 %v1611
        %1760 = vmatprep.subr.mxu0 %v1614
        %1761 = vmatpush1.msra.mxu0 %v1613
        %1762 = vmatprep.subr.mxu0 %v1616
        %1763 = vmatpush1.msra.mxu0 %v1615
        %1764 = vmatprep.subr.mxu0 %v1618
        %1765 = vmatpush1.msra.mxu0 %v1617
        %1766 = vmatprep.mubr.f32.mxu0 %v1490
        %1767 = vmatmul.mubr.f32.gmra.mrb[0].mxu0 %v1489
        %v1768 = vpop.f32.mrb[0].mxu0
        %v1769 = vadd.f32 %v1698, %v1768
        %v1770 = vpop.f32.mrb[0].mxu0
        %v1771 = vadd.f32 %v1700, %v1770
        %1772 = vdwg.mxu0
        %v1773 = vmax.f32 %v1769, 0.0
        %v1774 = vmax.f32 %v1771, 0.0
        %v1775 = vld [vmem:[#allocation7] sm:$0xff]
        %v1776 = vld [vmem:[#allocation7 + $0x8] sm:$0xff]
        %v1777 = vld [vmem:[#allocation7 + $0x10] sm:$0xff]
        %v1778 = vld [vmem:[#allocation7 + $0x18] sm:$0xff]
        %v1779 = vld [vmem:[#allocation7 + $0x20] sm:$0xff]
        %v1780 = vld [vmem:[#allocation7 + $0x28] sm:$0xff]
        %v1781 = vld [vmem:[#allocation7 + $0x30] sm:$0xff]
        %v1782 = vld [vmem:[#allocation7 + $0x38] sm:$0xff]
        %v1783 = vld [vmem:[#allocation7 + $0x40] sm:$0xff]
        %v1784 = vld [vmem:[#allocation7 + $0x48] sm:$0xff]
        %v1785 = vld [vmem:[#allocation7 + $0x50] sm:$0xff]
        %v1786 = vld [vmem:[#allocation7 + $0x58] sm:$0xff]
        %v1787 = vld [vmem:[#allocation7 + $0x60] sm:$0xff]
        %v1788 = vld [vmem:[#allocation7 + $0x68] sm:$0xff]
        %v1789 = vld [vmem:[#allocation7 + $0x70] sm:$0xff]
        %v1790 = vld [vmem:[#allocation7 + $0x78] sm:$0xff]
        %v1791 = vld [vmem:[#allocation7 + $0x80] sm:$0xff]
        %v1792 = vld [vmem:[#allocation7 + $0x88] sm:$0xff]
        %v1793 = vld [vmem:[#allocation7 + $0x90] sm:$0xff]
        %v1794 = vld [vmem:[#allocation7 + $0x98] sm:$0xff]
        %v1795 = vld [vmem:[#allocation7 + $0xa0] sm:$0xff]
        %v1796 = vld [vmem:[#allocation7 + $0xa8] sm:$0xff]
        %v1797 = vld [vmem:[#allocation7 + $0xb0] sm:$0xff]
        %v1798 = vld [vmem:[#allocation7 + $0xb8] sm:$0xff]
        %v1799 = vld [vmem:[#allocation7 + $0xc0] sm:$0xff]
        %v1800 = vld [vmem:[#allocation7 + $0xc8] sm:$0xff]
        %v1801 = vld [vmem:[#allocation7 + $0xd0] sm:$0xff]
        %v1802 = vld [vmem:[#allocation7 + $0xd8] sm:$0xff]
        %v1803 = vld [vmem:[#allocation7 + $0xe0] sm:$0xff]
        %v1804 = vld [vmem:[#allocation7 + $0xe8] sm:$0xff]
        %v1805 = vld [vmem:[#allocation7 + $0xf0] sm:$0xff]
        %v1806 = vld [vmem:[#allocation7 + $0xf8] sm:$0xff]
        %v1807 = vld [vmem:[%s17] sm:$0x1]
        %v1809 = vlaneseq
        %v1810 = vshrl.u32 %v1809, 7
        %v1811 = vsub.s32 0, %v1810
        %v1812 = vrot.slane %v1807, %v1811
        %1814 = vmatprep.subr.mxu0 0.0
        %1815 = vmatpush1.msra.mxu0 %v1775
        %1816 = vmatprep.subr.mxu0 0.0
        %1817 = vmatpush1.msra.mxu0 %v1776
        %1818 = vmatprep.subr.mxu0 0.0
        %1819 = vmatpush1.msra.mxu0 %v1777
        %1820 = vmatprep.subr.mxu0 0.0
        %1821 = vmatpush1.msra.mxu0 %v1778
        %1822 = vmatprep.subr.mxu0 0.0
        %1823 = vmatpush1.msra.mxu0 %v1779
        %1824 = vmatprep.subr.mxu0 0.0
        %1825 = vmatpush1.msra.mxu0 %v1780
        %1826 = vmatprep.subr.mxu0 0.0
        %1827 = vmatpush1.msra.mxu0 %v1781
        %1828 = vmatprep.subr.mxu0 0.0
        %1829 = vmatpush1.msra.mxu0 %v1782
        %1830 = vmatprep.subr.mxu0 0.0
        %1831 = vmatpush1.msra.mxu0 %v1783
        %1832 = vmatprep.subr.mxu0 0.0
        %1833 = vmatpush1.msra.mxu0 %v1784
        %1834 = vmatprep.subr.mxu0 0.0
        %1835 = vmatpush1.msra.mxu0 %v1785
        %1836 = vmatprep.subr.mxu0 0.0
        %1837 = vmatpush1.msra.mxu0 %v1786
        %1838 = vmatprep.subr.mxu0 0.0
        %1839 = vmatpush1.msra.mxu0 %v1787
        %1840 = vmatprep.subr.mxu0 0.0
        %1841 = vmatpush1.msra.mxu0 %v1788
        %1842 = vmatprep.subr.mxu0 0.0
        %1843 = vmatpush1.msra.mxu0 %v1789
        %1844 = vmatprep.subr.mxu0 0.0
        %1845 = vmatpush1.msra.mxu0 %v1790
        %1846 = vmatprep.subr.mxu0 0.0
        %1847 = vmatpush1.msra.mxu0 %v1791
        %1848 = vmatprep.subr.mxu0 0.0
        %1849 = vmatpush1.msra.mxu0 %v1792
        %1850 = vmatprep.subr.mxu0 0.0
        %1851 = vmatpush1.msra.mxu0 %v1793
        %1852 = vmatprep.subr.mxu0 0.0
        %1853 = vmatpush1.msra.mxu0 %v1794
        %1854 = vmatprep.subr.mxu0 0.0
        %1855 = vmatpush1.msra.mxu0 %v1795
        %1856 = vmatprep.subr.mxu0 0.0
        %1857 = vmatpush1.msra.mxu0 %v1796
        %1858 = vmatprep.subr.mxu0 0.0
        %1859 = vmatpush1.msra.mxu0 %v1797
        %1860 = vmatprep.subr.mxu0 0.0
        %1861 = vmatpush1.msra.mxu0 %v1798
        %1862 = vmatprep.subr.mxu0 0.0
        %1863 = vmatpush1.msra.mxu0 %v1799
        %1864 = vmatprep.subr.mxu0 0.0
        %1865 = vmatpush1.msra.mxu0 %v1800
        %1866 = vmatprep.subr.mxu0 0.0
        %1867 = vmatpush1.msra.mxu0 %v1801
        %1868 = vmatprep.subr.mxu0 0.0
        %1869 = vmatpush1.msra.mxu0 %v1802
        %1870 = vmatprep.subr.mxu0 0.0
        %1871 = vmatpush1.msra.mxu0 %v1803
        %1872 = vmatprep.subr.mxu0 0.0
        %1873 = vmatpush1.msra.mxu0 %v1804
        %1874 = vmatprep.subr.mxu0 0.0
        %1875 = vmatpush1.msra.mxu0 %v1805
        %1876 = vmatprep.subr.mxu0 0.0
        %1877 = vmatpush1.msra.mxu0 %v1806
        %1878 = vmatprep.mubr.f32.mxu0 %v1774
        %1879 = vmatmul.mubr.f32.gmra.mrb[0].mxu0 %v1773
        %v1880 = vpop.f32.mrb[0].mxu0
        %v1881 = vadd.f32 %v1812, %v1880
        %v1882 = vpop.f32.mrb[0].mxu0
        %1883 = vdwg.mxu0
        %v1884 = vld [vmem:[%s1253] sm:$0xff]
        %v1885 = vld [vmem:[#allocation8] sm:$0xff]
        %v1886 = vld [vmem:[#allocation8 + $0x8] sm:$0xff]
        %v1887 = vld [vmem:[#allocation8 + $0x10] sm:$0xff]
        %v1888 = vld [vmem:[#allocation8 + $0x18] sm:$0xff]
        %v1889 = vld [vmem:[#allocation8 + $0x20] sm:$0xff]
        %v1890 = vld [vmem:[#allocation8 + $0x28] sm:$0xff]
        %v1891 = vld [vmem:[#allocation8 + $0x30] sm:$0xff]
        %v1892 = vld [vmem:[#allocation8 + $0x38] sm:$0xff]
        %v1893 = vld [vmem:[#allocation8 + $0x40] sm:$0xff]
        %v1894 = vld [vmem:[#allocation8 + $0x48] sm:$0xff]
        %v1895 = vld [vmem:[#allocation8 + $0x50] sm:$0xff]
        %v1896 = vld [vmem:[#allocation8 + $0x58] sm:$0xff]
        %v1897 = vld [vmem:[#allocation8 + $0x60] sm:$0xff]
        %v1898 = vld [vmem:[#allocation8 + $0x68] sm:$0xff]
        %v1899 = vld [vmem:[#allocation8 + $0x70] sm:$0xff]
        %v1900 = vld [vmem:[#allocation8 + $0x78] sm:$0xff]
        %v1901 = vld [vmem:[#allocation8 + $0x80] sm:$0xff]
        %v1902 = vld [vmem:[#allocation8 + $0x88] sm:$0xff]
        %v1903 = vld [vmem:[#allocation8 + $0x90] sm:$0xff]
        %v1904 = vld [vmem:[#allocation8 + $0x98] sm:$0xff]
        %v1905 = vld [vmem:[#allocation8 + $0xa0] sm:$0xff]
        %v1906 = vld [vmem:[#allocation8 + $0xa8] sm:$0xff]
        %v1907 = vld [vmem:[#allocation8 + $0xb0] sm:$0xff]
        %v1908 = vld [vmem:[#allocation8 + $0xb8] sm:$0xff]
        %v1909 = vld [vmem:[#allocation8 + $0xc0] sm:$0xff]
        %v1910 = vld [vmem:[#allocation8 + $0xc8] sm:$0xff]
        %v1911 = vld [vmem:[#allocation8 + $0xd0] sm:$0xff]
        %v1912 = vld [vmem:[#allocation8 + $0xd8] sm:$0xff]
        %v1913 = vld [vmem:[#allocation8 + $0xe0] sm:$0xff]
        %v1914 = vld [vmem:[#allocation8 + $0xe8] sm:$0xff]
        %v1915 = vld [vmem:[#allocation8 + $0xf0] sm:$0xff]
        %v1916 = vld [vmem:[#allocation8 + $0xf8] sm:$0xff]
        %v1917 = vld [vmem:[#allocation8 + $0x100] sm:$0xff]
        %v1918 = vld [vmem:[#allocation8 + $0x108] sm:$0xff]
        %v1919 = vld [vmem:[#allocation8 + $0x110] sm:$0xff]
        %v1920 = vld [vmem:[#allocation8 + $0x118] sm:$0xff]
        %v1921 = vld [vmem:[#allocation8 + $0x120] sm:$0xff]
        %v1922 = vld [vmem:[#allocation8 + $0x128] sm:$0xff]
        %v1923 = vld [vmem:[#allocation8 + $0x130] sm:$0xff]
        %v1924 = vld [vmem:[#allocation8 + $0x138] sm:$0xff]
        %v1925 = vld [vmem:[#allocation8 + $0x140] sm:$0xff]
        %v1926 = vld [vmem:[#allocation8 + $0x148] sm:$0xff]
        %v1927 = vld [vmem:[#allocation8 + $0x150] sm:$0xff]
        %v1928 = vld [vmem:[#allocation8 + $0x158] sm:$0xff]
        %v1929 = vld [vmem:[#allocation8 + $0x160] sm:$0xff]
        %v1930 = vld [vmem:[#allocation8 + $0x168] sm:$0xff]
        %v1931 = vld [vmem:[#allocation8 + $0x170] sm:$0xff]
        %v1932 = vld [vmem:[#allocation8 + $0x178] sm:$0xff]
        %v1933 = vld [vmem:[#allocation8 + $0x180] sm:$0xff]
        %v1934 = vld [vmem:[#allocation8 + $0x188] sm:$0xff]
        %v1935 = vld [vmem:[#allocation8 + $0x190] sm:$0xff]
        %v1936 = vld [vmem:[#allocation8 + $0x198] sm:$0xff]
        %v1937 = vld [vmem:[#allocation8 + $0x1a0] sm:$0xff]
        %v1938 = vld [vmem:[#allocation8 + $0x1a8] sm:$0xff]
        %v1939 = vld [vmem:[#allocation8 + $0x1b0] sm:$0xff]
        %v1940 = vld [vmem:[#allocation8 + $0x1b8] sm:$0xff]
        %v1941 = vld [vmem:[#allocation8 + $0x1c0] sm:$0xff]
        %v1942 = vld [vmem:[#allocation8 + $0x1c8] sm:$0xff]
        %v1943 = vld [vmem:[#allocation8 + $0x1d0] sm:$0xff]
        %v1944 = vld [vmem:[#allocation8 + $0x1d8] sm:$0xff]
        %v1945 = vld [vmem:[#allocation8 + $0x1e0] sm:$0xff]
        %v1946 = vld [vmem:[#allocation8 + $0x1e8] sm:$0xff]
        %v1947 = vld [vmem:[#allocation8 + $0x1f0] sm:$0xff]
        %v1948 = vld [vmem:[#allocation8 + $0x1f8] sm:$0xff]
        %v1949 = vld [vmem:[%s21] sm:$0xf]
        %v1951 = vlaneseq
        %v1952 = vshrl.u32 %v1951, 7
        %v1953 = vsub.s32 0, %v1952
        %v1954 = vrot.slane %v1949, %v1953
        %v1955 = vlaneseq
        %v1956 = vshrl.u32 %v1955, 7
        %v1957 = vsub.s32 1, %v1956
        %v1958 = vrot.slane %v1949, %v1957
        %v1959 = vlaneseq
        %v1960 = vshrl.u32 %v1959, 7
        %v1961 = vsub.s32 2, %v1960
        %v1962 = vrot.slane %v1949, %v1961
        %v1963 = vlaneseq
        %v1964 = vshrl.u32 %v1963, 7
        %v1965 = vsub.s32 3, %v1964
        %v1966 = vrot.slane %v1949, %v1965
        %1971 = vmatprep.subr.mxu0 %v1886
        %1972 = vmatpush1.msra.mxu0 %v1885
        %1973 = vmatprep.subr.mxu0 %v1890
        %1974 = vmatpush1.msra.mxu0 %v1889
        %1975 = vmatprep.subr.mxu0 %v1894
        %1976 = vmatpush1.msra.mxu0 %v1893
        %1977 = vmatprep.subr.mxu0 %v1898
        %1978 = vmatpush1.msra.mxu0 %v1897
        %1979 = vmatprep.subr.mxu0 %v1902
        %1980 = vmatpush1.msra.mxu0 %v1901
        %1981 = vmatprep.subr.mxu0 %v1906
        %1982 = vmatpush1.msra.mxu0 %v1905
        %1983 = vmatprep.subr.mxu0 %v1910
        %1984 = vmatpush1.msra.mxu0 %v1909
        %1985 = vmatprep.subr.mxu0 %v1914
        %1986 = vmatpush1.msra.mxu0 %v1913
        %1987 = vmatprep.subr.mxu0 %v1918
        %1988 = vmatpush1.msra.mxu0 %v1917
        %1989 = vmatprep.subr.mxu0 %v1922
        %1990 = vmatpush1.msra.mxu0 %v1921
        %1991 = vmatprep.subr.mxu0 %v1926
        %1992 = vmatpush1.msra.mxu0 %v1925
        %1993 = vmatprep.subr.mxu0 %v1930
        %1994 = vmatpush1.msra.mxu0 %v1929
        %1995 = vmatprep.subr.mxu0 %v1934
        %1996 = vmatpush1.msra.mxu0 %v1933
        %1997 = vmatprep.subr.mxu0 %v1938
        %1998 = vmatpush1.msra.mxu0 %v1937
        %1999 = vmatprep.subr.mxu0 %v1942
        %2000 = vmatpush1.msra.mxu0 %v1941
        %2001 = vmatprep.subr.mxu0 %v1946
        %2002 = vmatpush1.msra.mxu0 %v1945
        %2003 = vmatprep.subr.mxu0 0.0
        %2004 = vmatpush1.msra.mxu0 0.0
        %2005 = vmatprep.subr.mxu0 0.0
        %2006 = vmatpush1.msra.mxu0 0.0
        %2007 = vmatprep.subr.mxu0 0.0
        %2008 = vmatpush1.msra.mxu0 0.0
        %2009 = vmatprep.subr.mxu0 0.0
        %2010 = vmatpush1.msra.mxu0 0.0
        %2011 = vmatprep.subr.mxu0 0.0
        %2012 = vmatpush1.msra.mxu0 0.0
        %2013 = vmatprep.subr.mxu0 0.0
        %2014 = vmatpush1.msra.mxu0 0.0
        %2015 = vmatprep.subr.mxu0 0.0
        %2016 = vmatpush1.msra.mxu0 0.0
        %2017 = vmatprep.subr.mxu0 0.0
        %2018 = vmatpush1.msra.mxu0 0.0
        %2019 = vmatprep.subr.mxu0 0.0
        %2020 = vmatpush1.msra.mxu0 0.0
        %2021 = vmatprep.subr.mxu0 0.0
        %2022 = vmatpush1.msra.mxu0 0.0
        %2023 = vmatprep.subr.mxu0 0.0
        %2024 = vmatpush1.msra.mxu0 0.0
        %2025 = vmatprep.subr.mxu0 0.0
        %2026 = vmatpush1.msra.mxu0 0.0
        %2027 = vmatprep.subr.mxu0 0.0
        %2028 = vmatpush1.msra.mxu0 0.0
        %2029 = vmatprep.subr.mxu0 0.0
        %2030 = vmatpush1.msra.mxu0 0.0
        %2031 = vmatprep.subr.mxu0 0.0
        %2032 = vmatpush1.msra.mxu0 0.0
        %2033 = vmatprep.subr.mxu0 0.0
        %2034 = vmatpush1.msra.mxu0 0.0
        %2035 = vmatprep.mubr.f32.mxu0 0.0
        %2036 = vmatmul.mubr.f32.gmra.mrb[0].mxu0 %v1884
        %v2037 = vpop.f32.mrb[0].mxu0
        %v2038 = vadd.f32 %v1954, %v2037
        %v2039 = vpop.f32.mrb[0].mxu0
        %v2040 = vadd.f32 %v1958, %v2039
        %2041 = vdwg.mxu0
        %2042 = vmatprep.subr.mxu0 %v1888
        %2043 = vmatpush1.msra.mxu0 %v1887
        %2044 = vmatprep.subr.mxu0 %v1892
        %2045 = vmatpush1.msra.mxu0 %v1891
        %2046 = vmatprep.subr.mxu0 %v1896
        %2047 = vmatpush1.msra.mxu0 %v1895
        %2048 = vmatprep.subr.mxu0 %v1900
        %2049 = vmatpush1.msra.mxu0 %v1899
        %2050 = vmatprep.subr.mxu0 %v1904
        %2051 = vmatpush1.msra.mxu0 %v1903
        %2052 = vmatprep.subr.mxu0 %v1908
        %2053 = vmatpush1.msra.mxu0 %v1907
        %2054 = vmatprep.subr.mxu0 %v1912
        %2055 = vmatpush1.msra.mxu0 %v1911
        %2056 = vmatprep.subr.mxu0 %v1916
        %2057 = vmatpush1.msra.mxu0 %v1915
        %2058 = vmatprep.subr.mxu0 %v1920
        %2059 = vmatpush1.msra.mxu0 %v1919
        %2060 = vmatprep.subr.mxu0 %v1924
        %2061 = vmatpush1.msra.mxu0 %v1923
        %2062 = vmatprep.subr.mxu0 %v1928
        %2063 = vmatpush1.msra.mxu0 %v1927
        %2064 = vmatprep.subr.mxu0 %v1932
        %2065 = vmatpush1.msra.mxu0 %v1931
        %2066 = vmatprep.subr.mxu0 %v1936
        %2067 = vmatpush1.msra.mxu0 %v1935
        %2068 = vmatprep.subr.mxu0 %v1940
        %2069 = vmatpush1.msra.mxu0 %v1939
        %2070 = vmatprep.subr.mxu0 %v1944
        %2071 = vmatpush1.msra.mxu0 %v1943
        %2072 = vmatprep.subr.mxu0 %v1948
        %2073 = vmatpush1.msra.mxu0 %v1947
        %2074 = vmatprep.subr.mxu0 0.0
        %2075 = vmatpush1.msra.mxu0 0.0
        %2076 = vmatprep.subr.mxu0 0.0
        %2077 = vmatpush1.msra.mxu0 0.0
        %2078 = vmatprep.subr.mxu0 0.0
        %2079 = vmatpush1.msra.mxu0 0.0
        %2080 = vmatprep.subr.mxu0 0.0
        %2081 = vmatpush1.msra.mxu0 0.0
        %2082 = vmatprep.subr.mxu0 0.0
        %2083 = vmatpush1.msra.mxu0 0.0
        %2084 = vmatprep.subr.mxu0 0.0
        %2085 = vmatpush1.msra.mxu0 0.0
        %2086 = vmatprep.subr.mxu0 0.0
        %2087 = vmatpush1.msra.mxu0 0.0
        %2088 = vmatprep.subr.mxu0 0.0
        %2089 = vmatpush1.msra.mxu0 0.0
        %2090 = vmatprep.subr.mxu0 0.0
        %2091 = vmatpush1.msra.mxu0 0.0
        %2092 = vmatprep.subr.mxu0 0.0
        %2093 = vmatpush1.msra.mxu0 0.0
        %2094 = vmatprep.subr.mxu0 0.0
        %2095 = vmatpush1.msra.mxu0 0.0
        %2096 = vmatprep.subr.mxu0 0.0
        %2097 = vmatpush1.msra.mxu0 0.0
        %2098 = vmatprep.subr.mxu0 0.0
        %2099 = vmatpush1.msra.mxu0 0.0
        %2100 = vmatprep.subr.mxu0 0.0
        %2101 = vmatpush1.msra.mxu0 0.0
        %2102 = vmatprep.subr.mxu0 0.0
        %2103 = vmatpush1.msra.mxu0 0.0
        %2104 = vmatprep.subr.mxu0 0.0
        %2105 = vmatpush1.msra.mxu0 0.0
        %2106 = vmatprep.mubr.f32.mxu0 0.0
        %2107 = vmatmul.mubr.f32.gmra.mrb[0].mxu0 %v1884
        %v2108 = vpop.f32.mrb[0].mxu0
        %v2109 = vadd.f32 %v1962, %v2108
        %v2110 = vpop.f32.mrb[0].mxu0
        %v2111 = vadd.f32 %v1966, %v2110
        %2112 = vdwg.mxu0
        %v2113 = vmax.f32 %v2038, 0.0
        %v2114 = vmax.f32 %v2040, 0.0
        %v2115 = vmax.f32 %v2109, 0.0
        %v2116 = vmax.f32 %v2111, 0.0
        %v2117 = vld [vmem:[#allocation10] sm:$0xff]
        %v2118 = vld [vmem:[#allocation10 + $0x8] sm:$0xff]
        %v2119 = vld [vmem:[#allocation10 + $0x10] sm:$0xff]
        %v2120 = vld [vmem:[#allocation10 + $0x18] sm:$0xff]
        %v2121 = vld [vmem:[#allocation10 + $0x20] sm:$0xff]
        %v2122 = vld [vmem:[#allocation10 + $0x28] sm:$0xff]
        %v2123 = vld [vmem:[#allocation10 + $0x30] sm:$0xff]
        %v2124 = vld [vmem:[#allocation10 + $0x38] sm:$0xff]
        %v2125 = vld [vmem:[#allocation10 + $0x40] sm:$0xff]
        %v2126 = vld [vmem:[#allocation10 + $0x48] sm:$0xff]
        %v2127 = vld [vmem:[#allocation10 + $0x50] sm:$0xff]
        %v2128 = vld [vmem:[#allocation10 + $0x58] sm:$0xff]
        %v2129 = vld [vmem:[#allocation10 + $0x60] sm:$0xff]
        %v2130 = vld [vmem:[#allocation10 + $0x68] sm:$0xff]
        %v2131 = vld [vmem:[#allocation10 + $0x70] sm:$0xff]
        %v2132 = vld [vmem:[#allocation10 + $0x78] sm:$0xff]
        %v2133 = vld [vmem:[#allocation10 + $0x80] sm:$0xff]
        %v2134 = vld [vmem:[#allocation10 + $0x88] sm:$0xff]
        %v2135 = vld [vmem:[#allocation10 + $0x90] sm:$0xff]
        %v2136 = vld [vmem:[#allocation10 + $0x98] sm:$0xff]
        %v2137 = vld [vmem:[#allocation10 + $0xa0] sm:$0xff]
        %v2138 = vld [vmem:[#allocation10 + $0xa8] sm:$0xff]
        %v2139 = vld [vmem:[#allocation10 + $0xb0] sm:$0xff]
        %v2140 = vld [vmem:[#allocation10 + $0xb8] sm:$0xff]
        %v2141 = vld [vmem:[#allocation10 + $0xc0] sm:$0xff]
        %v2142 = vld [vmem:[#allocation10 + $0xc8] sm:$0xff]
        %v2143 = vld [vmem:[#allocation10 + $0xd0] sm:$0xff]
        %v2144 = vld [vmem:[#allocation10 + $0xd8] sm:$0xff]
        %v2145 = vld [vmem:[#allocation10 + $0xe0] sm:$0xff]
        %v2146 = vld [vmem:[#allocation10 + $0xe8] sm:$0xff]
        %v2147 = vld [vmem:[#allocation10 + $0xf0] sm:$0xff]
        %v2148 = vld [vmem:[#allocation10 + $0xf8] sm:$0xff]
        %v2149 = vld [vmem:[#allocation10 + $0x100] sm:$0xff]
        %v2150 = vld [vmem:[#allocation10 + $0x108] sm:$0xff]
        %v2151 = vld [vmem:[#allocation10 + $0x110] sm:$0xff]
        %v2152 = vld [vmem:[#allocation10 + $0x118] sm:$0xff]
        %v2153 = vld [vmem:[#allocation10 + $0x120] sm:$0xff]
        %v2154 = vld [vmem:[#allocation10 + $0x128] sm:$0xff]
        %v2155 = vld [vmem:[#allocation10 + $0x130] sm:$0xff]
        %v2156 = vld [vmem:[#allocation10 + $0x138] sm:$0xff]
        %v2157 = vld [vmem:[#allocation10 + $0x140] sm:$0xff]
        %v2158 = vld [vmem:[#allocation10 + $0x148] sm:$0xff]
        %v2159 = vld [vmem:[#allocation10 + $0x150] sm:$0xff]
        %v2160 = vld [vmem:[#allocation10 + $0x158] sm:$0xff]
        %v2161 = vld [vmem:[#allocation10 + $0x160] sm:$0xff]
        %v2162 = vld [vmem:[#allocation10 + $0x168] sm:$0xff]
        %v2163 = vld [vmem:[#allocation10 + $0x170] sm:$0xff]
        %v2164 = vld [vmem:[#allocation10 + $0x178] sm:$0xff]
        %v2165 = vld [vmem:[#allocation10 + $0x180] sm:$0xff]
        %v2166 = vld [vmem:[#allocation10 + $0x188] sm:$0xff]
        %v2167 = vld [vmem:[#allocation10 + $0x190] sm:$0xff]
        %v2168 = vld [vmem:[#allocation10 + $0x198] sm:$0xff]
        %v2169 = vld [vmem:[#allocation10 + $0x1a0] sm:$0xff]
        %v2170 = vld [vmem:[#allocation10 + $0x1a8] sm:$0xff]
        %v2171 = vld [vmem:[#allocation10 + $0x1b0] sm:$0xff]
        %v2172 = vld [vmem:[#allocation10 + $0x1b8] sm:$0xff]
        %v2173 = vld [vmem:[#allocation10 + $0x1c0] sm:$0xff]
        %v2174 = vld [vmem:[#allocation10 + $0x1c8] sm:$0xff]
        %v2175 = vld [vmem:[#allocation10 + $0x1d0] sm:$0xff]
        %v2176 = vld [vmem:[#allocation10 + $0x1d8] sm:$0xff]
        %v2177 = vld [vmem:[#allocation10 + $0x1e0] sm:$0xff]
        %v2178 = vld [vmem:[#allocation10 + $0x1e8] sm:$0xff]
        %v2179 = vld [vmem:[#allocation10 + $0x1f0] sm:$0xff]
        %v2180 = vld [vmem:[#allocation10 + $0x1f8] sm:$0xff]
        %v2181 = vld [vmem:[#allocation10 + $0x200] sm:$0xff]
        %v2182 = vld [vmem:[#allocation10 + $0x208] sm:$0xff]
        %v2183 = vld [vmem:[#allocation10 + $0x210] sm:$0xff]
        %v2184 = vld [vmem:[#allocation10 + $0x218] sm:$0xff]
        %v2185 = vld [vmem:[#allocation10 + $0x220] sm:$0xff]
        %v2186 = vld [vmem:[#allocation10 + $0x228] sm:$0xff]
        %v2187 = vld [vmem:[#allocation10 + $0x230] sm:$0xff]
        %v2188 = vld [vmem:[#allocation10 + $0x238] sm:$0xff]
        %v2189 = vld [vmem:[#allocation10 + $0x240] sm:$0xff]
        %v2190 = vld [vmem:[#allocation10 + $0x248] sm:$0xff]
        %v2191 = vld [vmem:[#allocation10 + $0x250] sm:$0xff]
        %v2192 = vld [vmem:[#allocation10 + $0x258] sm:$0xff]
        %v2193 = vld [vmem:[#allocation10 + $0x260] sm:$0xff]
        %v2194 = vld [vmem:[#allocation10 + $0x268] sm:$0xff]
        %v2195 = vld [vmem:[#allocation10 + $0x270] sm:$0xff]
        %v2196 = vld [vmem:[#allocation10 + $0x278] sm:$0xff]
        %v2197 = vld [vmem:[#allocation10 + $0x280] sm:$0xff]
        %v2198 = vld [vmem:[#allocation10 + $0x288] sm:$0xff]
        %v2199 = vld [vmem:[#allocation10 + $0x290] sm:$0xff]
        %v2200 = vld [vmem:[#allocation10 + $0x298] sm:$0xff]
        %v2201 = vld [vmem:[#allocation10 + $0x2a0] sm:$0xff]
        %v2202 = vld [vmem:[#allocation10 + $0x2a8] sm:$0xff]
        %v2203 = vld [vmem:[#allocation10 + $0x2b0] sm:$0xff]
        %v2204 = vld [vmem:[#allocation10 + $0x2b8] sm:$0xff]
        %v2205 = vld [vmem:[#allocation10 + $0x2c0] sm:$0xff]
        %v2206 = vld [vmem:[#allocation10 + $0x2c8] sm:$0xff]
        %v2207 = vld [vmem:[#allocation10 + $0x2d0] sm:$0xff]
        %v2208 = vld [vmem:[#allocation10 + $0x2d8] sm:$0xff]
        %v2209 = vld [vmem:[#allocation10 + $0x2e0] sm:$0xff]
        %v2210 = vld [vmem:[#allocation10 + $0x2e8] sm:$0xff]
        %v2211 = vld [vmem:[#allocation10 + $0x2f0] sm:$0xff]
        %v2212 = vld [vmem:[#allocation10 + $0x2f8] sm:$0xff]
        %v2213 = vld [vmem:[#allocation10 + $0x300] sm:$0xff]
        %v2214 = vld [vmem:[#allocation10 + $0x308] sm:$0xff]
        %v2215 = vld [vmem:[#allocation10 + $0x310] sm:$0xff]
        %v2216 = vld [vmem:[#allocation10 + $0x318] sm:$0xff]
        %v2217 = vld [vmem:[#allocation10 + $0x320] sm:$0xff]
        %v2218 = vld [vmem:[#allocation10 + $0x328] sm:$0xff]
        %v2219 = vld [vmem:[#allocation10 + $0x330] sm:$0xff]
        %v2220 = vld [vmem:[#allocation10 + $0x338] sm:$0xff]
        %v2221 = vld [vmem:[#allocation10 + $0x340] sm:$0xff]
        %v2222 = vld [vmem:[#allocation10 + $0x348] sm:$0xff]
        %v2223 = vld [vmem:[#allocation10 + $0x350] sm:$0xff]
        %v2224 = vld [vmem:[#allocation10 + $0x358] sm:$0xff]
        %v2225 = vld [vmem:[#allocation10 + $0x360] sm:$0xff]
        %v2226 = vld [vmem:[#allocation10 + $0x368] sm:$0xff]
        %v2227 = vld [vmem:[#allocation10 + $0x370] sm:$0xff]
        %v2228 = vld [vmem:[#allocation10 + $0x378] sm:$0xff]
        %v2229 = vld [vmem:[#allocation10 + $0x380] sm:$0xff]
        %v2230 = vld [vmem:[#allocation10 + $0x388] sm:$0xff]
        %v2231 = vld [vmem:[#allocation10 + $0x390] sm:$0xff]
        %v2232 = vld [vmem:[#allocation10 + $0x398] sm:$0xff]
        %v2233 = vld [vmem:[#allocation10 + $0x3a0] sm:$0xff]
        %v2234 = vld [vmem:[#allocation10 + $0x3a8] sm:$0xff]
        %v2235 = vld [vmem:[#allocation10 + $0x3b0] sm:$0xff]
        %v2236 = vld [vmem:[#allocation10 + $0x3b8] sm:$0xff]
        %v2237 = vld [vmem:[#allocation10 + $0x3c0] sm:$0xff]
        %v2238 = vld [vmem:[#allocation10 + $0x3c8] sm:$0xff]
        %v2239 = vld [vmem:[#allocation10 + $0x3d0] sm:$0xff]
        %v2240 = vld [vmem:[#allocation10 + $0x3d8] sm:$0xff]
        %v2241 = vld [vmem:[#allocation10 + $0x3e0] sm:$0xff]
        %v2242 = vld [vmem:[#allocation10 + $0x3e8] sm:$0xff]
        %v2243 = vld [vmem:[#allocation10 + $0x3f0] sm:$0xff]
        %v2244 = vld [vmem:[#allocation10 + $0x3f8] sm:$0xff]
        %v2245 = vld [vmem:[%s25] sm:$0x3]
        %v2247 = vlaneseq
        %v2248 = vshrl.u32 %v2247, 7
        %v2249 = vsub.s32 0, %v2248
        %v2250 = vrot.slane %v2245, %v2249
        %v2251 = vlaneseq
        %v2252 = vshrl.u32 %v2251, 7
        %v2253 = vsub.s32 1, %v2252
        %v2254 = vrot.slane %v2245, %v2253
        %2257 = vmatprep.subr.mxu0 %v2118
        %2258 = vmatpush1.msra.mxu0 %v2117
        %2259 = vmatprep.subr.mxu0 %v2120
        %2260 = vmatpush1.msra.mxu0 %v2119
        %2261 = vmatprep.subr.mxu0 %v2122
        %2262 = vmatpush1.msra.mxu0 %v2121
        %2263 = vmatprep.subr.mxu0 %v2124
        %2264 = vmatpush1.msra.mxu0 %v2123
        %2265 = vmatprep.subr.mxu0 %v2126
        %2266 = vmatpush1.msra.mxu0 %v2125
        %2267 = vmatprep.subr.mxu0 %v2128
        %2268 = vmatpush1.msra.mxu0 %v2127
        %2269 = vmatprep.subr.mxu0 %v2130
        %2270 = vmatpush1.msra.mxu0 %v2129
        %2271 = vmatprep.subr.mxu0 %v2132
        %2272 = vmatpush1.msra.mxu0 %v2131
        %2273 = vmatprep.subr.mxu0 %v2134
        %2274 = vmatpush1.msra.mxu0 %v2133
        %2275 = vmatprep.subr.mxu0 %v2136
        %2276 = vmatpush1.msra.mxu0 %v2135
        %2277 = vmatprep.subr.mxu0 %v2138
        %2278 = vmatpush1.msra.mxu0 %v2137
        %2279 = vmatprep.subr.mxu0 %v2140
        %2280 = vmatpush1.msra.mxu0 %v2139
        %2281 = vmatprep.subr.mxu0 %v2142
        %2282 = vmatpush1.msra.mxu0 %v2141
        %2283 = vmatprep.subr.mxu0 %v2144
        %2284 = vmatpush1.msra.mxu0 %v2143
        %2285 = vmatprep.subr.mxu0 %v2146
        %2286 = vmatpush1.msra.mxu0 %v2145
        %2287 = vmatprep.subr.mxu0 %v2148
        %2288 = vmatpush1.msra.mxu0 %v2147
        %2289 = vmatprep.subr.mxu0 %v2150
        %2290 = vmatpush1.msra.mxu0 %v2149
        %2291 = vmatprep.subr.mxu0 %v2152
        %2292 = vmatpush1.msra.mxu0 %v2151
        %2293 = vmatprep.subr.mxu0 %v2154
        %2294 = vmatpush1.msra.mxu0 %v2153
        %2295 = vmatprep.subr.mxu0 %v2156
        %2296 = vmatpush1.msra.mxu0 %v2155
        %2297 = vmatprep.subr.mxu0 %v2158
        %2298 = vmatpush1.msra.mxu0 %v2157
        %2299 = vmatprep.subr.mxu0 %v2160
        %2300 = vmatpush1.msra.mxu0 %v2159
        %2301 = vmatprep.subr.mxu0 %v2162
        %2302 = vmatpush1.msra.mxu0 %v2161
        %2303 = vmatprep.subr.mxu0 %v2164
        %2304 = vmatpush1.msra.mxu0 %v2163
        %2305 = vmatprep.subr.mxu0 %v2166
        %2306 = vmatpush1.msra.mxu0 %v2165
        %2307 = vmatprep.subr.mxu0 %v2168
        %2308 = vmatpush1.msra.mxu0 %v2167
        %2309 = vmatprep.subr.mxu0 %v2170
        %2310 = vmatpush1.msra.mxu0 %v2169
        %2311 = vmatprep.subr.mxu0 %v2172
        %2312 = vmatpush1.msra.mxu0 %v2171
        %2313 = vmatprep.subr.mxu0 %v2174
        %2314 = vmatpush1.msra.mxu0 %v2173
        %2315 = vmatprep.subr.mxu0 %v2176
        %2316 = vmatpush1.msra.mxu0 %v2175
        %2317 = vmatprep.subr.mxu0 %v2178
        %2318 = vmatpush1.msra.mxu0 %v2177
        %2319 = vmatprep.subr.mxu0 %v2180
        %2320 = vmatpush1.msra.mxu0 %v2179
        %2321 = vmatprep.mubr.f32.mxu0 %v2114
        %2322 = vmatmul.mubr.f32.gmra.mrb[0].mxu0 %v2113
        %v2323 = vpop.f32.mrb[0].mxu0
        %v2324 = vadd.f32 %v2250, %v2323
        %v2325 = vpop.f32.mrb[0].mxu0
        %v2326 = vadd.f32 %v2254, %v2325
        %2327 = vdwg.mxu0
        %2328 = vmatprep.subr.mxu0 %v2182
        %2329 = vmatpush1.msra.mxu0 %v2181
        %2330 = vmatprep.subr.mxu0 %v2184
        %2331 = vmatpush1.msra.mxu0 %v2183
        %2332 = vmatprep.subr.mxu0 %v2186
        %2333 = vmatpush1.msra.mxu0 %v2185
        %2334 = vmatprep.subr.mxu0 %v2188
        %2335 = vmatpush1.msra.mxu0 %v2187
        %2336 = vmatprep.subr.mxu0 %v2190
        %2337 = vmatpush1.msra.mxu0 %v2189
        %2338 = vmatprep.subr.mxu0 %v2192
        %2339 = vmatpush1.msra.mxu0 %v2191
        %2340 = vmatprep.subr.mxu0 %v2194
        %2341 = vmatpush1.msra.mxu0 %v2193
        %2342 = vmatprep.subr.mxu0 %v2196
        %2343 = vmatpush1.msra.mxu0 %v2195
        %2344 = vmatprep.subr.mxu0 %v2198
        %2345 = vmatpush1.msra.mxu0 %v2197
        %2346 = vmatprep.subr.mxu0 %v2200
        %2347 = vmatpush1.msra.mxu0 %v2199
        %2348 = vmatprep.subr.mxu0 %v2202
        %2349 = vmatpush1.msra.mxu0 %v2201
        %2350 = vmatprep.subr.mxu0 %v2204
        %2351 = vmatpush1.msra.mxu0 %v2203
        %2352 = vmatprep.subr.mxu0 %v2206
        %2353 = vmatpush1.msra.mxu0 %v2205
        %2354 = vmatprep.subr.mxu0 %v2208
        %2355 = vmatpush1.msra.mxu0 %v2207
        %2356 = vmatprep.subr.mxu0 %v2210
        %2357 = vmatpush1.msra.mxu0 %v2209
        %2358 = vmatprep.subr.mxu0 %v2212
        %2359 = vmatpush1.msra.mxu0 %v2211
        %2360 = vmatprep.subr.mxu0 %v2214
        %2361 = vmatpush1.msra.mxu0 %v2213
        %2362 = vmatprep.subr.mxu0 %v2216
        %2363 = vmatpush1.msra.mxu0 %v2215
        %2364 = vmatprep.subr.mxu0 %v2218
        %2365 = vmatpush1.msra.mxu0 %v2217
        %2366 = vmatprep.subr.mxu0 %v2220
        %2367 = vmatpush1.msra.mxu0 %v2219
        %2368 = vmatprep.subr.mxu0 %v2222
        %2369 = vmatpush1.msra.mxu0 %v2221
        %2370 = vmatprep.subr.mxu0 %v2224
        %2371 = vmatpush1.msra.mxu0 %v2223
        %2372 = vmatprep.subr.mxu0 %v2226
        %2373 = vmatpush1.msra.mxu0 %v2225
        %2374 = vmatprep.subr.mxu0 %v2228
        %2375 = vmatpush1.msra.mxu0 %v2227
        %2376 = vmatprep.subr.mxu0 %v2230
        %2377 = vmatpush1.msra.mxu0 %v2229
        %2378 = vmatprep.subr.mxu0 %v2232
        %2379 = vmatpush1.msra.mxu0 %v2231
        %2380 = vmatprep.subr.mxu0 %v2234
        %2381 = vmatpush1.msra.mxu0 %v2233
        %2382 = vmatprep.subr.mxu0 %v2236
        %2383 = vmatpush1.msra.mxu0 %v2235
        %2384 = vmatprep.subr.mxu0 %v2238
        %2385 = vmatpush1.msra.mxu0 %v2237
        %2386 = vmatprep.subr.mxu0 %v2240
        %2387 = vmatpush1.msra.mxu0 %v2239
        %2388 = vmatprep.subr.mxu0 %v2242
        %2389 = vmatpush1.msra.mxu0 %v2241
        %2390 = vmatprep.subr.mxu0 %v2244
        %2391 = vmatpush1.msra.mxu0 %v2243
        %2392 = vmatprep.mubr.f32.mxu0 %v2116
        %2393 = vmatmul.mubr.f32.gmra.mrb[0].mxu0 %v2115
        %v2394 = vpop.f32.mrb[0].mxu0
        %v2395 = vadd.f32 %v2324, %v2394
        %v2396 = vpop.f32.mrb[0].mxu0
        %v2397 = vadd.f32 %v2326, %v2396
        %2398 = vdwg.mxu0
        %v2399 = vmax.f32 %v2395, 0.0
        %v2400 = vmax.f32 %v2397, 0.0
        %v2401 = vld [vmem:[#allocation11] sm:$0xff]
        %v2402 = vld [vmem:[#allocation11 + $0x8] sm:$0xff]
        %v2403 = vld [vmem:[#allocation11 + $0x10] sm:$0xff]
        %v2404 = vld [vmem:[#allocation11 + $0x18] sm:$0xff]
        %v2405 = vld [vmem:[#allocation11 + $0x20] sm:$0xff]
        %v2406 = vld [vmem:[#allocation11 + $0x28] sm:$0xff]
        %v2407 = vld [vmem:[#allocation11 + $0x30] sm:$0xff]
        %v2408 = vld [vmem:[#allocation11 + $0x38] sm:$0xff]
        %v2409 = vld [vmem:[#allocation11 + $0x40] sm:$0xff]
        %v2410 = vld [vmem:[#allocation11 + $0x48] sm:$0xff]
        %v2411 = vld [vmem:[#allocation11 + $0x50] sm:$0xff]
        %v2412 = vld [vmem:[#allocation11 + $0x58] sm:$0xff]
        %v2413 = vld [vmem:[#allocation11 + $0x60] sm:$0xff]
        %v2414 = vld [vmem:[#allocation11 + $0x68] sm:$0xff]
        %v2415 = vld [vmem:[#allocation11 + $0x70] sm:$0xff]
        %v2416 = vld [vmem:[#allocation11 + $0x78] sm:$0xff]
        %v2417 = vld [vmem:[#allocation11 + $0x80] sm:$0xff]
        %v2418 = vld [vmem:[#allocation11 + $0x88] sm:$0xff]
        %v2419 = vld [vmem:[#allocation11 + $0x90] sm:$0xff]
        %v2420 = vld [vmem:[#allocation11 + $0x98] sm:$0xff]
        %v2421 = vld [vmem:[#allocation11 + $0xa0] sm:$0xff]
        %v2422 = vld [vmem:[#allocation11 + $0xa8] sm:$0xff]
        %v2423 = vld [vmem:[#allocation11 + $0xb0] sm:$0xff]
        %v2424 = vld [vmem:[#allocation11 + $0xb8] sm:$0xff]
        %v2425 = vld [vmem:[#allocation11 + $0xc0] sm:$0xff]
        %v2426 = vld [vmem:[#allocation11 + $0xc8] sm:$0xff]
        %v2427 = vld [vmem:[#allocation11 + $0xd0] sm:$0xff]
        %v2428 = vld [vmem:[#allocation11 + $0xd8] sm:$0xff]
        %v2429 = vld [vmem:[#allocation11 + $0xe0] sm:$0xff]
        %v2430 = vld [vmem:[#allocation11 + $0xe8] sm:$0xff]
        %v2431 = vld [vmem:[#allocation11 + $0xf0] sm:$0xff]
        %v2432 = vld [vmem:[#allocation11 + $0xf8] sm:$0xff]
        %v2433 = vld [vmem:[%s29] sm:$0x1]
        %v2435 = vlaneseq
        %v2436 = vshrl.u32 %v2435, 7
        %v2437 = vsub.s32 0, %v2436
        %v2438 = vrot.slane %v2433, %v2437
        %2440 = vmatprep.subr.mxu0 0.0
        %2441 = vmatpush1.msra.mxu0 %v2401
        %2442 = vmatprep.subr.mxu0 0.0
        %2443 = vmatpush1.msra.mxu0 %v2402
        %2444 = vmatprep.subr.mxu0 0.0
        %2445 = vmatpush1.msra.mxu0 %v2403
        %2446 = vmatprep.subr.mxu0 0.0
        %2447 = vmatpush1.msra.mxu0 %v2404
        %2448 = vmatprep.subr.mxu0 0.0
        %2449 = vmatpush1.msra.mxu0 %v2405
        %2450 = vmatprep.subr.mxu0 0.0
        %2451 = vmatpush1.msra.mxu0 %v2406
        %2452 = vmatprep.subr.mxu0 0.0
        %2453 = vmatpush1.msra.mxu0 %v2407
        %2454 = vmatprep.subr.mxu0 0.0
        %2455 = vmatpush1.msra.mxu0 %v2408
        %2456 = vmatprep.subr.mxu0 0.0
        %2457 = vmatpush1.msra.mxu0 %v2409
        %2458 = vmatprep.subr.mxu0 0.0
        %2459 = vmatpush1.msra.mxu0 %v2410
        %2460 = vmatprep.subr.mxu0 0.0
        %2461 = vmatpush1.msra.mxu0 %v2411
        %2462 = vmatprep.subr.mxu0 0.0
        %2463 = vmatpush1.msra.mxu0 %v2412
        %2464 = vmatprep.subr.mxu0 0.0
        %2465 = vmatpush1.msra.mxu0 %v2413
        %2466 = vmatprep.subr.mxu0 0.0
        %2467 = vmatpush1.msra.mxu0 %v2414
        %2468 = vmatprep.subr.mxu0 0.0
        %2469 = vmatpush1.msra.mxu0 %v2415
        %2470 = vmatprep.subr.mxu0 0.0
        %2471 = vmatpush1.msra.mxu0 %v2416
        %2472 = vmatprep.subr.mxu0 0.0
        %2473 = vmatpush1.msra.mxu0 %v2417
        %2474 = vmatprep.subr.mxu0 0.0
        %2475 = vmatpush1.msra.mxu0 %v2418
        %2476 = vmatprep.subr.mxu0 0.0
        %2477 = vmatpush1.msra.mxu0 %v2419
        %2478 = vmatprep.subr.mxu0 0.0
        %2479 = vmatpush1.msra.mxu0 %v2420
        %2480 = vmatprep.subr.mxu0 0.0
        %2481 = vmatpush1.msra.mxu0 %v2421
        %2482 = vmatprep.subr.mxu0 0.0
        %2483 = vmatpush1.msra.mxu0 %v2422
        %2484 = vmatprep.subr.mxu0 0.0
        %2485 = vmatpush1.msra.mxu0 %v2423
        %2486 = vmatprep.subr.mxu0 0.0
        %2487 = vmatpush1.msra.mxu0 %v2424
        %2488 = vmatprep.subr.mxu0 0.0
        %2489 = vmatpush1.msra.mxu0 %v2425
        %2490 = vmatprep.subr.mxu0 0.0
        %2491 = vmatpush1.msra.mxu0 %v2426
        %2492 = vmatprep.subr.mxu0 0.0
        %2493 = vmatpush1.msra.mxu0 %v2427
        %2494 = vmatprep.subr.mxu0 0.0
        %2495 = vmatpush1.msra.mxu0 %v2428
        %2496 = vmatprep.subr.mxu0 0.0
        %2497 = vmatpush1.msra.mxu0 %v2429
        %2498 = vmatprep.subr.mxu0 0.0
        %2499 = vmatpush1.msra.mxu0 %v2430
        %2500 = vmatprep.subr.mxu0 0.0
        %2501 = vmatpush1.msra.mxu0 %v2431
        %2502 = vmatprep.subr.mxu0 0.0
        %2503 = vmatpush1.msra.mxu0 %v2432
        %2504 = vmatprep.mubr.f32.mxu0 %v2400
        %2505 = vmatmul.mubr.f32.gmra.mrb[0].mxu0 %v2399
        %v2506 = vpop.f32.mrb[0].mxu0
        %v2507 = vadd.f32 %v2438, %v2506
        %v2508 = vpop.f32.mrb[0].mxu0
        %2509 = vdwg.mxu0
        %v2510 = vld [vmem:[%s1257] sm:$0xff]
        %v2511 = vld [vmem:[#allocation13] sm:$0xff]
        %v2512 = vld [vmem:[#allocation13 + $0x8] sm:$0xff]
        %v2513 = vld [vmem:[#allocation13 + $0x10] sm:$0xff]
        %v2514 = vld [vmem:[#allocation13 + $0x18] sm:$0xff]
        %v2515 = vld [vmem:[#allocation13 + $0x20] sm:$0xff]
        %v2516 = vld [vmem:[#allocation13 + $0x28] sm:$0xff]
        %v2517 = vld [vmem:[#allocation13 + $0x30] sm:$0xff]
        %v2518 = vld [vmem:[#allocation13 + $0x38] sm:$0xff]
        %v2519 = vld [vmem:[#allocation13 + $0x40] sm:$0xff]
        %v2520 = vld [vmem:[#allocation13 + $0x48] sm:$0xff]
        %v2521 = vld [vmem:[#allocation13 + $0x50] sm:$0xff]
        %v2522 = vld [vmem:[#allocation13 + $0x58] sm:$0xff]
        %v2523 = vld [vmem:[#allocation13 + $0x60] sm:$0xff]
        %v2524 = vld [vmem:[#allocation13 + $0x68] sm:$0xff]
        %v2525 = vld [vmem:[#allocation13 + $0x70] sm:$0xff]
        %v2526 = vld [vmem:[#allocation13 + $0x78] sm:$0xff]
        %v2527 = vld [vmem:[#allocation13 + $0x80] sm:$0xff]
        %v2528 = vld [vmem:[#allocation13 + $0x88] sm:$0xff]
        %v2529 = vld [vmem:[#allocation13 + $0x90] sm:$0xff]
        %v2530 = vld [vmem:[#allocation13 + $0x98] sm:$0xff]
        %v2531 = vld [vmem:[#allocation13 + $0xa0] sm:$0xff]
        %v2532 = vld [vmem:[#allocation13 + $0xa8] sm:$0xff]
        %v2533 = vld [vmem:[#allocation13 + $0xb0] sm:$0xff]
        %v2534 = vld [vmem:[#allocation13 + $0xb8] sm:$0xff]
        %v2535 = vld [vmem:[#allocation13 + $0xc0] sm:$0xff]
        %v2536 = vld [vmem:[#allocation13 + $0xc8] sm:$0xff]
        %v2537 = vld [vmem:[#allocation13 + $0xd0] sm:$0xff]
        %v2538 = vld [vmem:[#allocation13 + $0xd8] sm:$0xff]
        %v2539 = vld [vmem:[#allocation13 + $0xe0] sm:$0xff]
        %v2540 = vld [vmem:[#allocation13 + $0xe8] sm:$0xff]
        %v2541 = vld [vmem:[#allocation13 + $0xf0] sm:$0xff]
        %v2542 = vld [vmem:[#allocation13 + $0xf8] sm:$0xff]
        %v2543 = vld [vmem:[%s33] sm:$0x3]
        %v2545 = vlaneseq
        %v2546 = vshrl.u32 %v2545, 7
        %v2547 = vsub.s32 0, %v2546
        %v2548 = vrot.slane %v2543, %v2547
        %v2549 = vlaneseq
        %v2550 = vshrl.u32 %v2549, 7
        %v2551 = vsub.s32 1, %v2550
        %v2552 = vrot.slane %v2543, %v2551
        %2555 = vmatprep.subr.mxu0 %v2512
        %2556 = vmatpush1.msra.mxu0 %v2511
        %2557 = vmatprep.subr.mxu0 %v2514
        %2558 = vmatpush1.msra.mxu0 %v2513
        %2559 = vmatprep.subr.mxu0 %v2516
        %2560 = vmatpush1.msra.mxu0 %v2515
        %2561 = vmatprep.subr.mxu0 %v2518
        %2562 = vmatpush1.msra.mxu0 %v2517
        %2563 = vmatprep.subr.mxu0 %v2520
        %2564 = vmatpush1.msra.mxu0 %v2519
        %2565 = vmatprep.subr.mxu0 %v2522
        %2566 = vmatpush1.msra.mxu0 %v2521
        %2567 = vmatprep.subr.mxu0 %v2524
        %2568 = vmatpush1.msra.mxu0 %v2523
        %2569 = vmatprep.subr.mxu0 %v2526
        %2570 = vmatpush1.msra.mxu0 %v2525
        %2571 = vmatprep.subr.mxu0 %v2528
        %2572 = vmatpush1.msra.mxu0 %v2527
        %2573 = vmatprep.subr.mxu0 %v2530
        %2574 = vmatpush1.msra.mxu0 %v2529
        %2575 = vmatprep.subr.mxu0 %v2532
        %2576 = vmatpush1.msra.mxu0 %v2531
        %2577 = vmatprep.subr.mxu0 %v2534
        %2578 = vmatpush1.msra.mxu0 %v2533
        %2579 = vmatprep.subr.mxu0 %v2536
        %2580 = vmatpush1.msra.mxu0 %v2535
        %2581 = vmatprep.subr.mxu0 %v2538
        %2582 = vmatpush1.msra.mxu0 %v2537
        %2583 = vmatprep.subr.mxu0 %v2540
        %2584 = vmatpush1.msra.mxu0 %v2539
        %2585 = vmatprep.subr.mxu0 %v2542
        %2586 = vmatpush1.msra.mxu0 %v2541
        %2587 = vmatprep.subr.mxu0 0.0
        %2588 = vmatpush1.msra.mxu0 0.0
        %2589 = vmatprep.subr.mxu0 0.0
        %2590 = vmatpush1.msra.mxu0 0.0
        %2591 = vmatprep.subr.mxu0 0.0
        %2592 = vmatpush1.msra.mxu0 0.0
        %2593 = vmatprep.subr.mxu0 0.0
        %2594 = vmatpush1.msra.mxu0 0.0
        %2595 = vmatprep.subr.mxu0 0.0
        %2596 = vmatpush1.msra.mxu0 0.0
        %2597 = vmatprep.subr.mxu0 0.0
        %2598 = vmatpush1.msra.mxu0 0.0
        %2599 = vmatprep.subr.mxu0 0.0
        %2600 = vmatpush1.msra.mxu0 0.0
        %2601 = vmatprep.subr.mxu0 0.0
        %2602 = vmatpush1.msra.mxu0 0.0
        %2603 = vmatprep.subr.mxu0 0.0
        %2604 = vmatpush1.msra.mxu0 0.0
        %2605 = vmatprep.subr.mxu0 0.0
        %2606 = vmatpush1.msra.mxu0 0.0
        %2607 = vmatprep.subr.mxu0 0.0
        %2608 = vmatpush1.msra.mxu0 0.0
        %2609 = vmatprep.subr.mxu0 0.0
        %2610 = vmatpush1.msra.mxu0 0.0
        %2611 = vmatprep.subr.mxu0 0.0
        %2612 = vmatpush1.msra.mxu0 0.0
        %2613 = vmatprep.subr.mxu0 0.0
        %2614 = vmatpush1.msra.mxu0 0.0
        %2615 = vmatprep.subr.mxu0 0.0
        %2616 = vmatpush1.msra.mxu0 0.0
        %2617 = vmatprep.subr.mxu0 0.0
        %2618 = vmatpush1.msra.mxu0 0.0
        %2619 = vmatprep.mubr.f32.mxu0 0.0
        %2620 = vmatmul.mubr.f32.gmra.mrb[0].mxu0 %v2510
        %v2621 = vpop.f32.mrb[0].mxu0
        %v2622 = vadd.f32 %v2548, %v2621
        %v2623 = vpop.f32.mrb[0].mxu0
        %v2624 = vadd.f32 %v2552, %v2623
        %2625 = vdwg.mxu0
        %v2626 = vmax.f32 %v2622, 0.0
        %v2627 = vmax.f32 %v2624, 0.0
        %v2628 = vld [vmem:[#allocation14] sm:$0xff]
        %v2629 = vld [vmem:[#allocation14 + $0x8] sm:$0xff]
        %v2630 = vld [vmem:[#allocation14 + $0x10] sm:$0xff]
        %v2631 = vld [vmem:[#allocation14 + $0x18] sm:$0xff]
        %v2632 = vld [vmem:[#allocation14 + $0x20] sm:$0xff]
        %v2633 = vld [vmem:[#allocation14 + $0x28] sm:$0xff]
        %v2634 = vld [vmem:[#allocation14 + $0x30] sm:$0xff]
        %v2635 = vld [vmem:[#allocation14 + $0x38] sm:$0xff]
        %v2636 = vld [vmem:[#allocation14 + $0x40] sm:$0xff]
        %v2637 = vld [vmem:[#allocation14 + $0x48] sm:$0xff]
        %v2638 = vld [vmem:[#allocation14 + $0x50] sm:$0xff]
        %v2639 = vld [vmem:[#allocation14 + $0x58] sm:$0xff]
        %v2640 = vld [vmem:[#allocation14 + $0x60] sm:$0xff]
        %v2641 = vld [vmem:[#allocation14 + $0x68] sm:$0xff]
        %v2642 = vld [vmem:[#allocation14 + $0x70] sm:$0xff]
        %v2643 = vld [vmem:[#allocation14 + $0x78] sm:$0xff]
        %v2644 = vld [vmem:[#allocation14 + $0x80] sm:$0xff]
        %v2645 = vld [vmem:[#allocation14 + $0x88] sm:$0xff]
        %v2646 = vld [vmem:[#allocation14 + $0x90] sm:$0xff]
        %v2647 = vld [vmem:[#allocation14 + $0x98] sm:$0xff]
        %v2648 = vld [vmem:[#allocation14 + $0xa0] sm:$0xff]
        %v2649 = vld [vmem:[#allocation14 + $0xa8] sm:$0xff]
        %v2650 = vld [vmem:[#allocation14 + $0xb0] sm:$0xff]
        %v2651 = vld [vmem:[#allocation14 + $0xb8] sm:$0xff]
        %v2652 = vld [vmem:[#allocation14 + $0xc0] sm:$0xff]
        %v2653 = vld [vmem:[#allocation14 + $0xc8] sm:$0xff]
        %v2654 = vld [vmem:[#allocation14 + $0xd0] sm:$0xff]
        %v2655 = vld [vmem:[#allocation14 + $0xd8] sm:$0xff]
        %v2656 = vld [vmem:[#allocation14 + $0xe0] sm:$0xff]
        %v2657 = vld [vmem:[#allocation14 + $0xe8] sm:$0xff]
        %v2658 = vld [vmem:[#allocation14 + $0xf0] sm:$0xff]
        %v2659 = vld [vmem:[#allocation14 + $0xf8] sm:$0xff]
        %v2660 = vld [vmem:[#allocation16] sm:$0x1]
        %v2662 = vlaneseq
        %v2663 = vshrl.u32 %v2662, 7
        %v2664 = vsub.s32 0, %v2663
        %v2665 = vrot.slane %v2660, %v2664
        %2667 = vmatprep.subr.mxu0 0.0
        %2668 = vmatpush1.msra.mxu0 %v2628
        %2669 = vmatprep.subr.mxu0 0.0
        %2670 = vmatpush1.msra.mxu0 %v2629
        %2671 = vmatprep.subr.mxu0 0.0
        %2672 = vmatpush1.msra.mxu0 %v2630
        %2673 = vmatprep.subr.mxu0 0.0
        %2674 = vmatpush1.msra.mxu0 %v2631
        %2675 = vmatprep.subr.mxu0 0.0
        %2676 = vmatpush1.msra.mxu0 %v2632
        %2677 = vmatprep.subr.mxu0 0.0
        %2678 = vmatpush1.msra.mxu0 %v2633
        %2679 = vmatprep.subr.mxu0 0.0
        %2680 = vmatpush1.msra.mxu0 %v2634
        %2681 = vmatprep.subr.mxu0 0.0
        %2682 = vmatpush1.msra.mxu0 %v2635
        %2683 = vmatprep.subr.mxu0 0.0
        %2684 = vmatpush1.msra.mxu0 %v2636
        %2685 = vmatprep.subr.mxu0 0.0
        %2686 = vmatpush1.msra.mxu0 %v2637
        %2687 = vmatprep.subr.mxu0 0.0
        %2688 = vmatpush1.msra.mxu0 %v2638
        %2689 = vmatprep.subr.mxu0 0.0
        %2690 = vmatpush1.msra.mxu0 %v2639
        %2691 = vmatprep.subr.mxu0 0.0
        %2692 = vmatpush1.msra.mxu0 %v2640
        %2693 = vmatprep.subr.mxu0 0.0
        %2694 = vmatpush1.msra.mxu0 %v2641
        %2695 = vmatprep.subr.mxu0 0.0
        %2696 = vmatpush1.msra.mxu0 %v2642
        %2697 = vmatprep.subr.mxu0 0.0
        %2698 = vmatpush1.msra.mxu0 %v2643
        %2699 = vmatprep.subr.mxu0 0.0
        %2700 = vmatpush1.msra.mxu0 %v2644
        %2701 = vmatprep.subr.mxu0 0.0
        %2702 = vmatpush1.msra.mxu0 %v2645
        %2703 = vmatprep.subr.mxu0 0.0
        %2704 = vmatpush1.msra.mxu0 %v2646
        %2705 = vmatprep.subr.mxu0 0.0
        %2706 = vmatpush1.msra.mxu0 %v2647
        %2707 = vmatprep.subr.mxu0 0.0
        %2708 = vmatpush1.msra.mxu0 %v2648
        %2709 = vmatprep.subr.mxu0 0.0
        %2710 = vmatpush1.msra.mxu0 %v2649
        %2711 = vmatprep.subr.mxu0 0.0
        %2712 = vmatpush1.msra.mxu0 %v2650
        %2713 = vmatprep.subr.mxu0 0.0
        %2714 = vmatpush1.msra.mxu0 %v2651
        %2715 = vmatprep.subr.mxu0 0.0
        %2716 = vmatpush1.msra.mxu0 %v2652
        %2717 = vmatprep.subr.mxu0 0.0
        %2718 = vmatpush1.msra.mxu0 %v2653
        %2719 = vmatprep.subr.mxu0 0.0
        %2720 = vmatpush1.msra.mxu0 %v2654
        %2721 = vmatprep.subr.mxu0 0.0
        %2722 = vmatpush1.msra.mxu0 %v2655
        %2723 = vmatprep.subr.mxu0 0.0
        %2724 = vmatpush1.msra.mxu0 %v2656
        %2725 = vmatprep.subr.mxu0 0.0
        %2726 = vmatpush1.msra.mxu0 %v2657
        %2727 = vmatprep.subr.mxu0 0.0
        %2728 = vmatpush1.msra.mxu0 %v2658
        %2729 = vmatprep.subr.mxu0 0.0
        %2730 = vmatpush1.msra.mxu0 %v2659
        %2731 = vmatprep.mubr.f32.mxu0 %v2627
        %2732 = vmatmul.mubr.f32.gmra.mrb[0].mxu0 %v2626
        %v2733 = vpop.f32.mrb[0].mxu0
        %v2734 = vadd.f32 %v2665, %v2733
        %v2735 = vpop.f32.mrb[0].mxu0
        %2736 = vdwg.mxu0
        %v2737 = vmax.f32 %v2734, 0.0
        %v2738 = vld [vmem:[%s39] sm:$0xff]
        %v2739 = vld [vmem:[%s39 + $0x8] sm:$0xff]
        %v2740 = vld [vmem:[%s39 + $0x10] sm:$0xff]
        %v2741 = vld [vmem:[%s39 + $0x18] sm:$0xff]
        %v2742 = vld [vmem:[%s39 + $0x20] sm:$0xff]
        %v2743 = vld [vmem:[%s39 + $0x28] sm:$0xff]
        %v2744 = vld [vmem:[%s39 + $0x30] sm:$0xff]
        %v2745 = vld [vmem:[%s39 + $0x38] sm:$0xff]
        %v2746 = vld [vmem:[%s39 + $0x40] sm:$0xff]
        %v2747 = vld [vmem:[%s39 + $0x48] sm:$0xff]
        %v2748 = vld [vmem:[%s39 + $0x50] sm:$0xff]
        %v2749 = vld [vmem:[%s39 + $0x58] sm:$0xff]
        %v2750 = vld [vmem:[%s39 + $0x60] sm:$0xff]
        %v2751 = vld [vmem:[%s39 + $0x68] sm:$0xff]
        %v2752 = vld [vmem:[%s39 + $0x70] sm:$0xff]
        %v2753 = vld [vmem:[%s39 + $0x78] sm:$0xff]
        %v2754 = vld [vmem:[#allocation17] sm:$0x1]
        %v2756 = vlaneseq
        %v2757 = vshrl.u32 %v2756, 7
        %v2758 = vsub.s32 0, %v2757
        %v2759 = vrot.slane %v2754, %v2758
        %2761 = vmatprep.subr.mxu0 0.0
        %2762 = vmatpush1.msra.mxu0 %v2738
        %2763 = vmatprep.subr.mxu0 0.0
        %2764 = vmatpush1.msra.mxu0 %v2739
        %2765 = vmatprep.subr.mxu0 0.0
        %2766 = vmatpush1.msra.mxu0 %v2740
        %2767 = vmatprep.subr.mxu0 0.0
        %2768 = vmatpush1.msra.mxu0 %v2741
        %2769 = vmatprep.subr.mxu0 0.0
        %2770 = vmatpush1.msra.mxu0 %v2742
        %2771 = vmatprep.subr.mxu0 0.0
        %2772 = vmatpush1.msra.mxu0 %v2743
        %2773 = vmatprep.subr.mxu0 0.0
        %2774 = vmatpush1.msra.mxu0 %v2744
        %2775 = vmatprep.subr.mxu0 0.0
        %2776 = vmatpush1.msra.mxu0 %v2745
        %2777 = vmatprep.subr.mxu0 0.0
        %2778 = vmatpush1.msra.mxu0 %v2746
        %2779 = vmatprep.subr.mxu0 0.0
        %2780 = vmatpush1.msra.mxu0 %v2747
        %2781 = vmatprep.subr.mxu0 0.0
        %2782 = vmatpush1.msra.mxu0 %v2748
        %2783 = vmatprep.subr.mxu0 0.0
        %2784 = vmatpush1.msra.mxu0 %v2749
        %2785 = vmatprep.subr.mxu0 0.0
        %2786 = vmatpush1.msra.mxu0 %v2750
        %2787 = vmatprep.subr.mxu0 0.0
        %2788 = vmatpush1.msra.mxu0 %v2751
        %2789 = vmatprep.subr.mxu0 0.0
        %2790 = vmatpush1.msra.mxu0 %v2752
        %2791 = vmatprep.subr.mxu0 0.0
        %2792 = vmatpush1.msra.mxu0 %v2753
        %2793 = vmatprep.subr.mxu0 0.0
        %2794 = vmatpush1.msra.mxu0 0.0
        %2795 = vmatprep.subr.mxu0 0.0
        %2796 = vmatpush1.msra.mxu0 0.0
        %2797 = vmatprep.subr.mxu0 0.0
        %2798 = vmatpush1.msra.mxu0 0.0
        %2799 = vmatprep.subr.mxu0 0.0
        %2800 = vmatpush1.msra.mxu0 0.0
        %2801 = vmatprep.subr.mxu0 0.0
        %2802 = vmatpush1.msra.mxu0 0.0
        %2803 = vmatprep.subr.mxu0 0.0
        %2804 = vmatpush1.msra.mxu0 0.0
        %2805 = vmatprep.subr.mxu0 0.0
        %2806 = vmatpush1.msra.mxu0 0.0
        %2807 = vmatprep.subr.mxu0 0.0
        %2808 = vmatpush1.msra.mxu0 0.0
        %2809 = vmatprep.subr.mxu0 0.0
        %2810 = vmatpush1.msra.mxu0 0.0
        %2811 = vmatprep.subr.mxu0 0.0
        %2812 = vmatpush1.msra.mxu0 0.0
        %2813 = vmatprep.subr.mxu0 0.0
        %2814 = vmatpush1.msra.mxu0 0.0
        %2815 = vmatprep.subr.mxu0 0.0
        %2816 = vmatpush1.msra.mxu0 0.0
        %2817 = vmatprep.subr.mxu0 0.0
        %2818 = vmatpush1.msra.mxu0 0.0
        %2819 = vmatprep.subr.mxu0 0.0
        %2820 = vmatpush1.msra.mxu0 0.0
        %2821 = vmatprep.subr.mxu0 0.0
        %2822 = vmatpush1.msra.mxu0 0.0
        %2823 = vmatprep.subr.mxu0 0.0
        %2824 = vmatpush1.msra.mxu0 0.0
        %2825 = vmatprep.mubr.f32.mxu0 0.0
        %2826 = vmatmul.mubr.f32.gmra.mrb[0].mxu0 %v2737
        %v2827 = vpop.f32.mrb[0].mxu0
        %v2828 = vadd.f32 %v2759, %v2827
        %v2829 = vpop.f32.mrb[0].mxu0
        %2830 = vdwg.mxu0
        %v2831 = vld [vmem:[#allocation19] sm:$0xff]
        %v2832 = vld [vmem:[#allocation19 + $0x8] sm:$0xff]
        %v2833 = vld [vmem:[#allocation19 + $0x10] sm:$0xff]
        %v2834 = vld [vmem:[#allocation19 + $0x18] sm:$0xff]
        %v2835 = vld [vmem:[#allocation19 + $0x20] sm:$0xff]
        %v2836 = vld [vmem:[#allocation19 + $0x28] sm:$0xff]
        %v2837 = vld [vmem:[#allocation19 + $0x30] sm:$0xff]
        %v2838 = vld [vmem:[#allocation19 + $0x38] sm:$0xff]
        %v2839 = vld [vmem:[#allocation19 + $0x40] sm:$0xff]
        %v2840 = vld [vmem:[#allocation19 + $0x48] sm:$0xff]
        %v2841 = vld [vmem:[#allocation19 + $0x50] sm:$0xff]
        %v2842 = vld [vmem:[#allocation19 + $0x58] sm:$0xff]
        %v2843 = vld [vmem:[#allocation19 + $0x60] sm:$0xff]
        %v2844 = vld [vmem:[#allocation19 + $0x68] sm:$0xff]
        %v2845 = vld [vmem:[#allocation19 + $0x70] sm:$0xff]
        %v2846 = vld [vmem:[#allocation19 + $0x78] sm:$0xff]
        %v2847 = vld [vmem:[#allocation19 + $0x80] sm:$0xff]
        %v2848 = vld [vmem:[#allocation19 + $0x88] sm:$0xff]
        %v2849 = vld [vmem:[#allocation19 + $0x90] sm:$0xff]
        %v2850 = vld [vmem:[#allocation19 + $0x98] sm:$0xff]
        %v2851 = vld [vmem:[#allocation19 + $0xa0] sm:$0xff]
        %v2852 = vld [vmem:[#allocation19 + $0xa8] sm:$0xff]
        %v2853 = vld [vmem:[#allocation19 + $0xb0] sm:$0xff]
        %v2854 = vld [vmem:[#allocation19 + $0xb8] sm:$0xff]
        %v2855 = vld [vmem:[#allocation19 + $0xc0] sm:$0xff]
        %v2856 = vld [vmem:[#allocation19 + $0xc8] sm:$0xff]
        %v2857 = vld [vmem:[#allocation19 + $0xd0] sm:$0xff]
        %v2858 = vld [vmem:[#allocation19 + $0xd8] sm:$0xff]
        %v2859 = vld [vmem:[#allocation19 + $0xe0] sm:$0xff]
        %v2860 = vld [vmem:[#allocation19 + $0xe8] sm:$0xff]
        %v2861 = vld [vmem:[#allocation19 + $0xf0] sm:$0xff]
        %v2862 = vld [vmem:[#allocation19 + $0xf8] sm:$0xff]
        %v2863 = vld [vmem:[#allocation19 + $0x100] sm:$0xff]
        %v2864 = vld [vmem:[#allocation19 + $0x108] sm:$0xff]
        %v2865 = vld [vmem:[#allocation19 + $0x110] sm:$0xff]
        %v2866 = vld [vmem:[#allocation19 + $0x118] sm:$0xff]
        %v2867 = vld [vmem:[#allocation19 + $0x120] sm:$0xff]
        %v2868 = vld [vmem:[#allocation19 + $0x128] sm:$0xff]
        %v2869 = vld [vmem:[#allocation19 + $0x130] sm:$0xff]
        %v2870 = vld [vmem:[#allocation19 + $0x138] sm:$0xff]
        %v2871 = vld [vmem:[#allocation19 + $0x140] sm:$0xff]
        %v2872 = vld [vmem:[#allocation19 + $0x148] sm:$0xff]
        %v2873 = vld [vmem:[#allocation19 + $0x150] sm:$0xff]
        %v2874 = vld [vmem:[#allocation19 + $0x158] sm:$0xff]
        %v2875 = vld [vmem:[#allocation19 + $0x160] sm:$0xff]
        %v2876 = vld [vmem:[#allocation19 + $0x168] sm:$0xff]
        %v2877 = vld [vmem:[#allocation19 + $0x170] sm:$0xff]
        %v2878 = vld [vmem:[#allocation19 + $0x178] sm:$0xff]
        %v2879 = vld [vmem:[%s45] sm:$0x7]
        %v2881 = vlaneseq
        %v2882 = vshrl.u32 %v2881, 7
        %v2883 = vsub.s32 0, %v2882
        %v2884 = vrot.slane %v2879, %v2883
        %v2885 = vlaneseq
        %v2886 = vshrl.u32 %v2885, 7
        %v2887 = vsub.s32 1, %v2886
        %v2888 = vrot.slane %v2879, %v2887
        %v2889 = vlaneseq
        %v2890 = vshrl.u32 %v2889, 7
        %v2891 = vsub.s32 2, %v2890
        %v2892 = vrot.slane %v2879, %v2891
        %2896 = vmatprep.subr.mxu0 %v2832
        %2897 = vmatpush1.msra.mxu0 %v2831
        %2898 = vmatprep.subr.mxu0 %v2835
        %2899 = vmatpush1.msra.mxu0 %v2834
        %2900 = vmatprep.subr.mxu0 %v2838
        %2901 = vmatpush1.msra.mxu0 %v2837
        %2902 = vmatprep.subr.mxu0 %v2841
        %2903 = vmatpush1.msra.mxu0 %v2840
        %2904 = vmatprep.subr.mxu0 %v2844
        %2905 = vmatpush1.msra.mxu0 %v2843
        %2906 = vmatprep.subr.mxu0 %v2847
        %2907 = vmatpush1.msra.mxu0 %v2846
        %2908 = vmatprep.subr.mxu0 %v2850
        %2909 = vmatpush1.msra.mxu0 %v2849
        %2910 = vmatprep.subr.mxu0 %v2853
        %2911 = vmatpush1.msra.mxu0 %v2852
        %2912 = vmatprep.subr.mxu0 %v2856
        %2913 = vmatpush1.msra.mxu0 %v2855
        %2914 = vmatprep.subr.mxu0 %v2859
        %2915 = vmatpush1.msra.mxu0 %v2858
        %2916 = vmatprep.subr.mxu0 %v2862
        %2917 = vmatpush1.msra.mxu0 %v2861
        %2918 = vmatprep.subr.mxu0 %v2865
        %2919 = vmatpush1.msra.mxu0 %v2864
        %2920 = vmatprep.subr.mxu0 %v2868
        %2921 = vmatpush1.msra.mxu0 %v2867
        %2922 = vmatprep.subr.mxu0 %v2871
        %2923 = vmatpush1.msra.mxu0 %v2870
        %2924 = vmatprep.subr.mxu0 %v2874
        %2925 = vmatpush1.msra.mxu0 %v2873
        %2926 = vmatprep.subr.mxu0 %v2877
        %2927 = vmatpush1.msra.mxu0 %v2876
        %2928 = vmatprep.subr.mxu0 0.0
        %2929 = vmatpush1.msra.mxu0 0.0
        %2930 = vmatprep.subr.mxu0 0.0
        %2931 = vmatpush1.msra.mxu0 0.0
        %2932 = vmatprep.subr.mxu0 0.0
        %2933 = vmatpush1.msra.mxu0 0.0
        %2934 = vmatprep.subr.mxu0 0.0
        %2935 = vmatpush1.msra.mxu0 0.0
        %2936 = vmatprep.subr.mxu0 0.0
        %2937 = vmatpush1.msra.mxu0 0.0
        %2938 = vmatprep.subr.mxu0 0.0
        %2939 = vmatpush1.msra.mxu0 0.0
        %2940 = vmatprep.subr.mxu0 0.0
        %2941 = vmatpush1.msra.mxu0 0.0
        %2942 = vmatprep.subr.mxu0 0.0
        %2943 = vmatpush1.msra.mxu0 0.0
        %2944 = vmatprep.subr.mxu0 0.0
        %2945 = vmatpush1.msra.mxu0 0.0
        %2946 = vmatprep.subr.mxu0 0.0
        %2947 = vmatpush1.msra.mxu0 0.0
        %2948 = vmatprep.subr.mxu0 0.0
        %2949 = vmatpush1.msra.mxu0 0.0
        %2950 = vmatprep.subr.mxu0 0.0
        %2951 = vmatpush1.msra.mxu0 0.0
        %2952 = vmatprep.subr.mxu0 0.0
        %2953 = vmatpush1.msra.mxu0 0.0
        %2954 = vmatprep.subr.mxu0 0.0
        %2955 = vmatpush1.msra.mxu0 0.0
        %2956 = vmatprep.subr.mxu0 0.0
        %2957 = vmatpush1.msra.mxu0 0.0
        %2958 = vmatprep.subr.mxu0 0.0
        %2959 = vmatpush1.msra.mxu0 0.0
        %2960 = vmatprep.mubr.f32.mxu0 0.0
        %2961 = vmatmul.mubr.f32.gmra.mrb[0].mxu0 %v1881
        %v2962 = vpop.f32.mrb[0].mxu0
        %v2963 = vadd.f32 %v2884, %v2962
        %v2964 = vpop.f32.mrb[0].mxu0
        %v2965 = vadd.f32 %v2888, %v2964
        %2966 = vmatprep.mubr.f32.mxu0 0.0
        %2967 = vmatmul.mubr.f32.gmra.mrb[0].mxu0 %v2507
        %v2968 = vpop.f32.mrb[0].mxu0
        %v2969 = vadd.f32 %v2884, %v2968
        %v2970 = vpop.f32.mrb[0].mxu0
        %v2971 = vadd.f32 %v2888, %v2970
        %2972 = vmatprep.mubr.f32.mxu0 0.0
        %2973 = vmatmul.mubr.f32.gmra.mrb[0].mxu0 %v2828
        %v2974 = vpop.f32.mrb[0].mxu0
        %v2975 = vadd.f32 %v2884, %v2974
        %v2976 = vpop.f32.mrb[0].mxu0
        %v2977 = vadd.f32 %v2888, %v2976
        %2978 = vdwg.mxu0
        %2979 = vmatprep.subr.mxu0 0.0
        %2980 = vmatpush1.msra.mxu0 %v2833
        %2981 = vmatprep.subr.mxu0 0.0
        %2982 = vmatpush1.msra.mxu0 %v2836
        %2983 = vmatprep.subr.mxu0 0.0
        %2984 = vmatpush1.msra.mxu0 %v2839
        %2985 = vmatprep.subr.mxu0 0.0
        %2986 = vmatpush1.msra.mxu0 %v2842
        %2987 = vmatprep.subr.mxu0 0.0
        %2988 = vmatpush1.msra.mxu0 %v2845
        %2989 = vmatprep.subr.mxu0 0.0
        %2990 = vmatpush1.msra.mxu0 %v2848
        %2991 = vmatprep.subr.mxu0 0.0
        %2992 = vmatpush1.msra.mxu0 %v2851
        %2993 = vmatprep.subr.mxu0 0.0
        %2994 = vmatpush1.msra.mxu0 %v2854
        %2995 = vmatprep.subr.mxu0 0.0
        %2996 = vmatpush1.msra.mxu0 %v2857
        %2997 = vmatprep.subr.mxu0 0.0
        %2998 = vmatpush1.msra.mxu0 %v2860
        %2999 = vmatprep.subr.mxu0 0.0
        %3000 = vmatpush1.msra.mxu0 %v2863
        %3001 = vmatprep.subr.mxu0 0.0
        %3002 = vmatpush1.msra.mxu0 %v2866
        %3003 = vmatprep.subr.mxu0 0.0
        %3004 = vmatpush1.msra.mxu0 %v2869
        %3005 = vmatprep.subr.mxu0 0.0
        %3006 = vmatpush1.msra.mxu0 %v2872
        %3007 = vmatprep.subr.mxu0 0.0
        %3008 = vmatpush1.msra.mxu0 %v2875
        %3009 = vmatprep.subr.mxu0 0.0
        %3010 = vmatpush1.msra.mxu0 %v2878
        %3011 = vmatprep.subr.mxu0 0.0
        %3012 = vmatpush1.msra.mxu0 0.0
        %3013 = vmatprep.subr.mxu0 0.0
        %3014 = vmatpush1.msra.mxu0 0.0
        %3015 = vmatprep.subr.mxu0 0.0
        %3016 = vmatpush1.msra.mxu0 0.0
        %3017 = vmatprep.subr.mxu0 0.0
        %3018 = vmatpush1.msra.mxu0 0.0
        %3019 = vmatprep.subr.mxu0 0.0
        %3020 = vmatpush1.msra.mxu0 0.0
        %3021 = vmatprep.subr.mxu0 0.0
        %3022 = vmatpush1.msra.mxu0 0.0
        %3023 = vmatprep.subr.mxu0 0.0
        %3024 = vmatpush1.msra.mxu0 0.0
        %3025 = vmatprep.subr.mxu0 0.0
        %3026 = vmatpush1.msra.mxu0 0.0
        %3027 = vmatprep.subr.mxu0 0.0
        %3028 = vmatpush1.msra.mxu0 0.0
        %3029 = vmatprep.subr.mxu0 0.0
        %3030 = vmatpush1.msra.mxu0 0.0
        %3031 = vmatprep.subr.mxu0 0.0
        %3032 = vmatpush1.msra.mxu0 0.0
        %3033 = vmatprep.subr.mxu0 0.0
        %3034 = vmatpush1.msra.mxu0 0.0
        %3035 = vmatprep.subr.mxu0 0.0
        %3036 = vmatpush1.msra.mxu0 0.0
        %3037 = vmatprep.subr.mxu0 0.0
        %3038 = vmatpush1.msra.mxu0 0.0
        %3039 = vmatprep.subr.mxu0 0.0
        %3040 = vmatpush1.msra.mxu0 0.0
        %3041 = vmatprep.subr.mxu0 0.0
        %3042 = vmatpush1.msra.mxu0 0.0
        %3043 = vmatprep.mubr.f32.mxu0 0.0
        %3044 = vmatmul.mubr.f32.gmra.mrb[0].mxu0 %v1881
        %v3045 = vpop.f32.mrb[0].mxu0
        %v3046 = vadd.f32 %v2892, %v3045
        %v3047 = vpop.f32.mrb[0].mxu0
        %3048 = vmatprep.mubr.f32.mxu0 0.0
        %3049 = vmatmul.mubr.f32.gmra.mrb[0].mxu0 %v2507
        %v3050 = vpop.f32.mrb[0].mxu0
        %v3051 = vadd.f32 %v2892, %v3050
        %v3052 = vpop.f32.mrb[0].mxu0
        %3053 = vmatprep.mubr.f32.mxu0 0.0
        %3054 = vmatmul.mubr.f32.gmra.mrb[0].mxu0 %v2828
        %v3055 = vpop.f32.mrb[0].mxu0
        %v3056 = vadd.f32 %v2892, %v3055
        %v3057 = vpop.f32.mrb[0].mxu0
        %3058 = vdwg.mxu0
        %v3059 = vld [vmem:[%s63] sm:$0xff]
        %v3060 = vld [vmem:[%s63 + $0x8] sm:$0xff]
        %v3061 = vld [vmem:[%s63 + $0x10] sm:$0xff]
        %v3062 = vld [vmem:[%s63 + $0x18] sm:$0xff]
        %v3063 = vld [vmem:[%s63 + $0x20] sm:$0xff]
        %v3064 = vld [vmem:[%s63 + $0x28] sm:$0xff]
        %v3065 = vld [vmem:[%s63 + $0x30] sm:$0xff]
        %v3066 = vld [vmem:[%s63 + $0x38] sm:$0xff]
        %v3067 = vld [vmem:[%s63 + $0x40] sm:$0xff]
        %v3068 = vld [vmem:[%s63 + $0x48] sm:$0xff]
        %v3069 = vld [vmem:[%s63 + $0x50] sm:$0xff]
        %v3070 = vld [vmem:[%s63 + $0x58] sm:$0xff]
        %v3071 = vld [vmem:[%s63 + $0x60] sm:$0xff]
        %v3072 = vld [vmem:[%s63 + $0x68] sm:$0xff]
        %v3073 = vld [vmem:[%s63 + $0x70] sm:$0xff]
        %v3074 = vld [vmem:[%s63 + $0x78] sm:$0xff]
        %v3075 = vld [vmem:[%s65] sm:$0xff]
        %v3076 = vmul.f32 %v2963, %v2965
        %v3077 = vmul.f32 %v2969, %v2971
        %v3078 = vmul.f32 %v2975, %v2977
        %3079 = vmatprep.subr.mxu0 0.0
        %3080 = vmatpush1.msra.mxu0 %v3059
        %3081 = vmatprep.subr.mxu0 0.0
        %3082 = vmatpush1.msra.mxu0 %v3060
        %3083 = vmatprep.subr.mxu0 0.0
        %3084 = vmatpush1.msra.mxu0 %v3061
        %3085 = vmatprep.subr.mxu0 0.0
        %3086 = vmatpush1.msra.mxu0 %v3062
        %3087 = vmatprep.subr.mxu0 0.0
        %3088 = vmatpush1.msra.mxu0 %v3063
        %3089 = vmatprep.subr.mxu0 0.0
        %3090 = vmatpush1.msra.mxu0 %v3064
        %3091 = vmatprep.subr.mxu0 0.0
        %3092 = vmatpush1.msra.mxu0 %v3065
        %3093 = vmatprep.subr.mxu0 0.0
        %3094 = vmatpush1.msra.mxu0 %v3066
        %3095 = vmatprep.subr.mxu0 0.0
        %3096 = vmatpush1.msra.mxu0 %v3067
        %3097 = vmatprep.subr.mxu0 0.0
        %3098 = vmatpush1.msra.mxu0 %v3068
        %3099 = vmatprep.subr.mxu0 0.0
        %3100 = vmatpush1.msra.mxu0 %v3069
        %3101 = vmatprep.subr.mxu0 0.0
        %3102 = vmatpush1.msra.mxu0 %v3070
        %3103 = vmatprep.subr.mxu0 0.0
        %3104 = vmatpush1.msra.mxu0 %v3071
        %3105 = vmatprep.subr.mxu0 0.0
        %3106 = vmatpush1.msra.mxu0 %v3072
        %3107 = vmatprep.subr.mxu0 0.0
        %3108 = vmatpush1.msra.mxu0 %v3073
        %3109 = vmatprep.subr.mxu0 0.0
        %3110 = vmatpush1.msra.mxu0 %v3074
        %3111 = vmatprep.subr.mxu0 0.0
        %3112 = vmatpush1.msra.mxu0 0.0
        %3113 = vmatprep.subr.mxu0 0.0
        %3114 = vmatpush1.msra.mxu0 0.0
        %3115 = vmatprep.subr.mxu0 0.0
        %3116 = vmatpush1.msra.mxu0 0.0
        %3117 = vmatprep.subr.mxu0 0.0
        %3118 = vmatpush1.msra.mxu0 0.0
        %3119 = vmatprep.subr.mxu0 0.0
        %3120 = vmatpush1.msra.mxu0 0.0
        %3121 = vmatprep.subr.mxu0 0.0
        %3122 = vmatpush1.msra.mxu0 0.0
        %3123 = vmatprep.subr.mxu0 0.0
        %3124 = vmatpush1.msra.mxu0 0.0
        %3125 = vmatprep.subr.mxu0 0.0
        %3126 = vmatpush1.msra.mxu0 0.0
        %3127 = vmatprep.subr.mxu0 0.0
        %3128 = vmatpush1.msra.mxu0 0.0
        %3129 = vmatprep.subr.mxu0 0.0
        %3130 = vmatpush1.msra.mxu0 0.0
        %3131 = vmatprep.subr.mxu0 0.0
        %3132 = vmatpush1.msra.mxu0 0.0
        %3133 = vmatprep.subr.mxu0 0.0
        %3134 = vmatpush1.msra.mxu0 0.0
        %3135 = vmatprep.subr.mxu0 0.0
        %3136 = vmatpush1.msra.mxu0 0.0
        %3137 = vmatprep.subr.mxu0 0.0
        %3138 = vmatpush1.msra.mxu0 0.0
        %3139 = vmatprep.subr.mxu0 0.0
        %3140 = vmatpush1.msra.mxu0 0.0
        %3141 = vmatprep.subr.mxu0 0.0
        %3142 = vmatpush1.msra.mxu0 0.0
        %3143 = vmatprep.mubr.f32.mxu0 0.0
        %3144 = vmatmul.mubr.f32.gmra.mrb[0].mxu0 %v3076
        %v3145 = vpop.f32.mrb[0].mxu0
        %v3146 = vadd.f32 0.0, %v3145
        %v3147 = vpop.f32.mrb[0].mxu0
        %3148 = vmatprep.mubr.f32.mxu0 0.0
        %3149 = vmatmul.mubr.f32.gmra.mrb[0].mxu0 %v3077
        %v3150 = vpop.f32.mrb[0].mxu0
        %v3151 = vadd.f32 0.0, %v3150
        %v3152 = vpop.f32.mrb[0].mxu0
        %3153 = vmatprep.mubr.f32.mxu0 0.0
        %3154 = vmatmul.mubr.f32.gmra.mrb[0].mxu0 %v3078
        %v3155 = vpop.f32.mrb[0].mxu0
        %v3156 = vadd.f32 0.0, %v3155
        %v3157 = vpop.f32.mrb[0].mxu0
        %3158 = vdwg.mxu0
        %v3159 = vmul.f32 %v3146, 0.35355338
        %v3160 = vmul.f32 %v3151, 0.35355338
        %v3161 = vmul.f32 %v3156, 0.35355338
        %v3162 = vmul.f32 %v2963, %v2971
        %v3163 = vmul.f32 %v2969, %v2977
        %v3164 = vmul.f32 %v2975, %v2965
        %3165 = vmatprep.subr.mxu0 0.0
        %3166 = vmatpush1.msra.mxu0 %v3059
        %3167 = vmatprep.subr.mxu0 0.0
        %3168 = vmatpush1.msra.mxu0 %v3060
        %3169 = vmatprep.subr.mxu0 0.0
        %3170 = vmatpush1.msra.mxu0 %v3061
        %3171 = vmatprep.subr.mxu0 0.0
        %3172 = vmatpush1.msra.mxu0 %v3062
        %3173 = vmatprep.subr.mxu0 0.0
        %3174 = vmatpush1.msra.mxu0 %v3063
        %3175 = vmatprep.subr.mxu0 0.0
        %3176 = vmatpush1.msra.mxu0 %v3064
        %3177 = vmatprep.subr.mxu0 0.0
        %3178 = vmatpush1.msra.mxu0 %v3065
        %3179 = vmatprep.subr.mxu0 0.0
        %3180 = vmatpush1.msra.mxu0 %v3066
        %3181 = vmatprep.subr.mxu0 0.0
        %3182 = vmatpush1.msra.mxu0 %v3067
        %3183 = vmatprep.subr.mxu0 0.0
        %3184 = vmatpush1.msra.mxu0 %v3068
        %3185 = vmatprep.subr.mxu0 0.0
        %3186 = vmatpush1.msra.mxu0 %v3069
        %3187 = vmatprep.subr.mxu0 0.0
        %3188 = vmatpush1.msra.mxu0 %v3070
        %3189 = vmatprep.subr.mxu0 0.0
        %3190 = vmatpush1.msra.mxu0 %v3071
        %3191 = vmatprep.subr.mxu0 0.0
        %3192 = vmatpush1.msra.mxu0 %v3072
        %3193 = vmatprep.subr.mxu0 0.0
        %3194 = vmatpush1.msra.mxu0 %v3073
        %3195 = vmatprep.subr.mxu0 0.0
        %3196 = vmatpush1.msra.mxu0 %v3074
        %3197 = vmatprep.subr.mxu0 0.0
        %3198 = vmatpush1.msra.mxu0 0.0
        %3199 = vmatprep.subr.mxu0 0.0
        %3200 = vmatpush1.msra.mxu0 0.0
        %3201 = vmatprep.subr.mxu0 0.0
        %3202 = vmatpush1.msra.mxu0 0.0
        %3203 = vmatprep.subr.mxu0 0.0
        %3204 = vmatpush1.msra.mxu0 0.0
        %3205 = vmatprep.subr.mxu0 0.0
        %3206 = vmatpush1.msra.mxu0 0.0
        %3207 = vmatprep.subr.mxu0 0.0
        %3208 = vmatpush1.msra.mxu0 0.0
        %3209 = vmatprep.subr.mxu0 0.0
        %3210 = vmatpush1.msra.mxu0 0.0
        %3211 = vmatprep.subr.mxu0 0.0
        %3212 = vmatpush1.msra.mxu0 0.0
        %3213 = vmatprep.subr.mxu0 0.0
        %3214 = vmatpush1.msra.mxu0 0.0
        %3215 = vmatprep.subr.mxu0 0.0
        %3216 = vmatpush1.msra.mxu0 0.0
        %3217 = vmatprep.subr.mxu0 0.0
        %3218 = vmatpush1.msra.mxu0 0.0
        %3219 = vmatprep.subr.mxu0 0.0
        %3220 = vmatpush1.msra.mxu0 0.0
        %3221 = vmatprep.subr.mxu0 0.0
        %3222 = vmatpush1.msra.mxu0 0.0
        %3223 = vmatprep.subr.mxu0 0.0
        %3224 = vmatpush1.msra.mxu0 0.0
        %3225 = vmatprep.subr.mxu0 0.0
        %3226 = vmatpush1.msra.mxu0 0.0
        %3227 = vmatprep.subr.mxu0 0.0
        %3228 = vmatpush1.msra.mxu0 0.0
        %3229 = vmatprep.mubr.f32.mxu0 0.0
        %3230 = vmatmul.mubr.f32.gmra.mrb[0].mxu0 %v3162
        %v3231 = vpop.f32.mrb[0].mxu0
        %v3232 = vadd.f32 0.0, %v3231
        %v3233 = vpop.f32.mrb[0].mxu0
        %3234 = vmatprep.mubr.f32.mxu0 0.0
        %3235 = vmatmul.mubr.f32.gmra.mrb[0].mxu0 %v3163
        %v3236 = vpop.f32.mrb[0].mxu0
        %v3237 = vadd.f32 0.0, %v3236
        %v3238 = vpop.f32.mrb[0].mxu0
        %3239 = vmatprep.mubr.f32.mxu0 0.0
        %3240 = vmatmul.mubr.f32.gmra.mrb[0].mxu0 %v3164
        %v3241 = vpop.f32.mrb[0].mxu0
        %v3242 = vadd.f32 0.0, %v3241
        %v3243 = vpop.f32.mrb[0].mxu0
        %3244 = vdwg.mxu0
        %v3245 = vmul.f32 %v3232, 0.35355338
        %v3246 = vmul.f32 %v3237, 0.35355338
        %v3247 = vmul.f32 %v3242, 0.35355338
        %v3248 = vmul.f32 %v2963, %v2977
        %v3249 = vmul.f32 %v2969, %v2965
        %v3250 = vmul.f32 %v2975, %v2971
        %3251 = vmatprep.subr.mxu0 0.0
        %3252 = vmatpush1.msra.mxu0 %v3059
        %3253 = vmatprep.subr.mxu0 0.0
        %3254 = vmatpush1.msra.mxu0 %v3060
        %3255 = vmatprep.subr.mxu0 0.0
        %3256 = vmatpush1.msra.mxu0 %v3061
        %3257 = vmatprep.subr.mxu0 0.0
        %3258 = vmatpush1.msra.mxu0 %v3062
        %3259 = vmatprep.subr.mxu0 0.0
        %3260 = vmatpush1.msra.mxu0 %v3063
        %3261 = vmatprep.subr.mxu0 0.0
        %3262 = vmatpush1.msra.mxu0 %v3064
        %3263 = vmatprep.subr.mxu0 0.0
        %3264 = vmatpush1.msra.mxu0 %v3065
        %3265 = vmatprep.subr.mxu0 0.0
        %3266 = vmatpush1.msra.mxu0 %v3066
        %3267 = vmatprep.subr.mxu0 0.0
        %3268 = vmatpush1.msra.mxu0 %v3067
        %3269 = vmatprep.subr.mxu0 0.0
        %3270 = vmatpush1.msra.mxu0 %v3068
        %3271 = vmatprep.subr.mxu0 0.0
        %3272 = vmatpush1.msra.mxu0 %v3069
        %3273 = vmatprep.subr.mxu0 0.0
        %3274 = vmatpush1.msra.mxu0 %v3070
        %3275 = vmatprep.subr.mxu0 0.0
        %3276 = vmatpush1.msra.mxu0 %v3071
        %3277 = vmatprep.subr.mxu0 0.0
        %3278 = vmatpush1.msra.mxu0 %v3072
        %3279 = vmatprep.subr.mxu0 0.0
        %3280 = vmatpush1.msra.mxu0 %v3073
        %3281 = vmatprep.subr.mxu0 0.0
        %3282 = vmatpush1.msra.mxu0 %v3074
        %3283 = vmatprep.subr.mxu0 0.0
        %3284 = vmatpush1.msra.mxu0 0.0
        %3285 = vmatprep.subr.mxu0 0.0
        %3286 = vmatpush1.msra.mxu0 0.0
        %3287 = vmatprep.subr.mxu0 0.0
        %3288 = vmatpush1.msra.mxu0 0.0
        %3289 = vmatprep.subr.mxu0 0.0
        %3290 = vmatpush1.msra.mxu0 0.0
        %3291 = vmatprep.subr.mxu0 0.0
        %3292 = vmatpush1.msra.mxu0 0.0
        %3293 = vmatprep.subr.mxu0 0.0
        %3294 = vmatpush1.msra.mxu0 0.0
        %3295 = vmatprep.subr.mxu0 0.0
        %3296 = vmatpush1.msra.mxu0 0.0
        %3297 = vmatprep.subr.mxu0 0.0
        %3298 = vmatpush1.msra.mxu0 0.0
        %3299 = vmatprep.subr.mxu0 0.0
        %3300 = vmatpush1.msra.mxu0 0.0
        %3301 = vmatprep.subr.mxu0 0.0
        %3302 = vmatpush1.msra.mxu0 0.0
        %3303 = vmatprep.subr.mxu0 0.0
        %3304 = vmatpush1.msra.mxu0 0.0
        %3305 = vmatprep.subr.mxu0 0.0
        %3306 = vmatpush1.msra.mxu0 0.0
        %3307 = vmatprep.subr.mxu0 0.0
        %3308 = vmatpush1.msra.mxu0 0.0
        %3309 = vmatprep.subr.mxu0 0.0
        %3310 = vmatpush1.msra.mxu0 0.0
        %3311 = vmatprep.subr.mxu0 0.0
        %3312 = vmatpush1.msra.mxu0 0.0
        %3313 = vmatprep.subr.mxu0 0.0
        %3314 = vmatpush1.msra.mxu0 0.0
        %3315 = vmatprep.mubr.f32.mxu0 0.0
        %3316 = vmatmul.mubr.f32.gmra.mrb[0].mxu0 %v3248
        %v3317 = vpop.f32.mrb[0].mxu0
        %v3318 = vadd.f32 0.0, %v3317
        %v3319 = vpop.f32.mrb[0].mxu0
        %3320 = vmatprep.mubr.f32.mxu0 0.0
        %3321 = vmatmul.mubr.f32.gmra.mrb[0].mxu0 %v3249
        %v3322 = vpop.f32.mrb[0].mxu0
        %v3323 = vadd.f32 0.0, %v3322
        %v3324 = vpop.f32.mrb[0].mxu0
        %3325 = vmatprep.mubr.f32.mxu0 0.0
        %3326 = vmatmul.mubr.f32.gmra.mrb[0].mxu0 %v3250
        %v3327 = vpop.f32.mrb[0].mxu0
        %v3328 = vadd.f32 0.0, %v3327
        %v3329 = vpop.f32.mrb[0].mxu0
        %3330 = vdwg.mxu0
        %v3331 = vmul.f32 %v3318, 0.35355338
        %v3332 = vmul.f32 %v3323, 0.35355338
        %v3333 = vmul.f32 %v3328, 0.35355338
        %v3334 = vmax.f32 %v3159, %v3245
        %v3335 = vmax.f32 %v3160, %v3246
        %v3336 = vmax.f32 %v3161, %v3247
        %v3337 = vmax.f32 %v3334, %v3331
        %v3338 = vmax.f32 %v3335, %v3332
        %v3339 = vmax.f32 %v3336, %v3333
        %v3340 = vsub.f32 %v3159, %v3337
        %v3341 = vsub.f32 %v3160, %v3338
        %v3342 = vsub.f32 %v3161, %v3339
        %v3343 = vmul.f32 %v3340, 1.442695
        %v3344 = vpow.pop %v3343
        %v3345 = vmul.f32 %v3341, 1.442695
        %v3346 = vpow.pop %v3345
        %v3347 = vmul.f32 %v3342, 1.442695
        %v3348 = vpow.pop %v3347
        %v3349 = vsub.f32 %v3245, %v3337
        %v3350 = vsub.f32 %v3246, %v3338
        %v3351 = vsub.f32 %v3247, %v3339
        %v3352 = vmul.f32 %v3349, 1.442695
        %v3353 = vpow.pop %v3352
        %v3354 = vmul.f32 %v3350, 1.442695
        %v3355 = vpow.pop %v3354
        %v3356 = vmul.f32 %v3351, 1.442695
        %v3357 = vpow.pop %v3356
        %v3358 = vsub.f32 %v3331, %v3337
        %v3359 = vsub.f32 %v3332, %v3338
        %v3360 = vsub.f32 %v3333, %v3339
        %v3361 = vmul.f32 %v3358, 1.442695
        %v3362 = vpow.pop %v3361
        %v3363 = vmul.f32 %v3359, 1.442695
        %v3364 = vpow.pop %v3363
        %v3365 = vmul.f32 %v3360, 1.442695
        %v3366 = vpow.pop %v3365
        %v3367 = vadd.f32 %v3344, %v3353
        %v3368 = vadd.f32 %v3346, %v3355
        %v3369 = vadd.f32 %v3348, %v3357
        %v3370 = vadd.f32 %v3367, %v3362
        %v3371 = vadd.f32 %v3368, %v3364
        %v3372 = vadd.f32 %v3369, %v3366
        %v3373 = vrcp.pop %v3370
        %v3374 = vmul.f32 1.0, %v3373
        %v3375 = vrcp.pop %v3371
        %v3376 = vmul.f32 1.0, %v3375
        %v3377 = vrcp.pop %v3372
        %v3378 = vmul.f32 1.0, %v3377
        %v3379 = vmul.f32 %v3344, %v3374
        %v3380 = vmul.f32 %v3346, %v3376
        %v3381 = vmul.f32 %v3348, %v3378
        %vm3382 = vcmask 64512
        %v3384 = vsel %vm3382, %v3379, 0
        %v3387 = vsel %vm3382, %v3380, 0
        %v3390 = vsel %vm3382, %v3381, 0
        %3392 = vmatprep.subr.mxu0 0.0
        %3393 = vmatpush1.msra.mxu0 %v3075
        %3394 = vmatprep.subr.mxu0 0.0
        %3395 = vmatpush1.msra.mxu0 0.0
        %3396 = vmatprep.subr.mxu0 0.0
        %3397 = vmatpush1.msra.mxu0 0.0
        %3398 = vmatprep.subr.mxu0 0.0
        %3399 = vmatpush1.msra.mxu0 0.0
        %3400 = vmatprep.subr.mxu0 0.0
        %3401 = vmatpush1.msra.mxu0 0.0
        %3402 = vmatprep.subr.mxu0 0.0
        %3403 = vmatpush1.msra.mxu0 0.0
        %3404 = vmatprep.subr.mxu0 0.0
        %3405 = vmatpush1.msra.mxu0 0.0
        %3406 = vmatprep.subr.mxu0 0.0
        %3407 = vmatpush1.msra.mxu0 0.0
        %3408 = vmatprep.subr.mxu0 0.0
        %3409 = vmatpush1.msra.mxu0 0.0
        %3410 = vmatprep.subr.mxu0 0.0
        %3411 = vmatpush1.msra.mxu0 0.0
        %3412 = vmatprep.subr.mxu0 0.0
        %3413 = vmatpush1.msra.mxu0 0.0
        %3414 = vmatprep.subr.mxu0 0.0
        %3415 = vmatpush1.msra.mxu0 0.0
        %3416 = vmatprep.subr.mxu0 0.0
        %3417 = vmatpush1.msra.mxu0 0.0
        %3418 = vmatprep.subr.mxu0 0.0
        %3419 = vmatpush1.msra.mxu0 0.0
        %3420 = vmatprep.subr.mxu0 0.0
        %3421 = vmatpush1.msra.mxu0 0.0
        %3422 = vmatprep.subr.mxu0 0.0
        %3423 = vmatpush1.msra.mxu0 0.0
        %3424 = vmatprep.subr.mxu0 0.0
        %3425 = vmatpush1.msra.mxu0 0.0
        %3426 = vmatprep.subr.mxu0 0.0
        %3427 = vmatpush1.msra.mxu0 0.0
        %3428 = vmatprep.subr.mxu0 0.0
        %3429 = vmatpush1.msra.mxu0 0.0
        %3430 = vmatprep.subr.mxu0 0.0
        %3431 = vmatpush1.msra.mxu0 0.0
        %3432 = vmatprep.subr.mxu0 0.0
        %3433 = vmatpush1.msra.mxu0 0.0
        %3434 = vmatprep.subr.mxu0 0.0
        %3435 = vmatpush1.msra.mxu0 0.0
        %3436 = vmatprep.subr.mxu0 0.0
        %3437 = vmatpush1.msra.mxu0 0.0
        %3438 = vmatprep.subr.mxu0 0.0
        %3439 = vmatpush1.msra.mxu0 0.0
        %3440 = vmatprep.subr.mxu0 0.0
        %3441 = vmatpush1.msra.mxu0 0.0
        %3442 = vmatprep.subr.mxu0 0.0
        %3443 = vmatpush1.msra.mxu0 0.0
        %3444 = vmatprep.subr.mxu0 0.0
        %3445 = vmatpush1.msra.mxu0 0.0
        %3446 = vmatprep.subr.mxu0 0.0
        %3447 = vmatpush1.msra.mxu0 0.0
        %3448 = vmatprep.subr.mxu0 0.0
        %3449 = vmatpush1.msra.mxu0 0.0
        %3450 = vmatprep.subr.mxu0 0.0
        %3451 = vmatpush1.msra.mxu0 0.0
        %3452 = vmatprep.subr.mxu0 0.0
        %3453 = vmatpush1.msra.mxu0 0.0
        %3454 = vmatprep.subr.mxu0 0.0
        %3455 = vmatpush1.msra.mxu0 0.0
        %3456 = vmatprep.mubr.f32.mxu0 0.0
        %3457 = vmatmul.mubr.f32.gmra.mrb[0].mxu0 %v3384
        %v3458 = vpop.f32.mrb[0].mxu0
        %v3459 = vadd.f32 0.0, %v3458
        %v3460 = vpop.f32.mrb[0].mxu0
        %3461 = vmatprep.mubr.f32.mxu0 0.0
        %3462 = vmatmul.mubr.f32.gmra.mrb[0].mxu0 %v3387
        %v3463 = vpop.f32.mrb[0].mxu0
        %v3464 = vadd.f32 0.0, %v3463
        %v3465 = vpop.f32.mrb[0].mxu0
        %3466 = vmatprep.mubr.f32.mxu0 0.0
        %3467 = vmatmul.mubr.f32.gmra.mrb[0].mxu0 %v3390
        %v3468 = vpop.f32.mrb[0].mxu0
        %v3469 = vadd.f32 0.0, %v3468
        %v3470 = vpop.f32.mrb[0].mxu0
        %3471 = vdwg.mxu0
        %v3472 = vmul.f32 %v3459, %v3046
        %v3473 = vmul.f32 %v3464, %v3051
        %v3474 = vmul.f32 %v3469, %v3056
        %v3475 = vadd.f32 %v3472, 0.0
        %v3476 = vadd.f32 %v3473, 0.0
        %v3477 = vadd.f32 %v3474, 0.0
        %v3478 = vmul.f32 %v3353, %v3374
        %v3479 = vmul.f32 %v3355, %v3376
        %v3480 = vmul.f32 %v3357, %v3378
        %v3482 = vsel %vm3382, %v3478, 0
        %v3485 = vsel %vm3382, %v3479, 0
        %v3488 = vsel %vm3382, %v3480, 0
        %3490 = vmatprep.subr.mxu0 0.0
        %3491 = vmatpush1.msra.mxu0 %v3075
        %3492 = vmatprep.subr.mxu0 0.0
        %3493 = vmatpush1.msra.mxu0 0.0
        %3494 = vmatprep.subr.mxu0 0.0
        %3495 = vmatpush1.msra.mxu0 0.0
        %3496 = vmatprep.subr.mxu0 0.0
        %3497 = vmatpush1.msra.mxu0 0.0
        %3498 = vmatprep.subr.mxu0 0.0
        %3499 = vmatpush1.msra.mxu0 0.0
        %3500 = vmatprep.subr.mxu0 0.0
        %3501 = vmatpush1.msra.mxu0 0.0
        %3502 = vmatprep.subr.mxu0 0.0
        %3503 = vmatpush1.msra.mxu0 0.0
        %3504 = vmatprep.subr.mxu0 0.0
        %3505 = vmatpush1.msra.mxu0 0.0
        %3506 = vmatprep.subr.mxu0 0.0
        %3507 = vmatpush1.msra.mxu0 0.0
        %3508 = vmatprep.subr.mxu0 0.0
        %3509 = vmatpush1.msra.mxu0 0.0
        %3510 = vmatprep.subr.mxu0 0.0
        %3511 = vmatpush1.msra.mxu0 0.0
        %3512 = vmatprep.subr.mxu0 0.0
        %3513 = vmatpush1.msra.mxu0 0.0
        %3514 = vmatprep.subr.mxu0 0.0
        %3515 = vmatpush1.msra.mxu0 0.0
        %3516 = vmatprep.subr.mxu0 0.0
        %3517 = vmatpush1.msra.mxu0 0.0
        %3518 = vmatprep.subr.mxu0 0.0
        %3519 = vmatpush1.msra.mxu0 0.0
        %3520 = vmatprep.subr.mxu0 0.0
        %3521 = vmatpush1.msra.mxu0 0.0
        %3522 = vmatprep.subr.mxu0 0.0
        %3523 = vmatpush1.msra.mxu0 0.0
        %3524 = vmatprep.subr.mxu0 0.0
        %3525 = vmatpush1.msra.mxu0 0.0
        %3526 = vmatprep.subr.mxu0 0.0
        %3527 = vmatpush1.msra.mxu0 0.0
        %3528 = vmatprep.subr.mxu0 0.0
        %3529 = vmatpush1.msra.mxu0 0.0
        %3530 = vmatprep.subr.mxu0 0.0
        %3531 = vmatpush1.msra.mxu0 0.0
        %3532 = vmatprep.subr.mxu0 0.0
        %3533 = vmatpush1.msra.mxu0 0.0
        %3534 = vmatprep.subr.mxu0 0.0
        %3535 = vmatpush1.msra.mxu0 0.0
        %3536 = vmatprep.subr.mxu0 0.0
        %3537 = vmatpush1.msra.mxu0 0.0
        %3538 = vmatprep.subr.mxu0 0.0
        %3539 = vmatpush1.msra.mxu0 0.0
        %3540 = vmatprep.subr.mxu0 0.0
        %3541 = vmatpush1.msra.mxu0 0.0
        %3542 = vmatprep.subr.mxu0 0.0
        %3543 = vmatpush1.msra.mxu0 0.0
        %3544 = vmatprep.subr.mxu0 0.0
        %3545 = vmatpush1.msra.mxu0 0.0
        %3546 = vmatprep.subr.mxu0 0.0
        %3547 = vmatpush1.msra.mxu0 0.0
        %3548 = vmatprep.subr.mxu0 0.0
        %3549 = vmatpush1.msra.mxu0 0.0
        %3550 = vmatprep.subr.mxu0 0.0
        %3551 = vmatpush1.msra.mxu0 0.0
        %3552 = vmatprep.subr.mxu0 0.0
        %3553 = vmatpush1.msra.mxu0 0.0
        %3554 = vmatprep.mubr.f32.mxu0 0.0
        %3555 = vmatmul.mubr.f32.gmra.mrb[0].mxu0 %v3482
        %v3556 = vpop.f32.mrb[0].mxu0
        %v3557 = vadd.f32 0.0, %v3556
        %v3558 = vpop.f32.mrb[0].mxu0
        %3559 = vmatprep.mubr.f32.mxu0 0.0
        %3560 = vmatmul.mubr.f32.gmra.mrb[0].mxu0 %v3485
        %v3561 = vpop.f32.mrb[0].mxu0
        %v3562 = vadd.f32 0.0, %v3561
        %v3563 = vpop.f32.mrb[0].mxu0
        %3564 = vmatprep.mubr.f32.mxu0 0.0
        %3565 = vmatmul.mubr.f32.gmra.mrb[0].mxu0 %v3488
        %v3566 = vpop.f32.mrb[0].mxu0
        %v3567 = vadd.f32 0.0, %v3566
        %v3568 = vpop.f32.mrb[0].mxu0
        %3569 = vdwg.mxu0
        %v3570 = vmul.f32 %v3557, %v3051
        %v3571 = vmul.f32 %v3562, %v3056
        %v3572 = vmul.f32 %v3567, %v3046
        %v3573 = vadd.f32 %v3475, %v3570
        %v3574 = vadd.f32 %v3476, %v3571
        %v3575 = vadd.f32 %v3477, %v3572
        %v3576 = vmul.f32 %v3362, %v3374
        %v3577 = vmul.f32 %v3364, %v3376
        %v3578 = vmul.f32 %v3366, %v3378
        %v3580 = vsel %vm3382, %v3576, 0
        %v3583 = vsel %vm3382, %v3577, 0
        %v3586 = vsel %vm3382, %v3578, 0
        %3588 = vmatprep.subr.mxu0 0.0
        %3589 = vmatpush1.msra.mxu0 %v3075
        %3590 = vmatprep.subr.mxu0 0.0
        %3591 = vmatpush1.msra.mxu0 0.0
        %3592 = vmatprep.subr.mxu0 0.0
        %3593 = vmatpush1.msra.mxu0 0.0
        %3594 = vmatprep.subr.mxu0 0.0
        %3595 = vmatpush1.msra.mxu0 0.0
        %3596 = vmatprep.subr.mxu0 0.0
        %3597 = vmatpush1.msra.mxu0 0.0
        %3598 = vmatprep.subr.mxu0 0.0
        %3599 = vmatpush1.msra.mxu0 0.0
        %3600 = vmatprep.subr.mxu0 0.0
        %3601 = vmatpush1.msra.mxu0 0.0
        %3602 = vmatprep.subr.mxu0 0.0
        %3603 = vmatpush1.msra.mxu0 0.0
        %3604 = vmatprep.subr.mxu0 0.0
        %3605 = vmatpush1.msra.mxu0 0.0
        %3606 = vmatprep.subr.mxu0 0.0
        %3607 = vmatpush1.msra.mxu0 0.0
        %3608 = vmatprep.subr.mxu0 0.0
        %3609 = vmatpush1.msra.mxu0 0.0
        %3610 = vmatprep.subr.mxu0 0.0
        %3611 = vmatpush1.msra.mxu0 0.0
        %3612 = vmatprep.subr.mxu0 0.0
        %3613 = vmatpush1.msra.mxu0 0.0
        %3614 = vmatprep.subr.mxu0 0.0
        %3615 = vmatpush1.msra.mxu0 0.0
        %3616 = vmatprep.subr.mxu0 0.0
        %3617 = vmatpush1.msra.mxu0 0.0
        %3618 = vmatprep.subr.mxu0 0.0
        %3619 = vmatpush1.msra.mxu0 0.0
        %3620 = vmatprep.subr.mxu0 0.0
        %3621 = vmatpush1.msra.mxu0 0.0
        %3622 = vmatprep.subr.mxu0 0.0
        %3623 = vmatpush1.msra.mxu0 0.0
        %3624 = vmatprep.subr.mxu0 0.0
        %3625 = vmatpush1.msra.mxu0 0.0
        %3626 = vmatprep.subr.mxu0 0.0
        %3627 = vmatpush1.msra.mxu0 0.0
        %3628 = vmatprep.subr.mxu0 0.0
        %3629 = vmatpush1.msra.mxu0 0.0
        %3630 = vmatprep.subr.mxu0 0.0
        %3631 = vmatpush1.msra.mxu0 0.0
        %3632 = vmatprep.subr.mxu0 0.0
        %3633 = vmatpush1.msra.mxu0 0.0
        %3634 = vmatprep.subr.mxu0 0.0
        %3635 = vmatpush1.msra.mxu0 0.0
        %3636 = vmatprep.subr.mxu0 0.0
        %3637 = vmatpush1.msra.mxu0 0.0
        %3638 = vmatprep.subr.mxu0 0.0
        %3639 = vmatpush1.msra.mxu0 0.0
        %3640 = vmatprep.subr.mxu0 0.0
        %3641 = vmatpush1.msra.mxu0 0.0
        %3642 = vmatprep.subr.mxu0 0.0
        %3643 = vmatpush1.msra.mxu0 0.0
        %3644 = vmatprep.subr.mxu0 0.0
        %3645 = vmatpush1.msra.mxu0 0.0
        %3646 = vmatprep.subr.mxu0 0.0
        %3647 = vmatpush1.msra.mxu0 0.0
        %3648 = vmatprep.subr.mxu0 0.0
        %3649 = vmatpush1.msra.mxu0 0.0
        %3650 = vmatprep.subr.mxu0 0.0
        %3651 = vmatpush1.msra.mxu0 0.0
        %3652 = vmatprep.mubr.f32.mxu0 0.0
        %3653 = vmatmul.mubr.f32.gmra.mrb[0].mxu0 %v3580
        %v3654 = vpop.f32.mrb[0].mxu0
        %v3655 = vadd.f32 0.0, %v3654
        %v3656 = vpop.f32.mrb[0].mxu0
        %3657 = vmatprep.mubr.f32.mxu0 0.0
        %3658 = vmatmul.mubr.f32.gmra.mrb[0].mxu0 %v3583
        %v3659 = vpop.f32.mrb[0].mxu0
        %v3660 = vadd.f32 0.0, %v3659
        %v3661 = vpop.f32.mrb[0].mxu0
        %3662 = vmatprep.mubr.f32.mxu0 0.0
        %3663 = vmatmul.mubr.f32.gmra.mrb[0].mxu0 %v3586
        %v3664 = vpop.f32.mrb[0].mxu0
        %v3665 = vadd.f32 0.0, %v3664
        %v3666 = vpop.f32.mrb[0].mxu0
        %3667 = vdwg.mxu0
        %v3668 = vmul.f32 %v3655, %v3056
        %v3669 = vmul.f32 %v3660, %v3046
        %v3670 = vmul.f32 %v3665, %v3051
        %v3671 = vadd.f32 %v3573, %v3668
        %v3672 = vadd.f32 %v3574, %v3669
        %v3673 = vadd.f32 %v3575, %v3670
        %v3674 = vadd.f32 %v3671, %v3672
        %v3675 = vadd.f32 %v3674, %v3673
        %v3676 = vmul.f32 %v3675, 0.33333334
        %v3677 = vld [vmem:[#allocation20] sm:$0xff]
        %v3678 = vld [vmem:[#allocation20 + $0x8] sm:$0xff]
        %v3679 = vld [vmem:[#allocation20 + $0x10] sm:$0xff]
        %v3680 = vld [vmem:[#allocation20 + $0x18] sm:$0xff]
        %v3681 = vld [vmem:[#allocation20 + $0x20] sm:$0xff]
        %v3682 = vld [vmem:[#allocation20 + $0x28] sm:$0xff]
        %v3683 = vld [vmem:[#allocation20 + $0x30] sm:$0xff]
        %v3684 = vld [vmem:[#allocation20 + $0x38] sm:$0xff]
        %v3685 = vld [vmem:[#allocation20 + $0x40] sm:$0xff]
        %v3686 = vld [vmem:[#allocation20 + $0x48] sm:$0xff]
        %v3687 = vld [vmem:[#allocation20 + $0x50] sm:$0xff]
        %v3688 = vld [vmem:[#allocation20 + $0x58] sm:$0xff]
        %v3689 = vld [vmem:[#allocation20 + $0x60] sm:$0xff]
        %v3690 = vld [vmem:[#allocation20 + $0x68] sm:$0xff]
        %v3691 = vld [vmem:[#allocation20 + $0x70] sm:$0xff]
        %v3692 = vld [vmem:[#allocation20 + $0x78] sm:$0xff]
        %v3693 = vld [vmem:[%s49] sm:$0x1]
        %v3695 = vlaneseq
        %v3696 = vshrl.u32 %v3695, 7
        %v3697 = vsub.s32 0, %v3696
        %v3698 = vrot.slane %v3693, %v3697
        %3700 = vmatprep.subr.mxu0 0.0
        %3701 = vmatpush1.msra.mxu0 %v3677
        %3702 = vmatprep.subr.mxu0 0.0
        %3703 = vmatpush1.msra.mxu0 %v3678
        %3704 = vmatprep.subr.mxu0 0.0
        %3705 = vmatpush1.msra.mxu0 %v3679
        %3706 = vmatprep.subr.mxu0 0.0
        %3707 = vmatpush1.msra.mxu0 %v3680
        %3708 = vmatprep.subr.mxu0 0.0
        %3709 = vmatpush1.msra.mxu0 %v3681
        %3710 = vmatprep.subr.mxu0 0.0
        %3711 = vmatpush1.msra.mxu0 %v3682
        %3712 = vmatprep.subr.mxu0 0.0
        %3713 = vmatpush1.msra.mxu0 %v3683
        %3714 = vmatprep.subr.mxu0 0.0
        %3715 = vmatpush1.msra.mxu0 %v3684
        %3716 = vmatprep.subr.mxu0 0.0
        %3717 = vmatpush1.msra.mxu0 %v3685
        %3718 = vmatprep.subr.mxu0 0.0
        %3719 = vmatpush1.msra.mxu0 %v3686
        %3720 = vmatprep.subr.mxu0 0.0
        %3721 = vmatpush1.msra.mxu0 %v3687
        %3722 = vmatprep.subr.mxu0 0.0
        %3723 = vmatpush1.msra.mxu0 %v3688
        %3724 = vmatprep.subr.mxu0 0.0
        %3725 = vmatpush1.msra.mxu0 %v3689
        %3726 = vmatprep.subr.mxu0 0.0
        %3727 = vmatpush1.msra.mxu0 %v3690
        %3728 = vmatprep.subr.mxu0 0.0
        %3729 = vmatpush1.msra.mxu0 %v3691
        %3730 = vmatprep.subr.mxu0 0.0
        %3731 = vmatpush1.msra.mxu0 %v3692
        %3732 = vmatprep.subr.mxu0 0.0
        %3733 = vmatpush1.msra.mxu0 0.0
        %3734 = vmatprep.subr.mxu0 0.0
        %3735 = vmatpush1.msra.mxu0 0.0
        %3736 = vmatprep.subr.mxu0 0.0
        %3737 = vmatpush1.msra.mxu0 0.0
        %3738 = vmatprep.subr.mxu0 0.0
        %3739 = vmatpush1.msra.mxu0 0.0
        %3740 = vmatprep.subr.mxu0 0.0
        %3741 = vmatpush1.msra.mxu0 0.0
        %3742 = vmatprep.subr.mxu0 0.0
        %3743 = vmatpush1.msra.mxu0 0.0
        %3744 = vmatprep.subr.mxu0 0.0
        %3745 = vmatpush1.msra.mxu0 0.0
        %3746 = vmatprep.subr.mxu0 0.0
        %3747 = vmatpush1.msra.mxu0 0.0
        %3748 = vmatprep.subr.mxu0 0.0
        %3749 = vmatpush1.msra.mxu0 0.0
        %3750 = vmatprep.subr.mxu0 0.0
        %3751 = vmatpush1.msra.mxu0 0.0
        %3752 = vmatprep.subr.mxu0 0.0
        %3753 = vmatpush1.msra.mxu0 0.0
        %3754 = vmatprep.subr.mxu0 0.0
        %3755 = vmatpush1.msra.mxu0 0.0
        %3756 = vmatprep.subr.mxu0 0.0
        %3757 = vmatpush1.msra.mxu0 0.0
        %3758 = vmatprep.subr.mxu0 0.0
        %3759 = vmatpush1.msra.mxu0 0.0
        %3760 = vmatprep.subr.mxu0 0.0
        %3761 = vmatpush1.msra.mxu0 0.0
        %3762 = vmatprep.subr.mxu0 0.0
        %3763 = vmatpush1.msra.mxu0 0.0
        %3764 = vmatprep.mubr.f32.mxu0 0.0
        %3765 = vmatmul.mubr.f32.gmra.mrb[0].mxu0 %v3676
        %v3766 = vpop.f32.mrb[0].mxu0
        %v3767 = vadd.f32 %v3698, %v3766
        %v3768 = vpop.f32.mrb[0].mxu0
        %3769 = vdwg.mxu0
        %v3770 = vld [vmem:[#allocation22] sm:$0xff]
        %v3771 = vld [vmem:[#allocation22 + $0x8] sm:$0xff]
        %v3772 = vld [vmem:[#allocation22 + $0x10] sm:$0xff]
        %v3773 = vld [vmem:[#allocation22 + $0x18] sm:$0xff]
        %v3774 = vld [vmem:[#allocation22 + $0x20] sm:$0xff]
        %v3775 = vld [vmem:[#allocation22 + $0x28] sm:$0xff]
        %v3776 = vld [vmem:[#allocation22 + $0x30] sm:$0xff]
        %v3777 = vld [vmem:[#allocation22 + $0x38] sm:$0xff]
        %v3778 = vld [vmem:[#allocation22 + $0x40] sm:$0xff]
        %v3779 = vld [vmem:[#allocation22 + $0x48] sm:$0xff]
        %v3780 = vld [vmem:[#allocation22 + $0x50] sm:$0xff]
        %v3781 = vld [vmem:[#allocation22 + $0x58] sm:$0xff]
        %v3782 = vld [vmem:[#allocation22 + $0x60] sm:$0xff]
        %v3783 = vld [vmem:[#allocation22 + $0x68] sm:$0xff]
        %v3784 = vld [vmem:[#allocation22 + $0x70] sm:$0xff]
        %v3785 = vld [vmem:[#allocation22 + $0x78] sm:$0xff]
        %v3786 = vld [vmem:[%s53] sm:$0x1]
        %v3788 = vlaneseq
        %v3789 = vshrl.u32 %v3788, 7
        %v3790 = vsub.s32 0, %v3789
        %v3791 = vrot.slane %v3786, %v3790
        %3793 = vmatprep.subr.mxu0 0.0
        %3794 = vmatpush1.msra.mxu0 %v3770
        %3795 = vmatprep.subr.mxu0 0.0
        %3796 = vmatpush1.msra.mxu0 %v3771
        %3797 = vmatprep.subr.mxu0 0.0
        %3798 = vmatpush1.msra.mxu0 %v3772
        %3799 = vmatprep.subr.mxu0 0.0
        %3800 = vmatpush1.msra.mxu0 %v3773
        %3801 = vmatprep.subr.mxu0 0.0
        %3802 = vmatpush1.msra.mxu0 %v3774
        %3803 = vmatprep.subr.mxu0 0.0
        %3804 = vmatpush1.msra.mxu0 %v3775
        %3805 = vmatprep.subr.mxu0 0.0
        %3806 = vmatpush1.msra.mxu0 %v3776
        %3807 = vmatprep.subr.mxu0 0.0
        %3808 = vmatpush1.msra.mxu0 %v3777
        %3809 = vmatprep.subr.mxu0 0.0
        %3810 = vmatpush1.msra.mxu0 %v3778
        %3811 = vmatprep.subr.mxu0 0.0
        %3812 = vmatpush1.msra.mxu0 %v3779
        %3813 = vmatprep.subr.mxu0 0.0
        %3814 = vmatpush1.msra.mxu0 %v3780
        %3815 = vmatprep.subr.mxu0 0.0
        %3816 = vmatpush1.msra.mxu0 %v3781
        %3817 = vmatprep.subr.mxu0 0.0
        %3818 = vmatpush1.msra.mxu0 %v3782
        %3819 = vmatprep.subr.mxu0 0.0
        %3820 = vmatpush1.msra.mxu0 %v3783
        %3821 = vmatprep.subr.mxu0 0.0
        %3822 = vmatpush1.msra.mxu0 %v3784
        %3823 = vmatprep.subr.mxu0 0.0
        %3824 = vmatpush1.msra.mxu0 %v3785
        %3825 = vmatprep.subr.mxu0 0.0
        %3826 = vmatpush1.msra.mxu0 0.0
        %3827 = vmatprep.subr.mxu0 0.0
        %3828 = vmatpush1.msra.mxu0 0.0
        %3829 = vmatprep.subr.mxu0 0.0
        %3830 = vmatpush1.msra.mxu0 0.0
        %3831 = vmatprep.subr.mxu0 0.0
        %3832 = vmatpush1.msra.mxu0 0.0
        %3833 = vmatprep.subr.mxu0 0.0
        %3834 = vmatpush1.msra.mxu0 0.0
        %3835 = vmatprep.subr.mxu0 0.0
        %3836 = vmatpush1.msra.mxu0 0.0
        %3837 = vmatprep.subr.mxu0 0.0
        %3838 = vmatpush1.msra.mxu0 0.0
        %3839 = vmatprep.subr.mxu0 0.0
        %3840 = vmatpush1.msra.mxu0 0.0
        %3841 = vmatprep.subr.mxu0 0.0
        %3842 = vmatpush1.msra.mxu0 0.0
        %3843 = vmatprep.subr.mxu0 0.0
        %3844 = vmatpush1.msra.mxu0 0.0
        %3845 = vmatprep.subr.mxu0 0.0
        %3846 = vmatpush1.msra.mxu0 0.0
        %3847 = vmatprep.subr.mxu0 0.0
        %3848 = vmatpush1.msra.mxu0 0.0
        %3849 = vmatprep.subr.mxu0 0.0
        %3850 = vmatpush1.msra.mxu0 0.0
        %3851 = vmatprep.subr.mxu0 0.0
        %3852 = vmatpush1.msra.mxu0 0.0
        %3853 = vmatprep.subr.mxu0 0.0
        %3854 = vmatpush1.msra.mxu0 0.0
        %3855 = vmatprep.subr.mxu0 0.0
        %3856 = vmatpush1.msra.mxu0 0.0
        %3857 = vmatprep.mubr.f32.mxu0 0.0
        %3858 = vmatmul.mubr.f32.gmra.mrb[0].mxu0 %v3767
        %v3859 = vpop.f32.mrb[0].mxu0
        %v3860 = vadd.f32 %v3791, %v3859
        %v3861 = vpop.f32.mrb[0].mxu0
        %3862 = vdwg.mxu0
        %v3863 = vmax.f32 %v3860, 0.0
        %v3864 = vld [vmem:[#allocation23] sm:$0xff]
        %v3865 = vld [vmem:[#allocation23 + $0x8] sm:$0xff]
        %v3866 = vld [vmem:[#allocation23 + $0x10] sm:$0xff]
        %v3867 = vld [vmem:[#allocation23 + $0x18] sm:$0xff]
        %v3868 = vld [vmem:[#allocation23 + $0x20] sm:$0xff]
        %v3869 = vld [vmem:[#allocation23 + $0x28] sm:$0xff]
        %v3870 = vld [vmem:[#allocation23 + $0x30] sm:$0xff]
        %v3871 = vld [vmem:[#allocation23 + $0x38] sm:$0xff]
        %v3872 = vld [vmem:[#allocation23 + $0x40] sm:$0xff]
        %v3873 = vld [vmem:[#allocation23 + $0x48] sm:$0xff]
        %v3874 = vld [vmem:[#allocation23 + $0x50] sm:$0xff]
        %v3875 = vld [vmem:[#allocation23 + $0x58] sm:$0xff]
        %v3876 = vld [vmem:[#allocation23 + $0x60] sm:$0xff]
        %v3877 = vld [vmem:[#allocation23 + $0x68] sm:$0xff]
        %v3878 = vld [vmem:[#allocation23 + $0x70] sm:$0xff]
        %v3879 = vld [vmem:[#allocation23 + $0x78] sm:$0xff]
        %v3880 = vld [vmem:[%s57] sm:$0x1]
        %v3882 = vlaneseq
        %v3883 = vshrl.u32 %v3882, 7
        %v3884 = vsub.s32 0, %v3883
        %v3885 = vrot.slane %v3880, %v3884
        %3887 = vmatprep.subr.mxu0 0.0
        %3888 = vmatpush1.msra.mxu0 %v3864
        %3889 = vmatprep.subr.mxu0 0.0
        %3890 = vmatpush1.msra.mxu0 %v3865
        %3891 = vmatprep.subr.mxu0 0.0
        %3892 = vmatpush1.msra.mxu0 %v3866
        %3893 = vmatprep.subr.mxu0 0.0
        %3894 = vmatpush1.msra.mxu0 %v3867
        %3895 = vmatprep.subr.mxu0 0.0
        %3896 = vmatpush1.msra.mxu0 %v3868
        %3897 = vmatprep.subr.mxu0 0.0
        %3898 = vmatpush1.msra.mxu0 %v3869
        %3899 = vmatprep.subr.mxu0 0.0
        %3900 = vmatpush1.msra.mxu0 %v3870
        %3901 = vmatprep.subr.mxu0 0.0
        %3902 = vmatpush1.msra.mxu0 %v3871
        %3903 = vmatprep.subr.mxu0 0.0
        %3904 = vmatpush1.msra.mxu0 %v3872
        %3905 = vmatprep.subr.mxu0 0.0
        %3906 = vmatpush1.msra.mxu0 %v3873
        %3907 = vmatprep.subr.mxu0 0.0
        %3908 = vmatpush1.msra.mxu0 %v3874
        %3909 = vmatprep.subr.mxu0 0.0
        %3910 = vmatpush1.msra.mxu0 %v3875
        %3911 = vmatprep.subr.mxu0 0.0
        %3912 = vmatpush1.msra.mxu0 %v3876
        %3913 = vmatprep.subr.mxu0 0.0
        %3914 = vmatpush1.msra.mxu0 %v3877
        %3915 = vmatprep.subr.mxu0 0.0
        %3916 = vmatpush1.msra.mxu0 %v3878
        %3917 = vmatprep.subr.mxu0 0.0
        %3918 = vmatpush1.msra.mxu0 %v3879
        %3919 = vmatprep.subr.mxu0 0.0
        %3920 = vmatpush1.msra.mxu0 0.0
        %3921 = vmatprep.subr.mxu0 0.0
        %3922 = vmatpush1.msra.mxu0 0.0
        %3923 = vmatprep.subr.mxu0 0.0
        %3924 = vmatpush1.msra.mxu0 0.0
        %3925 = vmatprep.subr.mxu0 0.0
        %3926 = vmatpush1.msra.mxu0 0.0
        %3927 = vmatprep.subr.mxu0 0.0
        %3928 = vmatpush1.msra.mxu0 0.0
        %3929 = vmatprep.subr.mxu0 0.0
        %3930 = vmatpush1.msra.mxu0 0.0
        %3931 = vmatprep.subr.mxu0 0.0
        %3932 = vmatpush1.msra.mxu0 0.0
        %3933 = vmatprep.subr.mxu0 0.0
        %3934 = vmatpush1.msra.mxu0 0.0
        %3935 = vmatprep.subr.mxu0 0.0
        %3936 = vmatpush1.msra.mxu0 0.0
        %3937 = vmatprep.subr.mxu0 0.0
        %3938 = vmatpush1.msra.mxu0 0.0
        %3939 = vmatprep.subr.mxu0 0.0
        %3940 = vmatpush1.msra.mxu0 0.0
        %3941 = vmatprep.subr.mxu0 0.0
        %3942 = vmatpush1.msra.mxu0 0.0
        %3943 = vmatprep.subr.mxu0 0.0
        %3944 = vmatpush1.msra.mxu0 0.0
        %3945 = vmatprep.subr.mxu0 0.0
        %3946 = vmatpush1.msra.mxu0 0.0
        %3947 = vmatprep.subr.mxu0 0.0
        %3948 = vmatpush1.msra.mxu0 0.0
        %3949 = vmatprep.subr.mxu0 0.0
        %3950 = vmatpush1.msra.mxu0 0.0
        %3951 = vmatprep.mubr.f32.mxu0 0.0
        %3952 = vmatmul.mubr.f32.gmra.mrb[0].mxu0 %v3863
        %v3953 = vpop.f32.mrb[0].mxu0
        %v3954 = vadd.f32 %v3885, %v3953
        %v3955 = vpop.f32.mrb[0].mxu0
        %3956 = vdwg.mxu0
        %v3957 = vmax.f32 %v3954, 0.0
        %v3958 = vld [vmem:[#allocation25] sm:$0xff]
        %v3959 = vld [vmem:[#allocation25 + $0x8] sm:$0xff]
        %v3960 = vld [vmem:[#allocation25 + $0x10] sm:$0xff]
        %v3961 = vld [vmem:[#allocation25 + $0x18] sm:$0xff]
        %v3962 = vld [vmem:[#allocation25 + $0x20] sm:$0xff]
        %v3963 = vld [vmem:[#allocation25 + $0x28] sm:$0xff]
        %v3964 = vld [vmem:[#allocation25 + $0x30] sm:$0xff]
        %v3965 = vld [vmem:[#allocation25 + $0x38] sm:$0xff]
        %v3966 = vld [vmem:[#allocation25 + $0x40] sm:$0xff]
        %v3967 = vld [vmem:[#allocation25 + $0x48] sm:$0xff]
        %v3968 = vld [vmem:[#allocation25 + $0x50] sm:$0xff]
        %v3969 = vld [vmem:[#allocation25 + $0x58] sm:$0xff]
        %v3970 = vld [vmem:[#allocation25 + $0x60] sm:$0xff]
        %v3971 = vld [vmem:[#allocation25 + $0x68] sm:$0xff]
        %v3972 = vld [vmem:[#allocation25 + $0x70] sm:$0xff]
        %v3973 = vld [vmem:[#allocation25 + $0x78] sm:$0xff]
        %v3974 = vld [vmem:[%s61] sm:$0x1]
        %v3976 = vlaneseq
        %v3977 = vshrl.u32 %v3976, 7
        %v3978 = vsub.s32 0, %v3977
        %v3979 = vrot.slane %v3974, %v3978
        %3981 = vmatprep.subr.mxu0 0.0
        %3982 = vmatpush1.msra.mxu0 %v3958
        %3983 = vmatprep.subr.mxu0 0.0
        %3984 = vmatpush1.msra.mxu0 %v3959
        %3985 = vmatprep.subr.mxu0 0.0
        %3986 = vmatpush1.msra.mxu0 %v3960
        %3987 = vmatprep.subr.mxu0 0.0
        %3988 = vmatpush1.msra.mxu0 %v3961
        %3989 = vmatprep.subr.mxu0 0.0
        %3990 = vmatpush1.msra.mxu0 %v3962
        %3991 = vmatprep.subr.mxu0 0.0
        %3992 = vmatpush1.msra.mxu0 %v3963
        %3993 = vmatprep.subr.mxu0 0.0
        %3994 = vmatpush1.msra.mxu0 %v3964
        %3995 = vmatprep.subr.mxu0 0.0
        %3996 = vmatpush1.msra.mxu0 %v3965
        %3997 = vmatprep.subr.mxu0 0.0
        %3998 = vmatpush1.msra.mxu0 %v3966
        %3999 = vmatprep.subr.mxu0 0.0
        %4000 = vmatpush1.msra.mxu0 %v3967
        %4001 = vmatprep.subr.mxu0 0.0
        %4002 = vmatpush1.msra.mxu0 %v3968
        %4003 = vmatprep.subr.mxu0 0.0
        %4004 = vmatpush1.msra.mxu0 %v3969
        %4005 = vmatprep.subr.mxu0 0.0
        %4006 = vmatpush1.msra.mxu0 %v3970
        %4007 = vmatprep.subr.mxu0 0.0
        %4008 = vmatpush1.msra.mxu0 %v3971
        %4009 = vmatprep.subr.mxu0 0.0
        %4010 = vmatpush1.msra.mxu0 %v3972
        %4011 = vmatprep.subr.mxu0 0.0
        %4012 = vmatpush1.msra.mxu0 %v3973
        %4013 = vmatprep.subr.mxu0 0.0
        %4014 = vmatpush1.msra.mxu0 0.0
        %4015 = vmatprep.subr.mxu0 0.0
        %4016 = vmatpush1.msra.mxu0 0.0
        %4017 = vmatprep.subr.mxu0 0.0
        %4018 = vmatpush1.msra.mxu0 0.0
        %4019 = vmatprep.subr.mxu0 0.0
        %4020 = vmatpush1.msra.mxu0 0.0
        %4021 = vmatprep.subr.mxu0 0.0
        %4022 = vmatpush1.msra.mxu0 0.0
        %4023 = vmatprep.subr.mxu0 0.0
        %4024 = vmatpush1.msra.mxu0 0.0
        %4025 = vmatprep.subr.mxu0 0.0
        %4026 = vmatpush1.msra.mxu0 0.0
        %4027 = vmatprep.subr.mxu0 0.0
        %4028 = vmatpush1.msra.mxu0 0.0
        %4029 = vmatprep.subr.mxu0 0.0
        %4030 = vmatpush1.msra.mxu0 0.0
        %4031 = vmatprep.subr.mxu0 0.0
        %4032 = vmatpush1.msra.mxu0 0.0
        %4033 = vmatprep.subr.mxu0 0.0
        %4034 = vmatpush1.msra.mxu0 0.0
        %4035 = vmatprep.subr.mxu0 0.0
        %4036 = vmatpush1.msra.mxu0 0.0
        %4037 = vmatprep.subr.mxu0 0.0
        %4038 = vmatpush1.msra.mxu0 0.0
        %4039 = vmatprep.subr.mxu0 0.0
        %4040 = vmatpush1.msra.mxu0 0.0
        %4041 = vmatprep.subr.mxu0 0.0
        %4042 = vmatpush1.msra.mxu0 0.0
        %4043 = vmatprep.subr.mxu0 0.0
        %4044 = vmatpush1.msra.mxu0 0.0
        %4045 = vmatprep.mubr.f32.mxu0 0.0
        %4046 = vmatmul.mubr.f32.gmra.mrb[0].mxu0 %v3957
        %v4047 = vpop.f32.mrb[0].mxu0
        %v4048 = vadd.f32 %v3979, %v4047
        %v4049 = vpop.f32.mrb[0].mxu0
        %4050 = vdwg.mxu0
        %4051 = vst [vmem:[%s1245] sm:$0xff] %v4048
        %4052 = vst [vmem:[%s1245 + $0x8] sm:$0xff] %v1881
        %4053 = vst [vmem:[%s1245 + $0x10] sm:$0xff] %v2507
        %4054 = vst [vmem:[%s1245 + $0x18] sm:$0xff] %v2828
        %4055 = vst [vmem:[%s1245 + $0x20] sm:$0xff] %v3957
        %s4056 = sand.u32 %s805, 1
        %s4057 = scalar_lea.sflag [#allocation4], %s4056
        %s4058 = sand.u32 %s805, 1
        %s4059 = smul.addr %s4058, 40
        %s4060 = scalar_lea.vmem [#allocation26], %s4059
        // Predicated region
        $region213: #{tpu_custom_call.1} parent=151 // pred_check
          %p4061 = pneg %p815
        $region214: #{tpu_custom_call.1} parent=151 // pred_check_branch
          %4063 = sbr.rel (%p4061) target = $region216
        $region215: #{tpu_custom_call.1} parent=151 // pred_region
          %s4065 = ssub.s32 640, 640
          %4066 = vsyncadd %s4057, %s4065
          %s4067 = smul.addr %s89, 5
          %s4068 = smul.addr %s4067, 128
          %s4069 = scalar_lea.hbm %s67, %s4068
          %s4071 = sshll.u32 %s4060, 4
          %s4072 = int_to_ptr.vmem [resolvable:$true] %s4071
          %4074 = dma.vmem_to_hbm [thread:$0]  %s4072, 640, %s4069, %s4057
        $region216: #{tpu_custom_call.1} parent=151 // pred_fallthru
          _
      $region152: #{tpu_custom_call.1} parent=5 // pred_fallthru
        _
      %p4075 = scmp.le.s32.totalorder 2, %s84
      // Predicated region
      $region217: #{tpu_custom_call.1} parent=5 // pred_check
        %p4076 = pneg %p4075
      $region218: #{tpu_custom_call.1} parent=5 // pred_check_branch
        %4078 = sbr.rel (%p4076) target = $region220
      $region219: #{tpu_custom_call.1} parent=5 // pred_region
        %s4079 = ssub.s32 %s84, 2
        // Predicated region
        $region221: #{tpu_custom_call.1} parent=219 // pred_check
          %p4080 = pneg %p821
        $region222: #{tpu_custom_call.1} parent=219 // pred_check_branch
          %4082 = sbr.rel (%p4080) target = $region224
        $region223: #{tpu_custom_call.1} parent=219 // pred_region
          %s4083 = sand.u32 %s806, 1
          %s4084 = scalar_lea.sflag [#allocation4], %s4083
          %s4085 = sand.u32 %s806, 1
          %s4086 = smul.addr %s4085, 40
          %s4087 = scalar_lea.vmem [#allocation26], %s4086
          %4088 = dma.done %s4084, 640
        $region224: #{tpu_custom_call.1} parent=219 // pred_fallthru
          _
      $region220: #{tpu_custom_call.1} parent=5 // pred_fallthru
        _
    $region6: #{tpu_custom_call.1} parent=1 // loop_footer
      %s88 = sadd.s32 1, %s84
    $region7: #{tpu_custom_call.1} parent=1 // loop_footer_branch
      %83 = sbr.rel target = $region3
    $region8: #{tpu_custom_call.1} parent=1 // loop_exit
      _
    %4089 = vsyncpa [#allocation3], 1
    %s4090 = scalar_lea.sflag [#allocation3], 1
    %4091 = vsyncpa %s4090, 1
    %4092 = vsyncpa [#allocation6], 1
    %4093 = vsyncpa [#allocation9], 1
    %4094 = vsyncpa [#allocation12], 1
    %4095 = vsyncpa [#allocation15], 1
    %4096 = vsyncpa [#allocation18], 1
    %4097 = vsyncpa [#allocation21], 1
    %4098 = vsyncpa [#allocation24], 1
    %4099 = vsyncpa [#allocation4], 1
    %s4100 = scalar_lea.sflag [#allocation4], 1
    %4101 = vsyncpa %s4100, 1

</llo_original>
